<compile_context>
chip_gen: v7x
topology: tpu7x:2x2x1
jax: 0.10.0
libtpu: 0.0.40
codegen_flags: <defaults>
</compile_context>

<pallas_src>
import jax
import jax.numpy as jnp
from jax.experimental import pallas as pl
from jax.experimental.pallas import tpu as pltpu


# ---------------------------------------------------------------------------
# Fused kernel:
#   GAP -> proj(1280, bf16)+ReLU6 -> [int8 Lin+BN]+ReLU6 -> [int8 Lin+BN]+ReLU6
#   -> int8 Lin (padded to 1024 outputs)
# int8 weights are dequantized on-chip (exact in bf16); f32 MXU accumulation;
# per-output-channel scale applied after accumulation, next to the bias add.
# ---------------------------------------------------------------------------
def fused_tmodel_kernel(x_ref,                       # (B, C, H*W) f32
                        wbb_ref, bbb_ref,            # (C,1280) bf16, (1,1280) f32
                        w1_ref, s1_ref, b1_ref,      # (1280,1024) i8, (1,1024) f32 x2
                        w2_ref, s2_ref, b2_ref,      # (1024,1024) i8, (1,1024) f32 x2
                        w3_ref, s3_ref, b3_ref,      # (1024,1024) i8 (padded), ...
                        o_ref):                      # (B,1024) f32
    # Global average pool over pixels (lane-dense reduction over H*W).
    pooled = jnp.mean(x_ref[...], axis=-1)                                # (B, C)

    # Backbone stand-in: 1x1 projection C -> 1280, ReLU6 (weights tiny -> bf16).
    feats = jnp.dot(pooled.astype(jnp.bfloat16), wbb_ref[...],
                    preferred_element_type=jnp.float32) + bbb_ref[...]
    feats = jnp.clip(feats, 0.0, 6.0)                                     # (B,1280)

    def qlinear(x_f32, wq_ref, s_ref, b_ref):
        # int8 -> bf16 is exact (|q| <= 127); scale applied post-accumulation.
        w_bf16 = wq_ref[...].astype(jnp.bfloat16)
        acc = jnp.dot(x_f32.astype(jnp.bfloat16), w_bf16,
                      preferred_element_type=jnp.float32)
        return acc * s_ref[...] + b_ref[...]

    # Linear(1280,1024) + BN (folded) + ReLU6.  Dropout(eval) = identity.
    h = jnp.clip(qlinear(feats, w1_ref, s1_ref, b1_ref), 0.0, 6.0)        # (B,1024)
    # Linear(1024,1024) + BN (folded) + ReLU6.
    h = jnp.clip(qlinear(h, w2_ref, s2_ref, b2_ref), 0.0, 6.0)            # (B,1024)
    # Final Linear(1024,1000), zero-padded to 1024 lanes for dense stores.
    o_ref[...] = qlinear(h, w3_ref, s3_ref, b3_ref)


_VMEM = pl.BlockSpec(memory_space=pltpu.MemorySpace.VMEM)


def tmodel_forward(x_nchw, params):
    B, C, H, W = x_nchw.shape
    # Free view: pixels on the lane (last) axis for the GAP reduction.
    x_flat = x_nchw.reshape(B, C, H * W)

    f, n_pad = 1280, 1024
    flops = int(2 * B * (C * f + f * 1024 + 1024 * 1024 + 1024 * n_pad)
                + B * C * H * W)
    bytes_accessed = int(
        B * C * H * W * 4                                   # input
        + C * f * 2 + f * 4                                 # bf16 proj + bias
        + (f * 1024 + 1024 * 1024 + 1024 * n_pad) * 1       # int8 weights
        + 6 * 1024 * 4                                      # scales + biases
        + B * n_pad * 4)                                    # output

    out_pad = pl.pallas_call(
        fused_tmodel_kernel,
        out_shape=jax.ShapeDtypeStruct((B, n_pad), jnp.float32),
        in_specs=[_VMEM] * 12,
        out_specs=_VMEM,
        compiler_params=pltpu.CompilerParams(
            # ~3.4 MB int8 weights + small activations; 32 MiB leaves slack on
            # v5e (16 MiB default scoped VMEM) and fits v7x's 64 MiB physical.
            vmem_limit_bytes=32 * 1024 * 1024,
        ),
        cost_estimate=pl.CostEstimate(
            flops=flops, transcendentals=0, bytes_accessed=bytes_accessed),
    )(x_flat,
      params["w_bb"], params["b_bb"],
      params["w1"], params["s1"], params["b1"],
      params["w2"], params["s2"], params["b2"],
      params["w3"], params["s3"], params["b3"])
    # Slice the padded logits back to the real 1000 classes.
    return out_pad[:, :1000]


# ---------------------------------------------------------------------------
# Parameter construction: fold eval-mode BN into the preceding Linear, pad the
# final layer to 1024 outputs, then quantize the large matrices to int8 with
# per-output-channel scales.
# ---------------------------------------------------------------------------
def fold_bn_into_linear(w, b, gamma, beta, mean, var, eps=1e-5):
    # y = (x @ w + b) * scale + shift  ==  x @ (w * scale) + (b * scale + shift)
    scale = gamma / jnp.sqrt(var + eps)
    shift = beta - mean * scale
    return w * scale[None, :], (b * scale + shift)[None, :]


def quantize_per_channel_int8(w):
    amax = jnp.max(jnp.abs(w), axis=0)                       # (N,)
    scale = jnp.maximum(amax, 1e-8) / 127.0
    wq = jnp.clip(jnp.round(w / scale[None, :]), -127, 127).astype(jnp.int8)
    return wq, scale[None, :].astype(jnp.float32)


def make_params(key, c_in):
    ks = jax.random.split(key, 16)
    f = 1280
    n_cls, n_pad = 1000, 1024

    w_bb = 0.1 * jax.random.normal(ks[0], (c_in, f), jnp.float32)
    b_bb = 0.01 * jax.random.normal(ks[1], (1, f), jnp.float32)

    w1 = 0.02 * jax.random.normal(ks[2], (f, 1024), jnp.float32)
    b1 = 0.01 * jax.random.normal(ks[3], (1024,), jnp.float32)
    g1 = 1.0 + 0.1 * jax.random.normal(ks[4], (1024,), jnp.float32)
    be1 = 0.01 * jax.random.normal(ks[5], (1024,), jnp.float32)
    m1 = 0.01 * jax.random.normal(ks[6], (1024,), jnp.float32)
    v1 = 0.9 + 0.1 * jnp.abs(jax.random.normal(ks[7], (1024,), jnp.float32))
    w1f, b1f = fold_bn_into_linear(w1, b1, g1, be1, m1, v1)

    w2 = 0.02 * jax.random.normal(ks[8], (1024, 1024), jnp.float32)
    b2 = 0.01 * jax.random.normal(ks[9], (1024,), jnp.float32)
    g2 = 1.0 + 0.1 * jax.random.normal(ks[10], (1024,), jnp.float32)
    be2 = 0.01 * jax.random.normal(ks[11], (1024,), jnp.float32)
    m2 = 0.01 * jax.random.normal(ks[12], (1024,), jnp.float32)
    v2 = 0.9 + 0.1 * jnp.abs(jax.random.normal(ks[13], (1024,), jnp.float32))
    w2f, b2f = fold_bn_into_linear(w2, b2, g2, be2, m2, v2)

    w3 = 0.02 * jax.random.normal(ks[14], (1024, n_cls), jnp.float32)
    b3 = 0.01 * jax.random.normal(ks[15], (1, n_cls), jnp.float32)
    w3p = jnp.pad(w3, ((0, 0), (0, n_pad - n_cls)))
    b3p = jnp.pad(b3, ((0, 0), (0, n_pad - n_cls)))

    w1q, s1 = quantize_per_channel_int8(w1f)
    w2q, s2 = quantize_per_channel_int8(w2f)
    w3q, s3 = quantize_per_channel_int8(w3p)

    qparams = {
        "w_bb": w_bb.astype(jnp.bfloat16), "b_bb": b_bb,
        "w1": w1q, "s1": s1, "b1": b1f,
        "w2": w2q, "s2": s2, "b2": b2f,
        "w3": w3q, "s3": s3, "b3": b3p,
    }
    fparams = {  # f32 reference (pre-quantization, BN folded, unpadded w3)
        "w_bb": w_bb, "b_bb": b_bb,
        "w1": w1f, "b1": b1f, "w2": w2f, "b2": b2f, "w3": w3, "b3": b3,
    }
    return qparams, fparams


def reference_forward(x_nchw, fp):
    B, C = x_nchw.shape[0], x_nchw.shape[1]
    pooled = jnp.mean(x_nchw.reshape(B, C, -1), axis=-1)
    feats = jnp.clip(pooled @ fp["w_bb"] + fp["b_bb"], 0.0, 6.0)
    h = jnp.clip(feats @ fp["w1"] + fp["b1"], 0.0, 6.0)
    h = jnp.clip(h @ fp["w2"] + fp["b2"], 0.0, 6.0)
    return h @ fp["w3"] + fp["b3"]


if __name__ == "__main__":
    key = jax.random.PRNGKey(0)
    kx, kp = jax.random.split(key)

    # Small NCHW image-like input.  (Larger batches amortize the fixed weight
    # DMA almost linearly; B=2 kept to match the reference test shapes.)
    B, C, H, W = 2, 4, 16, 16
    x = jax.random.normal(kx, (B, C, H, W), jnp.float32)
    params, fparams = make_params(kp, C)

    out = jax.jit(tmodel_forward)(x, params)
    out = jax.block_until_ready(out)

    assert out.shape == (B, 1000), out.shape
    assert bool(jnp.all(jnp.isfinite(out)))
    # Loose check vs. the f32 reference (bf16 + int8 weight quant error is
    # O(1e-3) at these magnitudes; tolerance is generous to avoid flakiness).
    ref = reference_forward(x, fparams)
    assert bool(jnp.allclose(out, ref, rtol=2e-2, atol=2e-2))
    print("KERNEL_OK")
</pallas_src>

<mosaic_0001>
module attributes {stable_mosaic.version = 11 : i64} {
  func.func @fused_tmodel_kernel(%arg0: memref<2x4x256xf32, #tpu.memory_space<vmem>>, %arg1: memref<4x1280xbf16, #tpu.memory_space<vmem>>, %arg2: memref<1x1280xf32, #tpu.memory_space<vmem>>, %arg3: memref<1280x1024xi8, #tpu.memory_space<vmem>>, %arg4: memref<1x1024xf32, #tpu.memory_space<vmem>>, %arg5: memref<1x1024xf32, #tpu.memory_space<vmem>>, %arg6: memref<1024x1024xi8, #tpu.memory_space<vmem>>, %arg7: memref<1x1024xf32, #tpu.memory_space<vmem>>, %arg8: memref<1x1024xf32, #tpu.memory_space<vmem>>, %arg9: memref<1024x1024xi8, #tpu.memory_space<vmem>>, %arg10: memref<1x1024xf32, #tpu.memory_space<vmem>>, %arg11: memref<1x1024xf32, #tpu.memory_space<vmem>>, %arg12: memref<2x1024xf32, #tpu.memory_space<vmem>>) attributes {dimension_semantics = [], scalar_prefetch = 0 : i64, scratch_operands = 0 : i64, tpu.core_type = #tpu.core_type<tc>} {
    %c0 = arith.constant 0 : index
    %c0_0 = arith.constant 0 : index
    %c0_1 = arith.constant 0 : index
    %0 = vector.load %arg0[%c0, %c0_0, %c0_1] : memref<2x4x256xf32, #tpu.memory_space<vmem>>, vector<2x4x256xf32>
    %cst = arith.constant dense<0.000000e+00> : vector<2x4xf32>
    %1 = vector.multi_reduction <add>, %0, %cst [2] : vector<2x4x256xf32> to vector<2x4xf32>
    %cst_2 = arith.constant 2.560000e+02 : f32
    %2 = vector.broadcast %cst_2 : f32 to vector<2x4xf32>
    %3 = arith.divf %1, %2 : vector<2x4xf32>
    %4 = arith.truncf %3 : vector<2x4xf32> to vector<2x4xbf16>
    %c0_3 = arith.constant 0 : index
    %c0_4 = arith.constant 0 : index
    %5 = vector.load %arg1[%c0_3, %c0_4] : memref<4x1280xbf16, #tpu.memory_space<vmem>>, vector<4x1280xbf16>
    %cst_5 = arith.constant dense<0.000000e+00> : vector<2x1280xf32>
    %6 = tpu.matmul %4, %5, %cst_5 {dimension_numbers = #tpu.dot_dimension_numbers<[1], [0], [0], [1], [0, 0, 1, 1], [], []>} : vector<2x4xbf16>, vector<4x1280xbf16>, vector<2x1280xf32> -> vector<2x1280xf32>
    %c0_6 = arith.constant 0 : index
    %c0_7 = arith.constant 0 : index
    %7 = vector.load %arg2[%c0_6, %c0_7] : memref<1x1280xf32, #tpu.memory_space<vmem>>, vector<1x1280xf32>
    %8 = vector.broadcast %7 : vector<1x1280xf32> to vector<2x1280xf32>
    %9 = arith.addf %6, %8 : vector<2x1280xf32>
    %cst_8 = arith.constant 0.000000e+00 : f32
    %cst_9 = arith.constant 6.000000e+00 : f32
    %10 = vector.broadcast %cst_8 : f32 to vector<2x1280xf32>
    %11 = arith.maximumf %10, %9 : vector<2x1280xf32>
    %12 = vector.broadcast %cst_9 : f32 to vector<2x1280xf32>
    %13 = arith.minimumf %12, %11 : vector<2x1280xf32>
    %c0_10 = arith.constant 0 : index
    %c0_11 = arith.constant 0 : index
    %14 = vector.load %arg3[%c0_10, %c0_11] : memref<1280x1024xi8, #tpu.memory_space<vmem>>, vector<1280x1024xi8>
    %15 = arith.sitofp %14 : vector<1280x1024xi8> to vector<1280x1024xbf16>
    %16 = arith.truncf %13 : vector<2x1280xf32> to vector<2x1280xbf16>
    %cst_12 = arith.constant dense<0.000000e+00> : vector<2x1024xf32>
    %17 = tpu.matmul %16, %15, %cst_12 {dimension_numbers = #tpu.dot_dimension_numbers<[1], [0], [0], [1], [0, 0, 1, 1], [], []>} : vector<2x1280xbf16>, vector<1280x1024xbf16>, vector<2x1024xf32> -> vector<2x1024xf32>
    %c0_13 = arith.constant 0 : index
    %c0_14 = arith.constant 0 : index
    %18 = vector.load %arg4[%c0_13, %c0_14] : memref<1x1024xf32, #tpu.memory_space<vmem>>, vector<1x1024xf32>
    %19 = vector.broadcast %18 : vector<1x1024xf32> to vector<2x1024xf32>
    %20 = arith.mulf %17, %19 : vector<2x1024xf32>
    %c0_15 = arith.constant 0 : index
    %c0_16 = arith.constant 0 : index
    %21 = vector.load %arg5[%c0_15, %c0_16] : memref<1x1024xf32, #tpu.memory_space<vmem>>, vector<1x1024xf32>
    %22 = vector.broadcast %21 : vector<1x1024xf32> to vector<2x1024xf32>
    %23 = arith.addf %20, %22 : vector<2x1024xf32>
    %cst_17 = arith.constant 0.000000e+00 : f32
    %cst_18 = arith.constant 6.000000e+00 : f32
    %24 = vector.broadcast %cst_17 : f32 to vector<2x1024xf32>
    %25 = arith.maximumf %24, %23 : vector<2x1024xf32>
    %26 = vector.broadcast %cst_18 : f32 to vector<2x1024xf32>
    %27 = arith.minimumf %26, %25 : vector<2x1024xf32>
    %c0_19 = arith.constant 0 : index
    %c0_20 = arith.constant 0 : index
    %28 = vector.load %arg6[%c0_19, %c0_20] : memref<1024x1024xi8, #tpu.memory_space<vmem>>, vector<1024x1024xi8>
    %29 = arith.sitofp %28 : vector<1024x1024xi8> to vector<1024x1024xbf16>
    %30 = arith.truncf %27 : vector<2x1024xf32> to vector<2x1024xbf16>
    %cst_21 = arith.constant dense<0.000000e+00> : vector<2x1024xf32>
    %31 = tpu.matmul %30, %29, %cst_21 {dimension_numbers = #tpu.dot_dimension_numbers<[1], [0], [0], [1], [0, 0, 1, 1], [], []>} : vector<2x1024xbf16>, vector<1024x1024xbf16>, vector<2x1024xf32> -> vector<2x1024xf32>
    %c0_22 = arith.constant 0 : index
    %c0_23 = arith.constant 0 : index
    %32 = vector.load %arg7[%c0_22, %c0_23] : memref<1x1024xf32, #tpu.memory_space<vmem>>, vector<1x1024xf32>
    %33 = vector.broadcast %32 : vector<1x1024xf32> to vector<2x1024xf32>
    %34 = arith.mulf %31, %33 : vector<2x1024xf32>
    %c0_24 = arith.constant 0 : index
    %c0_25 = arith.constant 0 : index
    %35 = vector.load %arg8[%c0_24, %c0_25] : memref<1x1024xf32, #tpu.memory_space<vmem>>, vector<1x1024xf32>
    %36 = vector.broadcast %35 : vector<1x1024xf32> to vector<2x1024xf32>
    %37 = arith.addf %34, %36 : vector<2x1024xf32>
    %cst_26 = arith.constant 0.000000e+00 : f32
    %cst_27 = arith.constant 6.000000e+00 : f32
    %38 = vector.broadcast %cst_26 : f32 to vector<2x1024xf32>
    %39 = arith.maximumf %38, %37 : vector<2x1024xf32>
    %40 = vector.broadcast %cst_27 : f32 to vector<2x1024xf32>
    %41 = arith.minimumf %40, %39 : vector<2x1024xf32>
    %c0_28 = arith.constant 0 : index
    %c0_29 = arith.constant 0 : index
    %42 = vector.load %arg9[%c0_28, %c0_29] : memref<1024x1024xi8, #tpu.memory_space<vmem>>, vector<1024x1024xi8>
    %43 = arith.sitofp %42 : vector<1024x1024xi8> to vector<1024x1024xbf16>
    %44 = arith.truncf %41 : vector<2x1024xf32> to vector<2x1024xbf16>
    %cst_30 = arith.constant dense<0.000000e+00> : vector<2x1024xf32>
    %45 = tpu.matmul %44, %43, %cst_30 {dimension_numbers = #tpu.dot_dimension_numbers<[1], [0], [0], [1], [0, 0, 1, 1], [], []>} : vector<2x1024xbf16>, vector<1024x1024xbf16>, vector<2x1024xf32> -> vector<2x1024xf32>
    %c0_31 = arith.constant 0 : index
    %c0_32 = arith.constant 0 : index
    %46 = vector.load %arg10[%c0_31, %c0_32] : memref<1x1024xf32, #tpu.memory_space<vmem>>, vector<1x1024xf32>
    %47 = vector.broadcast %46 : vector<1x1024xf32> to vector<2x1024xf32>
    %48 = arith.mulf %45, %47 : vector<2x1024xf32>
    %c0_33 = arith.constant 0 : index
    %c0_34 = arith.constant 0 : index
    %49 = vector.load %arg11[%c0_33, %c0_34] : memref<1x1024xf32, #tpu.memory_space<vmem>>, vector<1x1024xf32>
    %50 = vector.broadcast %49 : vector<1x1024xf32> to vector<2x1024xf32>
    %51 = arith.addf %48, %50 : vector<2x1024xf32>
    %c0_35 = arith.constant 0 : index
    %c0_36 = arith.constant 0 : index
    %52 = vector.load %arg12[%c0_35, %c0_36] : memref<2x1024xf32, #tpu.memory_space<vmem>>, vector<2x1024xf32>
    tpu.vector_store %arg12[%c0_35, %c0_36], %51 {strides = array<i32>} : memref<2x1024xf32, #tpu.memory_space<vmem>>, vector<2x1024xf32>,
    return
  }
}

</mosaic_0001>

<llo_original>
// kernel: tmodel_forward.1
$region0: #{tmodel_forward.1}
  #allocation0 [shape = 'u32[]', space=smem, size = 0x4, offset = 0x4, fixed_abs, tag = 'smem constant byte address 0x4 - core index']
  #allocation1 [shape = 'u32[144,128]{1,0:T(1,128)}', space=vmem, size = 0x12000, scoped, tag = 'internal scratch']
  %s0 = inlined_call_operand.vmem [shape: f32[2,4,256], index: 0, kind: input, shape index: {}]
  %s1 = inlined_call_operand.hbm [shape: bf16[4,1280], index: 1, kind: input, shape index: {}]
  %s2 = inlined_call_operand.hbm [shape: f32[1,1280], index: 2, kind: input, shape index: {}]
  %s3 = inlined_call_operand.hbm [shape: s8[1280,1024], index: 3, kind: input, shape index: {}]
  %s4 = inlined_call_operand.hbm [shape: f32[1,1024], index: 4, kind: input, shape index: {}]
  %s5 = inlined_call_operand.hbm [shape: f32[1,1024], index: 5, kind: input, shape index: {}]
  %s6 = inlined_call_operand.hbm [shape: s8[1024,1024], index: 6, kind: input, shape index: {}]
  %s7 = inlined_call_operand.hbm [shape: f32[1,1024], index: 7, kind: input, shape index: {}]
  %s8 = inlined_call_operand.hbm [shape: f32[1,1024], index: 8, kind: input, shape index: {}]
  %s9 = inlined_call_operand.hbm [shape: s8[1024,1024], index: 9, kind: input, shape index: {}]
  %s10 = inlined_call_operand.hbm [shape: f32[1,1024], index: 10, kind: input, shape index: {}]
  %s11 = inlined_call_operand.hbm [shape: f32[1,1024], index: 11, kind: input, shape index: {}]
  %s12 = inlined_call_operand.hbm [shape: f32[2,1024], index: 12, kind: output, shape index: {}]
  %s13 = sld [smem:[#allocation0]]
  $region102: #{tmodel_forward.1} parent=0
    _
  %s15 = ssub.s32 1, %s13
  %s16 = scalar_select 0, %s15, %s13
  $region1: #{tmodel_forward.1} parent=0
    #allocation2 [shape = 'u8[10240]{0}', space=vmem, size = 0x2800, scoped, tag = 'input window, operand 1, single buffered']
    #allocation3 [shape = 's32[1]{0}', space=sflag, size = 0x4, scoped, tag = 'scoped memory for tmodel_forward.1']
    #allocation4 [shape = 's32[1]{0}', space=sflag, size = 0x4, scoped, tag = 'scoped memory for tmodel_forward.1']
    #allocation5 [shape = 'u8[5120]{0}', space=vmem, size = 0x1400, scoped, tag = 'input window, operand 2, single buffered']
    #allocation6 [shape = 's32[1]{0}', space=sflag, size = 0x4, scoped, tag = 'scoped memory for tmodel_forward.1']
    #allocation7 [shape = 'u8[1310720]{0}', space=vmem, size = 0x140000, scoped, tag = 'input window, operand 3, single buffered']
    #allocation8 [shape = 'u8[4096]{0}', space=vmem, size = 0x1000, scoped, tag = 'input window, operand 4, single buffered']
    #allocation9 [shape = 's32[1]{0}', space=sflag, size = 0x4, scoped, tag = 'scoped memory for tmodel_forward.1']
    #allocation10 [shape = 'u8[4096]{0}', space=vmem, size = 0x1000, scoped, tag = 'input window, operand 5, single buffered']
    #allocation11 [shape = 'u8[1048576]{0}', space=vmem, size = 0x100000, scoped, tag = 'input window, operand 6, single buffered']
    #allocation12 [shape = 's32[1]{0}', space=sflag, size = 0x4, scoped, tag = 'scoped memory for tmodel_forward.1']
    #allocation13 [shape = 'u8[4096]{0}', space=vmem, size = 0x1000, scoped, tag = 'input window, operand 7, single buffered']
    #allocation14 [shape = 'u8[4096]{0}', space=vmem, size = 0x1000, scoped, tag = 'input window, operand 8, single buffered']
    #allocation15 [shape = 's32[1]{0}', space=sflag, size = 0x4, scoped, tag = 'scoped memory for tmodel_forward.1']
    #allocation16 [shape = 'u8[1048576]{0}', space=vmem, size = 0x100000, scoped, tag = 'input window, operand 9, single buffered']
    #allocation17 [shape = 'u8[4096]{0}', space=vmem, size = 0x1000, scoped, tag = 'input window, operand 10, single buffered']
    #allocation18 [shape = 's32[1]{0}', space=sflag, size = 0x4, scoped, tag = 'scoped memory for tmodel_forward.1']
    #allocation19 [shape = 'u8[4096]{0}', space=vmem, size = 0x1000, scoped, tag = 'input window, operand 11, single buffered']
    #allocation20 [shape = 'u8[8192]{0}', space=vmem, size = 0x2000, scoped, tag = 'output window, operand 0, single buffered']
    %17 = vsyncpa [#allocation3], 0
    %18 = vsyncpa [#allocation6], 0
    %19 = vsyncpa [#allocation9], 0
    %20 = vsyncpa [#allocation12], 0
    %21 = vsyncpa [#allocation15], 0
    %22 = vsyncpa [#allocation18], 0
    %23 = vsyncpa [#allocation4], 0
    // Predicated region
    $region2: #{tmodel_forward.1} parent=1 // pred_check
      _
    $region3: #{tmodel_forward.1} parent=1 // pred_check_branch
      %25 = sbr.rel (0) target = $region5
    $region4: #{tmodel_forward.1} parent=1 // pred_region
      _
    $region5: #{tmodel_forward.1} parent=1 // pred_fallthru
      _
    // Predicated region
    $region6: #{tmodel_forward.1} parent=1 // pred_check
      _
    $region7: #{tmodel_forward.1} parent=1 // pred_check_branch
      %27 = sbr.rel (0) target = $region9
    $region8: #{tmodel_forward.1} parent=1 // pred_region
      %s29 = ssub.s32 320, 320
      %30 = vsyncadd [#allocation3], %s29
      %s32 = sshll.u32 [#allocation2], 4
      %s33 = int_to_ptr.vmem [resolvable:$true] %s32
      %35 = dma.hbm_to_vmem [thread:$0]  %s1, 320, %s33, [#allocation3]
    $region9: #{tmodel_forward.1} parent=1 // pred_fallthru
      _
    // Predicated region
    $region10: #{tmodel_forward.1} parent=1 // pred_check
      _
    $region11: #{tmodel_forward.1} parent=1 // pred_check_branch
      %37 = sbr.rel (0) target = $region13
    $region12: #{tmodel_forward.1} parent=1 // pred_region
      %s39 = ssub.s32 160, 160
      %40 = vsyncadd [#allocation6], %s39
      %s42 = sshll.u32 [#allocation5], 4
      %s43 = int_to_ptr.vmem [resolvable:$true] %s42
      %45 = dma.hbm_to_vmem [thread:$0]  %s2, 160, %s43, [#allocation6]
    $region13: #{tmodel_forward.1} parent=1 // pred_fallthru
      _
    // Predicated region
    $region14: #{tmodel_forward.1} parent=1 // pred_check
      _
    $region15: #{tmodel_forward.1} parent=1 // pred_check_branch
      %47 = sbr.rel (0) target = $region17
    $region16: #{tmodel_forward.1} parent=1 // pred_region
      %s49 = ssub.s32 40960, 40960
      %50 = vsyncadd [#allocation6], %s49
      %s51 = sshll.u32 [#allocation7], 4
      %s52 = int_to_ptr.vmem [resolvable:$true] %s51
      %57 = dma.hbm_to_vmem [thread:$0]  %s3, 40960, %s52, [#allocation6], 1024, 1024, 64
    $region17: #{tmodel_forward.1} parent=1 // pred_fallthru
      _
    // Predicated region
    $region18: #{tmodel_forward.1} parent=1 // pred_check
      _
    $region19: #{tmodel_forward.1} parent=1 // pred_check_branch
      %59 = sbr.rel (0) target = $region21
    $region20: #{tmodel_forward.1} parent=1 // pred_region
      %s61 = ssub.s32 128, 128
      %62 = vsyncadd [#allocation9], %s61
      %s64 = sshll.u32 [#allocation8], 4
      %s65 = int_to_ptr.vmem [resolvable:$true] %s64
      %67 = dma.hbm_to_vmem [thread:$0]  %s4, 128, %s65, [#allocation9]
    $region21: #{tmodel_forward.1} parent=1 // pred_fallthru
      _
    // Predicated region
    $region22: #{tmodel_forward.1} parent=1 // pred_check
      _
    $region23: #{tmodel_forward.1} parent=1 // pred_check_branch
      %69 = sbr.rel (0) target = $region25
    $region24: #{tmodel_forward.1} parent=1 // pred_region
      %s71 = ssub.s32 128, 128
      %72 = vsyncadd [#allocation9], %s71
      %s74 = sshll.u32 [#allocation10], 4
      %s75 = int_to_ptr.vmem [resolvable:$true] %s74
      %77 = dma.hbm_to_vmem [thread:$0]  %s5, 128, %s75, [#allocation9]
    $region25: #{tmodel_forward.1} parent=1 // pred_fallthru
      _
    // Predicated region
    $region26: #{tmodel_forward.1} parent=1 // pred_check
      _
    $region27: #{tmodel_forward.1} parent=1 // pred_check_branch
      %79 = sbr.rel (0) target = $region29
    $region28: #{tmodel_forward.1} parent=1 // pred_region
      %s81 = ssub.s32 32768, 32768
      %82 = vsyncadd [#allocation12], %s81
      %s83 = sshll.u32 [#allocation11], 4
      %s84 = int_to_ptr.vmem [resolvable:$true] %s83
      %89 = dma.hbm_to_vmem [thread:$0]  %s6, 32768, %s84, [#allocation12], 1024, 1024, 64
    $region29: #{tmodel_forward.1} parent=1 // pred_fallthru
      _
    // Predicated region
    $region30: #{tmodel_forward.1} parent=1 // pred_check
      _
    $region31: #{tmodel_forward.1} parent=1 // pred_check_branch
      %91 = sbr.rel (0) target = $region33
    $region32: #{tmodel_forward.1} parent=1 // pred_region
      %s93 = ssub.s32 128, 128
      %94 = vsyncadd [#allocation12], %s93
      %s96 = sshll.u32 [#allocation13], 4
      %s97 = int_to_ptr.vmem [resolvable:$true] %s96
      %99 = dma.hbm_to_vmem [thread:$0]  %s7, 128, %s97, [#allocation12]
    $region33: #{tmodel_forward.1} parent=1 // pred_fallthru
      _
    // Predicated region
    $region34: #{tmodel_forward.1} parent=1 // pred_check
      _
    $region35: #{tmodel_forward.1} parent=1 // pred_check_branch
      %101 = sbr.rel (0) target = $region37
    $region36: #{tmodel_forward.1} parent=1 // pred_region
      %s103 = ssub.s32 128, 128
      %104 = vsyncadd [#allocation15], %s103
      %s106 = sshll.u32 [#allocation14], 4
      %s107 = int_to_ptr.vmem [resolvable:$true] %s106
      %109 = dma.hbm_to_vmem [thread:$0]  %s8, 128, %s107, [#allocation15]
    $region37: #{tmodel_forward.1} parent=1 // pred_fallthru
      _
    // Predicated region
    $region38: #{tmodel_forward.1} parent=1 // pred_check
      _
    $region39: #{tmodel_forward.1} parent=1 // pred_check_branch
      %111 = sbr.rel (0) target = $region41
    $region40: #{tmodel_forward.1} parent=1 // pred_region
      %s113 = ssub.s32 32768, 32768
      %114 = vsyncadd [#allocation15], %s113
      %s115 = sshll.u32 [#allocation16], 4
      %s116 = int_to_ptr.vmem [resolvable:$true] %s115
      %121 = dma.hbm_to_vmem [thread:$0]  %s9, 32768, %s116, [#allocation15], 1024, 1024, 64
    $region41: #{tmodel_forward.1} parent=1 // pred_fallthru
      _
    // Predicated region
    $region42: #{tmodel_forward.1} parent=1 // pred_check
      _
    $region43: #{tmodel_forward.1} parent=1 // pred_check_branch
      %123 = sbr.rel (0) target = $region45
    $region44: #{tmodel_forward.1} parent=1 // pred_region
      %s125 = ssub.s32 128, 128
      %126 = vsyncadd [#allocation18], %s125
      %s128 = sshll.u32 [#allocation17], 4
      %s129 = int_to_ptr.vmem [resolvable:$true] %s128
      %131 = dma.hbm_to_vmem [thread:$0]  %s10, 128, %s129, [#allocation18]
    $region45: #{tmodel_forward.1} parent=1 // pred_fallthru
      _
    // Predicated region
    $region46: #{tmodel_forward.1} parent=1 // pred_check
      _
    $region47: #{tmodel_forward.1} parent=1 // pred_check_branch
      %133 = sbr.rel (0) target = $region49
    $region48: #{tmodel_forward.1} parent=1 // pred_region
      %s135 = ssub.s32 128, 128
      %136 = vsyncadd [#allocation18], %s135
      %s138 = sshll.u32 [#allocation19], 4
      %s139 = int_to_ptr.vmem [resolvable:$true] %s138
      %141 = dma.hbm_to_vmem [thread:$0]  %s11, 128, %s139, [#allocation18]
    $region49: #{tmodel_forward.1} parent=1 // pred_fallthru
      _
    // Predicated region
    $region50: #{tmodel_forward.1} parent=1 // pred_check
      _
    $region51: #{tmodel_forward.1} parent=1 // pred_check_branch
      %143 = sbr.rel (0) target = $region53
    $region52: #{tmodel_forward.1} parent=1 // pred_region
      %144 = dma.done [#allocation3], 320
    $region53: #{tmodel_forward.1} parent=1 // pred_fallthru
      _
    // Predicated region
    $region54: #{tmodel_forward.1} parent=1 // pred_check
      _
    $region55: #{tmodel_forward.1} parent=1 // pred_check_branch
      %146 = sbr.rel (0) target = $region57
    $region56: #{tmodel_forward.1} parent=1 // pred_region
      %147 = dma.done [#allocation6], 160
    $region57: #{tmodel_forward.1} parent=1 // pred_fallthru
      _
    // Predicated region
    $region58: #{tmodel_forward.1} parent=1 // pred_check
      _
    $region59: #{tmodel_forward.1} parent=1 // pred_check_branch
      %149 = sbr.rel (0) target = $region61
    $region60: #{tmodel_forward.1} parent=1 // pred_region
      %150 = dma.done [#allocation6], 40960
    $region61: #{tmodel_forward.1} parent=1 // pred_fallthru
      _
    // Predicated region
    $region62: #{tmodel_forward.1} parent=1 // pred_check
      _
    $region63: #{tmodel_forward.1} parent=1 // pred_check_branch
      %152 = sbr.rel (0) target = $region65
    $region64: #{tmodel_forward.1} parent=1 // pred_region
      %153 = dma.done [#allocation9], 128
    $region65: #{tmodel_forward.1} parent=1 // pred_fallthru
      _
    // Predicated region
    $region66: #{tmodel_forward.1} parent=1 // pred_check
      _
    $region67: #{tmodel_forward.1} parent=1 // pred_check_branch
      %155 = sbr.rel (0) target = $region69
    $region68: #{tmodel_forward.1} parent=1 // pred_region
      %156 = dma.done [#allocation9], 128
    $region69: #{tmodel_forward.1} parent=1 // pred_fallthru
      _
    // Predicated region
    $region70: #{tmodel_forward.1} parent=1 // pred_check
      _
    $region71: #{tmodel_forward.1} parent=1 // pred_check_branch
      %158 = sbr.rel (0) target = $region73
    $region72: #{tmodel_forward.1} parent=1 // pred_region
      %159 = dma.done [#allocation12], 32768
    $region73: #{tmodel_forward.1} parent=1 // pred_fallthru
      _
    // Predicated region
    $region74: #{tmodel_forward.1} parent=1 // pred_check
      _
    $region75: #{tmodel_forward.1} parent=1 // pred_check_branch
      %161 = sbr.rel (0) target = $region77
    $region76: #{tmodel_forward.1} parent=1 // pred_region
      %162 = dma.done [#allocation12], 128
    $region77: #{tmodel_forward.1} parent=1 // pred_fallthru
      _
    // Predicated region
    $region78: #{tmodel_forward.1} parent=1 // pred_check
      _
    $region79: #{tmodel_forward.1} parent=1 // pred_check_branch
      %164 = sbr.rel (0) target = $region81
    $region80: #{tmodel_forward.1} parent=1 // pred_region
      %165 = dma.done [#allocation15], 128
    $region81: #{tmodel_forward.1} parent=1 // pred_fallthru
      _
    // Predicated region
    $region82: #{tmodel_forward.1} parent=1 // pred_check
      _
    $region83: #{tmodel_forward.1} parent=1 // pred_check_branch
      %167 = sbr.rel (0) target = $region85
    $region84: #{tmodel_forward.1} parent=1 // pred_region
      %168 = dma.done [#allocation15], 32768
    $region85: #{tmodel_forward.1} parent=1 // pred_fallthru
      _
    // Predicated region
    $region86: #{tmodel_forward.1} parent=1 // pred_check
      _
    $region87: #{tmodel_forward.1} parent=1 // pred_check_branch
      %170 = sbr.rel (0) target = $region89
    $region88: #{tmodel_forward.1} parent=1 // pred_region
      %171 = dma.done [#allocation18], 128
    $region89: #{tmodel_forward.1} parent=1 // pred_fallthru
      _
    // Predicated region
    $region90: #{tmodel_forward.1} parent=1 // pred_check
      _
    $region91: #{tmodel_forward.1} parent=1 // pred_check_branch
      %173 = sbr.rel (0) target = $region93
    $region92: #{tmodel_forward.1} parent=1 // pred_region
      %174 = dma.done [#allocation18], 128
    $region93: #{tmodel_forward.1} parent=1 // pred_fallthru
      _
    %v176 = vld [vmem:[%s0] sm:$0xff]
    %v177 = vld [vmem:[%s0 + $0x8] sm:$0xff]
    %v180 = vcombine.high %v176, %v176
    %v181 = vcombine.high %v177, %v177
    %vm184 = vcmask 1043456
    %v185 = vsel %vm184, %v176, 0.0
    %v186 = vsel %vm184, %v180, 0.0
    %v187 = vadd.f32 %v185, %v186
    %188 = vadd.xlane.f32.xlu0 %v187
    %v189 = vpop.xlane.xlu0 %188
    %v190 = vsel %vm184, %v177, 0.0
    %v191 = vsel %vm184, %v181, 0.0
    %v192 = vadd.f32 %v190, %v191
    %193 = vadd.xlane.f32.xlu0 %v192
    %v194 = vpop.xlane.xlu0 %193
    %v195 = vrcp.pop 256.0
    %v196 = vmul.f32 %v189, %v195
    %v197 = vmul.f32 %v194, %v195
    %v198 = vpack.c.bf16 %v196, %v196
    %v199 = vpack.c.bf16 %v197, %v197
    %v200 = vld [vmem:[#allocation2] sm:$0xff]
    %v201 = vld [vmem:[#allocation2 + $0x8] sm:$0xff]
    %v202 = vld [vmem:[#allocation2 + $0x10] sm:$0xf]
    %v203 = vld [vmem:[#allocation5] sm:$0xff]
    %v204 = vld [vmem:[#allocation5 + $0x8] sm:$0x3]
    %v207 = vlaneseq
    %v208 = vshrl.u32 %v207, 7
    %v209 = vsub.s32 0, %v208
    %v210 = vrot.slane %v203, %v209
    %v211 = vlaneseq
    %v212 = vshrl.u32 %v211, 7
    %v213 = vsub.s32 1, %v212
    %v214 = vrot.slane %v203, %v213
    %v215 = vlaneseq
    %v216 = vshrl.u32 %v215, 7
    %v217 = vsub.s32 2, %v216
    %v218 = vrot.slane %v203, %v217
    %v219 = vlaneseq
    %v220 = vshrl.u32 %v219, 7
    %v221 = vsub.s32 3, %v220
    %v222 = vrot.slane %v203, %v221
    %v223 = vlaneseq
    %v224 = vshrl.u32 %v223, 7
    %v225 = vsub.s32 4, %v224
    %v226 = vrot.slane %v203, %v225
    %v227 = vlaneseq
    %v228 = vshrl.u32 %v227, 7
    %v229 = vsub.s32 5, %v228
    %v230 = vrot.slane %v203, %v229
    %v231 = vlaneseq
    %v232 = vshrl.u32 %v231, 7
    %v233 = vsub.s32 6, %v232
    %v234 = vrot.slane %v203, %v233
    %v235 = vlaneseq
    %v236 = vshrl.u32 %v235, 7
    %v237 = vsub.s32 7, %v236
    %v238 = vrot.slane %v203, %v237
    %v239 = vlaneseq
    %v240 = vshrl.u32 %v239, 7
    %v241 = vsub.s32 0, %v240
    %v242 = vrot.slane %v204, %v241
    %v243 = vlaneseq
    %v244 = vshrl.u32 %v243, 7
    %v245 = vsub.s32 1, %v244
    %v246 = vrot.slane %v204, %v245
    %v259 = vunpack.c.l.b16 %v198
    %v260 = vunpack.c.l.b16 %v199
    %v261 = vlaneseq
    %v262 = vand.u32 %v261, 127
    %v263 = vlaneseq
    %v264 = vshrl.u32 %v263, 7
    %v265 = vsub.s32 %v262, %v264
    %v266 = vrot.slane %v259, %v265
    %v267 = vlaneseq
    %v268 = vshrl.u32 %v267, 7
    %v269 = vsub.s32 %v262, %v268
    %v270 = vrot.slane %v260, %v269
    %vm271 = vcmask 1041409
    %v272 = vsel %vm271, %v270, %v266
    %v273 = vpack.c.b16 %v272, %v272
    %v277 = vcombine.high %v200, %v200
    %v279 = vunpack.c.l.s4 1983009808
    %v280 = vunpack.c.0.s8 %v279
    %v281 = vlaneseq
    %v282 = vshrl.u32 %v281, 7
    %v283 = vsub.s32 %v280, %v282
    %v284 = vrot.slane %v200, %v283
    %v286 = vunpack.c.l.s4 1983009808
    %v287 = vunpack.c.0.s8 %v286
    %v288 = vlaneseq
    %v289 = vshrl.u32 %v288, 7
    %v290 = vsub.s32 %v287, %v289
    %v291 = vrot.slane %v277, %v290
    %v292 = vcombine.high %v284, %v284
    %v293 = vcombine.high %v291, %v291
    %v294 = vcombine.high %v201, %v201
    %v296 = vunpack.c.l.s4 1983009808
    %v297 = vunpack.c.0.s8 %v296
    %v298 = vlaneseq
    %v299 = vshrl.u32 %v298, 7
    %v300 = vsub.s32 %v297, %v299
    %v301 = vrot.slane %v201, %v300
    %v303 = vunpack.c.l.s4 1983009808
    %v304 = vunpack.c.0.s8 %v303
    %v305 = vlaneseq
    %v306 = vshrl.u32 %v305, 7
    %v307 = vsub.s32 %v304, %v306
    %v308 = vrot.slane %v294, %v307
    %v309 = vcombine.high %v301, %v301
    %v310 = vcombine.high %v308, %v308
    %v312 = vunpack.c.l.s4 1983009808
    %v313 = vunpack.c.0.s8 %v312
    %v314 = vlaneseq
    %v315 = vshrl.u32 %v314, 7
    %v316 = vsub.s32 %v313, %v315
    %v317 = vrot.slane %v202, %v316
    %v318 = vcombine.high %v317, %v317
    %vm319 = vcmask 31744
    %v321 = vsel %vm319, %v273, 0
    %vm323 = vcmask 1041408
    %v325 = vsel %vm323, %v284, 0
    %v328 = vsel %vm323, %v292, 0
    %v331 = vsel %vm323, %v291, 0
    %v334 = vsel %vm323, %v293, 0
    %v337 = vsel %vm323, %v301, 0
    %v340 = vsel %vm323, %v309, 0
    %v343 = vsel %vm323, %v308, 0
    %v346 = vsel %vm323, %v310, 0
    %v349 = vsel %vm323, %v317, 0
    %v352 = vsel %vm323, %v318, 0
    %354 = vmatprep.subr.bf16.mxu0 %v328
    %355 = vmatpush1.bf16.msra.mxu0 %v325
    %356 = vmatprep.subr.bf16.mxu0 0
    %357 = vmatpush1.bf16.msra.mxu0 0
    %358 = vmatprep.subr.bf16.mxu0 0
    %359 = vmatpush1.bf16.msra.mxu0 0
    %360 = vmatprep.subr.bf16.mxu0 0
    %361 = vmatpush1.bf16.msra.mxu0 0
    %362 = vmatprep.subr.bf16.mxu0 0
    %363 = vmatpush1.bf16.msra.mxu0 0
    %364 = vmatprep.subr.bf16.mxu0 0
    %365 = vmatpush1.bf16.msra.mxu0 0
    %366 = vmatprep.subr.bf16.mxu0 0
    %367 = vmatpush1.bf16.msra.mxu0 0
    %368 = vmatprep.subr.bf16.mxu0 0
    %369 = vmatpush1.bf16.msra.mxu0 0
    %370 = vmatprep.subr.bf16.mxu0 0
    %371 = vmatpush1.bf16.msra.mxu0 0
    %372 = vmatprep.subr.bf16.mxu0 0
    %373 = vmatpush1.bf16.msra.mxu0 0
    %374 = vmatprep.subr.bf16.mxu0 0
    %375 = vmatpush1.bf16.msra.mxu0 0
    %376 = vmatprep.subr.bf16.mxu0 0
    %377 = vmatpush1.bf16.msra.mxu0 0
    %378 = vmatprep.subr.bf16.mxu0 0
    %379 = vmatpush1.bf16.msra.mxu0 0
    %380 = vmatprep.subr.bf16.mxu0 0
    %381 = vmatpush1.bf16.msra.mxu0 0
    %382 = vmatprep.subr.bf16.mxu0 0
    %383 = vmatpush1.bf16.msra.mxu0 0
    %384 = vmatprep.subr.bf16.mxu0 0
    %385 = vmatpush1.bf16.msra.mxu0 0
    %386 = vmatprep.mubr.bf16.mxu0 0
    %387 = vmatmul.mubr.bf16.gmra.mrb[0].mxu0 %v321
    %v388 = vpop.f32.mrb[0].mxu0
    %v389 = vadd.f32 %v210, %v388
    %v390 = vpop.f32.mrb[0].mxu0
    %v391 = vadd.f32 %v214, %v390
    %v392 = vpop.f32.mrb[0].mxu0
    %v393 = vpop.f32.mrb[0].mxu0
    %394 = vdwg.mxu0
    %395 = vmatprep.subr.bf16.mxu0 %v334
    %396 = vmatpush1.bf16.msra.mxu0 %v331
    %397 = vmatprep.subr.bf16.mxu0 0
    %398 = vmatpush1.bf16.msra.mxu0 0
    %399 = vmatprep.subr.bf16.mxu0 0
    %400 = vmatpush1.bf16.msra.mxu0 0
    %401 = vmatprep.subr.bf16.mxu0 0
    %402 = vmatpush1.bf16.msra.mxu0 0
    %403 = vmatprep.subr.bf16.mxu0 0
    %404 = vmatpush1.bf16.msra.mxu0 0
    %405 = vmatprep.subr.bf16.mxu0 0
    %406 = vmatpush1.bf16.msra.mxu0 0
    %407 = vmatprep.subr.bf16.mxu0 0
    %408 = vmatpush1.bf16.msra.mxu0 0
    %409 = vmatprep.subr.bf16.mxu0 0
    %410 = vmatpush1.bf16.msra.mxu0 0
    %411 = vmatprep.subr.bf16.mxu0 0
    %412 = vmatpush1.bf16.msra.mxu0 0
    %413 = vmatprep.subr.bf16.mxu0 0
    %414 = vmatpush1.bf16.msra.mxu0 0
    %415 = vmatprep.subr.bf16.mxu0 0
    %416 = vmatpush1.bf16.msra.mxu0 0
    %417 = vmatprep.subr.bf16.mxu0 0
    %418 = vmatpush1.bf16.msra.mxu0 0
    %419 = vmatprep.subr.bf16.mxu0 0
    %420 = vmatpush1.bf16.msra.mxu0 0
    %421 = vmatprep.subr.bf16.mxu0 0
    %422 = vmatpush1.bf16.msra.mxu0 0
    %423 = vmatprep.subr.bf16.mxu0 0
    %424 = vmatpush1.bf16.msra.mxu0 0
    %425 = vmatprep.subr.bf16.mxu0 0
    %426 = vmatpush1.bf16.msra.mxu0 0
    %427 = vmatprep.mubr.bf16.mxu0 0
    %428 = vmatmul.mubr.bf16.gmra.mrb[0].mxu0 %v321
    %v429 = vpop.f32.mrb[0].mxu0
    %v430 = vadd.f32 %v218, %v429
    %v431 = vpop.f32.mrb[0].mxu0
    %v432 = vadd.f32 %v222, %v431
    %v433 = vpop.f32.mrb[0].mxu0
    %v434 = vpop.f32.mrb[0].mxu0
    %435 = vdwg.mxu0
    %436 = vmatprep.subr.bf16.mxu0 %v340
    %437 = vmatpush1.bf16.msra.mxu0 %v337
    %438 = vmatprep.subr.bf16.mxu0 0
    %439 = vmatpush1.bf16.msra.mxu0 0
    %440 = vmatprep.subr.bf16.mxu0 0
    %441 = vmatpush1.bf16.msra.mxu0 0
    %442 = vmatprep.subr.bf16.mxu0 0
    %443 = vmatpush1.bf16.msra.mxu0 0
    %444 = vmatprep.subr.bf16.mxu0 0
    %445 = vmatpush1.bf16.msra.mxu0 0
    %446 = vmatprep.subr.bf16.mxu0 0
    %447 = vmatpush1.bf16.msra.mxu0 0
    %448 = vmatprep.subr.bf16.mxu0 0
    %449 = vmatpush1.bf16.msra.mxu0 0
    %450 = vmatprep.subr.bf16.mxu0 0
    %451 = vmatpush1.bf16.msra.mxu0 0
    %452 = vmatprep.subr.bf16.mxu0 0
    %453 = vmatpush1.bf16.msra.mxu0 0
    %454 = vmatprep.subr.bf16.mxu0 0
    %455 = vmatpush1.bf16.msra.mxu0 0
    %456 = vmatprep.subr.bf16.mxu0 0
    %457 = vmatpush1.bf16.msra.mxu0 0
    %458 = vmatprep.subr.bf16.mxu0 0
    %459 = vmatpush1.bf16.msra.mxu0 0
    %460 = vmatprep.subr.bf16.mxu0 0
    %461 = vmatpush1.bf16.msra.mxu0 0
    %462 = vmatprep.subr.bf16.mxu0 0
    %463 = vmatpush1.bf16.msra.mxu0 0
    %464 = vmatprep.subr.bf16.mxu0 0
    %465 = vmatpush1.bf16.msra.mxu0 0
    %466 = vmatprep.subr.bf16.mxu0 0
    %467 = vmatpush1.bf16.msra.mxu0 0
    %468 = vmatprep.mubr.bf16.mxu0 0
    %469 = vmatmul.mubr.bf16.gmra.mrb[0].mxu0 %v321
    %v470 = vpop.f32.mrb[0].mxu0
    %v471 = vadd.f32 %v226, %v470
    %v472 = vpop.f32.mrb[0].mxu0
    %v473 = vadd.f32 %v230, %v472
    %v474 = vpop.f32.mrb[0].mxu0
    %v475 = vpop.f32.mrb[0].mxu0
    %476 = vdwg.mxu0
    %477 = vmatprep.subr.bf16.mxu0 %v346
    %478 = vmatpush1.bf16.msra.mxu0 %v343
    %479 = vmatprep.subr.bf16.mxu0 0
    %480 = vmatpush1.bf16.msra.mxu0 0
    %481 = vmatprep.subr.bf16.mxu0 0
    %482 = vmatpush1.bf16.msra.mxu0 0
    %483 = vmatprep.subr.bf16.mxu0 0
    %484 = vmatpush1.bf16.msra.mxu0 0
    %485 = vmatprep.subr.bf16.mxu0 0
    %486 = vmatpush1.bf16.msra.mxu0 0
    %487 = vmatprep.subr.bf16.mxu0 0
    %488 = vmatpush1.bf16.msra.mxu0 0
    %489 = vmatprep.subr.bf16.mxu0 0
    %490 = vmatpush1.bf16.msra.mxu0 0
    %491 = vmatprep.subr.bf16.mxu0 0
    %492 = vmatpush1.bf16.msra.mxu0 0
    %493 = vmatprep.subr.bf16.mxu0 0
    %494 = vmatpush1.bf16.msra.mxu0 0
    %495 = vmatprep.subr.bf16.mxu0 0
    %496 = vmatpush1.bf16.msra.mxu0 0
    %497 = vmatprep.subr.bf16.mxu0 0
    %498 = vmatpush1.bf16.msra.mxu0 0
    %499 = vmatprep.subr.bf16.mxu0 0
    %500 = vmatpush1.bf16.msra.mxu0 0
    %501 = vmatprep.subr.bf16.mxu0 0
    %502 = vmatpush1.bf16.msra.mxu0 0
    %503 = vmatprep.subr.bf16.mxu0 0
    %504 = vmatpush1.bf16.msra.mxu0 0
    %505 = vmatprep.subr.bf16.mxu0 0
    %506 = vmatpush1.bf16.msra.mxu0 0
    %507 = vmatprep.subr.bf16.mxu0 0
    %508 = vmatpush1.bf16.msra.mxu0 0
    %509 = vmatprep.mubr.bf16.mxu0 0
    %510 = vmatmul.mubr.bf16.gmra.mrb[0].mxu0 %v321
    %v511 = vpop.f32.mrb[0].mxu0
    %v512 = vadd.f32 %v234, %v511
    %v513 = vpop.f32.mrb[0].mxu0
    %v514 = vadd.f32 %v238, %v513
    %v515 = vpop.f32.mrb[0].mxu0
    %v516 = vpop.f32.mrb[0].mxu0
    %517 = vdwg.mxu0
    %518 = vmatprep.subr.bf16.mxu0 %v352
    %519 = vmatpush1.bf16.msra.mxu0 %v349
    %520 = vmatprep.subr.bf16.mxu0 0
    %521 = vmatpush1.bf16.msra.mxu0 0
    %522 = vmatprep.subr.bf16.mxu0 0
    %523 = vmatpush1.bf16.msra.mxu0 0
    %524 = vmatprep.subr.bf16.mxu0 0
    %525 = vmatpush1.bf16.msra.mxu0 0
    %526 = vmatprep.subr.bf16.mxu0 0
    %527 = vmatpush1.bf16.msra.mxu0 0
    %528 = vmatprep.subr.bf16.mxu0 0
    %529 = vmatpush1.bf16.msra.mxu0 0
    %530 = vmatprep.subr.bf16.mxu0 0
    %531 = vmatpush1.bf16.msra.mxu0 0
    %532 = vmatprep.subr.bf16.mxu0 0
    %533 = vmatpush1.bf16.msra.mxu0 0
    %534 = vmatprep.subr.bf16.mxu0 0
    %535 = vmatpush1.bf16.msra.mxu0 0
    %536 = vmatprep.subr.bf16.mxu0 0
    %537 = vmatpush1.bf16.msra.mxu0 0
    %538 = vmatprep.subr.bf16.mxu0 0
    %539 = vmatpush1.bf16.msra.mxu0 0
    %540 = vmatprep.subr.bf16.mxu0 0
    %541 = vmatpush1.bf16.msra.mxu0 0
    %542 = vmatprep.subr.bf16.mxu0 0
    %543 = vmatpush1.bf16.msra.mxu0 0
    %544 = vmatprep.subr.bf16.mxu0 0
    %545 = vmatpush1.bf16.msra.mxu0 0
    %546 = vmatprep.subr.bf16.mxu0 0
    %547 = vmatpush1.bf16.msra.mxu0 0
    %548 = vmatprep.subr.bf16.mxu0 0
    %549 = vmatpush1.bf16.msra.mxu0 0
    %550 = vmatprep.mubr.bf16.mxu0 0
    %551 = vmatmul.mubr.bf16.gmra.mrb[0].mxu0 %v321
    %v552 = vpop.f32.mrb[0].mxu0
    %v553 = vadd.f32 %v242, %v552
    %v554 = vpop.f32.mrb[0].mxu0
    %v555 = vadd.f32 %v246, %v554
    %v556 = vpop.f32.mrb[0].mxu0
    %v557 = vpop.f32.mrb[0].mxu0
    %558 = vdwg.mxu0
    %v559 = vmax.f32 %v389, 0.0
    %v560 = vmax.f32 %v391, 0.0
    %v561 = vmax.f32 %v430, 0.0
    %v562 = vmax.f32 %v432, 0.0
    %v563 = vmax.f32 %v471, 0.0
    %v564 = vmax.f32 %v473, 0.0
    %v565 = vmax.f32 %v512, 0.0
    %v566 = vmax.f32 %v514, 0.0
    %v567 = vmax.f32 %v553, 0.0
    %v568 = vmax.f32 %v555, 0.0
    %v569 = vmin.f32 %v559, 6.0
    %v570 = vmin.f32 %v560, 6.0
    %v571 = vmin.f32 %v561, 6.0
    %v572 = vmin.f32 %v562, 6.0
    %v573 = vmin.f32 %v563, 6.0
    %v574 = vmin.f32 %v564, 6.0
    %v575 = vmin.f32 %v565, 6.0
    %v576 = vmin.f32 %v566, 6.0
    %v577 = vmin.f32 %v567, 6.0
    %v578 = vmin.f32 %v568, 6.0
    %v579 = vld [vmem:[#allocation7] sm:$0xff]
    %v580 = vld [vmem:[#allocation7 + $0x8] sm:$0xff]
    %v581 = vld [vmem:[#allocation7 + $0x10] sm:$0xff]
    %v582 = vld [vmem:[#allocation7 + $0x18] sm:$0xff]
    %v583 = vld [vmem:[#allocation7 + $0x20] sm:$0xff]
    %v584 = vld [vmem:[#allocation7 + $0x28] sm:$0xff]
    %v585 = vld [vmem:[#allocation7 + $0x30] sm:$0xff]
    %v586 = vld [vmem:[#allocation7 + $0x38] sm:$0xff]
    %v587 = vld [vmem:[#allocation7 + $0x40] sm:$0xff]
    %v588 = vld [vmem:[#allocation7 + $0x48] sm:$0xff]
    %v589 = vld [vmem:[#allocation7 + $0x50] sm:$0xff]
    %v590 = vld [vmem:[#allocation7 + $0x58] sm:$0xff]
    %v591 = vld [vmem:[#allocation7 + $0x60] sm:$0xff]
    %v592 = vld [vmem:[#allocation7 + $0x68] sm:$0xff]
    %v593 = vld [vmem:[#allocation7 + $0x70] sm:$0xff]
    %v594 = vld [vmem:[#allocation7 + $0x78] sm:$0xff]
    %v595 = vld [vmem:[#allocation7 + $0x80] sm:$0xff]
    %v596 = vld [vmem:[#allocation7 + $0x88] sm:$0xff]
    %v597 = vld [vmem:[#allocation7 + $0x90] sm:$0xff]
    %v598 = vld [vmem:[#allocation7 + $0x98] sm:$0xff]
    %v599 = vld [vmem:[#allocation7 + $0xa0] sm:$0xff]
    %v600 = vld [vmem:[#allocation7 + $0xa8] sm:$0xff]
    %v601 = vld [vmem:[#allocation7 + $0xb0] sm:$0xff]
    %v602 = vld [vmem:[#allocation7 + $0xb8] sm:$0xff]
    %v603 = vld [vmem:[#allocation7 + $0xc0] sm:$0xff]
    %v604 = vld [vmem:[#allocation7 + $0xc8] sm:$0xff]
    %v605 = vld [vmem:[#allocation7 + $0xd0] sm:$0xff]
    %v606 = vld [vmem:[#allocation7 + $0xd8] sm:$0xff]
    %v607 = vld [vmem:[#allocation7 + $0xe0] sm:$0xff]
    %v608 = vld [vmem:[#allocation7 + $0xe8] sm:$0xff]
    %v609 = vld [vmem:[#allocation7 + $0xf0] sm:$0xff]
    %v610 = vld [vmem:[#allocation7 + $0xf8] sm:$0xff]
    %v611 = vld [vmem:[#allocation7 + $0x100] sm:$0xff]
    %v612 = vld [vmem:[#allocation7 + $0x108] sm:$0xff]
    %v613 = vld [vmem:[#allocation7 + $0x110] sm:$0xff]
    %v614 = vld [vmem:[#allocation7 + $0x118] sm:$0xff]
    %v615 = vld [vmem:[#allocation7 + $0x120] sm:$0xff]
    %v616 = vld [vmem:[#allocation7 + $0x128] sm:$0xff]
    %v617 = vld [vmem:[#allocation7 + $0x130] sm:$0xff]
    %v618 = vld [vmem:[#allocation7 + $0x138] sm:$0xff]
    %v619 = vld [vmem:[#allocation7 + $0x140] sm:$0xff]
    %v620 = vld [vmem:[#allocation7 + $0x148] sm:$0xff]
    %v621 = vld [vmem:[#allocation7 + $0x150] sm:$0xff]
    %v622 = vld [vmem:[#allocation7 + $0x158] sm:$0xff]
    %v623 = vld [vmem:[#allocation7 + $0x160] sm:$0xff]
    %v624 = vld [vmem:[#allocation7 + $0x168] sm:$0xff]
    %v625 = vld [vmem:[#allocation7 + $0x170] sm:$0xff]
    %v626 = vld [vmem:[#allocation7 + $0x178] sm:$0xff]
    %v627 = vld [vmem:[#allocation7 + $0x180] sm:$0xff]
    %v628 = vld [vmem:[#allocation7 + $0x188] sm:$0xff]
    %v629 = vld [vmem:[#allocation7 + $0x190] sm:$0xff]
    %v630 = vld [vmem:[#allocation7 + $0x198] sm:$0xff]
    %v631 = vld [vmem:[#allocation7 + $0x1a0] sm:$0xff]
    %v632 = vld [vmem:[#allocation7 + $0x1a8] sm:$0xff]
    %v633 = vld [vmem:[#allocation7 + $0x1b0] sm:$0xff]
    %v634 = vld [vmem:[#allocation7 + $0x1b8] sm:$0xff]
    %v635 = vld [vmem:[#allocation7 + $0x1c0] sm:$0xff]
    %v636 = vld [vmem:[#allocation7 + $0x1c8] sm:$0xff]
    %v637 = vld [vmem:[#allocation7 + $0x1d0] sm:$0xff]
    %v638 = vld [vmem:[#allocation7 + $0x1d8] sm:$0xff]
    %v639 = vld [vmem:[#allocation7 + $0x1e0] sm:$0xff]
    %v640 = vld [vmem:[#allocation7 + $0x1e8] sm:$0xff]
    %v641 = vld [vmem:[#allocation7 + $0x1f0] sm:$0xff]
    %v642 = vld [vmem:[#allocation7 + $0x1f8] sm:$0xff]
    %v643 = vld [vmem:[#allocation7 + $0x200] sm:$0xff]
    %v644 = vld [vmem:[#allocation7 + $0x208] sm:$0xff]
    %v645 = vld [vmem:[#allocation7 + $0x210] sm:$0xff]
    %v646 = vld [vmem:[#allocation7 + $0x218] sm:$0xff]
    %v647 = vld [vmem:[#allocation7 + $0x220] sm:$0xff]
    %v648 = vld [vmem:[#allocation7 + $0x228] sm:$0xff]
    %v649 = vld [vmem:[#allocation7 + $0x230] sm:$0xff]
    %v650 = vld [vmem:[#allocation7 + $0x238] sm:$0xff]
    %v651 = vld [vmem:[#allocation7 + $0x240] sm:$0xff]
    %v652 = vld [vmem:[#allocation7 + $0x248] sm:$0xff]
    %v653 = vld [vmem:[#allocation7 + $0x250] sm:$0xff]
    %v654 = vld [vmem:[#allocation7 + $0x258] sm:$0xff]
    %v655 = vld [vmem:[#allocation7 + $0x260] sm:$0xff]
    %v656 = vld [vmem:[#allocation7 + $0x268] sm:$0xff]
    %v657 = vld [vmem:[#allocation7 + $0x270] sm:$0xff]
    %v658 = vld [vmem:[#allocation7 + $0x278] sm:$0xff]
    %v659 = vld [vmem:[#allocation7 + $0x280] sm:$0xff]
    %v660 = vld [vmem:[#allocation7 + $0x288] sm:$0xff]
    %v661 = vld [vmem:[#allocation7 + $0x290] sm:$0xff]
    %v662 = vld [vmem:[#allocation7 + $0x298] sm:$0xff]
    %v663 = vld [vmem:[#allocation7 + $0x2a0] sm:$0xff]
    %v664 = vld [vmem:[#allocation7 + $0x2a8] sm:$0xff]
    %v665 = vld [vmem:[#allocation7 + $0x2b0] sm:$0xff]
    %v666 = vld [vmem:[#allocation7 + $0x2b8] sm:$0xff]
    %v667 = vld [vmem:[#allocation7 + $0x2c0] sm:$0xff]
    %v668 = vld [vmem:[#allocation7 + $0x2c8] sm:$0xff]
    %v669 = vld [vmem:[#allocation7 + $0x2d0] sm:$0xff]
    %v670 = vld [vmem:[#allocation7 + $0x2d8] sm:$0xff]
    %v671 = vld [vmem:[#allocation7 + $0x2e0] sm:$0xff]
    %v672 = vld [vmem:[#allocation7 + $0x2e8] sm:$0xff]
    %v673 = vld [vmem:[#allocation7 + $0x2f0] sm:$0xff]
    %v674 = vld [vmem:[#allocation7 + $0x2f8] sm:$0xff]
    %v675 = vld [vmem:[#allocation7 + $0x300] sm:$0xff]
    %v676 = vld [vmem:[#allocation7 + $0x308] sm:$0xff]
    %v677 = vld [vmem:[#allocation7 + $0x310] sm:$0xff]
    %v678 = vld [vmem:[#allocation7 + $0x318] sm:$0xff]
    %v679 = vld [vmem:[#allocation7 + $0x320] sm:$0xff]
    %v680 = vld [vmem:[#allocation7 + $0x328] sm:$0xff]
    %v681 = vld [vmem:[#allocation7 + $0x330] sm:$0xff]
    %v682 = vld [vmem:[#allocation7 + $0x338] sm:$0xff]
    %v683 = vld [vmem:[#allocation7 + $0x340] sm:$0xff]
    %v684 = vld [vmem:[#allocation7 + $0x348] sm:$0xff]
    %v685 = vld [vmem:[#allocation7 + $0x350] sm:$0xff]
    %v686 = vld [vmem:[#allocation7 + $0x358] sm:$0xff]
    %v687 = vld [vmem:[#allocation7 + $0x360] sm:$0xff]
    %v688 = vld [vmem:[#allocation7 + $0x368] sm:$0xff]
    %v689 = vld [vmem:[#allocation7 + $0x370] sm:$0xff]
    %v690 = vld [vmem:[#allocation7 + $0x378] sm:$0xff]
    %v691 = vld [vmem:[#allocation7 + $0x380] sm:$0xff]
    %v692 = vld [vmem:[#allocation7 + $0x388] sm:$0xff]
    %v693 = vld [vmem:[#allocation7 + $0x390] sm:$0xff]
    %v694 = vld [vmem:[#allocation7 + $0x398] sm:$0xff]
    %v695 = vld [vmem:[#allocation7 + $0x3a0] sm:$0xff]
    %v696 = vld [vmem:[#allocation7 + $0x3a8] sm:$0xff]
    %v697 = vld [vmem:[#allocation7 + $0x3b0] sm:$0xff]
    %v698 = vld [vmem:[#allocation7 + $0x3b8] sm:$0xff]
    %v699 = vld [vmem:[#allocation7 + $0x3c0] sm:$0xff]
    %v700 = vld [vmem:[#allocation7 + $0x3c8] sm:$0xff]
    %v701 = vld [vmem:[#allocation7 + $0x3d0] sm:$0xff]
    %v702 = vld [vmem:[#allocation7 + $0x3d8] sm:$0xff]
    %v703 = vld [vmem:[#allocation7 + $0x3e0] sm:$0xff]
    %v704 = vld [vmem:[#allocation7 + $0x3e8] sm:$0xff]
    %v705 = vld [vmem:[#allocation7 + $0x3f0] sm:$0xff]
    %v706 = vld [vmem:[#allocation7 + $0x3f8] sm:$0xff]
    %v707 = vld [vmem:[#allocation7 + $0x400] sm:$0xff]
    %v708 = vld [vmem:[#allocation7 + $0x408] sm:$0xff]
    %v709 = vld [vmem:[#allocation7 + $0x410] sm:$0xff]
    %v710 = vld [vmem:[#allocation7 + $0x418] sm:$0xff]
    %v711 = vld [vmem:[#allocation7 + $0x420] sm:$0xff]
    %v712 = vld [vmem:[#allocation7 + $0x428] sm:$0xff]
    %v713 = vld [vmem:[#allocation7 + $0x430] sm:$0xff]
    %v714 = vld [vmem:[#allocation7 + $0x438] sm:$0xff]
    %v715 = vld [vmem:[#allocation7 + $0x440] sm:$0xff]
    %v716 = vld [vmem:[#allocation7 + $0x448] sm:$0xff]
    %v717 = vld [vmem:[#allocation7 + $0x450] sm:$0xff]
    %v718 = vld [vmem:[#allocation7 + $0x458] sm:$0xff]
    %v719 = vld [vmem:[#allocation7 + $0x460] sm:$0xff]
    %v720 = vld [vmem:[#allocation7 + $0x468] sm:$0xff]
    %v721 = vld [vmem:[#allocation7 + $0x470] sm:$0xff]
    %v722 = vld [vmem:[#allocation7 + $0x478] sm:$0xff]
    %v723 = vld [vmem:[#allocation7 + $0x480] sm:$0xff]
    %v724 = vld [vmem:[#allocation7 + $0x488] sm:$0xff]
    %v725 = vld [vmem:[#allocation7 + $0x490] sm:$0xff]
    %v726 = vld [vmem:[#allocation7 + $0x498] sm:$0xff]
    %v727 = vld [vmem:[#allocation7 + $0x4a0] sm:$0xff]
    %v728 = vld [vmem:[#allocation7 + $0x4a8] sm:$0xff]
    %v729 = vld [vmem:[#allocation7 + $0x4b0] sm:$0xff]
    %v730 = vld [vmem:[#allocation7 + $0x4b8] sm:$0xff]
    %v731 = vld [vmem:[#allocation7 + $0x4c0] sm:$0xff]
    %v732 = vld [vmem:[#allocation7 + $0x4c8] sm:$0xff]
    %v733 = vld [vmem:[#allocation7 + $0x4d0] sm:$0xff]
    %v734 = vld [vmem:[#allocation7 + $0x4d8] sm:$0xff]
    %v735 = vld [vmem:[#allocation7 + $0x4e0] sm:$0xff]
    %v736 = vld [vmem:[#allocation7 + $0x4e8] sm:$0xff]
    %v737 = vld [vmem:[#allocation7 + $0x4f0] sm:$0xff]
    %v738 = vld [vmem:[#allocation7 + $0x4f8] sm:$0xff]
    %v739 = vld [vmem:[#allocation7 + $0x500] sm:$0xff]
    %v740 = vld [vmem:[#allocation7 + $0x508] sm:$0xff]
    %v741 = vld [vmem:[#allocation7 + $0x510] sm:$0xff]
    %v742 = vld [vmem:[#allocation7 + $0x518] sm:$0xff]
    %v743 = vld [vmem:[#allocation7 + $0x520] sm:$0xff]
    %v744 = vld [vmem:[#allocation7 + $0x528] sm:$0xff]
    %v745 = vld [vmem:[#allocation7 + $0x530] sm:$0xff]
    %v746 = vld [vmem:[#allocation7 + $0x538] sm:$0xff]
    %v747 = vld [vmem:[#allocation7 + $0x540] sm:$0xff]
    %v748 = vld [vmem:[#allocation7 + $0x548] sm:$0xff]
    %v749 = vld [vmem:[#allocation7 + $0x550] sm:$0xff]
    %v750 = vld [vmem:[#allocation7 + $0x558] sm:$0xff]
    %v751 = vld [vmem:[#allocation7 + $0x560] sm:$0xff]
    %v752 = vld [vmem:[#allocation7 + $0x568] sm:$0xff]
    %v753 = vld [vmem:[#allocation7 + $0x570] sm:$0xff]
    %v754 = vld [vmem:[#allocation7 + $0x578] sm:$0xff]
    %v755 = vld [vmem:[#allocation7 + $0x580] sm:$0xff]
    %v756 = vld [vmem:[#allocation7 + $0x588] sm:$0xff]
    %v757 = vld [vmem:[#allocation7 + $0x590] sm:$0xff]
    %v758 = vld [vmem:[#allocation7 + $0x598] sm:$0xff]
    %v759 = vld [vmem:[#allocation7 + $0x5a0] sm:$0xff]
    %v760 = vld [vmem:[#allocation7 + $0x5a8] sm:$0xff]
    %v761 = vld [vmem:[#allocation7 + $0x5b0] sm:$0xff]
    %v762 = vld [vmem:[#allocation7 + $0x5b8] sm:$0xff]
    %v763 = vld [vmem:[#allocation7 + $0x5c0] sm:$0xff]
    %v764 = vld [vmem:[#allocation7 + $0x5c8] sm:$0xff]
    %v765 = vld [vmem:[#allocation7 + $0x5d0] sm:$0xff]
    %v766 = vld [vmem:[#allocation7 + $0x5d8] sm:$0xff]
    %v767 = vld [vmem:[#allocation7 + $0x5e0] sm:$0xff]
    %v768 = vld [vmem:[#allocation7 + $0x5e8] sm:$0xff]
    %v769 = vld [vmem:[#allocation7 + $0x5f0] sm:$0xff]
    %v770 = vld [vmem:[#allocation7 + $0x5f8] sm:$0xff]
    %v771 = vld [vmem:[#allocation7 + $0x600] sm:$0xff]
    %v772 = vld [vmem:[#allocation7 + $0x608] sm:$0xff]
    %v773 = vld [vmem:[#allocation7 + $0x610] sm:$0xff]
    %v774 = vld [vmem:[#allocation7 + $0x618] sm:$0xff]
    %v775 = vld [vmem:[#allocation7 + $0x620] sm:$0xff]
    %v776 = vld [vmem:[#allocation7 + $0x628] sm:$0xff]
    %v777 = vld [vmem:[#allocation7 + $0x630] sm:$0xff]
    %v778 = vld [vmem:[#allocation7 + $0x638] sm:$0xff]
    %v779 = vld [vmem:[#allocation7 + $0x640] sm:$0xff]
    %v780 = vld [vmem:[#allocation7 + $0x648] sm:$0xff]
    %v781 = vld [vmem:[#allocation7 + $0x650] sm:$0xff]
    %v782 = vld [vmem:[#allocation7 + $0x658] sm:$0xff]
    %v783 = vld [vmem:[#allocation7 + $0x660] sm:$0xff]
    %v784 = vld [vmem:[#allocation7 + $0x668] sm:$0xff]
    %v785 = vld [vmem:[#allocation7 + $0x670] sm:$0xff]
    %v786 = vld [vmem:[#allocation7 + $0x678] sm:$0xff]
    %v787 = vld [vmem:[#allocation7 + $0x680] sm:$0xff]
    %v788 = vld [vmem:[#allocation7 + $0x688] sm:$0xff]
    %v789 = vld [vmem:[#allocation7 + $0x690] sm:$0xff]
    %v790 = vld [vmem:[#allocation7 + $0x698] sm:$0xff]
    %v791 = vld [vmem:[#allocation7 + $0x6a0] sm:$0xff]
    %v792 = vld [vmem:[#allocation7 + $0x6a8] sm:$0xff]
    %v793 = vld [vmem:[#allocation7 + $0x6b0] sm:$0xff]
    %v794 = vld [vmem:[#allocation7 + $0x6b8] sm:$0xff]
    %v795 = vld [vmem:[#allocation7 + $0x6c0] sm:$0xff]
    %v796 = vld [vmem:[#allocation7 + $0x6c8] sm:$0xff]
    %v797 = vld [vmem:[#allocation7 + $0x6d0] sm:$0xff]
    %v798 = vld [vmem:[#allocation7 + $0x6d8] sm:$0xff]
    %v799 = vld [vmem:[#allocation7 + $0x6e0] sm:$0xff]
    %v800 = vld [vmem:[#allocation7 + $0x6e8] sm:$0xff]
    %v801 = vld [vmem:[#allocation7 + $0x6f0] sm:$0xff]
    %v802 = vld [vmem:[#allocation7 + $0x6f8] sm:$0xff]
    %v803 = vld [vmem:[#allocation7 + $0x700] sm:$0xff]
    %v804 = vld [vmem:[#allocation7 + $0x708] sm:$0xff]
    %v805 = vld [vmem:[#allocation7 + $0x710] sm:$0xff]
    %v806 = vld [vmem:[#allocation7 + $0x718] sm:$0xff]
    %v807 = vld [vmem:[#allocation7 + $0x720] sm:$0xff]
    %v808 = vld [vmem:[#allocation7 + $0x728] sm:$0xff]
    %v809 = vld [vmem:[#allocation7 + $0x730] sm:$0xff]
    %v810 = vld [vmem:[#allocation7 + $0x738] sm:$0xff]
    %v811 = vld [vmem:[#allocation7 + $0x740] sm:$0xff]
    %v812 = vld [vmem:[#allocation7 + $0x748] sm:$0xff]
    %v813 = vld [vmem:[#allocation7 + $0x750] sm:$0xff]
    %v814 = vld [vmem:[#allocation7 + $0x758] sm:$0xff]
    %v815 = vld [vmem:[#allocation7 + $0x760] sm:$0xff]
    %v816 = vld [vmem:[#allocation7 + $0x768] sm:$0xff]
    %v817 = vld [vmem:[#allocation7 + $0x770] sm:$0xff]
    %v818 = vld [vmem:[#allocation7 + $0x778] sm:$0xff]
    %v819 = vld [vmem:[#allocation7 + $0x780] sm:$0xff]
    %v820 = vld [vmem:[#allocation7 + $0x788] sm:$0xff]
    %v821 = vld [vmem:[#allocation7 + $0x790] sm:$0xff]
    %v822 = vld [vmem:[#allocation7 + $0x798] sm:$0xff]
    %v823 = vld [vmem:[#allocation7 + $0x7a0] sm:$0xff]
    %v824 = vld [vmem:[#allocation7 + $0x7a8] sm:$0xff]
    %v825 = vld [vmem:[#allocation7 + $0x7b0] sm:$0xff]
    %v826 = vld [vmem:[#allocation7 + $0x7b8] sm:$0xff]
    %v827 = vld [vmem:[#allocation7 + $0x7c0] sm:$0xff]
    %v828 = vld [vmem:[#allocation7 + $0x7c8] sm:$0xff]
    %v829 = vld [vmem:[#allocation7 + $0x7d0] sm:$0xff]
    %v830 = vld [vmem:[#allocation7 + $0x7d8] sm:$0xff]
    %v831 = vld [vmem:[#allocation7 + $0x7e0] sm:$0xff]
    %v832 = vld [vmem:[#allocation7 + $0x7e8] sm:$0xff]
    %v833 = vld [vmem:[#allocation7 + $0x7f0] sm:$0xff]
    %v834 = vld [vmem:[#allocation7 + $0x7f8] sm:$0xff]
    %v835 = vld [vmem:[#allocation7 + $0x800] sm:$0xff]
    %v836 = vld [vmem:[#allocation7 + $0x808] sm:$0xff]
    %v837 = vld [vmem:[#allocation7 + $0x810] sm:$0xff]
    %v838 = vld [vmem:[#allocation7 + $0x818] sm:$0xff]
    %v839 = vld [vmem:[#allocation7 + $0x820] sm:$0xff]
    %v840 = vld [vmem:[#allocation7 + $0x828] sm:$0xff]
    %v841 = vld [vmem:[#allocation7 + $0x830] sm:$0xff]
    %v842 = vld [vmem:[#allocation7 + $0x838] sm:$0xff]
    %v843 = vld [vmem:[#allocation7 + $0x840] sm:$0xff]
    %v844 = vld [vmem:[#allocation7 + $0x848] sm:$0xff]
    %v845 = vld [vmem:[#allocation7 + $0x850] sm:$0xff]
    %v846 = vld [vmem:[#allocation7 + $0x858] sm:$0xff]
    %v847 = vld [vmem:[#allocation7 + $0x860] sm:$0xff]
    %v848 = vld [vmem:[#allocation7 + $0x868] sm:$0xff]
    %v849 = vld [vmem:[#allocation7 + $0x870] sm:$0xff]
    %v850 = vld [vmem:[#allocation7 + $0x878] sm:$0xff]
    %v851 = vld [vmem:[#allocation7 + $0x880] sm:$0xff]
    %v852 = vld [vmem:[#allocation7 + $0x888] sm:$0xff]
    %v853 = vld [vmem:[#allocation7 + $0x890] sm:$0xff]
    %v854 = vld [vmem:[#allocation7 + $0x898] sm:$0xff]
    %v855 = vld [vmem:[#allocation7 + $0x8a0] sm:$0xff]
    %v856 = vld [vmem:[#allocation7 + $0x8a8] sm:$0xff]
    %v857 = vld [vmem:[#allocation7 + $0x8b0] sm:$0xff]
    %v858 = vld [vmem:[#allocation7 + $0x8b8] sm:$0xff]
    %v859 = vld [vmem:[#allocation7 + $0x8c0] sm:$0xff]
    %v860 = vld [vmem:[#allocation7 + $0x8c8] sm:$0xff]
    %v861 = vld [vmem:[#allocation7 + $0x8d0] sm:$0xff]
    %v862 = vld [vmem:[#allocation7 + $0x8d8] sm:$0xff]
    %v863 = vld [vmem:[#allocation7 + $0x8e0] sm:$0xff]
    %v864 = vld [vmem:[#allocation7 + $0x8e8] sm:$0xff]
    %v865 = vld [vmem:[#allocation7 + $0x8f0] sm:$0xff]
    %v866 = vld [vmem:[#allocation7 + $0x8f8] sm:$0xff]
    %v867 = vld [vmem:[#allocation7 + $0x900] sm:$0xff]
    %v868 = vld [vmem:[#allocation7 + $0x908] sm:$0xff]
    %v869 = vld [vmem:[#allocation7 + $0x910] sm:$0xff]
    %v870 = vld [vmem:[#allocation7 + $0x918] sm:$0xff]
    %v871 = vld [vmem:[#allocation7 + $0x920] sm:$0xff]
    %v872 = vld [vmem:[#allocation7 + $0x928] sm:$0xff]
    %v873 = vld [vmem:[#allocation7 + $0x930] sm:$0xff]
    %v874 = vld [vmem:[#allocation7 + $0x938] sm:$0xff]
    %v875 = vld [vmem:[#allocation7 + $0x940] sm:$0xff]
    %v876 = vld [vmem:[#allocation7 + $0x948] sm:$0xff]
    %v877 = vld [vmem:[#allocation7 + $0x950] sm:$0xff]
    %v878 = vld [vmem:[#allocation7 + $0x958] sm:$0xff]
    %v879 = vld [vmem:[#allocation7 + $0x960] sm:$0xff]
    %v880 = vld [vmem:[#allocation7 + $0x968] sm:$0xff]
    %v881 = vld [vmem:[#allocation7 + $0x970] sm:$0xff]
    %v882 = vld [vmem:[#allocation7 + $0x978] sm:$0xff]
    %v883 = vld [vmem:[#allocation7 + $0x980] sm:$0xff]
    %v884 = vld [vmem:[#allocation7 + $0x988] sm:$0xff]
    %v885 = vld [vmem:[#allocation7 + $0x990] sm:$0xff]
    %v886 = vld [vmem:[#allocation7 + $0x998] sm:$0xff]
    %v887 = vld [vmem:[#allocation7 + $0x9a0] sm:$0xff]
    %v888 = vld [vmem:[#allocation7 + $0x9a8] sm:$0xff]
    %v889 = vld [vmem:[#allocation7 + $0x9b0] sm:$0xff]
    %v890 = vld [vmem:[#allocation7 + $0x9b8] sm:$0xff]
    %v891 = vld [vmem:[#allocation7 + $0x9c0] sm:$0xff]
    %v892 = vld [vmem:[#allocation7 + $0x9c8] sm:$0xff]
    %v893 = vld [vmem:[#allocation7 + $0x9d0] sm:$0xff]
    %v894 = vld [vmem:[#allocation7 + $0x9d8] sm:$0xff]
    %v895 = vld [vmem:[#allocation7 + $0x9e0] sm:$0xff]
    %v896 = vld [vmem:[#allocation7 + $0x9e8] sm:$0xff]
    %v897 = vld [vmem:[#allocation7 + $0x9f0] sm:$0xff]
    %v898 = vld [vmem:[#allocation7 + $0x9f8] sm:$0xff]
    %v899 = vunpack.c.l.s8.bf16 %v579
    %v900 = vunpack.c.l.s8.bf16 %v580
    %v901 = vunpack.c.l.s8.bf16 %v581
    %v902 = vunpack.c.l.s8.bf16 %v582
    %v903 = vunpack.c.l.s8.bf16 %v583
    %v904 = vunpack.c.l.s8.bf16 %v584
    %v905 = vunpack.c.l.s8.bf16 %v585
    %v906 = vunpack.c.l.s8.bf16 %v586
    %v907 = vunpack.c.h.s8.bf16 %v579
    %v908 = vunpack.c.h.s8.bf16 %v580
    %v909 = vunpack.c.h.s8.bf16 %v581
    %v910 = vunpack.c.h.s8.bf16 %v582
    %v911 = vunpack.c.h.s8.bf16 %v583
    %v912 = vunpack.c.h.s8.bf16 %v584
    %v913 = vunpack.c.h.s8.bf16 %v585
    %v914 = vunpack.c.h.s8.bf16 %v586
    %v915 = vunpack.c.l.s8.bf16 %v587
    %v916 = vunpack.c.l.s8.bf16 %v588
    %v917 = vunpack.c.l.s8.bf16 %v589
    %v918 = vunpack.c.l.s8.bf16 %v590
    %v919 = vunpack.c.l.s8.bf16 %v591
    %v920 = vunpack.c.l.s8.bf16 %v592
    %v921 = vunpack.c.l.s8.bf16 %v593
    %v922 = vunpack.c.l.s8.bf16 %v594
    %v923 = vunpack.c.h.s8.bf16 %v587
    %v924 = vunpack.c.h.s8.bf16 %v588
    %v925 = vunpack.c.h.s8.bf16 %v589
    %v926 = vunpack.c.h.s8.bf16 %v590
    %v927 = vunpack.c.h.s8.bf16 %v591
    %v928 = vunpack.c.h.s8.bf16 %v592
    %v929 = vunpack.c.h.s8.bf16 %v593
    %v930 = vunpack.c.h.s8.bf16 %v594
    %v931 = vunpack.c.l.s8.bf16 %v595
    %v932 = vunpack.c.l.s8.bf16 %v596
    %v933 = vunpack.c.l.s8.bf16 %v597
    %v934 = vunpack.c.l.s8.bf16 %v598
    %v935 = vunpack.c.l.s8.bf16 %v599
    %v936 = vunpack.c.l.s8.bf16 %v600
    %v937 = vunpack.c.l.s8.bf16 %v601
    %v938 = vunpack.c.l.s8.bf16 %v602
    %v939 = vunpack.c.h.s8.bf16 %v595
    %v940 = vunpack.c.h.s8.bf16 %v596
    %v941 = vunpack.c.h.s8.bf16 %v597
    %v942 = vunpack.c.h.s8.bf16 %v598
    %v943 = vunpack.c.h.s8.bf16 %v599
    %v944 = vunpack.c.h.s8.bf16 %v600
    %v945 = vunpack.c.h.s8.bf16 %v601
    %v946 = vunpack.c.h.s8.bf16 %v602
    %v947 = vunpack.c.l.s8.bf16 %v603
    %v948 = vunpack.c.l.s8.bf16 %v604
    %v949 = vunpack.c.l.s8.bf16 %v605
    %v950 = vunpack.c.l.s8.bf16 %v606
    %v951 = vunpack.c.l.s8.bf16 %v607
    %v952 = vunpack.c.l.s8.bf16 %v608
    %v953 = vunpack.c.l.s8.bf16 %v609
    %v954 = vunpack.c.l.s8.bf16 %v610
    %v955 = vunpack.c.h.s8.bf16 %v603
    %v956 = vunpack.c.h.s8.bf16 %v604
    %v957 = vunpack.c.h.s8.bf16 %v605
    %v958 = vunpack.c.h.s8.bf16 %v606
    %v959 = vunpack.c.h.s8.bf16 %v607
    %v960 = vunpack.c.h.s8.bf16 %v608
    %v961 = vunpack.c.h.s8.bf16 %v609
    %v962 = vunpack.c.h.s8.bf16 %v610
    %v963 = vunpack.c.l.s8.bf16 %v611
    %v964 = vunpack.c.l.s8.bf16 %v612
    %v965 = vunpack.c.l.s8.bf16 %v613
    %v966 = vunpack.c.l.s8.bf16 %v614
    %v967 = vunpack.c.l.s8.bf16 %v615
    %v968 = vunpack.c.l.s8.bf16 %v616
    %v969 = vunpack.c.l.s8.bf16 %v617
    %v970 = vunpack.c.l.s8.bf16 %v618
    %v971 = vunpack.c.h.s8.bf16 %v611
    %v972 = vunpack.c.h.s8.bf16 %v612
    %v973 = vunpack.c.h.s8.bf16 %v613
    %v974 = vunpack.c.h.s8.bf16 %v614
    %v975 = vunpack.c.h.s8.bf16 %v615
    %v976 = vunpack.c.h.s8.bf16 %v616
    %v977 = vunpack.c.h.s8.bf16 %v617
    %v978 = vunpack.c.h.s8.bf16 %v618
    %v979 = vunpack.c.l.s8.bf16 %v619
    %v980 = vunpack.c.l.s8.bf16 %v620
    %v981 = vunpack.c.l.s8.bf16 %v621
    %v982 = vunpack.c.l.s8.bf16 %v622
    %v983 = vunpack.c.l.s8.bf16 %v623
    %v984 = vunpack.c.l.s8.bf16 %v624
    %v985 = vunpack.c.l.s8.bf16 %v625
    %v986 = vunpack.c.l.s8.bf16 %v626
    %v987 = vunpack.c.h.s8.bf16 %v619
    %v988 = vunpack.c.h.s8.bf16 %v620
    %v989 = vunpack.c.h.s8.bf16 %v621
    %v990 = vunpack.c.h.s8.bf16 %v622
    %v991 = vunpack.c.h.s8.bf16 %v623
    %v992 = vunpack.c.h.s8.bf16 %v624
    %v993 = vunpack.c.h.s8.bf16 %v625
    %v994 = vunpack.c.h.s8.bf16 %v626
    %v995 = vunpack.c.l.s8.bf16 %v627
    %v996 = vunpack.c.l.s8.bf16 %v628
    %v997 = vunpack.c.l.s8.bf16 %v629
    %v998 = vunpack.c.l.s8.bf16 %v630
    %v999 = vunpack.c.l.s8.bf16 %v631
    %v1000 = vunpack.c.l.s8.bf16 %v632
    %v1001 = vunpack.c.l.s8.bf16 %v633
    %v1002 = vunpack.c.l.s8.bf16 %v634
    %v1003 = vunpack.c.h.s8.bf16 %v627
    %v1004 = vunpack.c.h.s8.bf16 %v628
    %v1005 = vunpack.c.h.s8.bf16 %v629
    %v1006 = vunpack.c.h.s8.bf16 %v630
    %v1007 = vunpack.c.h.s8.bf16 %v631
    %v1008 = vunpack.c.h.s8.bf16 %v632
    %v1009 = vunpack.c.h.s8.bf16 %v633
    %v1010 = vunpack.c.h.s8.bf16 %v634
    %v1011 = vunpack.c.l.s8.bf16 %v635
    %v1012 = vunpack.c.l.s8.bf16 %v636
    %v1013 = vunpack.c.l.s8.bf16 %v637
    %v1014 = vunpack.c.l.s8.bf16 %v638
    %v1015 = vunpack.c.l.s8.bf16 %v639
    %v1016 = vunpack.c.l.s8.bf16 %v640
    %v1017 = vunpack.c.l.s8.bf16 %v641
    %v1018 = vunpack.c.l.s8.bf16 %v642
    %v1019 = vunpack.c.h.s8.bf16 %v635
    %v1020 = vunpack.c.h.s8.bf16 %v636
    %v1021 = vunpack.c.h.s8.bf16 %v637
    %v1022 = vunpack.c.h.s8.bf16 %v638
    %v1023 = vunpack.c.h.s8.bf16 %v639
    %v1024 = vunpack.c.h.s8.bf16 %v640
    %v1025 = vunpack.c.h.s8.bf16 %v641
    %v1026 = vunpack.c.h.s8.bf16 %v642
    %v1027 = vunpack.c.l.s8.bf16 %v643
    %v1028 = vunpack.c.l.s8.bf16 %v644
    %v1029 = vunpack.c.l.s8.bf16 %v645
    %v1030 = vunpack.c.l.s8.bf16 %v646
    %v1031 = vunpack.c.l.s8.bf16 %v647
    %v1032 = vunpack.c.l.s8.bf16 %v648
    %v1033 = vunpack.c.l.s8.bf16 %v649
    %v1034 = vunpack.c.l.s8.bf16 %v650
    %v1035 = vunpack.c.h.s8.bf16 %v643
    %v1036 = vunpack.c.h.s8.bf16 %v644
    %v1037 = vunpack.c.h.s8.bf16 %v645
    %v1038 = vunpack.c.h.s8.bf16 %v646
    %v1039 = vunpack.c.h.s8.bf16 %v647
    %v1040 = vunpack.c.h.s8.bf16 %v648
    %v1041 = vunpack.c.h.s8.bf16 %v649
    %v1042 = vunpack.c.h.s8.bf16 %v650
    %v1043 = vunpack.c.l.s8.bf16 %v651
    %v1044 = vunpack.c.l.s8.bf16 %v652
    %v1045 = vunpack.c.l.s8.bf16 %v653
    %v1046 = vunpack.c.l.s8.bf16 %v654
    %v1047 = vunpack.c.l.s8.bf16 %v655
    %v1048 = vunpack.c.l.s8.bf16 %v656
    %v1049 = vunpack.c.l.s8.bf16 %v657
    %v1050 = vunpack.c.l.s8.bf16 %v658
    %v1051 = vunpack.c.h.s8.bf16 %v651
    %v1052 = vunpack.c.h.s8.bf16 %v652
    %v1053 = vunpack.c.h.s8.bf16 %v653
    %v1054 = vunpack.c.h.s8.bf16 %v654
    %v1055 = vunpack.c.h.s8.bf16 %v655
    %v1056 = vunpack.c.h.s8.bf16 %v656
    %v1057 = vunpack.c.h.s8.bf16 %v657
    %v1058 = vunpack.c.h.s8.bf16 %v658
    %v1059 = vunpack.c.l.s8.bf16 %v659
    %v1060 = vunpack.c.l.s8.bf16 %v660
    %v1061 = vunpack.c.l.s8.bf16 %v661
    %v1062 = vunpack.c.l.s8.bf16 %v662
    %v1063 = vunpack.c.l.s8.bf16 %v663
    %v1064 = vunpack.c.l.s8.bf16 %v664
    %v1065 = vunpack.c.l.s8.bf16 %v665
    %v1066 = vunpack.c.l.s8.bf16 %v666
    %v1067 = vunpack.c.h.s8.bf16 %v659
    %v1068 = vunpack.c.h.s8.bf16 %v660
    %v1069 = vunpack.c.h.s8.bf16 %v661
    %v1070 = vunpack.c.h.s8.bf16 %v662
    %v1071 = vunpack.c.h.s8.bf16 %v663
    %v1072 = vunpack.c.h.s8.bf16 %v664
    %v1073 = vunpack.c.h.s8.bf16 %v665
    %v1074 = vunpack.c.h.s8.bf16 %v666
    %v1075 = vunpack.c.l.s8.bf16 %v667
    %v1076 = vunpack.c.l.s8.bf16 %v668
    %v1077 = vunpack.c.l.s8.bf16 %v669
    %v1078 = vunpack.c.l.s8.bf16 %v670
    %v1079 = vunpack.c.l.s8.bf16 %v671
    %v1080 = vunpack.c.l.s8.bf16 %v672
    %v1081 = vunpack.c.l.s8.bf16 %v673
    %v1082 = vunpack.c.l.s8.bf16 %v674
    %v1083 = vunpack.c.h.s8.bf16 %v667
    %v1084 = vunpack.c.h.s8.bf16 %v668
    %v1085 = vunpack.c.h.s8.bf16 %v669
    %v1086 = vunpack.c.h.s8.bf16 %v670
    %v1087 = vunpack.c.h.s8.bf16 %v671
    %v1088 = vunpack.c.h.s8.bf16 %v672
    %v1089 = vunpack.c.h.s8.bf16 %v673
    %v1090 = vunpack.c.h.s8.bf16 %v674
    %v1091 = vunpack.c.l.s8.bf16 %v675
    %v1092 = vunpack.c.l.s8.bf16 %v676
    %v1093 = vunpack.c.l.s8.bf16 %v677
    %v1094 = vunpack.c.l.s8.bf16 %v678
    %v1095 = vunpack.c.l.s8.bf16 %v679
    %v1096 = vunpack.c.l.s8.bf16 %v680
    %v1097 = vunpack.c.l.s8.bf16 %v681
    %v1098 = vunpack.c.l.s8.bf16 %v682
    %v1099 = vunpack.c.h.s8.bf16 %v675
    %v1100 = vunpack.c.h.s8.bf16 %v676
    %v1101 = vunpack.c.h.s8.bf16 %v677
    %v1102 = vunpack.c.h.s8.bf16 %v678
    %v1103 = vunpack.c.h.s8.bf16 %v679
    %v1104 = vunpack.c.h.s8.bf16 %v680
    %v1105 = vunpack.c.h.s8.bf16 %v681
    %v1106 = vunpack.c.h.s8.bf16 %v682
    %v1107 = vunpack.c.l.s8.bf16 %v683
    %v1108 = vunpack.c.l.s8.bf16 %v684
    %v1109 = vunpack.c.l.s8.bf16 %v685
    %v1110 = vunpack.c.l.s8.bf16 %v686
    %v1111 = vunpack.c.l.s8.bf16 %v687
    %v1112 = vunpack.c.l.s8.bf16 %v688
    %v1113 = vunpack.c.l.s8.bf16 %v689
    %v1114 = vunpack.c.l.s8.bf16 %v690
    %v1115 = vunpack.c.h.s8.bf16 %v683
    %v1116 = vunpack.c.h.s8.bf16 %v684
    %v1117 = vunpack.c.h.s8.bf16 %v685
    %v1118 = vunpack.c.h.s8.bf16 %v686
    %v1119 = vunpack.c.h.s8.bf16 %v687
    %v1120 = vunpack.c.h.s8.bf16 %v688
    %v1121 = vunpack.c.h.s8.bf16 %v689
    %v1122 = vunpack.c.h.s8.bf16 %v690
    %v1123 = vunpack.c.l.s8.bf16 %v691
    %v1124 = vunpack.c.l.s8.bf16 %v692
    %v1125 = vunpack.c.l.s8.bf16 %v693
    %v1126 = vunpack.c.l.s8.bf16 %v694
    %v1127 = vunpack.c.l.s8.bf16 %v695
    %v1128 = vunpack.c.l.s8.bf16 %v696
    %v1129 = vunpack.c.l.s8.bf16 %v697
    %v1130 = vunpack.c.l.s8.bf16 %v698
    %v1131 = vunpack.c.h.s8.bf16 %v691
    %v1132 = vunpack.c.h.s8.bf16 %v692
    %v1133 = vunpack.c.h.s8.bf16 %v693
    %v1134 = vunpack.c.h.s8.bf16 %v694
    %v1135 = vunpack.c.h.s8.bf16 %v695
    %v1136 = vunpack.c.h.s8.bf16 %v696
    %v1137 = vunpack.c.h.s8.bf16 %v697
    %v1138 = vunpack.c.h.s8.bf16 %v698
    %v1139 = vunpack.c.l.s8.bf16 %v699
    %v1140 = vunpack.c.l.s8.bf16 %v700
    %v1141 = vunpack.c.l.s8.bf16 %v701
    %v1142 = vunpack.c.l.s8.bf16 %v702
    %v1143 = vunpack.c.l.s8.bf16 %v703
    %v1144 = vunpack.c.l.s8.bf16 %v704
    %v1145 = vunpack.c.l.s8.bf16 %v705
    %v1146 = vunpack.c.l.s8.bf16 %v706
    %v1147 = vunpack.c.h.s8.bf16 %v699
    %v1148 = vunpack.c.h.s8.bf16 %v700
    %v1149 = vunpack.c.h.s8.bf16 %v701
    %v1150 = vunpack.c.h.s8.bf16 %v702
    %v1151 = vunpack.c.h.s8.bf16 %v703
    %v1152 = vunpack.c.h.s8.bf16 %v704
    %v1153 = vunpack.c.h.s8.bf16 %v705
    %v1154 = vunpack.c.h.s8.bf16 %v706
    %v1155 = vunpack.c.l.s8.bf16 %v707
    %v1156 = vunpack.c.l.s8.bf16 %v708
    %v1157 = vunpack.c.l.s8.bf16 %v709
    %v1158 = vunpack.c.l.s8.bf16 %v710
    %v1159 = vunpack.c.l.s8.bf16 %v711
    %v1160 = vunpack.c.l.s8.bf16 %v712
    %v1161 = vunpack.c.l.s8.bf16 %v713
    %v1162 = vunpack.c.l.s8.bf16 %v714
    %v1163 = vunpack.c.h.s8.bf16 %v707
    %v1164 = vunpack.c.h.s8.bf16 %v708
    %v1165 = vunpack.c.h.s8.bf16 %v709
    %v1166 = vunpack.c.h.s8.bf16 %v710
    %v1167 = vunpack.c.h.s8.bf16 %v711
    %v1168 = vunpack.c.h.s8.bf16 %v712
    %v1169 = vunpack.c.h.s8.bf16 %v713
    %v1170 = vunpack.c.h.s8.bf16 %v714
    %v1171 = vunpack.c.l.s8.bf16 %v715
    %v1172 = vunpack.c.l.s8.bf16 %v716
    %v1173 = vunpack.c.l.s8.bf16 %v717
    %v1174 = vunpack.c.l.s8.bf16 %v718
    %v1175 = vunpack.c.l.s8.bf16 %v719
    %v1176 = vunpack.c.l.s8.bf16 %v720
    %v1177 = vunpack.c.l.s8.bf16 %v721
    %v1178 = vunpack.c.l.s8.bf16 %v722
    %v1179 = vunpack.c.h.s8.bf16 %v715
    %v1180 = vunpack.c.h.s8.bf16 %v716
    %v1181 = vunpack.c.h.s8.bf16 %v717
    %v1182 = vunpack.c.h.s8.bf16 %v718
    %v1183 = vunpack.c.h.s8.bf16 %v719
    %v1184 = vunpack.c.h.s8.bf16 %v720
    %v1185 = vunpack.c.h.s8.bf16 %v721
    %v1186 = vunpack.c.h.s8.bf16 %v722
    %v1187 = vunpack.c.l.s8.bf16 %v723
    %v1188 = vunpack.c.l.s8.bf16 %v724
    %v1189 = vunpack.c.l.s8.bf16 %v725
    %v1190 = vunpack.c.l.s8.bf16 %v726
    %v1191 = vunpack.c.l.s8.bf16 %v727
    %v1192 = vunpack.c.l.s8.bf16 %v728
    %v1193 = vunpack.c.l.s8.bf16 %v729
    %v1194 = vunpack.c.l.s8.bf16 %v730
    %v1195 = vunpack.c.h.s8.bf16 %v723
    %v1196 = vunpack.c.h.s8.bf16 %v724
    %v1197 = vunpack.c.h.s8.bf16 %v725
    %v1198 = vunpack.c.h.s8.bf16 %v726
    %v1199 = vunpack.c.h.s8.bf16 %v727
    %v1200 = vunpack.c.h.s8.bf16 %v728
    %v1201 = vunpack.c.h.s8.bf16 %v729
    %v1202 = vunpack.c.h.s8.bf16 %v730
    %v1203 = vunpack.c.l.s8.bf16 %v731
    %v1204 = vunpack.c.l.s8.bf16 %v732
    %v1205 = vunpack.c.l.s8.bf16 %v733
    %v1206 = vunpack.c.l.s8.bf16 %v734
    %v1207 = vunpack.c.l.s8.bf16 %v735
    %v1208 = vunpack.c.l.s8.bf16 %v736
    %v1209 = vunpack.c.l.s8.bf16 %v737
    %v1210 = vunpack.c.l.s8.bf16 %v738
    %v1211 = vunpack.c.h.s8.bf16 %v731
    %v1212 = vunpack.c.h.s8.bf16 %v732
    %v1213 = vunpack.c.h.s8.bf16 %v733
    %v1214 = vunpack.c.h.s8.bf16 %v734
    %v1215 = vunpack.c.h.s8.bf16 %v735
    %v1216 = vunpack.c.h.s8.bf16 %v736
    %v1217 = vunpack.c.h.s8.bf16 %v737
    %v1218 = vunpack.c.h.s8.bf16 %v738
    %v1219 = vunpack.c.l.s8.bf16 %v739
    %v1220 = vunpack.c.l.s8.bf16 %v740
    %v1221 = vunpack.c.l.s8.bf16 %v741
    %v1222 = vunpack.c.l.s8.bf16 %v742
    %v1223 = vunpack.c.l.s8.bf16 %v743
    %v1224 = vunpack.c.l.s8.bf16 %v744
    %v1225 = vunpack.c.l.s8.bf16 %v745
    %v1226 = vunpack.c.l.s8.bf16 %v746
    %v1227 = vunpack.c.h.s8.bf16 %v739
    %v1228 = vunpack.c.h.s8.bf16 %v740
    %v1229 = vunpack.c.h.s8.bf16 %v741
    %v1230 = vunpack.c.h.s8.bf16 %v742
    %v1231 = vunpack.c.h.s8.bf16 %v743
    %v1232 = vunpack.c.h.s8.bf16 %v744
    %v1233 = vunpack.c.h.s8.bf16 %v745
    %v1234 = vunpack.c.h.s8.bf16 %v746
    %v1235 = vunpack.c.l.s8.bf16 %v747
    %v1236 = vunpack.c.l.s8.bf16 %v748
    %v1237 = vunpack.c.l.s8.bf16 %v749
    %v1238 = vunpack.c.l.s8.bf16 %v750
    %v1239 = vunpack.c.l.s8.bf16 %v751
    %v1240 = vunpack.c.l.s8.bf16 %v752
    %v1241 = vunpack.c.l.s8.bf16 %v753
    %v1242 = vunpack.c.l.s8.bf16 %v754
    %v1243 = vunpack.c.h.s8.bf16 %v747
    %v1244 = vunpack.c.h.s8.bf16 %v748
    %v1245 = vunpack.c.h.s8.bf16 %v749
    %v1246 = vunpack.c.h.s8.bf16 %v750
    %v1247 = vunpack.c.h.s8.bf16 %v751
    %v1248 = vunpack.c.h.s8.bf16 %v752
    %v1249 = vunpack.c.h.s8.bf16 %v753
    %v1250 = vunpack.c.h.s8.bf16 %v754
    %v1251 = vunpack.c.l.s8.bf16 %v755
    %v1252 = vunpack.c.l.s8.bf16 %v756
    %v1253 = vunpack.c.l.s8.bf16 %v757
    %v1254 = vunpack.c.l.s8.bf16 %v758
    %v1255 = vunpack.c.l.s8.bf16 %v759
    %v1256 = vunpack.c.l.s8.bf16 %v760
    %v1257 = vunpack.c.l.s8.bf16 %v761
    %v1258 = vunpack.c.l.s8.bf16 %v762
    %v1259 = vunpack.c.h.s8.bf16 %v755
    %v1260 = vunpack.c.h.s8.bf16 %v756
    %v1261 = vunpack.c.h.s8.bf16 %v757
    %v1262 = vunpack.c.h.s8.bf16 %v758
    %v1263 = vunpack.c.h.s8.bf16 %v759
    %v1264 = vunpack.c.h.s8.bf16 %v760
    %v1265 = vunpack.c.h.s8.bf16 %v761
    %v1266 = vunpack.c.h.s8.bf16 %v762
    %v1267 = vunpack.c.l.s8.bf16 %v763
    %v1268 = vunpack.c.l.s8.bf16 %v764
    %v1269 = vunpack.c.l.s8.bf16 %v765
    %v1270 = vunpack.c.l.s8.bf16 %v766
    %v1271 = vunpack.c.l.s8.bf16 %v767
    %v1272 = vunpack.c.l.s8.bf16 %v768
    %v1273 = vunpack.c.l.s8.bf16 %v769
    %v1274 = vunpack.c.l.s8.bf16 %v770
    %v1275 = vunpack.c.h.s8.bf16 %v763
    %v1276 = vunpack.c.h.s8.bf16 %v764
    %v1277 = vunpack.c.h.s8.bf16 %v765
    %v1278 = vunpack.c.h.s8.bf16 %v766
    %v1279 = vunpack.c.h.s8.bf16 %v767
    %v1280 = vunpack.c.h.s8.bf16 %v768
    %v1281 = vunpack.c.h.s8.bf16 %v769
    %v1282 = vunpack.c.h.s8.bf16 %v770
    %v1283 = vunpack.c.l.s8.bf16 %v771
    %v1284 = vunpack.c.l.s8.bf16 %v772
    %v1285 = vunpack.c.l.s8.bf16 %v773
    %v1286 = vunpack.c.l.s8.bf16 %v774
    %v1287 = vunpack.c.l.s8.bf16 %v775
    %v1288 = vunpack.c.l.s8.bf16 %v776
    %v1289 = vunpack.c.l.s8.bf16 %v777
    %v1290 = vunpack.c.l.s8.bf16 %v778
    %v1291 = vunpack.c.h.s8.bf16 %v771
    %v1292 = vunpack.c.h.s8.bf16 %v772
    %v1293 = vunpack.c.h.s8.bf16 %v773
    %v1294 = vunpack.c.h.s8.bf16 %v774
    %v1295 = vunpack.c.h.s8.bf16 %v775
    %v1296 = vunpack.c.h.s8.bf16 %v776
    %v1297 = vunpack.c.h.s8.bf16 %v777
    %v1298 = vunpack.c.h.s8.bf16 %v778
    %v1299 = vunpack.c.l.s8.bf16 %v779
    %v1300 = vunpack.c.l.s8.bf16 %v780
    %v1301 = vunpack.c.l.s8.bf16 %v781
    %v1302 = vunpack.c.l.s8.bf16 %v782
    %v1303 = vunpack.c.l.s8.bf16 %v783
    %v1304 = vunpack.c.l.s8.bf16 %v784
    %v1305 = vunpack.c.l.s8.bf16 %v785
    %v1306 = vunpack.c.l.s8.bf16 %v786
    %v1307 = vunpack.c.h.s8.bf16 %v779
    %v1308 = vunpack.c.h.s8.bf16 %v780
    %v1309 = vunpack.c.h.s8.bf16 %v781
    %v1310 = vunpack.c.h.s8.bf16 %v782
    %v1311 = vunpack.c.h.s8.bf16 %v783
    %v1312 = vunpack.c.h.s8.bf16 %v784
    %v1313 = vunpack.c.h.s8.bf16 %v785
    %v1314 = vunpack.c.h.s8.bf16 %v786
    %v1315 = vunpack.c.l.s8.bf16 %v787
    %v1316 = vunpack.c.l.s8.bf16 %v788
    %v1317 = vunpack.c.l.s8.bf16 %v789
    %v1318 = vunpack.c.l.s8.bf16 %v790
    %v1319 = vunpack.c.l.s8.bf16 %v791
    %v1320 = vunpack.c.l.s8.bf16 %v792
    %v1321 = vunpack.c.l.s8.bf16 %v793
    %v1322 = vunpack.c.l.s8.bf16 %v794
    %v1323 = vunpack.c.h.s8.bf16 %v787
    %v1324 = vunpack.c.h.s8.bf16 %v788
    %v1325 = vunpack.c.h.s8.bf16 %v789
    %v1326 = vunpack.c.h.s8.bf16 %v790
    %v1327 = vunpack.c.h.s8.bf16 %v791
    %v1328 = vunpack.c.h.s8.bf16 %v792
    %v1329 = vunpack.c.h.s8.bf16 %v793
    %v1330 = vunpack.c.h.s8.bf16 %v794
    %v1331 = vunpack.c.l.s8.bf16 %v795
    %v1332 = vunpack.c.l.s8.bf16 %v796
    %v1333 = vunpack.c.l.s8.bf16 %v797
    %v1334 = vunpack.c.l.s8.bf16 %v798
    %v1335 = vunpack.c.l.s8.bf16 %v799
    %v1336 = vunpack.c.l.s8.bf16 %v800
    %v1337 = vunpack.c.l.s8.bf16 %v801
    %v1338 = vunpack.c.l.s8.bf16 %v802
    %v1339 = vunpack.c.h.s8.bf16 %v795
    %v1340 = vunpack.c.h.s8.bf16 %v796
    %v1341 = vunpack.c.h.s8.bf16 %v797
    %v1342 = vunpack.c.h.s8.bf16 %v798
    %v1343 = vunpack.c.h.s8.bf16 %v799
    %v1344 = vunpack.c.h.s8.bf16 %v800
    %v1345 = vunpack.c.h.s8.bf16 %v801
    %v1346 = vunpack.c.h.s8.bf16 %v802
    %v1347 = vunpack.c.l.s8.bf16 %v803
    %v1348 = vunpack.c.l.s8.bf16 %v804
    %v1349 = vunpack.c.l.s8.bf16 %v805
    %v1350 = vunpack.c.l.s8.bf16 %v806
    %v1351 = vunpack.c.l.s8.bf16 %v807
    %v1352 = vunpack.c.l.s8.bf16 %v808
    %v1353 = vunpack.c.l.s8.bf16 %v809
    %v1354 = vunpack.c.l.s8.bf16 %v810
    %v1355 = vunpack.c.h.s8.bf16 %v803
    %v1356 = vunpack.c.h.s8.bf16 %v804
    %v1357 = vunpack.c.h.s8.bf16 %v805
    %v1358 = vunpack.c.h.s8.bf16 %v806
    %v1359 = vunpack.c.h.s8.bf16 %v807
    %v1360 = vunpack.c.h.s8.bf16 %v808
    %v1361 = vunpack.c.h.s8.bf16 %v809
    %v1362 = vunpack.c.h.s8.bf16 %v810
    %v1363 = vunpack.c.l.s8.bf16 %v811
    %v1364 = vunpack.c.l.s8.bf16 %v812
    %v1365 = vunpack.c.l.s8.bf16 %v813
    %v1366 = vunpack.c.l.s8.bf16 %v814
    %v1367 = vunpack.c.l.s8.bf16 %v815
    %v1368 = vunpack.c.l.s8.bf16 %v816
    %v1369 = vunpack.c.l.s8.bf16 %v817
    %v1370 = vunpack.c.l.s8.bf16 %v818
    %v1371 = vunpack.c.h.s8.bf16 %v811
    %v1372 = vunpack.c.h.s8.bf16 %v812
    %v1373 = vunpack.c.h.s8.bf16 %v813
    %v1374 = vunpack.c.h.s8.bf16 %v814
    %v1375 = vunpack.c.h.s8.bf16 %v815
    %v1376 = vunpack.c.h.s8.bf16 %v816
    %v1377 = vunpack.c.h.s8.bf16 %v817
    %v1378 = vunpack.c.h.s8.bf16 %v818
    %v1379 = vunpack.c.l.s8.bf16 %v819
    %v1380 = vunpack.c.l.s8.bf16 %v820
    %v1381 = vunpack.c.l.s8.bf16 %v821
    %v1382 = vunpack.c.l.s8.bf16 %v822
    %v1383 = vunpack.c.l.s8.bf16 %v823
    %v1384 = vunpack.c.l.s8.bf16 %v824
    %v1385 = vunpack.c.l.s8.bf16 %v825
    %v1386 = vunpack.c.l.s8.bf16 %v826
    %v1387 = vunpack.c.h.s8.bf16 %v819
    %v1388 = vunpack.c.h.s8.bf16 %v820
    %v1389 = vunpack.c.h.s8.bf16 %v821
    %v1390 = vunpack.c.h.s8.bf16 %v822
    %v1391 = vunpack.c.h.s8.bf16 %v823
    %v1392 = vunpack.c.h.s8.bf16 %v824
    %v1393 = vunpack.c.h.s8.bf16 %v825
    %v1394 = vunpack.c.h.s8.bf16 %v826
    %v1395 = vunpack.c.l.s8.bf16 %v827
    %v1396 = vunpack.c.l.s8.bf16 %v828
    %v1397 = vunpack.c.l.s8.bf16 %v829
    %v1398 = vunpack.c.l.s8.bf16 %v830
    %v1399 = vunpack.c.l.s8.bf16 %v831
    %v1400 = vunpack.c.l.s8.bf16 %v832
    %v1401 = vunpack.c.l.s8.bf16 %v833
    %v1402 = vunpack.c.l.s8.bf16 %v834
    %v1403 = vunpack.c.h.s8.bf16 %v827
    %v1404 = vunpack.c.h.s8.bf16 %v828
    %v1405 = vunpack.c.h.s8.bf16 %v829
    %v1406 = vunpack.c.h.s8.bf16 %v830
    %v1407 = vunpack.c.h.s8.bf16 %v831
    %v1408 = vunpack.c.h.s8.bf16 %v832
    %v1409 = vunpack.c.h.s8.bf16 %v833
    %v1410 = vunpack.c.h.s8.bf16 %v834
    %v1411 = vunpack.c.l.s8.bf16 %v835
    %v1412 = vunpack.c.l.s8.bf16 %v836
    %v1413 = vunpack.c.l.s8.bf16 %v837
    %v1414 = vunpack.c.l.s8.bf16 %v838
    %v1415 = vunpack.c.l.s8.bf16 %v839
    %v1416 = vunpack.c.l.s8.bf16 %v840
    %v1417 = vunpack.c.l.s8.bf16 %v841
    %v1418 = vunpack.c.l.s8.bf16 %v842
    %v1419 = vunpack.c.h.s8.bf16 %v835
    %v1420 = vunpack.c.h.s8.bf16 %v836
    %v1421 = vunpack.c.h.s8.bf16 %v837
    %v1422 = vunpack.c.h.s8.bf16 %v838
    %v1423 = vunpack.c.h.s8.bf16 %v839
    %v1424 = vunpack.c.h.s8.bf16 %v840
    %v1425 = vunpack.c.h.s8.bf16 %v841
    %v1426 = vunpack.c.h.s8.bf16 %v842
    %v1427 = vunpack.c.l.s8.bf16 %v843
    %v1428 = vunpack.c.l.s8.bf16 %v844
    %v1429 = vunpack.c.l.s8.bf16 %v845
    %v1430 = vunpack.c.l.s8.bf16 %v846
    %v1431 = vunpack.c.l.s8.bf16 %v847
    %v1432 = vunpack.c.l.s8.bf16 %v848
    %v1433 = vunpack.c.l.s8.bf16 %v849
    %v1434 = vunpack.c.l.s8.bf16 %v850
    %v1435 = vunpack.c.h.s8.bf16 %v843
    %v1436 = vunpack.c.h.s8.bf16 %v844
    %v1437 = vunpack.c.h.s8.bf16 %v845
    %v1438 = vunpack.c.h.s8.bf16 %v846
    %v1439 = vunpack.c.h.s8.bf16 %v847
    %v1440 = vunpack.c.h.s8.bf16 %v848
    %v1441 = vunpack.c.h.s8.bf16 %v849
    %v1442 = vunpack.c.h.s8.bf16 %v850
    %v1443 = vunpack.c.l.s8.bf16 %v851
    %v1444 = vunpack.c.l.s8.bf16 %v852
    %v1445 = vunpack.c.l.s8.bf16 %v853
    %v1446 = vunpack.c.l.s8.bf16 %v854
    %v1447 = vunpack.c.l.s8.bf16 %v855
    %v1448 = vunpack.c.l.s8.bf16 %v856
    %v1449 = vunpack.c.l.s8.bf16 %v857
    %v1450 = vunpack.c.l.s8.bf16 %v858
    %v1451 = vunpack.c.h.s8.bf16 %v851
    %v1452 = vunpack.c.h.s8.bf16 %v852
    %v1453 = vunpack.c.h.s8.bf16 %v853
    %v1454 = vunpack.c.h.s8.bf16 %v854
    %v1455 = vunpack.c.h.s8.bf16 %v855
    %v1456 = vunpack.c.h.s8.bf16 %v856
    %v1457 = vunpack.c.h.s8.bf16 %v857
    %v1458 = vunpack.c.h.s8.bf16 %v858
    %v1459 = vunpack.c.l.s8.bf16 %v859
    %v1460 = vunpack.c.l.s8.bf16 %v860
    %v1461 = vunpack.c.l.s8.bf16 %v861
    %v1462 = vunpack.c.l.s8.bf16 %v862
    %v1463 = vunpack.c.l.s8.bf16 %v863
    %v1464 = vunpack.c.l.s8.bf16 %v864
    %v1465 = vunpack.c.l.s8.bf16 %v865
    %v1466 = vunpack.c.l.s8.bf16 %v866
    %v1467 = vunpack.c.h.s8.bf16 %v859
    %v1468 = vunpack.c.h.s8.bf16 %v860
    %v1469 = vunpack.c.h.s8.bf16 %v861
    %v1470 = vunpack.c.h.s8.bf16 %v862
    %v1471 = vunpack.c.h.s8.bf16 %v863
    %v1472 = vunpack.c.h.s8.bf16 %v864
    %v1473 = vunpack.c.h.s8.bf16 %v865
    %v1474 = vunpack.c.h.s8.bf16 %v866
    %v1475 = vunpack.c.l.s8.bf16 %v867
    %v1476 = vunpack.c.l.s8.bf16 %v868
    %v1477 = vunpack.c.l.s8.bf16 %v869
    %v1478 = vunpack.c.l.s8.bf16 %v870
    %v1479 = vunpack.c.l.s8.bf16 %v871
    %v1480 = vunpack.c.l.s8.bf16 %v872
    %v1481 = vunpack.c.l.s8.bf16 %v873
    %v1482 = vunpack.c.l.s8.bf16 %v874
    %v1483 = vunpack.c.h.s8.bf16 %v867
    %v1484 = vunpack.c.h.s8.bf16 %v868
    %v1485 = vunpack.c.h.s8.bf16 %v869
    %v1486 = vunpack.c.h.s8.bf16 %v870
    %v1487 = vunpack.c.h.s8.bf16 %v871
    %v1488 = vunpack.c.h.s8.bf16 %v872
    %v1489 = vunpack.c.h.s8.bf16 %v873
    %v1490 = vunpack.c.h.s8.bf16 %v874
    %v1491 = vunpack.c.l.s8.bf16 %v875
    %v1492 = vunpack.c.l.s8.bf16 %v876
    %v1493 = vunpack.c.l.s8.bf16 %v877
    %v1494 = vunpack.c.l.s8.bf16 %v878
    %v1495 = vunpack.c.l.s8.bf16 %v879
    %v1496 = vunpack.c.l.s8.bf16 %v880
    %v1497 = vunpack.c.l.s8.bf16 %v881
    %v1498 = vunpack.c.l.s8.bf16 %v882
    %v1499 = vunpack.c.h.s8.bf16 %v875
    %v1500 = vunpack.c.h.s8.bf16 %v876
    %v1501 = vunpack.c.h.s8.bf16 %v877
    %v1502 = vunpack.c.h.s8.bf16 %v878
    %v1503 = vunpack.c.h.s8.bf16 %v879
    %v1504 = vunpack.c.h.s8.bf16 %v880
    %v1505 = vunpack.c.h.s8.bf16 %v881
    %v1506 = vunpack.c.h.s8.bf16 %v882
    %v1507 = vunpack.c.l.s8.bf16 %v883
    %v1508 = vunpack.c.l.s8.bf16 %v884
    %v1509 = vunpack.c.l.s8.bf16 %v885
    %v1510 = vunpack.c.l.s8.bf16 %v886
    %v1511 = vunpack.c.l.s8.bf16 %v887
    %v1512 = vunpack.c.l.s8.bf16 %v888
    %v1513 = vunpack.c.l.s8.bf16 %v889
    %v1514 = vunpack.c.l.s8.bf16 %v890
    %v1515 = vunpack.c.h.s8.bf16 %v883
    %v1516 = vunpack.c.h.s8.bf16 %v884
    %v1517 = vunpack.c.h.s8.bf16 %v885
    %v1518 = vunpack.c.h.s8.bf16 %v886
    %v1519 = vunpack.c.h.s8.bf16 %v887
    %v1520 = vunpack.c.h.s8.bf16 %v888
    %v1521 = vunpack.c.h.s8.bf16 %v889
    %v1522 = vunpack.c.h.s8.bf16 %v890
    %v1523 = vunpack.c.l.s8.bf16 %v891
    %v1524 = vunpack.c.l.s8.bf16 %v892
    %v1525 = vunpack.c.l.s8.bf16 %v893
    %v1526 = vunpack.c.l.s8.bf16 %v894
    %v1527 = vunpack.c.l.s8.bf16 %v895
    %v1528 = vunpack.c.l.s8.bf16 %v896
    %v1529 = vunpack.c.l.s8.bf16 %v897
    %v1530 = vunpack.c.l.s8.bf16 %v898
    %v1531 = vunpack.c.h.s8.bf16 %v891
    %v1532 = vunpack.c.h.s8.bf16 %v892
    %v1533 = vunpack.c.h.s8.bf16 %v893
    %v1534 = vunpack.c.h.s8.bf16 %v894
    %v1535 = vunpack.c.h.s8.bf16 %v895
    %v1536 = vunpack.c.h.s8.bf16 %v896
    %v1537 = vunpack.c.h.s8.bf16 %v897
    %v1538 = vunpack.c.h.s8.bf16 %v898
    %v1539 = vpack.c.bf16 %v569, %v569
    %v1540 = vpack.c.bf16 %v570, %v570
    %v1541 = vpack.c.bf16 %v571, %v571
    %v1542 = vpack.c.bf16 %v572, %v572
    %v1543 = vpack.c.bf16 %v573, %v573
    %v1544 = vpack.c.bf16 %v574, %v574
    %v1545 = vpack.c.bf16 %v575, %v575
    %v1546 = vpack.c.bf16 %v576, %v576
    %v1547 = vpack.c.bf16 %v577, %v577
    %v1548 = vpack.c.bf16 %v578, %v578
    %1549 = vmatprep.subr.bf16.mxu0 %v900
    %1550 = vmatpush1.bf16.msra.mxu0 %v899
    %1551 = vmatprep.subr.bf16.mxu0 %v908
    %1552 = vmatpush1.bf16.msra.mxu0 %v907
    %1553 = vmatprep.subr.bf16.mxu0 %v916
    %1554 = vmatpush1.bf16.msra.mxu0 %v915
    %1555 = vmatprep.subr.bf16.mxu0 %v924
    %1556 = vmatpush1.bf16.msra.mxu0 %v923
    %1557 = vmatprep.subr.bf16.mxu0 %v932
    %1558 = vmatpush1.bf16.msra.mxu0 %v931
    %1559 = vmatprep.subr.bf16.mxu0 %v940
    %1560 = vmatpush1.bf16.msra.mxu0 %v939
    %1561 = vmatprep.subr.bf16.mxu0 %v948
    %1562 = vmatpush1.bf16.msra.mxu0 %v947
    %1563 = vmatprep.subr.bf16.mxu0 %v956
    %1564 = vmatpush1.bf16.msra.mxu0 %v955
    %1565 = vmatprep.subr.bf16.mxu0 %v964
    %1566 = vmatpush1.bf16.msra.mxu0 %v963
    %1567 = vmatprep.subr.bf16.mxu0 %v972
    %1568 = vmatpush1.bf16.msra.mxu0 %v971
    %1569 = vmatprep.subr.bf16.mxu0 %v980
    %1570 = vmatpush1.bf16.msra.mxu0 %v979
    %1571 = vmatprep.subr.bf16.mxu0 %v988
    %1572 = vmatpush1.bf16.msra.mxu0 %v987
    %1573 = vmatprep.subr.bf16.mxu0 %v996
    %1574 = vmatpush1.bf16.msra.mxu0 %v995
    %1575 = vmatprep.subr.bf16.mxu0 %v1004
    %1576 = vmatpush1.bf16.msra.mxu0 %v1003
    %1577 = vmatprep.subr.bf16.mxu0 %v1012
    %1578 = vmatpush1.bf16.msra.mxu0 %v1011
    %1579 = vmatprep.subr.bf16.mxu0 %v1020
    %1580 = vmatpush1.bf16.msra.mxu0 %v1019
    %1581 = vmatprep.mubr.bf16.mxu0 %v1540
    %1582 = vmatmul.mubr.bf16.gmra.mrb[0].mxu0 %v1539
    %v1583 = vpop.f32.mrb[0].mxu0
    %v1584 = vadd.f32 0.0, %v1583
    %v1585 = vpop.f32.mrb[0].mxu0
    %v1586 = vadd.f32 0.0, %v1585
    %v1587 = vpop.f32.mrb[0].mxu0
    %v1588 = vpop.f32.mrb[0].mxu0
    %1589 = vdwg.mxu0
    %1590 = vmatprep.subr.bf16.mxu0 %v1028
    %1591 = vmatpush1.bf16.msra.mxu0 %v1027
    %1592 = vmatprep.subr.bf16.mxu0 %v1036
    %1593 = vmatpush1.bf16.msra.mxu0 %v1035
    %1594 = vmatprep.subr.bf16.mxu0 %v1044
    %1595 = vmatpush1.bf16.msra.mxu0 %v1043
    %1596 = vmatprep.subr.bf16.mxu0 %v1052
    %1597 = vmatpush1.bf16.msra.mxu0 %v1051
    %1598 = vmatprep.subr.bf16.mxu0 %v1060
    %1599 = vmatpush1.bf16.msra.mxu0 %v1059
    %1600 = vmatprep.subr.bf16.mxu0 %v1068
    %1601 = vmatpush1.bf16.msra.mxu0 %v1067
    %1602 = vmatprep.subr.bf16.mxu0 %v1076
    %1603 = vmatpush1.bf16.msra.mxu0 %v1075
    %1604 = vmatprep.subr.bf16.mxu0 %v1084
    %1605 = vmatpush1.bf16.msra.mxu0 %v1083
    %1606 = vmatprep.subr.bf16.mxu0 %v1092
    %1607 = vmatpush1.bf16.msra.mxu0 %v1091
    %1608 = vmatprep.subr.bf16.mxu0 %v1100
    %1609 = vmatpush1.bf16.msra.mxu0 %v1099
    %1610 = vmatprep.subr.bf16.mxu0 %v1108
    %1611 = vmatpush1.bf16.msra.mxu0 %v1107
    %1612 = vmatprep.subr.bf16.mxu0 %v1116
    %1613 = vmatpush1.bf16.msra.mxu0 %v1115
    %1614 = vmatprep.subr.bf16.mxu0 %v1124
    %1615 = vmatpush1.bf16.msra.mxu0 %v1123
    %1616 = vmatprep.subr.bf16.mxu0 %v1132
    %1617 = vmatpush1.bf16.msra.mxu0 %v1131
    %1618 = vmatprep.subr.bf16.mxu0 %v1140
    %1619 = vmatpush1.bf16.msra.mxu0 %v1139
    %1620 = vmatprep.subr.bf16.mxu0 %v1148
    %1621 = vmatpush1.bf16.msra.mxu0 %v1147
    %1622 = vmatprep.mubr.bf16.mxu0 %v1542
    %1623 = vmatmul.mubr.bf16.gmra.mrb[0].mxu0 %v1541
    %v1624 = vpop.f32.mrb[0].mxu0
    %v1625 = vadd.f32 %v1584, %v1624
    %v1626 = vpop.f32.mrb[0].mxu0
    %v1627 = vadd.f32 %v1586, %v1626
    %v1628 = vpop.f32.mrb[0].mxu0
    %v1629 = vpop.f32.mrb[0].mxu0
    %1630 = vdwg.mxu0
    %1631 = vmatprep.subr.bf16.mxu0 %v1156
    %1632 = vmatpush1.bf16.msra.mxu0 %v1155
    %1633 = vmatprep.subr.bf16.mxu0 %v1164
    %1634 = vmatpush1.bf16.msra.mxu0 %v1163
    %1635 = vmatprep.subr.bf16.mxu0 %v1172
    %1636 = vmatpush1.bf16.msra.mxu0 %v1171
    %1637 = vmatprep.subr.bf16.mxu0 %v1180
    %1638 = vmatpush1.bf16.msra.mxu0 %v1179
    %1639 = vmatprep.subr.bf16.mxu0 %v1188
    %1640 = vmatpush1.bf16.msra.mxu0 %v1187
    %1641 = vmatprep.subr.bf16.mxu0 %v1196
    %1642 = vmatpush1.bf16.msra.mxu0 %v1195
    %1643 = vmatprep.subr.bf16.mxu0 %v1204
    %1644 = vmatpush1.bf16.msra.mxu0 %v1203
    %1645 = vmatprep.subr.bf16.mxu0 %v1212
    %1646 = vmatpush1.bf16.msra.mxu0 %v1211
    %1647 = vmatprep.subr.bf16.mxu0 %v1220
    %1648 = vmatpush1.bf16.msra.mxu0 %v1219
    %1649 = vmatprep.subr.bf16.mxu0 %v1228
    %1650 = vmatpush1.bf16.msra.mxu0 %v1227
    %1651 = vmatprep.subr.bf16.mxu0 %v1236
    %1652 = vmatpush1.bf16.msra.mxu0 %v1235
    %1653 = vmatprep.subr.bf16.mxu0 %v1244
    %1654 = vmatpush1.bf16.msra.mxu0 %v1243
    %1655 = vmatprep.subr.bf16.mxu0 %v1252
    %1656 = vmatpush1.bf16.msra.mxu0 %v1251
    %1657 = vmatprep.subr.bf16.mxu0 %v1260
    %1658 = vmatpush1.bf16.msra.mxu0 %v1259
    %1659 = vmatprep.subr.bf16.mxu0 %v1268
    %1660 = vmatpush1.bf16.msra.mxu0 %v1267
    %1661 = vmatprep.subr.bf16.mxu0 %v1276
    %1662 = vmatpush1.bf16.msra.mxu0 %v1275
    %1663 = vmatprep.mubr.bf16.mxu0 %v1544
    %1664 = vmatmul.mubr.bf16.gmra.mrb[0].mxu0 %v1543
    %v1665 = vpop.f32.mrb[0].mxu0
    %v1666 = vadd.f32 %v1625, %v1665
    %v1667 = vpop.f32.mrb[0].mxu0
    %v1668 = vadd.f32 %v1627, %v1667
    %v1669 = vpop.f32.mrb[0].mxu0
    %v1670 = vpop.f32.mrb[0].mxu0
    %1671 = vdwg.mxu0
    %1672 = vmatprep.subr.bf16.mxu0 %v1284
    %1673 = vmatpush1.bf16.msra.mxu0 %v1283
    %1674 = vmatprep.subr.bf16.mxu0 %v1292
    %1675 = vmatpush1.bf16.msra.mxu0 %v1291
    %1676 = vmatprep.subr.bf16.mxu0 %v1300
    %1677 = vmatpush1.bf16.msra.mxu0 %v1299
    %1678 = vmatprep.subr.bf16.mxu0 %v1308
    %1679 = vmatpush1.bf16.msra.mxu0 %v1307
    %1680 = vmatprep.subr.bf16.mxu0 %v1316
    %1681 = vmatpush1.bf16.msra.mxu0 %v1315
    %1682 = vmatprep.subr.bf16.mxu0 %v1324
    %1683 = vmatpush1.bf16.msra.mxu0 %v1323
    %1684 = vmatprep.subr.bf16.mxu0 %v1332
    %1685 = vmatpush1.bf16.msra.mxu0 %v1331
    %1686 = vmatprep.subr.bf16.mxu0 %v1340
    %1687 = vmatpush1.bf16.msra.mxu0 %v1339
    %1688 = vmatprep.subr.bf16.mxu0 %v1348
    %1689 = vmatpush1.bf16.msra.mxu0 %v1347
    %1690 = vmatprep.subr.bf16.mxu0 %v1356
    %1691 = vmatpush1.bf16.msra.mxu0 %v1355
    %1692 = vmatprep.subr.bf16.mxu0 %v1364
    %1693 = vmatpush1.bf16.msra.mxu0 %v1363
    %1694 = vmatprep.subr.bf16.mxu0 %v1372
    %1695 = vmatpush1.bf16.msra.mxu0 %v1371
    %1696 = vmatprep.subr.bf16.mxu0 %v1380
    %1697 = vmatpush1.bf16.msra.mxu0 %v1379
    %1698 = vmatprep.subr.bf16.mxu0 %v1388
    %1699 = vmatpush1.bf16.msra.mxu0 %v1387
    %1700 = vmatprep.subr.bf16.mxu0 %v1396
    %1701 = vmatpush1.bf16.msra.mxu0 %v1395
    %1702 = vmatprep.subr.bf16.mxu0 %v1404
    %1703 = vmatpush1.bf16.msra.mxu0 %v1403
    %1704 = vmatprep.mubr.bf16.mxu0 %v1546
    %1705 = vmatmul.mubr.bf16.gmra.mrb[0].mxu0 %v1545
    %v1706 = vpop.f32.mrb[0].mxu0
    %v1707 = vadd.f32 %v1666, %v1706
    %v1708 = vpop.f32.mrb[0].mxu0
    %v1709 = vadd.f32 %v1668, %v1708
    %v1710 = vpop.f32.mrb[0].mxu0
    %v1711 = vpop.f32.mrb[0].mxu0
    %1712 = vdwg.mxu0
    %1713 = vmatprep.subr.bf16.mxu0 %v1412
    %1714 = vmatpush1.bf16.msra.mxu0 %v1411
    %1715 = vmatprep.subr.bf16.mxu0 %v1420
    %1716 = vmatpush1.bf16.msra.mxu0 %v1419
    %1717 = vmatprep.subr.bf16.mxu0 %v1428
    %1718 = vmatpush1.bf16.msra.mxu0 %v1427
    %1719 = vmatprep.subr.bf16.mxu0 %v1436
    %1720 = vmatpush1.bf16.msra.mxu0 %v1435
    %1721 = vmatprep.subr.bf16.mxu0 %v1444
    %1722 = vmatpush1.bf16.msra.mxu0 %v1443
    %1723 = vmatprep.subr.bf16.mxu0 %v1452
    %1724 = vmatpush1.bf16.msra.mxu0 %v1451
    %1725 = vmatprep.subr.bf16.mxu0 %v1460
    %1726 = vmatpush1.bf16.msra.mxu0 %v1459
    %1727 = vmatprep.subr.bf16.mxu0 %v1468
    %1728 = vmatpush1.bf16.msra.mxu0 %v1467
    %1729 = vmatprep.subr.bf16.mxu0 %v1476
    %1730 = vmatpush1.bf16.msra.mxu0 %v1475
    %1731 = vmatprep.subr.bf16.mxu0 %v1484
    %1732 = vmatpush1.bf16.msra.mxu0 %v1483
    %1733 = vmatprep.subr.bf16.mxu0 %v1492
    %1734 = vmatpush1.bf16.msra.mxu0 %v1491
    %1735 = vmatprep.subr.bf16.mxu0 %v1500
    %1736 = vmatpush1.bf16.msra.mxu0 %v1499
    %1737 = vmatprep.subr.bf16.mxu0 %v1508
    %1738 = vmatpush1.bf16.msra.mxu0 %v1507
    %1739 = vmatprep.subr.bf16.mxu0 %v1516
    %1740 = vmatpush1.bf16.msra.mxu0 %v1515
    %1741 = vmatprep.subr.bf16.mxu0 %v1524
    %1742 = vmatpush1.bf16.msra.mxu0 %v1523
    %1743 = vmatprep.subr.bf16.mxu0 %v1532
    %1744 = vmatpush1.bf16.msra.mxu0 %v1531
    %1745 = vmatprep.mubr.bf16.mxu0 %v1548
    %1746 = vmatmul.mubr.bf16.gmra.mrb[0].mxu0 %v1547
    %v1747 = vpop.f32.mrb[0].mxu0
    %v1748 = vadd.f32 %v1707, %v1747
    %v1749 = vpop.f32.mrb[0].mxu0
    %v1750 = vadd.f32 %v1709, %v1749
    %v1751 = vpop.f32.mrb[0].mxu0
    %v1752 = vpop.f32.mrb[0].mxu0
    %1753 = vdwg.mxu0
    %1754 = vmatprep.subr.bf16.mxu0 %v902
    %1755 = vmatpush1.bf16.msra.mxu0 %v901
    %1756 = vmatprep.subr.bf16.mxu0 %v910
    %1757 = vmatpush1.bf16.msra.mxu0 %v909
    %1758 = vmatprep.subr.bf16.mxu0 %v918
    %1759 = vmatpush1.bf16.msra.mxu0 %v917
    %1760 = vmatprep.subr.bf16.mxu0 %v926
    %1761 = vmatpush1.bf16.msra.mxu0 %v925
    %1762 = vmatprep.subr.bf16.mxu0 %v934
    %1763 = vmatpush1.bf16.msra.mxu0 %v933
    %1764 = vmatprep.subr.bf16.mxu0 %v942
    %1765 = vmatpush1.bf16.msra.mxu0 %v941
    %1766 = vmatprep.subr.bf16.mxu0 %v950
    %1767 = vmatpush1.bf16.msra.mxu0 %v949
    %1768 = vmatprep.subr.bf16.mxu0 %v958
    %1769 = vmatpush1.bf16.msra.mxu0 %v957
    %1770 = vmatprep.subr.bf16.mxu0 %v966
    %1771 = vmatpush1.bf16.msra.mxu0 %v965
    %1772 = vmatprep.subr.bf16.mxu0 %v974
    %1773 = vmatpush1.bf16.msra.mxu0 %v973
    %1774 = vmatprep.subr.bf16.mxu0 %v982
    %1775 = vmatpush1.bf16.msra.mxu0 %v981
    %1776 = vmatprep.subr.bf16.mxu0 %v990
    %1777 = vmatpush1.bf16.msra.mxu0 %v989
    %1778 = vmatprep.subr.bf16.mxu0 %v998
    %1779 = vmatpush1.bf16.msra.mxu0 %v997
    %1780 = vmatprep.subr.bf16.mxu0 %v1006
    %1781 = vmatpush1.bf16.msra.mxu0 %v1005
    %1782 = vmatprep.subr.bf16.mxu0 %v1014
    %1783 = vmatpush1.bf16.msra.mxu0 %v1013
    %1784 = vmatprep.subr.bf16.mxu0 %v1022
    %1785 = vmatpush1.bf16.msra.mxu0 %v1021
    %1786 = vmatprep.mubr.bf16.mxu0 %v1540
    %1787 = vmatmul.mubr.bf16.gmra.mrb[0].mxu0 %v1539
    %v1788 = vpop.f32.mrb[0].mxu0
    %v1789 = vadd.f32 0.0, %v1788
    %v1790 = vpop.f32.mrb[0].mxu0
    %v1791 = vadd.f32 0.0, %v1790
    %v1792 = vpop.f32.mrb[0].mxu0
    %v1793 = vpop.f32.mrb[0].mxu0
    %1794 = vdwg.mxu0
    %1795 = vmatprep.subr.bf16.mxu0 %v1030
    %1796 = vmatpush1.bf16.msra.mxu0 %v1029
    %1797 = vmatprep.subr.bf16.mxu0 %v1038
    %1798 = vmatpush1.bf16.msra.mxu0 %v1037
    %1799 = vmatprep.subr.bf16.mxu0 %v1046
    %1800 = vmatpush1.bf16.msra.mxu0 %v1045
    %1801 = vmatprep.subr.bf16.mxu0 %v1054
    %1802 = vmatpush1.bf16.msra.mxu0 %v1053
    %1803 = vmatprep.subr.bf16.mxu0 %v1062
    %1804 = vmatpush1.bf16.msra.mxu0 %v1061
    %1805 = vmatprep.subr.bf16.mxu0 %v1070
    %1806 = vmatpush1.bf16.msra.mxu0 %v1069
    %1807 = vmatprep.subr.bf16.mxu0 %v1078
    %1808 = vmatpush1.bf16.msra.mxu0 %v1077
    %1809 = vmatprep.subr.bf16.mxu0 %v1086
    %1810 = vmatpush1.bf16.msra.mxu0 %v1085
    %1811 = vmatprep.subr.bf16.mxu0 %v1094
    %1812 = vmatpush1.bf16.msra.mxu0 %v1093
    %1813 = vmatprep.subr.bf16.mxu0 %v1102
    %1814 = vmatpush1.bf16.msra.mxu0 %v1101
    %1815 = vmatprep.subr.bf16.mxu0 %v1110
    %1816 = vmatpush1.bf16.msra.mxu0 %v1109
    %1817 = vmatprep.subr.bf16.mxu0 %v1118
    %1818 = vmatpush1.bf16.msra.mxu0 %v1117
    %1819 = vmatprep.subr.bf16.mxu0 %v1126
    %1820 = vmatpush1.bf16.msra.mxu0 %v1125
    %1821 = vmatprep.subr.bf16.mxu0 %v1134
    %1822 = vmatpush1.bf16.msra.mxu0 %v1133
    %1823 = vmatprep.subr.bf16.mxu0 %v1142
    %1824 = vmatpush1.bf16.msra.mxu0 %v1141
    %1825 = vmatprep.subr.bf16.mxu0 %v1150
    %1826 = vmatpush1.bf16.msra.mxu0 %v1149
    %1827 = vmatprep.mubr.bf16.mxu0 %v1542
    %1828 = vmatmul.mubr.bf16.gmra.mrb[0].mxu0 %v1541
    %v1829 = vpop.f32.mrb[0].mxu0
    %v1830 = vadd.f32 %v1789, %v1829
    %v1831 = vpop.f32.mrb[0].mxu0
    %v1832 = vadd.f32 %v1791, %v1831
    %v1833 = vpop.f32.mrb[0].mxu0
    %v1834 = vpop.f32.mrb[0].mxu0
    %1835 = vdwg.mxu0
    %1836 = vmatprep.subr.bf16.mxu0 %v1158
    %1837 = vmatpush1.bf16.msra.mxu0 %v1157
    %1838 = vmatprep.subr.bf16.mxu0 %v1166
    %1839 = vmatpush1.bf16.msra.mxu0 %v1165
    %1840 = vmatprep.subr.bf16.mxu0 %v1174
    %1841 = vmatpush1.bf16.msra.mxu0 %v1173
    %1842 = vmatprep.subr.bf16.mxu0 %v1182
    %1843 = vmatpush1.bf16.msra.mxu0 %v1181
    %1844 = vmatprep.subr.bf16.mxu0 %v1190
    %1845 = vmatpush1.bf16.msra.mxu0 %v1189
    %1846 = vmatprep.subr.bf16.mxu0 %v1198
    %1847 = vmatpush1.bf16.msra.mxu0 %v1197
    %1848 = vmatprep.subr.bf16.mxu0 %v1206
    %1849 = vmatpush1.bf16.msra.mxu0 %v1205
    %1850 = vmatprep.subr.bf16.mxu0 %v1214
    %1851 = vmatpush1.bf16.msra.mxu0 %v1213
    %1852 = vmatprep.subr.bf16.mxu0 %v1222
    %1853 = vmatpush1.bf16.msra.mxu0 %v1221
    %1854 = vmatprep.subr.bf16.mxu0 %v1230
    %1855 = vmatpush1.bf16.msra.mxu0 %v1229
    %1856 = vmatprep.subr.bf16.mxu0 %v1238
    %1857 = vmatpush1.bf16.msra.mxu0 %v1237
    %1858 = vmatprep.subr.bf16.mxu0 %v1246
    %1859 = vmatpush1.bf16.msra.mxu0 %v1245
    %1860 = vmatprep.subr.bf16.mxu0 %v1254
    %1861 = vmatpush1.bf16.msra.mxu0 %v1253
    %1862 = vmatprep.subr.bf16.mxu0 %v1262
    %1863 = vmatpush1.bf16.msra.mxu0 %v1261
    %1864 = vmatprep.subr.bf16.mxu0 %v1270
    %1865 = vmatpush1.bf16.msra.mxu0 %v1269
    %1866 = vmatprep.subr.bf16.mxu0 %v1278
    %1867 = vmatpush1.bf16.msra.mxu0 %v1277
    %1868 = vmatprep.mubr.bf16.mxu0 %v1544
    %1869 = vmatmul.mubr.bf16.gmra.mrb[0].mxu0 %v1543
    %v1870 = vpop.f32.mrb[0].mxu0
    %v1871 = vadd.f32 %v1830, %v1870
    %v1872 = vpop.f32.mrb[0].mxu0
    %v1873 = vadd.f32 %v1832, %v1872
    %v1874 = vpop.f32.mrb[0].mxu0
    %v1875 = vpop.f32.mrb[0].mxu0
    %1876 = vdwg.mxu0
    %1877 = vmatprep.subr.bf16.mxu0 %v1286
    %1878 = vmatpush1.bf16.msra.mxu0 %v1285
    %1879 = vmatprep.subr.bf16.mxu0 %v1294
    %1880 = vmatpush1.bf16.msra.mxu0 %v1293
    %1881 = vmatprep.subr.bf16.mxu0 %v1302
    %1882 = vmatpush1.bf16.msra.mxu0 %v1301
    %1883 = vmatprep.subr.bf16.mxu0 %v1310
    %1884 = vmatpush1.bf16.msra.mxu0 %v1309
    %1885 = vmatprep.subr.bf16.mxu0 %v1318
    %1886 = vmatpush1.bf16.msra.mxu0 %v1317
    %1887 = vmatprep.subr.bf16.mxu0 %v1326
    %1888 = vmatpush1.bf16.msra.mxu0 %v1325
    %1889 = vmatprep.subr.bf16.mxu0 %v1334
    %1890 = vmatpush1.bf16.msra.mxu0 %v1333
    %1891 = vmatprep.subr.bf16.mxu0 %v1342
    %1892 = vmatpush1.bf16.msra.mxu0 %v1341
    %1893 = vmatprep.subr.bf16.mxu0 %v1350
    %1894 = vmatpush1.bf16.msra.mxu0 %v1349
    %1895 = vmatprep.subr.bf16.mxu0 %v1358
    %1896 = vmatpush1.bf16.msra.mxu0 %v1357
    %1897 = vmatprep.subr.bf16.mxu0 %v1366
    %1898 = vmatpush1.bf16.msra.mxu0 %v1365
    %1899 = vmatprep.subr.bf16.mxu0 %v1374
    %1900 = vmatpush1.bf16.msra.mxu0 %v1373
    %1901 = vmatprep.subr.bf16.mxu0 %v1382
    %1902 = vmatpush1.bf16.msra.mxu0 %v1381
    %1903 = vmatprep.subr.bf16.mxu0 %v1390
    %1904 = vmatpush1.bf16.msra.mxu0 %v1389
    %1905 = vmatprep.subr.bf16.mxu0 %v1398
    %1906 = vmatpush1.bf16.msra.mxu0 %v1397
    %1907 = vmatprep.subr.bf16.mxu0 %v1406
    %1908 = vmatpush1.bf16.msra.mxu0 %v1405
    %1909 = vmatprep.mubr.bf16.mxu0 %v1546
    %1910 = vmatmul.mubr.bf16.gmra.mrb[0].mxu0 %v1545
    %v1911 = vpop.f32.mrb[0].mxu0
    %v1912 = vadd.f32 %v1871, %v1911
    %v1913 = vpop.f32.mrb[0].mxu0
    %v1914 = vadd.f32 %v1873, %v1913
    %v1915 = vpop.f32.mrb[0].mxu0
    %v1916 = vpop.f32.mrb[0].mxu0
    %1917 = vdwg.mxu0
    %1918 = vmatprep.subr.bf16.mxu0 %v1414
    %1919 = vmatpush1.bf16.msra.mxu0 %v1413
    %1920 = vmatprep.subr.bf16.mxu0 %v1422
    %1921 = vmatpush1.bf16.msra.mxu0 %v1421
    %1922 = vmatprep.subr.bf16.mxu0 %v1430
    %1923 = vmatpush1.bf16.msra.mxu0 %v1429
    %1924 = vmatprep.subr.bf16.mxu0 %v1438
    %1925 = vmatpush1.bf16.msra.mxu0 %v1437
    %1926 = vmatprep.subr.bf16.mxu0 %v1446
    %1927 = vmatpush1.bf16.msra.mxu0 %v1445
    %1928 = vmatprep.subr.bf16.mxu0 %v1454
    %1929 = vmatpush1.bf16.msra.mxu0 %v1453
    %1930 = vmatprep.subr.bf16.mxu0 %v1462
    %1931 = vmatpush1.bf16.msra.mxu0 %v1461
    %1932 = vmatprep.subr.bf16.mxu0 %v1470
    %1933 = vmatpush1.bf16.msra.mxu0 %v1469
    %1934 = vmatprep.subr.bf16.mxu0 %v1478
    %1935 = vmatpush1.bf16.msra.mxu0 %v1477
    %1936 = vmatprep.subr.bf16.mxu0 %v1486
    %1937 = vmatpush1.bf16.msra.mxu0 %v1485
    %1938 = vmatprep.subr.bf16.mxu0 %v1494
    %1939 = vmatpush1.bf16.msra.mxu0 %v1493
    %1940 = vmatprep.subr.bf16.mxu0 %v1502
    %1941 = vmatpush1.bf16.msra.mxu0 %v1501
    %1942 = vmatprep.subr.bf16.mxu0 %v1510
    %1943 = vmatpush1.bf16.msra.mxu0 %v1509
    %1944 = vmatprep.subr.bf16.mxu0 %v1518
    %1945 = vmatpush1.bf16.msra.mxu0 %v1517
    %1946 = vmatprep.subr.bf16.mxu0 %v1526
    %1947 = vmatpush1.bf16.msra.mxu0 %v1525
    %1948 = vmatprep.subr.bf16.mxu0 %v1534
    %1949 = vmatpush1.bf16.msra.mxu0 %v1533
    %1950 = vmatprep.mubr.bf16.mxu0 %v1548
    %1951 = vmatmul.mubr.bf16.gmra.mrb[0].mxu0 %v1547
    %v1952 = vpop.f32.mrb[0].mxu0
    %v1953 = vadd.f32 %v1912, %v1952
    %v1954 = vpop.f32.mrb[0].mxu0
    %v1955 = vadd.f32 %v1914, %v1954
    %v1956 = vpop.f32.mrb[0].mxu0
    %v1957 = vpop.f32.mrb[0].mxu0
    %1958 = vdwg.mxu0
    %1959 = vmatprep.subr.bf16.mxu0 %v904
    %1960 = vmatpush1.bf16.msra.mxu0 %v903
    %1961 = vmatprep.subr.bf16.mxu0 %v912
    %1962 = vmatpush1.bf16.msra.mxu0 %v911
    %1963 = vmatprep.subr.bf16.mxu0 %v920
    %1964 = vmatpush1.bf16.msra.mxu0 %v919
    %1965 = vmatprep.subr.bf16.mxu0 %v928
    %1966 = vmatpush1.bf16.msra.mxu0 %v927
    %1967 = vmatprep.subr.bf16.mxu0 %v936
    %1968 = vmatpush1.bf16.msra.mxu0 %v935
    %1969 = vmatprep.subr.bf16.mxu0 %v944
    %1970 = vmatpush1.bf16.msra.mxu0 %v943
    %1971 = vmatprep.subr.bf16.mxu0 %v952
    %1972 = vmatpush1.bf16.msra.mxu0 %v951
    %1973 = vmatprep.subr.bf16.mxu0 %v960
    %1974 = vmatpush1.bf16.msra.mxu0 %v959
    %1975 = vmatprep.subr.bf16.mxu0 %v968
    %1976 = vmatpush1.bf16.msra.mxu0 %v967
    %1977 = vmatprep.subr.bf16.mxu0 %v976
    %1978 = vmatpush1.bf16.msra.mxu0 %v975
    %1979 = vmatprep.subr.bf16.mxu0 %v984
    %1980 = vmatpush1.bf16.msra.mxu0 %v983
    %1981 = vmatprep.subr.bf16.mxu0 %v992
    %1982 = vmatpush1.bf16.msra.mxu0 %v991
    %1983 = vmatprep.subr.bf16.mxu0 %v1000
    %1984 = vmatpush1.bf16.msra.mxu0 %v999
    %1985 = vmatprep.subr.bf16.mxu0 %v1008
    %1986 = vmatpush1.bf16.msra.mxu0 %v1007
    %1987 = vmatprep.subr.bf16.mxu0 %v1016
    %1988 = vmatpush1.bf16.msra.mxu0 %v1015
    %1989 = vmatprep.subr.bf16.mxu0 %v1024
    %1990 = vmatpush1.bf16.msra.mxu0 %v1023
    %1991 = vmatprep.mubr.bf16.mxu0 %v1540
    %1992 = vmatmul.mubr.bf16.gmra.mrb[0].mxu0 %v1539
    %v1993 = vpop.f32.mrb[0].mxu0
    %v1994 = vadd.f32 0.0, %v1993
    %v1995 = vpop.f32.mrb[0].mxu0
    %v1996 = vadd.f32 0.0, %v1995
    %v1997 = vpop.f32.mrb[0].mxu0
    %v1998 = vpop.f32.mrb[0].mxu0
    %1999 = vdwg.mxu0
    %2000 = vmatprep.subr.bf16.mxu0 %v1032
    %2001 = vmatpush1.bf16.msra.mxu0 %v1031
    %2002 = vmatprep.subr.bf16.mxu0 %v1040
    %2003 = vmatpush1.bf16.msra.mxu0 %v1039
    %2004 = vmatprep.subr.bf16.mxu0 %v1048
    %2005 = vmatpush1.bf16.msra.mxu0 %v1047
    %2006 = vmatprep.subr.bf16.mxu0 %v1056
    %2007 = vmatpush1.bf16.msra.mxu0 %v1055
    %2008 = vmatprep.subr.bf16.mxu0 %v1064
    %2009 = vmatpush1.bf16.msra.mxu0 %v1063
    %2010 = vmatprep.subr.bf16.mxu0 %v1072
    %2011 = vmatpush1.bf16.msra.mxu0 %v1071
    %2012 = vmatprep.subr.bf16.mxu0 %v1080
    %2013 = vmatpush1.bf16.msra.mxu0 %v1079
    %2014 = vmatprep.subr.bf16.mxu0 %v1088
    %2015 = vmatpush1.bf16.msra.mxu0 %v1087
    %2016 = vmatprep.subr.bf16.mxu0 %v1096
    %2017 = vmatpush1.bf16.msra.mxu0 %v1095
    %2018 = vmatprep.subr.bf16.mxu0 %v1104
    %2019 = vmatpush1.bf16.msra.mxu0 %v1103
    %2020 = vmatprep.subr.bf16.mxu0 %v1112
    %2021 = vmatpush1.bf16.msra.mxu0 %v1111
    %2022 = vmatprep.subr.bf16.mxu0 %v1120
    %2023 = vmatpush1.bf16.msra.mxu0 %v1119
    %2024 = vmatprep.subr.bf16.mxu0 %v1128
    %2025 = vmatpush1.bf16.msra.mxu0 %v1127
    %2026 = vmatprep.subr.bf16.mxu0 %v1136
    %2027 = vmatpush1.bf16.msra.mxu0 %v1135
    %2028 = vmatprep.subr.bf16.mxu0 %v1144
    %2029 = vmatpush1.bf16.msra.mxu0 %v1143
    %2030 = vmatprep.subr.bf16.mxu0 %v1152
    %2031 = vmatpush1.bf16.msra.mxu0 %v1151
    %2032 = vmatprep.mubr.bf16.mxu0 %v1542
    %2033 = vmatmul.mubr.bf16.gmra.mrb[0].mxu0 %v1541
    %v2034 = vpop.f32.mrb[0].mxu0
    %v2035 = vadd.f32 %v1994, %v2034
    %v2036 = vpop.f32.mrb[0].mxu0
    %v2037 = vadd.f32 %v1996, %v2036
    %v2038 = vpop.f32.mrb[0].mxu0
    %v2039 = vpop.f32.mrb[0].mxu0
    %2040 = vdwg.mxu0
    %2041 = vmatprep.subr.bf16.mxu0 %v1160
    %2042 = vmatpush1.bf16.msra.mxu0 %v1159
    %2043 = vmatprep.subr.bf16.mxu0 %v1168
    %2044 = vmatpush1.bf16.msra.mxu0 %v1167
    %2045 = vmatprep.subr.bf16.mxu0 %v1176
    %2046 = vmatpush1.bf16.msra.mxu0 %v1175
    %2047 = vmatprep.subr.bf16.mxu0 %v1184
    %2048 = vmatpush1.bf16.msra.mxu0 %v1183
    %2049 = vmatprep.subr.bf16.mxu0 %v1192
    %2050 = vmatpush1.bf16.msra.mxu0 %v1191
    %2051 = vmatprep.subr.bf16.mxu0 %v1200
    %2052 = vmatpush1.bf16.msra.mxu0 %v1199
    %2053 = vmatprep.subr.bf16.mxu0 %v1208
    %2054 = vmatpush1.bf16.msra.mxu0 %v1207
    %2055 = vmatprep.subr.bf16.mxu0 %v1216
    %2056 = vmatpush1.bf16.msra.mxu0 %v1215
    %2057 = vmatprep.subr.bf16.mxu0 %v1224
    %2058 = vmatpush1.bf16.msra.mxu0 %v1223
    %2059 = vmatprep.subr.bf16.mxu0 %v1232
    %2060 = vmatpush1.bf16.msra.mxu0 %v1231
    %2061 = vmatprep.subr.bf16.mxu0 %v1240
    %2062 = vmatpush1.bf16.msra.mxu0 %v1239
    %2063 = vmatprep.subr.bf16.mxu0 %v1248
    %2064 = vmatpush1.bf16.msra.mxu0 %v1247
    %2065 = vmatprep.subr.bf16.mxu0 %v1256
    %2066 = vmatpush1.bf16.msra.mxu0 %v1255
    %2067 = vmatprep.subr.bf16.mxu0 %v1264
    %2068 = vmatpush1.bf16.msra.mxu0 %v1263
    %2069 = vmatprep.subr.bf16.mxu0 %v1272
    %2070 = vmatpush1.bf16.msra.mxu0 %v1271
    %2071 = vmatprep.subr.bf16.mxu0 %v1280
    %2072 = vmatpush1.bf16.msra.mxu0 %v1279
    %2073 = vmatprep.mubr.bf16.mxu0 %v1544
    %2074 = vmatmul.mubr.bf16.gmra.mrb[0].mxu0 %v1543
    %v2075 = vpop.f32.mrb[0].mxu0
    %v2076 = vadd.f32 %v2035, %v2075
    %v2077 = vpop.f32.mrb[0].mxu0
    %v2078 = vadd.f32 %v2037, %v2077
    %v2079 = vpop.f32.mrb[0].mxu0
    %v2080 = vpop.f32.mrb[0].mxu0
    %2081 = vdwg.mxu0
    %2082 = vmatprep.subr.bf16.mxu0 %v1288
    %2083 = vmatpush1.bf16.msra.mxu0 %v1287
    %2084 = vmatprep.subr.bf16.mxu0 %v1296
    %2085 = vmatpush1.bf16.msra.mxu0 %v1295
    %2086 = vmatprep.subr.bf16.mxu0 %v1304
    %2087 = vmatpush1.bf16.msra.mxu0 %v1303
    %2088 = vmatprep.subr.bf16.mxu0 %v1312
    %2089 = vmatpush1.bf16.msra.mxu0 %v1311
    %2090 = vmatprep.subr.bf16.mxu0 %v1320
    %2091 = vmatpush1.bf16.msra.mxu0 %v1319
    %2092 = vmatprep.subr.bf16.mxu0 %v1328
    %2093 = vmatpush1.bf16.msra.mxu0 %v1327
    %2094 = vmatprep.subr.bf16.mxu0 %v1336
    %2095 = vmatpush1.bf16.msra.mxu0 %v1335
    %2096 = vmatprep.subr.bf16.mxu0 %v1344
    %2097 = vmatpush1.bf16.msra.mxu0 %v1343
    %2098 = vmatprep.subr.bf16.mxu0 %v1352
    %2099 = vmatpush1.bf16.msra.mxu0 %v1351
    %2100 = vmatprep.subr.bf16.mxu0 %v1360
    %2101 = vmatpush1.bf16.msra.mxu0 %v1359
    %2102 = vmatprep.subr.bf16.mxu0 %v1368
    %2103 = vmatpush1.bf16.msra.mxu0 %v1367
    %2104 = vmatprep.subr.bf16.mxu0 %v1376
    %2105 = vmatpush1.bf16.msra.mxu0 %v1375
    %2106 = vmatprep.subr.bf16.mxu0 %v1384
    %2107 = vmatpush1.bf16.msra.mxu0 %v1383
    %2108 = vmatprep.subr.bf16.mxu0 %v1392
    %2109 = vmatpush1.bf16.msra.mxu0 %v1391
    %2110 = vmatprep.subr.bf16.mxu0 %v1400
    %2111 = vmatpush1.bf16.msra.mxu0 %v1399
    %2112 = vmatprep.subr.bf16.mxu0 %v1408
    %2113 = vmatpush1.bf16.msra.mxu0 %v1407
    %2114 = vmatprep.mubr.bf16.mxu0 %v1546
    %2115 = vmatmul.mubr.bf16.gmra.mrb[0].mxu0 %v1545
    %v2116 = vpop.f32.mrb[0].mxu0
    %v2117 = vadd.f32 %v2076, %v2116
    %v2118 = vpop.f32.mrb[0].mxu0
    %v2119 = vadd.f32 %v2078, %v2118
    %v2120 = vpop.f32.mrb[0].mxu0
    %v2121 = vpop.f32.mrb[0].mxu0
    %2122 = vdwg.mxu0
    %2123 = vmatprep.subr.bf16.mxu0 %v1416
    %2124 = vmatpush1.bf16.msra.mxu0 %v1415
    %2125 = vmatprep.subr.bf16.mxu0 %v1424
    %2126 = vmatpush1.bf16.msra.mxu0 %v1423
    %2127 = vmatprep.subr.bf16.mxu0 %v1432
    %2128 = vmatpush1.bf16.msra.mxu0 %v1431
    %2129 = vmatprep.subr.bf16.mxu0 %v1440
    %2130 = vmatpush1.bf16.msra.mxu0 %v1439
    %2131 = vmatprep.subr.bf16.mxu0 %v1448
    %2132 = vmatpush1.bf16.msra.mxu0 %v1447
    %2133 = vmatprep.subr.bf16.mxu0 %v1456
    %2134 = vmatpush1.bf16.msra.mxu0 %v1455
    %2135 = vmatprep.subr.bf16.mxu0 %v1464
    %2136 = vmatpush1.bf16.msra.mxu0 %v1463
    %2137 = vmatprep.subr.bf16.mxu0 %v1472
    %2138 = vmatpush1.bf16.msra.mxu0 %v1471
    %2139 = vmatprep.subr.bf16.mxu0 %v1480
    %2140 = vmatpush1.bf16.msra.mxu0 %v1479
    %2141 = vmatprep.subr.bf16.mxu0 %v1488
    %2142 = vmatpush1.bf16.msra.mxu0 %v1487
    %2143 = vmatprep.subr.bf16.mxu0 %v1496
    %2144 = vmatpush1.bf16.msra.mxu0 %v1495
    %2145 = vmatprep.subr.bf16.mxu0 %v1504
    %2146 = vmatpush1.bf16.msra.mxu0 %v1503
    %2147 = vmatprep.subr.bf16.mxu0 %v1512
    %2148 = vmatpush1.bf16.msra.mxu0 %v1511
    %2149 = vmatprep.subr.bf16.mxu0 %v1520
    %2150 = vmatpush1.bf16.msra.mxu0 %v1519
    %2151 = vmatprep.subr.bf16.mxu0 %v1528
    %2152 = vmatpush1.bf16.msra.mxu0 %v1527
    %2153 = vmatprep.subr.bf16.mxu0 %v1536
    %2154 = vmatpush1.bf16.msra.mxu0 %v1535
    %2155 = vmatprep.mubr.bf16.mxu0 %v1548
    %2156 = vmatmul.mubr.bf16.gmra.mrb[0].mxu0 %v1547
    %v2157 = vpop.f32.mrb[0].mxu0
    %v2158 = vadd.f32 %v2117, %v2157
    %v2159 = vpop.f32.mrb[0].mxu0
    %v2160 = vadd.f32 %v2119, %v2159
    %v2161 = vpop.f32.mrb[0].mxu0
    %v2162 = vpop.f32.mrb[0].mxu0
    %2163 = vdwg.mxu0
    %2164 = vmatprep.subr.bf16.mxu0 %v906
    %2165 = vmatpush1.bf16.msra.mxu0 %v905
    %2166 = vmatprep.subr.bf16.mxu0 %v914
    %2167 = vmatpush1.bf16.msra.mxu0 %v913
    %2168 = vmatprep.subr.bf16.mxu0 %v922
    %2169 = vmatpush1.bf16.msra.mxu0 %v921
    %2170 = vmatprep.subr.bf16.mxu0 %v930
    %2171 = vmatpush1.bf16.msra.mxu0 %v929
    %2172 = vmatprep.subr.bf16.mxu0 %v938
    %2173 = vmatpush1.bf16.msra.mxu0 %v937
    %2174 = vmatprep.subr.bf16.mxu0 %v946
    %2175 = vmatpush1.bf16.msra.mxu0 %v945
    %2176 = vmatprep.subr.bf16.mxu0 %v954
    %2177 = vmatpush1.bf16.msra.mxu0 %v953
    %2178 = vmatprep.subr.bf16.mxu0 %v962
    %2179 = vmatpush1.bf16.msra.mxu0 %v961
    %2180 = vmatprep.subr.bf16.mxu0 %v970
    %2181 = vmatpush1.bf16.msra.mxu0 %v969
    %2182 = vmatprep.subr.bf16.mxu0 %v978
    %2183 = vmatpush1.bf16.msra.mxu0 %v977
    %2184 = vmatprep.subr.bf16.mxu0 %v986
    %2185 = vmatpush1.bf16.msra.mxu0 %v985
    %2186 = vmatprep.subr.bf16.mxu0 %v994
    %2187 = vmatpush1.bf16.msra.mxu0 %v993
    %2188 = vmatprep.subr.bf16.mxu0 %v1002
    %2189 = vmatpush1.bf16.msra.mxu0 %v1001
    %2190 = vmatprep.subr.bf16.mxu0 %v1010
    %2191 = vmatpush1.bf16.msra.mxu0 %v1009
    %2192 = vmatprep.subr.bf16.mxu0 %v1018
    %2193 = vmatpush1.bf16.msra.mxu0 %v1017
    %2194 = vmatprep.subr.bf16.mxu0 %v1026
    %2195 = vmatpush1.bf16.msra.mxu0 %v1025
    %2196 = vmatprep.mubr.bf16.mxu0 %v1540
    %2197 = vmatmul.mubr.bf16.gmra.mrb[0].mxu0 %v1539
    %v2198 = vpop.f32.mrb[0].mxu0
    %v2199 = vadd.f32 0.0, %v2198
    %v2200 = vpop.f32.mrb[0].mxu0
    %v2201 = vadd.f32 0.0, %v2200
    %v2202 = vpop.f32.mrb[0].mxu0
    %v2203 = vpop.f32.mrb[0].mxu0
    %2204 = vdwg.mxu0
    %2205 = vmatprep.subr.bf16.mxu0 %v1034
    %2206 = vmatpush1.bf16.msra.mxu0 %v1033
    %2207 = vmatprep.subr.bf16.mxu0 %v1042
    %2208 = vmatpush1.bf16.msra.mxu0 %v1041
    %2209 = vmatprep.subr.bf16.mxu0 %v1050
    %2210 = vmatpush1.bf16.msra.mxu0 %v1049
    %2211 = vmatprep.subr.bf16.mxu0 %v1058
    %2212 = vmatpush1.bf16.msra.mxu0 %v1057
    %2213 = vmatprep.subr.bf16.mxu0 %v1066
    %2214 = vmatpush1.bf16.msra.mxu0 %v1065
    %2215 = vmatprep.subr.bf16.mxu0 %v1074
    %2216 = vmatpush1.bf16.msra.mxu0 %v1073
    %2217 = vmatprep.subr.bf16.mxu0 %v1082
    %2218 = vmatpush1.bf16.msra.mxu0 %v1081
    %2219 = vmatprep.subr.bf16.mxu0 %v1090
    %2220 = vmatpush1.bf16.msra.mxu0 %v1089
    %2221 = vmatprep.subr.bf16.mxu0 %v1098
    %2222 = vmatpush1.bf16.msra.mxu0 %v1097
    %2223 = vmatprep.subr.bf16.mxu0 %v1106
    %2224 = vmatpush1.bf16.msra.mxu0 %v1105
    %2225 = vmatprep.subr.bf16.mxu0 %v1114
    %2226 = vmatpush1.bf16.msra.mxu0 %v1113
    %2227 = vmatprep.subr.bf16.mxu0 %v1122
    %2228 = vmatpush1.bf16.msra.mxu0 %v1121
    %2229 = vmatprep.subr.bf16.mxu0 %v1130
    %2230 = vmatpush1.bf16.msra.mxu0 %v1129
    %2231 = vmatprep.subr.bf16.mxu0 %v1138
    %2232 = vmatpush1.bf16.msra.mxu0 %v1137
    %2233 = vmatprep.subr.bf16.mxu0 %v1146
    %2234 = vmatpush1.bf16.msra.mxu0 %v1145
    %2235 = vmatprep.subr.bf16.mxu0 %v1154
    %2236 = vmatpush1.bf16.msra.mxu0 %v1153
    %2237 = vmatprep.mubr.bf16.mxu0 %v1542
    %2238 = vmatmul.mubr.bf16.gmra.mrb[0].mxu0 %v1541
    %v2239 = vpop.f32.mrb[0].mxu0
    %v2240 = vadd.f32 %v2199, %v2239
    %v2241 = vpop.f32.mrb[0].mxu0
    %v2242 = vadd.f32 %v2201, %v2241
    %v2243 = vpop.f32.mrb[0].mxu0
    %v2244 = vpop.f32.mrb[0].mxu0
    %2245 = vdwg.mxu0
    %2246 = vmatprep.subr.bf16.mxu0 %v1162
    %2247 = vmatpush1.bf16.msra.mxu0 %v1161
    %2248 = vmatprep.subr.bf16.mxu0 %v1170
    %2249 = vmatpush1.bf16.msra.mxu0 %v1169
    %2250 = vmatprep.subr.bf16.mxu0 %v1178
    %2251 = vmatpush1.bf16.msra.mxu0 %v1177
    %2252 = vmatprep.subr.bf16.mxu0 %v1186
    %2253 = vmatpush1.bf16.msra.mxu0 %v1185
    %2254 = vmatprep.subr.bf16.mxu0 %v1194
    %2255 = vmatpush1.bf16.msra.mxu0 %v1193
    %2256 = vmatprep.subr.bf16.mxu0 %v1202
    %2257 = vmatpush1.bf16.msra.mxu0 %v1201
    %2258 = vmatprep.subr.bf16.mxu0 %v1210
    %2259 = vmatpush1.bf16.msra.mxu0 %v1209
    %2260 = vmatprep.subr.bf16.mxu0 %v1218
    %2261 = vmatpush1.bf16.msra.mxu0 %v1217
    %2262 = vmatprep.subr.bf16.mxu0 %v1226
    %2263 = vmatpush1.bf16.msra.mxu0 %v1225
    %2264 = vmatprep.subr.bf16.mxu0 %v1234
    %2265 = vmatpush1.bf16.msra.mxu0 %v1233
    %2266 = vmatprep.subr.bf16.mxu0 %v1242
    %2267 = vmatpush1.bf16.msra.mxu0 %v1241
    %2268 = vmatprep.subr.bf16.mxu0 %v1250
    %2269 = vmatpush1.bf16.msra.mxu0 %v1249
    %2270 = vmatprep.subr.bf16.mxu0 %v1258
    %2271 = vmatpush1.bf16.msra.mxu0 %v1257
    %2272 = vmatprep.subr.bf16.mxu0 %v1266
    %2273 = vmatpush1.bf16.msra.mxu0 %v1265
    %2274 = vmatprep.subr.bf16.mxu0 %v1274
    %2275 = vmatpush1.bf16.msra.mxu0 %v1273
    %2276 = vmatprep.subr.bf16.mxu0 %v1282
    %2277 = vmatpush1.bf16.msra.mxu0 %v1281
    %2278 = vmatprep.mubr.bf16.mxu0 %v1544
    %2279 = vmatmul.mubr.bf16.gmra.mrb[0].mxu0 %v1543
    %v2280 = vpop.f32.mrb[0].mxu0
    %v2281 = vadd.f32 %v2240, %v2280
    %v2282 = vpop.f32.mrb[0].mxu0
    %v2283 = vadd.f32 %v2242, %v2282
    %v2284 = vpop.f32.mrb[0].mxu0
    %v2285 = vpop.f32.mrb[0].mxu0
    %2286 = vdwg.mxu0
    %2287 = vmatprep.subr.bf16.mxu0 %v1290
    %2288 = vmatpush1.bf16.msra.mxu0 %v1289
    %2289 = vmatprep.subr.bf16.mxu0 %v1298
    %2290 = vmatpush1.bf16.msra.mxu0 %v1297
    %2291 = vmatprep.subr.bf16.mxu0 %v1306
    %2292 = vmatpush1.bf16.msra.mxu0 %v1305
    %2293 = vmatprep.subr.bf16.mxu0 %v1314
    %2294 = vmatpush1.bf16.msra.mxu0 %v1313
    %2295 = vmatprep.subr.bf16.mxu0 %v1322
    %2296 = vmatpush1.bf16.msra.mxu0 %v1321
    %2297 = vmatprep.subr.bf16.mxu0 %v1330
    %2298 = vmatpush1.bf16.msra.mxu0 %v1329
    %2299 = vmatprep.subr.bf16.mxu0 %v1338
    %2300 = vmatpush1.bf16.msra.mxu0 %v1337
    %2301 = vmatprep.subr.bf16.mxu0 %v1346
    %2302 = vmatpush1.bf16.msra.mxu0 %v1345
    %2303 = vmatprep.subr.bf16.mxu0 %v1354
    %2304 = vmatpush1.bf16.msra.mxu0 %v1353
    %2305 = vmatprep.subr.bf16.mxu0 %v1362
    %2306 = vmatpush1.bf16.msra.mxu0 %v1361
    %2307 = vmatprep.subr.bf16.mxu0 %v1370
    %2308 = vmatpush1.bf16.msra.mxu0 %v1369
    %2309 = vmatprep.subr.bf16.mxu0 %v1378
    %2310 = vmatpush1.bf16.msra.mxu0 %v1377
    %2311 = vmatprep.subr.bf16.mxu0 %v1386
    %2312 = vmatpush1.bf16.msra.mxu0 %v1385
    %2313 = vmatprep.subr.bf16.mxu0 %v1394
    %2314 = vmatpush1.bf16.msra.mxu0 %v1393
    %2315 = vmatprep.subr.bf16.mxu0 %v1402
    %2316 = vmatpush1.bf16.msra.mxu0 %v1401
    %2317 = vmatprep.subr.bf16.mxu0 %v1410
    %2318 = vmatpush1.bf16.msra.mxu0 %v1409
    %2319 = vmatprep.mubr.bf16.mxu0 %v1546
    %2320 = vmatmul.mubr.bf16.gmra.mrb[0].mxu0 %v1545
    %v2321 = vpop.f32.mrb[0].mxu0
    %v2322 = vadd.f32 %v2281, %v2321
    %v2323 = vpop.f32.mrb[0].mxu0
    %v2324 = vadd.f32 %v2283, %v2323
    %v2325 = vpop.f32.mrb[0].mxu0
    %v2326 = vpop.f32.mrb[0].mxu0
    %2327 = vdwg.mxu0
    %2328 = vmatprep.subr.bf16.mxu0 %v1418
    %2329 = vmatpush1.bf16.msra.mxu0 %v1417
    %2330 = vmatprep.subr.bf16.mxu0 %v1426
    %2331 = vmatpush1.bf16.msra.mxu0 %v1425
    %2332 = vmatprep.subr.bf16.mxu0 %v1434
    %2333 = vmatpush1.bf16.msra.mxu0 %v1433
    %2334 = vmatprep.subr.bf16.mxu0 %v1442
    %2335 = vmatpush1.bf16.msra.mxu0 %v1441
    %2336 = vmatprep.subr.bf16.mxu0 %v1450
    %2337 = vmatpush1.bf16.msra.mxu0 %v1449
    %2338 = vmatprep.subr.bf16.mxu0 %v1458
    %2339 = vmatpush1.bf16.msra.mxu0 %v1457
    %2340 = vmatprep.subr.bf16.mxu0 %v1466
    %2341 = vmatpush1.bf16.msra.mxu0 %v1465
    %2342 = vmatprep.subr.bf16.mxu0 %v1474
    %2343 = vmatpush1.bf16.msra.mxu0 %v1473
    %2344 = vmatprep.subr.bf16.mxu0 %v1482
    %2345 = vmatpush1.bf16.msra.mxu0 %v1481
    %2346 = vmatprep.subr.bf16.mxu0 %v1490
    %2347 = vmatpush1.bf16.msra.mxu0 %v1489
    %2348 = vmatprep.subr.bf16.mxu0 %v1498
    %2349 = vmatpush1.bf16.msra.mxu0 %v1497
    %2350 = vmatprep.subr.bf16.mxu0 %v1506
    %2351 = vmatpush1.bf16.msra.mxu0 %v1505
    %2352 = vmatprep.subr.bf16.mxu0 %v1514
    %2353 = vmatpush1.bf16.msra.mxu0 %v1513
    %2354 = vmatprep.subr.bf16.mxu0 %v1522
    %2355 = vmatpush1.bf16.msra.mxu0 %v1521
    %2356 = vmatprep.subr.bf16.mxu0 %v1530
    %2357 = vmatpush1.bf16.msra.mxu0 %v1529
    %2358 = vmatprep.subr.bf16.mxu0 %v1538
    %2359 = vmatpush1.bf16.msra.mxu0 %v1537
    %2360 = vmatprep.mubr.bf16.mxu0 %v1548
    %2361 = vmatmul.mubr.bf16.gmra.mrb[0].mxu0 %v1547
    %v2362 = vpop.f32.mrb[0].mxu0
    %v2363 = vadd.f32 %v2322, %v2362
    %v2364 = vpop.f32.mrb[0].mxu0
    %v2365 = vadd.f32 %v2324, %v2364
    %v2366 = vpop.f32.mrb[0].mxu0
    %v2367 = vpop.f32.mrb[0].mxu0
    %2368 = vdwg.mxu0
    %v2369 = vld [vmem:[#allocation8] sm:$0xff]
    %v2371 = vlaneseq
    %v2372 = vshrl.u32 %v2371, 7
    %v2373 = vsub.s32 0, %v2372
    %v2374 = vrot.slane %v2369, %v2373
    %v2375 = vlaneseq
    %v2376 = vshrl.u32 %v2375, 7
    %v2377 = vsub.s32 1, %v2376
    %v2378 = vrot.slane %v2369, %v2377
    %v2379 = vlaneseq
    %v2380 = vshrl.u32 %v2379, 7
    %v2381 = vsub.s32 2, %v2380
    %v2382 = vrot.slane %v2369, %v2381
    %v2383 = vlaneseq
    %v2384 = vshrl.u32 %v2383, 7
    %v2385 = vsub.s32 3, %v2384
    %v2386 = vrot.slane %v2369, %v2385
    %v2387 = vlaneseq
    %v2388 = vshrl.u32 %v2387, 7
    %v2389 = vsub.s32 4, %v2388
    %v2390 = vrot.slane %v2369, %v2389
    %v2391 = vlaneseq
    %v2392 = vshrl.u32 %v2391, 7
    %v2393 = vsub.s32 5, %v2392
    %v2394 = vrot.slane %v2369, %v2393
    %v2395 = vlaneseq
    %v2396 = vshrl.u32 %v2395, 7
    %v2397 = vsub.s32 6, %v2396
    %v2398 = vrot.slane %v2369, %v2397
    %v2399 = vlaneseq
    %v2400 = vshrl.u32 %v2399, 7
    %v2401 = vsub.s32 7, %v2400
    %v2402 = vrot.slane %v2369, %v2401
    %v2411 = vmul.f32 %v1748, %v2374
    %v2412 = vmul.f32 %v1750, %v2378
    %v2413 = vmul.f32 %v1953, %v2382
    %v2414 = vmul.f32 %v1955, %v2386
    %v2415 = vmul.f32 %v2158, %v2390
    %v2416 = vmul.f32 %v2160, %v2394
    %v2417 = vmul.f32 %v2363, %v2398
    %v2418 = vmul.f32 %v2365, %v2402
    %v2419 = vld [vmem:[#allocation10] sm:$0xff]
    %v2421 = vlaneseq
    %v2422 = vshrl.u32 %v2421, 7
    %v2423 = vsub.s32 0, %v2422
    %v2424 = vrot.slane %v2419, %v2423
    %v2425 = vlaneseq
    %v2426 = vshrl.u32 %v2425, 7
    %v2427 = vsub.s32 1, %v2426
    %v2428 = vrot.slane %v2419, %v2427
    %v2429 = vlaneseq
    %v2430 = vshrl.u32 %v2429, 7
    %v2431 = vsub.s32 2, %v2430
    %v2432 = vrot.slane %v2419, %v2431
    %v2433 = vlaneseq
    %v2434 = vshrl.u32 %v2433, 7
    %v2435 = vsub.s32 3, %v2434
    %v2436 = vrot.slane %v2419, %v2435
    %v2437 = vlaneseq
    %v2438 = vshrl.u32 %v2437, 7
    %v2439 = vsub.s32 4, %v2438
    %v2440 = vrot.slane %v2419, %v2439
    %v2441 = vlaneseq
    %v2442 = vshrl.u32 %v2441, 7
    %v2443 = vsub.s32 5, %v2442
    %v2444 = vrot.slane %v2419, %v2443
    %v2445 = vlaneseq
    %v2446 = vshrl.u32 %v2445, 7
    %v2447 = vsub.s32 6, %v2446
    %v2448 = vrot.slane %v2419, %v2447
    %v2449 = vlaneseq
    %v2450 = vshrl.u32 %v2449, 7
    %v2451 = vsub.s32 7, %v2450
    %v2452 = vrot.slane %v2419, %v2451
    %v2461 = vadd.f32 %v2411, %v2424
    %v2462 = vadd.f32 %v2412, %v2428
    %v2463 = vadd.f32 %v2413, %v2432
    %v2464 = vadd.f32 %v2414, %v2436
    %v2465 = vadd.f32 %v2415, %v2440
    %v2466 = vadd.f32 %v2416, %v2444
    %v2467 = vadd.f32 %v2417, %v2448
    %v2468 = vadd.f32 %v2418, %v2452
    %v2469 = vmax.f32 %v2461, 0.0
    %v2470 = vmax.f32 %v2462, 0.0
    %v2471 = vmax.f32 %v2463, 0.0
    %v2472 = vmax.f32 %v2464, 0.0
    %v2473 = vmax.f32 %v2465, 0.0
    %v2474 = vmax.f32 %v2466, 0.0
    %v2475 = vmax.f32 %v2467, 0.0
    %v2476 = vmax.f32 %v2468, 0.0
    %v2477 = vmin.f32 %v2469, 6.0
    %v2478 = vmin.f32 %v2470, 6.0
    %v2479 = vmin.f32 %v2471, 6.0
    %v2480 = vmin.f32 %v2472, 6.0
    %v2481 = vmin.f32 %v2473, 6.0
    %v2482 = vmin.f32 %v2474, 6.0
    %v2483 = vmin.f32 %v2475, 6.0
    %v2484 = vmin.f32 %v2476, 6.0
    %v2485 = vld [vmem:[#allocation11] sm:$0xff]
    %v2486 = vld [vmem:[#allocation11 + $0x8] sm:$0xff]
    %v2487 = vld [vmem:[#allocation11 + $0x10] sm:$0xff]
    %v2488 = vld [vmem:[#allocation11 + $0x18] sm:$0xff]
    %v2489 = vld [vmem:[#allocation11 + $0x20] sm:$0xff]
    %v2490 = vld [vmem:[#allocation11 + $0x28] sm:$0xff]
    %v2491 = vld [vmem:[#allocation11 + $0x30] sm:$0xff]
    %v2492 = vld [vmem:[#allocation11 + $0x38] sm:$0xff]
    %v2493 = vld [vmem:[#allocation11 + $0x40] sm:$0xff]
    %v2494 = vld [vmem:[#allocation11 + $0x48] sm:$0xff]
    %v2495 = vld [vmem:[#allocation11 + $0x50] sm:$0xff]
    %v2496 = vld [vmem:[#allocation11 + $0x58] sm:$0xff]
    %v2497 = vld [vmem:[#allocation11 + $0x60] sm:$0xff]
    %v2498 = vld [vmem:[#allocation11 + $0x68] sm:$0xff]
    %v2499 = vld [vmem:[#allocation11 + $0x70] sm:$0xff]
    %v2500 = vld [vmem:[#allocation11 + $0x78] sm:$0xff]
    %v2501 = vld [vmem:[#allocation11 + $0x80] sm:$0xff]
    %v2502 = vld [vmem:[#allocation11 + $0x88] sm:$0xff]
    %v2503 = vld [vmem:[#allocation11 + $0x90] sm:$0xff]
    %v2504 = vld [vmem:[#allocation11 + $0x98] sm:$0xff]
    %v2505 = vld [vmem:[#allocation11 + $0xa0] sm:$0xff]
    %v2506 = vld [vmem:[#allocation11 + $0xa8] sm:$0xff]
    %v2507 = vld [vmem:[#allocation11 + $0xb0] sm:$0xff]
    %v2508 = vld [vmem:[#allocation11 + $0xb8] sm:$0xff]
    %v2509 = vld [vmem:[#allocation11 + $0xc0] sm:$0xff]
    %v2510 = vld [vmem:[#allocation11 + $0xc8] sm:$0xff]
    %v2511 = vld [vmem:[#allocation11 + $0xd0] sm:$0xff]
    %v2512 = vld [vmem:[#allocation11 + $0xd8] sm:$0xff]
    %v2513 = vld [vmem:[#allocation11 + $0xe0] sm:$0xff]
    %v2514 = vld [vmem:[#allocation11 + $0xe8] sm:$0xff]
    %v2515 = vld [vmem:[#allocation11 + $0xf0] sm:$0xff]
    %v2516 = vld [vmem:[#allocation11 + $0xf8] sm:$0xff]
    %v2517 = vld [vmem:[#allocation11 + $0x100] sm:$0xff]
    %v2518 = vld [vmem:[#allocation11 + $0x108] sm:$0xff]
    %v2519 = vld [vmem:[#allocation11 + $0x110] sm:$0xff]
    %v2520 = vld [vmem:[#allocation11 + $0x118] sm:$0xff]
    %v2521 = vld [vmem:[#allocation11 + $0x120] sm:$0xff]
    %v2522 = vld [vmem:[#allocation11 + $0x128] sm:$0xff]
    %v2523 = vld [vmem:[#allocation11 + $0x130] sm:$0xff]
    %v2524 = vld [vmem:[#allocation11 + $0x138] sm:$0xff]
    %v2525 = vld [vmem:[#allocation11 + $0x140] sm:$0xff]
    %v2526 = vld [vmem:[#allocation11 + $0x148] sm:$0xff]
    %v2527 = vld [vmem:[#allocation11 + $0x150] sm:$0xff]
    %v2528 = vld [vmem:[#allocation11 + $0x158] sm:$0xff]
    %v2529 = vld [vmem:[#allocation11 + $0x160] sm:$0xff]
    %v2530 = vld [vmem:[#allocation11 + $0x168] sm:$0xff]
    %v2531 = vld [vmem:[#allocation11 + $0x170] sm:$0xff]
    %v2532 = vld [vmem:[#allocation11 + $0x178] sm:$0xff]
    %v2533 = vld [vmem:[#allocation11 + $0x180] sm:$0xff]
    %v2534 = vld [vmem:[#allocation11 + $0x188] sm:$0xff]
    %v2535 = vld [vmem:[#allocation11 + $0x190] sm:$0xff]
    %v2536 = vld [vmem:[#allocation11 + $0x198] sm:$0xff]
    %v2537 = vld [vmem:[#allocation11 + $0x1a0] sm:$0xff]
    %v2538 = vld [vmem:[#allocation11 + $0x1a8] sm:$0xff]
    %v2539 = vld [vmem:[#allocation11 + $0x1b0] sm:$0xff]
    %v2540 = vld [vmem:[#allocation11 + $0x1b8] sm:$0xff]
    %v2541 = vld [vmem:[#allocation11 + $0x1c0] sm:$0xff]
    %v2542 = vld [vmem:[#allocation11 + $0x1c8] sm:$0xff]
    %v2543 = vld [vmem:[#allocation11 + $0x1d0] sm:$0xff]
    %v2544 = vld [vmem:[#allocation11 + $0x1d8] sm:$0xff]
    %v2545 = vld [vmem:[#allocation11 + $0x1e0] sm:$0xff]
    %v2546 = vld [vmem:[#allocation11 + $0x1e8] sm:$0xff]
    %v2547 = vld [vmem:[#allocation11 + $0x1f0] sm:$0xff]
    %v2548 = vld [vmem:[#allocation11 + $0x1f8] sm:$0xff]
    %v2549 = vld [vmem:[#allocation11 + $0x200] sm:$0xff]
    %v2550 = vld [vmem:[#allocation11 + $0x208] sm:$0xff]
    %v2551 = vld [vmem:[#allocation11 + $0x210] sm:$0xff]
    %v2552 = vld [vmem:[#allocation11 + $0x218] sm:$0xff]
    %v2553 = vld [vmem:[#allocation11 + $0x220] sm:$0xff]
    %v2554 = vld [vmem:[#allocation11 + $0x228] sm:$0xff]
    %v2555 = vld [vmem:[#allocation11 + $0x230] sm:$0xff]
    %v2556 = vld [vmem:[#allocation11 + $0x238] sm:$0xff]
    %v2557 = vld [vmem:[#allocation11 + $0x240] sm:$0xff]
    %v2558 = vld [vmem:[#allocation11 + $0x248] sm:$0xff]
    %v2559 = vld [vmem:[#allocation11 + $0x250] sm:$0xff]
    %v2560 = vld [vmem:[#allocation11 + $0x258] sm:$0xff]
    %v2561 = vld [vmem:[#allocation11 + $0x260] sm:$0xff]
    %v2562 = vld [vmem:[#allocation11 + $0x268] sm:$0xff]
    %v2563 = vld [vmem:[#allocation11 + $0x270] sm:$0xff]
    %v2564 = vld [vmem:[#allocation11 + $0x278] sm:$0xff]
    %v2565 = vld [vmem:[#allocation11 + $0x280] sm:$0xff]
    %v2566 = vld [vmem:[#allocation11 + $0x288] sm:$0xff]
    %v2567 = vld [vmem:[#allocation11 + $0x290] sm:$0xff]
    %v2568 = vld [vmem:[#allocation11 + $0x298] sm:$0xff]
    %v2569 = vld [vmem:[#allocation11 + $0x2a0] sm:$0xff]
    %v2570 = vld [vmem:[#allocation11 + $0x2a8] sm:$0xff]
    %v2571 = vld [vmem:[#allocation11 + $0x2b0] sm:$0xff]
    %v2572 = vld [vmem:[#allocation11 + $0x2b8] sm:$0xff]
    %v2573 = vld [vmem:[#allocation11 + $0x2c0] sm:$0xff]
    %v2574 = vld [vmem:[#allocation11 + $0x2c8] sm:$0xff]
    %v2575 = vld [vmem:[#allocation11 + $0x2d0] sm:$0xff]
    %v2576 = vld [vmem:[#allocation11 + $0x2d8] sm:$0xff]
    %v2577 = vld [vmem:[#allocation11 + $0x2e0] sm:$0xff]
    %v2578 = vld [vmem:[#allocation11 + $0x2e8] sm:$0xff]
    %v2579 = vld [vmem:[#allocation11 + $0x2f0] sm:$0xff]
    %v2580 = vld [vmem:[#allocation11 + $0x2f8] sm:$0xff]
    %v2581 = vld [vmem:[#allocation11 + $0x300] sm:$0xff]
    %v2582 = vld [vmem:[#allocation11 + $0x308] sm:$0xff]
    %v2583 = vld [vmem:[#allocation11 + $0x310] sm:$0xff]
    %v2584 = vld [vmem:[#allocation11 + $0x318] sm:$0xff]
    %v2585 = vld [vmem:[#allocation11 + $0x320] sm:$0xff]
    %v2586 = vld [vmem:[#allocation11 + $0x328] sm:$0xff]
    %v2587 = vld [vmem:[#allocation11 + $0x330] sm:$0xff]
    %v2588 = vld [vmem:[#allocation11 + $0x338] sm:$0xff]
    %v2589 = vld [vmem:[#allocation11 + $0x340] sm:$0xff]
    %v2590 = vld [vmem:[#allocation11 + $0x348] sm:$0xff]
    %v2591 = vld [vmem:[#allocation11 + $0x350] sm:$0xff]
    %v2592 = vld [vmem:[#allocation11 + $0x358] sm:$0xff]
    %v2593 = vld [vmem:[#allocation11 + $0x360] sm:$0xff]
    %v2594 = vld [vmem:[#allocation11 + $0x368] sm:$0xff]
    %v2595 = vld [vmem:[#allocation11 + $0x370] sm:$0xff]
    %v2596 = vld [vmem:[#allocation11 + $0x378] sm:$0xff]
    %v2597 = vld [vmem:[#allocation11 + $0x380] sm:$0xff]
    %v2598 = vld [vmem:[#allocation11 + $0x388] sm:$0xff]
    %v2599 = vld [vmem:[#allocation11 + $0x390] sm:$0xff]
    %v2600 = vld [vmem:[#allocation11 + $0x398] sm:$0xff]
    %v2601 = vld [vmem:[#allocation11 + $0x3a0] sm:$0xff]
    %v2602 = vld [vmem:[#allocation11 + $0x3a8] sm:$0xff]
    %v2603 = vld [vmem:[#allocation11 + $0x3b0] sm:$0xff]
    %v2604 = vld [vmem:[#allocation11 + $0x3b8] sm:$0xff]
    %v2605 = vld [vmem:[#allocation11 + $0x3c0] sm:$0xff]
    %v2606 = vld [vmem:[#allocation11 + $0x3c8] sm:$0xff]
    %v2607 = vld [vmem:[#allocation11 + $0x3d0] sm:$0xff]
    %v2608 = vld [vmem:[#allocation11 + $0x3d8] sm:$0xff]
    %v2609 = vld [vmem:[#allocation11 + $0x3e0] sm:$0xff]
    %v2610 = vld [vmem:[#allocation11 + $0x3e8] sm:$0xff]
    %v2611 = vld [vmem:[#allocation11 + $0x3f0] sm:$0xff]
    %v2612 = vld [vmem:[#allocation11 + $0x3f8] sm:$0xff]
    %v2613 = vld [vmem:[#allocation11 + $0x400] sm:$0xff]
    %v2614 = vld [vmem:[#allocation11 + $0x408] sm:$0xff]
    %v2615 = vld [vmem:[#allocation11 + $0x410] sm:$0xff]
    %v2616 = vld [vmem:[#allocation11 + $0x418] sm:$0xff]
    %v2617 = vld [vmem:[#allocation11 + $0x420] sm:$0xff]
    %v2618 = vld [vmem:[#allocation11 + $0x428] sm:$0xff]
    %v2619 = vld [vmem:[#allocation11 + $0x430] sm:$0xff]
    %v2620 = vld [vmem:[#allocation11 + $0x438] sm:$0xff]
    %v2621 = vld [vmem:[#allocation11 + $0x440] sm:$0xff]
    %v2622 = vld [vmem:[#allocation11 + $0x448] sm:$0xff]
    %v2623 = vld [vmem:[#allocation11 + $0x450] sm:$0xff]
    %v2624 = vld [vmem:[#allocation11 + $0x458] sm:$0xff]
    %v2625 = vld [vmem:[#allocation11 + $0x460] sm:$0xff]
    %v2626 = vld [vmem:[#allocation11 + $0x468] sm:$0xff]
    %v2627 = vld [vmem:[#allocation11 + $0x470] sm:$0xff]
    %v2628 = vld [vmem:[#allocation11 + $0x478] sm:$0xff]
    %v2629 = vld [vmem:[#allocation11 + $0x480] sm:$0xff]
    %v2630 = vld [vmem:[#allocation11 + $0x488] sm:$0xff]
    %v2631 = vld [vmem:[#allocation11 + $0x490] sm:$0xff]
    %v2632 = vld [vmem:[#allocation11 + $0x498] sm:$0xff]
    %v2633 = vld [vmem:[#allocation11 + $0x4a0] sm:$0xff]
    %v2634 = vld [vmem:[#allocation11 + $0x4a8] sm:$0xff]
    %v2635 = vld [vmem:[#allocation11 + $0x4b0] sm:$0xff]
    %v2636 = vld [vmem:[#allocation11 + $0x4b8] sm:$0xff]
    %v2637 = vld [vmem:[#allocation11 + $0x4c0] sm:$0xff]
    %v2638 = vld [vmem:[#allocation11 + $0x4c8] sm:$0xff]
    %v2639 = vld [vmem:[#allocation11 + $0x4d0] sm:$0xff]
    %v2640 = vld [vmem:[#allocation11 + $0x4d8] sm:$0xff]
    %v2641 = vld [vmem:[#allocation11 + $0x4e0] sm:$0xff]
    %v2642 = vld [vmem:[#allocation11 + $0x4e8] sm:$0xff]
    %v2643 = vld [vmem:[#allocation11 + $0x4f0] sm:$0xff]
    %v2644 = vld [vmem:[#allocation11 + $0x4f8] sm:$0xff]
    %v2645 = vld [vmem:[#allocation11 + $0x500] sm:$0xff]
    %v2646 = vld [vmem:[#allocation11 + $0x508] sm:$0xff]
    %v2647 = vld [vmem:[#allocation11 + $0x510] sm:$0xff]
    %v2648 = vld [vmem:[#allocation11 + $0x518] sm:$0xff]
    %v2649 = vld [vmem:[#allocation11 + $0x520] sm:$0xff]
    %v2650 = vld [vmem:[#allocation11 + $0x528] sm:$0xff]
    %v2651 = vld [vmem:[#allocation11 + $0x530] sm:$0xff]
    %v2652 = vld [vmem:[#allocation11 + $0x538] sm:$0xff]
    %v2653 = vld [vmem:[#allocation11 + $0x540] sm:$0xff]
    %v2654 = vld [vmem:[#allocation11 + $0x548] sm:$0xff]
    %v2655 = vld [vmem:[#allocation11 + $0x550] sm:$0xff]
    %v2656 = vld [vmem:[#allocation11 + $0x558] sm:$0xff]
    %v2657 = vld [vmem:[#allocation11 + $0x560] sm:$0xff]
    %v2658 = vld [vmem:[#allocation11 + $0x568] sm:$0xff]
    %v2659 = vld [vmem:[#allocation11 + $0x570] sm:$0xff]
    %v2660 = vld [vmem:[#allocation11 + $0x578] sm:$0xff]
    %v2661 = vld [vmem:[#allocation11 + $0x580] sm:$0xff]
    %v2662 = vld [vmem:[#allocation11 + $0x588] sm:$0xff]
    %v2663 = vld [vmem:[#allocation11 + $0x590] sm:$0xff]
    %v2664 = vld [vmem:[#allocation11 + $0x598] sm:$0xff]
    %v2665 = vld [vmem:[#allocation11 + $0x5a0] sm:$0xff]
    %v2666 = vld [vmem:[#allocation11 + $0x5a8] sm:$0xff]
    %v2667 = vld [vmem:[#allocation11 + $0x5b0] sm:$0xff]
    %v2668 = vld [vmem:[#allocation11 + $0x5b8] sm:$0xff]
    %v2669 = vld [vmem:[#allocation11 + $0x5c0] sm:$0xff]
    %v2670 = vld [vmem:[#allocation11 + $0x5c8] sm:$0xff]
    %v2671 = vld [vmem:[#allocation11 + $0x5d0] sm:$0xff]
    %v2672 = vld [vmem:[#allocation11 + $0x5d8] sm:$0xff]
    %v2673 = vld [vmem:[#allocation11 + $0x5e0] sm:$0xff]
    %v2674 = vld [vmem:[#allocation11 + $0x5e8] sm:$0xff]
    %v2675 = vld [vmem:[#allocation11 + $0x5f0] sm:$0xff]
    %v2676 = vld [vmem:[#allocation11 + $0x5f8] sm:$0xff]
    %v2677 = vld [vmem:[#allocation11 + $0x600] sm:$0xff]
    %v2678 = vld [vmem:[#allocation11 + $0x608] sm:$0xff]
    %v2679 = vld [vmem:[#allocation11 + $0x610] sm:$0xff]
    %v2680 = vld [vmem:[#allocation11 + $0x618] sm:$0xff]
    %v2681 = vld [vmem:[#allocation11 + $0x620] sm:$0xff]
    %v2682 = vld [vmem:[#allocation11 + $0x628] sm:$0xff]
    %v2683 = vld [vmem:[#allocation11 + $0x630] sm:$0xff]
    %v2684 = vld [vmem:[#allocation11 + $0x638] sm:$0xff]
    %v2685 = vld [vmem:[#allocation11 + $0x640] sm:$0xff]
    %v2686 = vld [vmem:[#allocation11 + $0x648] sm:$0xff]
    %v2687 = vld [vmem:[#allocation11 + $0x650] sm:$0xff]
    %v2688 = vld [vmem:[#allocation11 + $0x658] sm:$0xff]
    %v2689 = vld [vmem:[#allocation11 + $0x660] sm:$0xff]
    %v2690 = vld [vmem:[#allocation11 + $0x668] sm:$0xff]
    %v2691 = vld [vmem:[#allocation11 + $0x670] sm:$0xff]
    %v2692 = vld [vmem:[#allocation11 + $0x678] sm:$0xff]
    %v2693 = vld [vmem:[#allocation11 + $0x680] sm:$0xff]
    %v2694 = vld [vmem:[#allocation11 + $0x688] sm:$0xff]
    %v2695 = vld [vmem:[#allocation11 + $0x690] sm:$0xff]
    %v2696 = vld [vmem:[#allocation11 + $0x698] sm:$0xff]
    %v2697 = vld [vmem:[#allocation11 + $0x6a0] sm:$0xff]
    %v2698 = vld [vmem:[#allocation11 + $0x6a8] sm:$0xff]
    %v2699 = vld [vmem:[#allocation11 + $0x6b0] sm:$0xff]
    %v2700 = vld [vmem:[#allocation11 + $0x6b8] sm:$0xff]
    %v2701 = vld [vmem:[#allocation11 + $0x6c0] sm:$0xff]
    %v2702 = vld [vmem:[#allocation11 + $0x6c8] sm:$0xff]
    %v2703 = vld [vmem:[#allocation11 + $0x6d0] sm:$0xff]
    %v2704 = vld [vmem:[#allocation11 + $0x6d8] sm:$0xff]
    %v2705 = vld [vmem:[#allocation11 + $0x6e0] sm:$0xff]
    %v2706 = vld [vmem:[#allocation11 + $0x6e8] sm:$0xff]
    %v2707 = vld [vmem:[#allocation11 + $0x6f0] sm:$0xff]
    %v2708 = vld [vmem:[#allocation11 + $0x6f8] sm:$0xff]
    %v2709 = vld [vmem:[#allocation11 + $0x700] sm:$0xff]
    %v2710 = vld [vmem:[#allocation11 + $0x708] sm:$0xff]
    %v2711 = vld [vmem:[#allocation11 + $0x710] sm:$0xff]
    %v2712 = vld [vmem:[#allocation11 + $0x718] sm:$0xff]
    %v2713 = vld [vmem:[#allocation11 + $0x720] sm:$0xff]
    %v2714 = vld [vmem:[#allocation11 + $0x728] sm:$0xff]
    %v2715 = vld [vmem:[#allocation11 + $0x730] sm:$0xff]
    %v2716 = vld [vmem:[#allocation11 + $0x738] sm:$0xff]
    %v2717 = vld [vmem:[#allocation11 + $0x740] sm:$0xff]
    %v2718 = vld [vmem:[#allocation11 + $0x748] sm:$0xff]
    %v2719 = vld [vmem:[#allocation11 + $0x750] sm:$0xff]
    %v2720 = vld [vmem:[#allocation11 + $0x758] sm:$0xff]
    %v2721 = vld [vmem:[#allocation11 + $0x760] sm:$0xff]
    %v2722 = vld [vmem:[#allocation11 + $0x768] sm:$0xff]
    %v2723 = vld [vmem:[#allocation11 + $0x770] sm:$0xff]
    %v2724 = vld [vmem:[#allocation11 + $0x778] sm:$0xff]
    %v2725 = vld [vmem:[#allocation11 + $0x780] sm:$0xff]
    %v2726 = vld [vmem:[#allocation11 + $0x788] sm:$0xff]
    %v2727 = vld [vmem:[#allocation11 + $0x790] sm:$0xff]
    %v2728 = vld [vmem:[#allocation11 + $0x798] sm:$0xff]
    %v2729 = vld [vmem:[#allocation11 + $0x7a0] sm:$0xff]
    %v2730 = vld [vmem:[#allocation11 + $0x7a8] sm:$0xff]
    %v2731 = vld [vmem:[#allocation11 + $0x7b0] sm:$0xff]
    %v2732 = vld [vmem:[#allocation11 + $0x7b8] sm:$0xff]
    %v2733 = vld [vmem:[#allocation11 + $0x7c0] sm:$0xff]
    %v2734 = vld [vmem:[#allocation11 + $0x7c8] sm:$0xff]
    %v2735 = vld [vmem:[#allocation11 + $0x7d0] sm:$0xff]
    %v2736 = vld [vmem:[#allocation11 + $0x7d8] sm:$0xff]
    %v2737 = vld [vmem:[#allocation11 + $0x7e0] sm:$0xff]
    %v2738 = vld [vmem:[#allocation11 + $0x7e8] sm:$0xff]
    %v2739 = vld [vmem:[#allocation11 + $0x7f0] sm:$0xff]
    %v2740 = vld [vmem:[#allocation11 + $0x7f8] sm:$0xff]
    %v2741 = vunpack.c.l.s8.bf16 %v2485
    %v2742 = vunpack.c.l.s8.bf16 %v2486
    %v2743 = vunpack.c.l.s8.bf16 %v2487
    %v2744 = vunpack.c.l.s8.bf16 %v2488
    %v2745 = vunpack.c.l.s8.bf16 %v2489
    %v2746 = vunpack.c.l.s8.bf16 %v2490
    %v2747 = vunpack.c.l.s8.bf16 %v2491
    %v2748 = vunpack.c.l.s8.bf16 %v2492
    %v2749 = vunpack.c.h.s8.bf16 %v2485
    %v2750 = vunpack.c.h.s8.bf16 %v2486
    %v2751 = vunpack.c.h.s8.bf16 %v2487
    %v2752 = vunpack.c.h.s8.bf16 %v2488
    %v2753 = vunpack.c.h.s8.bf16 %v2489
    %v2754 = vunpack.c.h.s8.bf16 %v2490
    %v2755 = vunpack.c.h.s8.bf16 %v2491
    %v2756 = vunpack.c.h.s8.bf16 %v2492
    %v2757 = vunpack.c.l.s8.bf16 %v2493
    %v2758 = vunpack.c.l.s8.bf16 %v2494
    %v2759 = vunpack.c.l.s8.bf16 %v2495
    %v2760 = vunpack.c.l.s8.bf16 %v2496
    %v2761 = vunpack.c.l.s8.bf16 %v2497
    %v2762 = vunpack.c.l.s8.bf16 %v2498
    %v2763 = vunpack.c.l.s8.bf16 %v2499
    %v2764 = vunpack.c.l.s8.bf16 %v2500
    %v2765 = vunpack.c.h.s8.bf16 %v2493
    %v2766 = vunpack.c.h.s8.bf16 %v2494
    %v2767 = vunpack.c.h.s8.bf16 %v2495
    %v2768 = vunpack.c.h.s8.bf16 %v2496
    %v2769 = vunpack.c.h.s8.bf16 %v2497
    %v2770 = vunpack.c.h.s8.bf16 %v2498
    %v2771 = vunpack.c.h.s8.bf16 %v2499
    %v2772 = vunpack.c.h.s8.bf16 %v2500
    %v2773 = vunpack.c.l.s8.bf16 %v2501
    %v2774 = vunpack.c.l.s8.bf16 %v2502
    %v2775 = vunpack.c.l.s8.bf16 %v2503
    %v2776 = vunpack.c.l.s8.bf16 %v2504
    %v2777 = vunpack.c.l.s8.bf16 %v2505
    %v2778 = vunpack.c.l.s8.bf16 %v2506
    %v2779 = vunpack.c.l.s8.bf16 %v2507
    %v2780 = vunpack.c.l.s8.bf16 %v2508
    %v2781 = vunpack.c.h.s8.bf16 %v2501
    %v2782 = vunpack.c.h.s8.bf16 %v2502
    %v2783 = vunpack.c.h.s8.bf16 %v2503
    %v2784 = vunpack.c.h.s8.bf16 %v2504
    %v2785 = vunpack.c.h.s8.bf16 %v2505
    %v2786 = vunpack.c.h.s8.bf16 %v2506
    %v2787 = vunpack.c.h.s8.bf16 %v2507
    %v2788 = vunpack.c.h.s8.bf16 %v2508
    %v2789 = vunpack.c.l.s8.bf16 %v2509
    %v2790 = vunpack.c.l.s8.bf16 %v2510
    %v2791 = vunpack.c.l.s8.bf16 %v2511
    %v2792 = vunpack.c.l.s8.bf16 %v2512
    %v2793 = vunpack.c.l.s8.bf16 %v2513
    %v2794 = vunpack.c.l.s8.bf16 %v2514
    %v2795 = vunpack.c.l.s8.bf16 %v2515
    %v2796 = vunpack.c.l.s8.bf16 %v2516
    %v2797 = vunpack.c.h.s8.bf16 %v2509
    %v2798 = vunpack.c.h.s8.bf16 %v2510
    %v2799 = vunpack.c.h.s8.bf16 %v2511
    %v2800 = vunpack.c.h.s8.bf16 %v2512
    %v2801 = vunpack.c.h.s8.bf16 %v2513
    %v2802 = vunpack.c.h.s8.bf16 %v2514
    %v2803 = vunpack.c.h.s8.bf16 %v2515
    %v2804 = vunpack.c.h.s8.bf16 %v2516
    %v2805 = vunpack.c.l.s8.bf16 %v2517
    %v2806 = vunpack.c.l.s8.bf16 %v2518
    %v2807 = vunpack.c.l.s8.bf16 %v2519
    %v2808 = vunpack.c.l.s8.bf16 %v2520
    %v2809 = vunpack.c.l.s8.bf16 %v2521
    %v2810 = vunpack.c.l.s8.bf16 %v2522
    %v2811 = vunpack.c.l.s8.bf16 %v2523
    %v2812 = vunpack.c.l.s8.bf16 %v2524
    %v2813 = vunpack.c.h.s8.bf16 %v2517
    %v2814 = vunpack.c.h.s8.bf16 %v2518
    %v2815 = vunpack.c.h.s8.bf16 %v2519
    %v2816 = vunpack.c.h.s8.bf16 %v2520
    %v2817 = vunpack.c.h.s8.bf16 %v2521
    %v2818 = vunpack.c.h.s8.bf16 %v2522
    %v2819 = vunpack.c.h.s8.bf16 %v2523
    %v2820 = vunpack.c.h.s8.bf16 %v2524
    %v2821 = vunpack.c.l.s8.bf16 %v2525
    %v2822 = vunpack.c.l.s8.bf16 %v2526
    %v2823 = vunpack.c.l.s8.bf16 %v2527
    %v2824 = vunpack.c.l.s8.bf16 %v2528
    %v2825 = vunpack.c.l.s8.bf16 %v2529
    %v2826 = vunpack.c.l.s8.bf16 %v2530
    %v2827 = vunpack.c.l.s8.bf16 %v2531
    %v2828 = vunpack.c.l.s8.bf16 %v2532
    %v2829 = vunpack.c.h.s8.bf16 %v2525
    %v2830 = vunpack.c.h.s8.bf16 %v2526
    %v2831 = vunpack.c.h.s8.bf16 %v2527
    %v2832 = vunpack.c.h.s8.bf16 %v2528
    %v2833 = vunpack.c.h.s8.bf16 %v2529
    %v2834 = vunpack.c.h.s8.bf16 %v2530
    %v2835 = vunpack.c.h.s8.bf16 %v2531
    %v2836 = vunpack.c.h.s8.bf16 %v2532
    %v2837 = vunpack.c.l.s8.bf16 %v2533
    %v2838 = vunpack.c.l.s8.bf16 %v2534
    %v2839 = vunpack.c.l.s8.bf16 %v2535
    %v2840 = vunpack.c.l.s8.bf16 %v2536
    %v2841 = vunpack.c.l.s8.bf16 %v2537
    %v2842 = vunpack.c.l.s8.bf16 %v2538
    %v2843 = vunpack.c.l.s8.bf16 %v2539
    %v2844 = vunpack.c.l.s8.bf16 %v2540
    %v2845 = vunpack.c.h.s8.bf16 %v2533
    %v2846 = vunpack.c.h.s8.bf16 %v2534
    %v2847 = vunpack.c.h.s8.bf16 %v2535
    %v2848 = vunpack.c.h.s8.bf16 %v2536
    %v2849 = vunpack.c.h.s8.bf16 %v2537
    %v2850 = vunpack.c.h.s8.bf16 %v2538
    %v2851 = vunpack.c.h.s8.bf16 %v2539
    %v2852 = vunpack.c.h.s8.bf16 %v2540
    %v2853 = vunpack.c.l.s8.bf16 %v2541
    %v2854 = vunpack.c.l.s8.bf16 %v2542
    %v2855 = vunpack.c.l.s8.bf16 %v2543
    %v2856 = vunpack.c.l.s8.bf16 %v2544
    %v2857 = vunpack.c.l.s8.bf16 %v2545
    %v2858 = vunpack.c.l.s8.bf16 %v2546
    %v2859 = vunpack.c.l.s8.bf16 %v2547
    %v2860 = vunpack.c.l.s8.bf16 %v2548
    %v2861 = vunpack.c.h.s8.bf16 %v2541
    %v2862 = vunpack.c.h.s8.bf16 %v2542
    %v2863 = vunpack.c.h.s8.bf16 %v2543
    %v2864 = vunpack.c.h.s8.bf16 %v2544
    %v2865 = vunpack.c.h.s8.bf16 %v2545
    %v2866 = vunpack.c.h.s8.bf16 %v2546
    %v2867 = vunpack.c.h.s8.bf16 %v2547
    %v2868 = vunpack.c.h.s8.bf16 %v2548
    %v2869 = vunpack.c.l.s8.bf16 %v2549
    %v2870 = vunpack.c.l.s8.bf16 %v2550
    %v2871 = vunpack.c.l.s8.bf16 %v2551
    %v2872 = vunpack.c.l.s8.bf16 %v2552
    %v2873 = vunpack.c.l.s8.bf16 %v2553
    %v2874 = vunpack.c.l.s8.bf16 %v2554
    %v2875 = vunpack.c.l.s8.bf16 %v2555
    %v2876 = vunpack.c.l.s8.bf16 %v2556
    %v2877 = vunpack.c.h.s8.bf16 %v2549
    %v2878 = vunpack.c.h.s8.bf16 %v2550
    %v2879 = vunpack.c.h.s8.bf16 %v2551
    %v2880 = vunpack.c.h.s8.bf16 %v2552
    %v2881 = vunpack.c.h.s8.bf16 %v2553
    %v2882 = vunpack.c.h.s8.bf16 %v2554
    %v2883 = vunpack.c.h.s8.bf16 %v2555
    %v2884 = vunpack.c.h.s8.bf16 %v2556
    %v2885 = vunpack.c.l.s8.bf16 %v2557
    %v2886 = vunpack.c.l.s8.bf16 %v2558
    %v2887 = vunpack.c.l.s8.bf16 %v2559
    %v2888 = vunpack.c.l.s8.bf16 %v2560
    %v2889 = vunpack.c.l.s8.bf16 %v2561
    %v2890 = vunpack.c.l.s8.bf16 %v2562
    %v2891 = vunpack.c.l.s8.bf16 %v2563
    %v2892 = vunpack.c.l.s8.bf16 %v2564
    %v2893 = vunpack.c.h.s8.bf16 %v2557
    %v2894 = vunpack.c.h.s8.bf16 %v2558
    %v2895 = vunpack.c.h.s8.bf16 %v2559
    %v2896 = vunpack.c.h.s8.bf16 %v2560
    %v2897 = vunpack.c.h.s8.bf16 %v2561
    %v2898 = vunpack.c.h.s8.bf16 %v2562
    %v2899 = vunpack.c.h.s8.bf16 %v2563
    %v2900 = vunpack.c.h.s8.bf16 %v2564
    %v2901 = vunpack.c.l.s8.bf16 %v2565
    %v2902 = vunpack.c.l.s8.bf16 %v2566
    %v2903 = vunpack.c.l.s8.bf16 %v2567
    %v2904 = vunpack.c.l.s8.bf16 %v2568
    %v2905 = vunpack.c.l.s8.bf16 %v2569
    %v2906 = vunpack.c.l.s8.bf16 %v2570
    %v2907 = vunpack.c.l.s8.bf16 %v2571
    %v2908 = vunpack.c.l.s8.bf16 %v2572
    %v2909 = vunpack.c.h.s8.bf16 %v2565
    %v2910 = vunpack.c.h.s8.bf16 %v2566
    %v2911 = vunpack.c.h.s8.bf16 %v2567
    %v2912 = vunpack.c.h.s8.bf16 %v2568
    %v2913 = vunpack.c.h.s8.bf16 %v2569
    %v2914 = vunpack.c.h.s8.bf16 %v2570
    %v2915 = vunpack.c.h.s8.bf16 %v2571
    %v2916 = vunpack.c.h.s8.bf16 %v2572
    %v2917 = vunpack.c.l.s8.bf16 %v2573
    %v2918 = vunpack.c.l.s8.bf16 %v2574
    %v2919 = vunpack.c.l.s8.bf16 %v2575
    %v2920 = vunpack.c.l.s8.bf16 %v2576
    %v2921 = vunpack.c.l.s8.bf16 %v2577
    %v2922 = vunpack.c.l.s8.bf16 %v2578
    %v2923 = vunpack.c.l.s8.bf16 %v2579
    %v2924 = vunpack.c.l.s8.bf16 %v2580
    %v2925 = vunpack.c.h.s8.bf16 %v2573
    %v2926 = vunpack.c.h.s8.bf16 %v2574
    %v2927 = vunpack.c.h.s8.bf16 %v2575
    %v2928 = vunpack.c.h.s8.bf16 %v2576
    %v2929 = vunpack.c.h.s8.bf16 %v2577
    %v2930 = vunpack.c.h.s8.bf16 %v2578
    %v2931 = vunpack.c.h.s8.bf16 %v2579
    %v2932 = vunpack.c.h.s8.bf16 %v2580
    %v2933 = vunpack.c.l.s8.bf16 %v2581
    %v2934 = vunpack.c.l.s8.bf16 %v2582
    %v2935 = vunpack.c.l.s8.bf16 %v2583
    %v2936 = vunpack.c.l.s8.bf16 %v2584
    %v2937 = vunpack.c.l.s8.bf16 %v2585
    %v2938 = vunpack.c.l.s8.bf16 %v2586
    %v2939 = vunpack.c.l.s8.bf16 %v2587
    %v2940 = vunpack.c.l.s8.bf16 %v2588
    %v2941 = vunpack.c.h.s8.bf16 %v2581
    %v2942 = vunpack.c.h.s8.bf16 %v2582
    %v2943 = vunpack.c.h.s8.bf16 %v2583
    %v2944 = vunpack.c.h.s8.bf16 %v2584
    %v2945 = vunpack.c.h.s8.bf16 %v2585
    %v2946 = vunpack.c.h.s8.bf16 %v2586
    %v2947 = vunpack.c.h.s8.bf16 %v2587
    %v2948 = vunpack.c.h.s8.bf16 %v2588
    %v2949 = vunpack.c.l.s8.bf16 %v2589
    %v2950 = vunpack.c.l.s8.bf16 %v2590
    %v2951 = vunpack.c.l.s8.bf16 %v2591
    %v2952 = vunpack.c.l.s8.bf16 %v2592
    %v2953 = vunpack.c.l.s8.bf16 %v2593
    %v2954 = vunpack.c.l.s8.bf16 %v2594
    %v2955 = vunpack.c.l.s8.bf16 %v2595
    %v2956 = vunpack.c.l.s8.bf16 %v2596
    %v2957 = vunpack.c.h.s8.bf16 %v2589
    %v2958 = vunpack.c.h.s8.bf16 %v2590
    %v2959 = vunpack.c.h.s8.bf16 %v2591
    %v2960 = vunpack.c.h.s8.bf16 %v2592
    %v2961 = vunpack.c.h.s8.bf16 %v2593
    %v2962 = vunpack.c.h.s8.bf16 %v2594
    %v2963 = vunpack.c.h.s8.bf16 %v2595
    %v2964 = vunpack.c.h.s8.bf16 %v2596
    %v2965 = vunpack.c.l.s8.bf16 %v2597
    %v2966 = vunpack.c.l.s8.bf16 %v2598
    %v2967 = vunpack.c.l.s8.bf16 %v2599
    %v2968 = vunpack.c.l.s8.bf16 %v2600
    %v2969 = vunpack.c.l.s8.bf16 %v2601
    %v2970 = vunpack.c.l.s8.bf16 %v2602
    %v2971 = vunpack.c.l.s8.bf16 %v2603
    %v2972 = vunpack.c.l.s8.bf16 %v2604
    %v2973 = vunpack.c.h.s8.bf16 %v2597
    %v2974 = vunpack.c.h.s8.bf16 %v2598
    %v2975 = vunpack.c.h.s8.bf16 %v2599
    %v2976 = vunpack.c.h.s8.bf16 %v2600
    %v2977 = vunpack.c.h.s8.bf16 %v2601
    %v2978 = vunpack.c.h.s8.bf16 %v2602
    %v2979 = vunpack.c.h.s8.bf16 %v2603
    %v2980 = vunpack.c.h.s8.bf16 %v2604
    %v2981 = vunpack.c.l.s8.bf16 %v2605
    %v2982 = vunpack.c.l.s8.bf16 %v2606
    %v2983 = vunpack.c.l.s8.bf16 %v2607
    %v2984 = vunpack.c.l.s8.bf16 %v2608
    %v2985 = vunpack.c.l.s8.bf16 %v2609
    %v2986 = vunpack.c.l.s8.bf16 %v2610
    %v2987 = vunpack.c.l.s8.bf16 %v2611
    %v2988 = vunpack.c.l.s8.bf16 %v2612
    %v2989 = vunpack.c.h.s8.bf16 %v2605
    %v2990 = vunpack.c.h.s8.bf16 %v2606
    %v2991 = vunpack.c.h.s8.bf16 %v2607
    %v2992 = vunpack.c.h.s8.bf16 %v2608
    %v2993 = vunpack.c.h.s8.bf16 %v2609
    %v2994 = vunpack.c.h.s8.bf16 %v2610
    %v2995 = vunpack.c.h.s8.bf16 %v2611
    %v2996 = vunpack.c.h.s8.bf16 %v2612
    %v2997 = vunpack.c.l.s8.bf16 %v2613
    %v2998 = vunpack.c.l.s8.bf16 %v2614
    %v2999 = vunpack.c.l.s8.bf16 %v2615
    %v3000 = vunpack.c.l.s8.bf16 %v2616
    %v3001 = vunpack.c.l.s8.bf16 %v2617
    %v3002 = vunpack.c.l.s8.bf16 %v2618
    %v3003 = vunpack.c.l.s8.bf16 %v2619
    %v3004 = vunpack.c.l.s8.bf16 %v2620
    %v3005 = vunpack.c.h.s8.bf16 %v2613
    %v3006 = vunpack.c.h.s8.bf16 %v2614
    %v3007 = vunpack.c.h.s8.bf16 %v2615
    %v3008 = vunpack.c.h.s8.bf16 %v2616
    %v3009 = vunpack.c.h.s8.bf16 %v2617
    %v3010 = vunpack.c.h.s8.bf16 %v2618
    %v3011 = vunpack.c.h.s8.bf16 %v2619
    %v3012 = vunpack.c.h.s8.bf16 %v2620
    %v3013 = vunpack.c.l.s8.bf16 %v2621
    %v3014 = vunpack.c.l.s8.bf16 %v2622
    %v3015 = vunpack.c.l.s8.bf16 %v2623
    %v3016 = vunpack.c.l.s8.bf16 %v2624
    %v3017 = vunpack.c.l.s8.bf16 %v2625
    %v3018 = vunpack.c.l.s8.bf16 %v2626
    %v3019 = vunpack.c.l.s8.bf16 %v2627
    %v3020 = vunpack.c.l.s8.bf16 %v2628
    %v3021 = vunpack.c.h.s8.bf16 %v2621
    %v3022 = vunpack.c.h.s8.bf16 %v2622
    %v3023 = vunpack.c.h.s8.bf16 %v2623
    %v3024 = vunpack.c.h.s8.bf16 %v2624
    %v3025 = vunpack.c.h.s8.bf16 %v2625
    %v3026 = vunpack.c.h.s8.bf16 %v2626
    %v3027 = vunpack.c.h.s8.bf16 %v2627
    %v3028 = vunpack.c.h.s8.bf16 %v2628
    %v3029 = vunpack.c.l.s8.bf16 %v2629
    %v3030 = vunpack.c.l.s8.bf16 %v2630
    %v3031 = vunpack.c.l.s8.bf16 %v2631
    %v3032 = vunpack.c.l.s8.bf16 %v2632
    %v3033 = vunpack.c.l.s8.bf16 %v2633
    %v3034 = vunpack.c.l.s8.bf16 %v2634
    %v3035 = vunpack.c.l.s8.bf16 %v2635
    %v3036 = vunpack.c.l.s8.bf16 %v2636
    %v3037 = vunpack.c.h.s8.bf16 %v2629
    %v3038 = vunpack.c.h.s8.bf16 %v2630
    %v3039 = vunpack.c.h.s8.bf16 %v2631
    %v3040 = vunpack.c.h.s8.bf16 %v2632
    %v3041 = vunpack.c.h.s8.bf16 %v2633
    %v3042 = vunpack.c.h.s8.bf16 %v2634
    %v3043 = vunpack.c.h.s8.bf16 %v2635
    %v3044 = vunpack.c.h.s8.bf16 %v2636
    %v3045 = vunpack.c.l.s8.bf16 %v2637
    %v3046 = vunpack.c.l.s8.bf16 %v2638
    %v3047 = vunpack.c.l.s8.bf16 %v2639
    %v3048 = vunpack.c.l.s8.bf16 %v2640
    %v3049 = vunpack.c.l.s8.bf16 %v2641
    %v3050 = vunpack.c.l.s8.bf16 %v2642
    %v3051 = vunpack.c.l.s8.bf16 %v2643
    %v3052 = vunpack.c.l.s8.bf16 %v2644
    %v3053 = vunpack.c.h.s8.bf16 %v2637
    %v3054 = vunpack.c.h.s8.bf16 %v2638
    %v3055 = vunpack.c.h.s8.bf16 %v2639
    %v3056 = vunpack.c.h.s8.bf16 %v2640
    %v3057 = vunpack.c.h.s8.bf16 %v2641
    %v3058 = vunpack.c.h.s8.bf16 %v2642
    %v3059 = vunpack.c.h.s8.bf16 %v2643
    %v3060 = vunpack.c.h.s8.bf16 %v2644
    %v3061 = vunpack.c.l.s8.bf16 %v2645
    %v3062 = vunpack.c.l.s8.bf16 %v2646
    %v3063 = vunpack.c.l.s8.bf16 %v2647
    %v3064 = vunpack.c.l.s8.bf16 %v2648
    %v3065 = vunpack.c.l.s8.bf16 %v2649
    %v3066 = vunpack.c.l.s8.bf16 %v2650
    %v3067 = vunpack.c.l.s8.bf16 %v2651
    %v3068 = vunpack.c.l.s8.bf16 %v2652
    %v3069 = vunpack.c.h.s8.bf16 %v2645
    %v3070 = vunpack.c.h.s8.bf16 %v2646
    %v3071 = vunpack.c.h.s8.bf16 %v2647
    %v3072 = vunpack.c.h.s8.bf16 %v2648
    %v3073 = vunpack.c.h.s8.bf16 %v2649
    %v3074 = vunpack.c.h.s8.bf16 %v2650
    %v3075 = vunpack.c.h.s8.bf16 %v2651
    %v3076 = vunpack.c.h.s8.bf16 %v2652
    %v3077 = vunpack.c.l.s8.bf16 %v2653
    %v3078 = vunpack.c.l.s8.bf16 %v2654
    %v3079 = vunpack.c.l.s8.bf16 %v2655
    %v3080 = vunpack.c.l.s8.bf16 %v2656
    %v3081 = vunpack.c.l.s8.bf16 %v2657
    %v3082 = vunpack.c.l.s8.bf16 %v2658
    %v3083 = vunpack.c.l.s8.bf16 %v2659
    %v3084 = vunpack.c.l.s8.bf16 %v2660
    %v3085 = vunpack.c.h.s8.bf16 %v2653
    %v3086 = vunpack.c.h.s8.bf16 %v2654
    %v3087 = vunpack.c.h.s8.bf16 %v2655
    %v3088 = vunpack.c.h.s8.bf16 %v2656
    %v3089 = vunpack.c.h.s8.bf16 %v2657
    %v3090 = vunpack.c.h.s8.bf16 %v2658
    %v3091 = vunpack.c.h.s8.bf16 %v2659
    %v3092 = vunpack.c.h.s8.bf16 %v2660
    %v3093 = vunpack.c.l.s8.bf16 %v2661
    %v3094 = vunpack.c.l.s8.bf16 %v2662
    %v3095 = vunpack.c.l.s8.bf16 %v2663
    %v3096 = vunpack.c.l.s8.bf16 %v2664
    %v3097 = vunpack.c.l.s8.bf16 %v2665
    %v3098 = vunpack.c.l.s8.bf16 %v2666
    %v3099 = vunpack.c.l.s8.bf16 %v2667
    %v3100 = vunpack.c.l.s8.bf16 %v2668
    %v3101 = vunpack.c.h.s8.bf16 %v2661
    %v3102 = vunpack.c.h.s8.bf16 %v2662
    %v3103 = vunpack.c.h.s8.bf16 %v2663
    %v3104 = vunpack.c.h.s8.bf16 %v2664
    %v3105 = vunpack.c.h.s8.bf16 %v2665
    %v3106 = vunpack.c.h.s8.bf16 %v2666
    %v3107 = vunpack.c.h.s8.bf16 %v2667
    %v3108 = vunpack.c.h.s8.bf16 %v2668
    %v3109 = vunpack.c.l.s8.bf16 %v2669
    %v3110 = vunpack.c.l.s8.bf16 %v2670
    %v3111 = vunpack.c.l.s8.bf16 %v2671
    %v3112 = vunpack.c.l.s8.bf16 %v2672
    %v3113 = vunpack.c.l.s8.bf16 %v2673
    %v3114 = vunpack.c.l.s8.bf16 %v2674
    %v3115 = vunpack.c.l.s8.bf16 %v2675
    %v3116 = vunpack.c.l.s8.bf16 %v2676
    %v3117 = vunpack.c.h.s8.bf16 %v2669
    %v3118 = vunpack.c.h.s8.bf16 %v2670
    %v3119 = vunpack.c.h.s8.bf16 %v2671
    %v3120 = vunpack.c.h.s8.bf16 %v2672
    %v3121 = vunpack.c.h.s8.bf16 %v2673
    %v3122 = vunpack.c.h.s8.bf16 %v2674
    %v3123 = vunpack.c.h.s8.bf16 %v2675
    %v3124 = vunpack.c.h.s8.bf16 %v2676
    %v3125 = vunpack.c.l.s8.bf16 %v2677
    %v3126 = vunpack.c.l.s8.bf16 %v2678
    %v3127 = vunpack.c.l.s8.bf16 %v2679
    %v3128 = vunpack.c.l.s8.bf16 %v2680
    %v3129 = vunpack.c.l.s8.bf16 %v2681
    %v3130 = vunpack.c.l.s8.bf16 %v2682
    %v3131 = vunpack.c.l.s8.bf16 %v2683
    %v3132 = vunpack.c.l.s8.bf16 %v2684
    %v3133 = vunpack.c.h.s8.bf16 %v2677
    %v3134 = vunpack.c.h.s8.bf16 %v2678
    %v3135 = vunpack.c.h.s8.bf16 %v2679
    %v3136 = vunpack.c.h.s8.bf16 %v2680
    %v3137 = vunpack.c.h.s8.bf16 %v2681
    %v3138 = vunpack.c.h.s8.bf16 %v2682
    %v3139 = vunpack.c.h.s8.bf16 %v2683
    %v3140 = vunpack.c.h.s8.bf16 %v2684
    %v3141 = vunpack.c.l.s8.bf16 %v2685
    %v3142 = vunpack.c.l.s8.bf16 %v2686
    %v3143 = vunpack.c.l.s8.bf16 %v2687
    %v3144 = vunpack.c.l.s8.bf16 %v2688
    %v3145 = vunpack.c.l.s8.bf16 %v2689
    %v3146 = vunpack.c.l.s8.bf16 %v2690
    %v3147 = vunpack.c.l.s8.bf16 %v2691
    %v3148 = vunpack.c.l.s8.bf16 %v2692
    %v3149 = vunpack.c.h.s8.bf16 %v2685
    %v3150 = vunpack.c.h.s8.bf16 %v2686
    %v3151 = vunpack.c.h.s8.bf16 %v2687
    %v3152 = vunpack.c.h.s8.bf16 %v2688
    %v3153 = vunpack.c.h.s8.bf16 %v2689
    %v3154 = vunpack.c.h.s8.bf16 %v2690
    %v3155 = vunpack.c.h.s8.bf16 %v2691
    %v3156 = vunpack.c.h.s8.bf16 %v2692
    %v3157 = vunpack.c.l.s8.bf16 %v2693
    %v3158 = vunpack.c.l.s8.bf16 %v2694
    %v3159 = vunpack.c.l.s8.bf16 %v2695
    %v3160 = vunpack.c.l.s8.bf16 %v2696
    %v3161 = vunpack.c.l.s8.bf16 %v2697
    %v3162 = vunpack.c.l.s8.bf16 %v2698
    %v3163 = vunpack.c.l.s8.bf16 %v2699
    %v3164 = vunpack.c.l.s8.bf16 %v2700
    %v3165 = vunpack.c.h.s8.bf16 %v2693
    %v3166 = vunpack.c.h.s8.bf16 %v2694
    %v3167 = vunpack.c.h.s8.bf16 %v2695
    %v3168 = vunpack.c.h.s8.bf16 %v2696
    %v3169 = vunpack.c.h.s8.bf16 %v2697
    %v3170 = vunpack.c.h.s8.bf16 %v2698
    %v3171 = vunpack.c.h.s8.bf16 %v2699
    %v3172 = vunpack.c.h.s8.bf16 %v2700
    %v3173 = vunpack.c.l.s8.bf16 %v2701
    %v3174 = vunpack.c.l.s8.bf16 %v2702
    %v3175 = vunpack.c.l.s8.bf16 %v2703
    %v3176 = vunpack.c.l.s8.bf16 %v2704
    %v3177 = vunpack.c.l.s8.bf16 %v2705
    %v3178 = vunpack.c.l.s8.bf16 %v2706
    %v3179 = vunpack.c.l.s8.bf16 %v2707
    %v3180 = vunpack.c.l.s8.bf16 %v2708
    %v3181 = vunpack.c.h.s8.bf16 %v2701
    %v3182 = vunpack.c.h.s8.bf16 %v2702
    %v3183 = vunpack.c.h.s8.bf16 %v2703
    %v3184 = vunpack.c.h.s8.bf16 %v2704
    %v3185 = vunpack.c.h.s8.bf16 %v2705
    %v3186 = vunpack.c.h.s8.bf16 %v2706
    %v3187 = vunpack.c.h.s8.bf16 %v2707
    %v3188 = vunpack.c.h.s8.bf16 %v2708
    %v3189 = vunpack.c.l.s8.bf16 %v2709
    %v3190 = vunpack.c.l.s8.bf16 %v2710
    %v3191 = vunpack.c.l.s8.bf16 %v2711
    %v3192 = vunpack.c.l.s8.bf16 %v2712
    %v3193 = vunpack.c.l.s8.bf16 %v2713
    %v3194 = vunpack.c.l.s8.bf16 %v2714
    %v3195 = vunpack.c.l.s8.bf16 %v2715
    %v3196 = vunpack.c.l.s8.bf16 %v2716
    %v3197 = vunpack.c.h.s8.bf16 %v2709
    %v3198 = vunpack.c.h.s8.bf16 %v2710
    %v3199 = vunpack.c.h.s8.bf16 %v2711
    %v3200 = vunpack.c.h.s8.bf16 %v2712
    %v3201 = vunpack.c.h.s8.bf16 %v2713
    %v3202 = vunpack.c.h.s8.bf16 %v2714
    %v3203 = vunpack.c.h.s8.bf16 %v2715
    %v3204 = vunpack.c.h.s8.bf16 %v2716
    %v3205 = vunpack.c.l.s8.bf16 %v2717
    %v3206 = vunpack.c.l.s8.bf16 %v2718
    %v3207 = vunpack.c.l.s8.bf16 %v2719
    %v3208 = vunpack.c.l.s8.bf16 %v2720
    %v3209 = vunpack.c.l.s8.bf16 %v2721
    %v3210 = vunpack.c.l.s8.bf16 %v2722
    %v3211 = vunpack.c.l.s8.bf16 %v2723
    %v3212 = vunpack.c.l.s8.bf16 %v2724
    %v3213 = vunpack.c.h.s8.bf16 %v2717
    %v3214 = vunpack.c.h.s8.bf16 %v2718
    %v3215 = vunpack.c.h.s8.bf16 %v2719
    %v3216 = vunpack.c.h.s8.bf16 %v2720
    %v3217 = vunpack.c.h.s8.bf16 %v2721
    %v3218 = vunpack.c.h.s8.bf16 %v2722
    %v3219 = vunpack.c.h.s8.bf16 %v2723
    %v3220 = vunpack.c.h.s8.bf16 %v2724
    %v3221 = vunpack.c.l.s8.bf16 %v2725
    %v3222 = vunpack.c.l.s8.bf16 %v2726
    %v3223 = vunpack.c.l.s8.bf16 %v2727
    %v3224 = vunpack.c.l.s8.bf16 %v2728
    %v3225 = vunpack.c.l.s8.bf16 %v2729
    %v3226 = vunpack.c.l.s8.bf16 %v2730
    %v3227 = vunpack.c.l.s8.bf16 %v2731
    %v3228 = vunpack.c.l.s8.bf16 %v2732
    %v3229 = vunpack.c.h.s8.bf16 %v2725
    %v3230 = vunpack.c.h.s8.bf16 %v2726
    %v3231 = vunpack.c.h.s8.bf16 %v2727
    %v3232 = vunpack.c.h.s8.bf16 %v2728
    %v3233 = vunpack.c.h.s8.bf16 %v2729
    %v3234 = vunpack.c.h.s8.bf16 %v2730
    %v3235 = vunpack.c.h.s8.bf16 %v2731
    %v3236 = vunpack.c.h.s8.bf16 %v2732
    %v3237 = vunpack.c.l.s8.bf16 %v2733
    %v3238 = vunpack.c.l.s8.bf16 %v2734
    %v3239 = vunpack.c.l.s8.bf16 %v2735
    %v3240 = vunpack.c.l.s8.bf16 %v2736
    %v3241 = vunpack.c.l.s8.bf16 %v2737
    %v3242 = vunpack.c.l.s8.bf16 %v2738
    %v3243 = vunpack.c.l.s8.bf16 %v2739
    %v3244 = vunpack.c.l.s8.bf16 %v2740
    %v3245 = vunpack.c.h.s8.bf16 %v2733
    %v3246 = vunpack.c.h.s8.bf16 %v2734
    %v3247 = vunpack.c.h.s8.bf16 %v2735
    %v3248 = vunpack.c.h.s8.bf16 %v2736
    %v3249 = vunpack.c.h.s8.bf16 %v2737
    %v3250 = vunpack.c.h.s8.bf16 %v2738
    %v3251 = vunpack.c.h.s8.bf16 %v2739
    %v3252 = vunpack.c.h.s8.bf16 %v2740
    %v3253 = vpack.c.bf16 %v2477, %v2477
    %v3254 = vpack.c.bf16 %v2478, %v2478
    %v3255 = vpack.c.bf16 %v2479, %v2479
    %v3256 = vpack.c.bf16 %v2480, %v2480
    %v3257 = vpack.c.bf16 %v2481, %v2481
    %v3258 = vpack.c.bf16 %v2482, %v2482
    %v3259 = vpack.c.bf16 %v2483, %v2483
    %v3260 = vpack.c.bf16 %v2484, %v2484
    %3261 = vmatprep.subr.bf16.mxu0 %v2742
    %3262 = vmatpush1.bf16.msra.mxu0 %v2741
    %3263 = vmatprep.subr.bf16.mxu0 %v2750
    %3264 = vmatpush1.bf16.msra.mxu0 %v2749
    %3265 = vmatprep.subr.bf16.mxu0 %v2758
    %3266 = vmatpush1.bf16.msra.mxu0 %v2757
    %3267 = vmatprep.subr.bf16.mxu0 %v2766
    %3268 = vmatpush1.bf16.msra.mxu0 %v2765
    %3269 = vmatprep.subr.bf16.mxu0 %v2774
    %3270 = vmatpush1.bf16.msra.mxu0 %v2773
    %3271 = vmatprep.subr.bf16.mxu0 %v2782
    %3272 = vmatpush1.bf16.msra.mxu0 %v2781
    %3273 = vmatprep.subr.bf16.mxu0 %v2790
    %3274 = vmatpush1.bf16.msra.mxu0 %v2789
    %3275 = vmatprep.subr.bf16.mxu0 %v2798
    %3276 = vmatpush1.bf16.msra.mxu0 %v2797
    %3277 = vmatprep.subr.bf16.mxu0 %v2806
    %3278 = vmatpush1.bf16.msra.mxu0 %v2805
    %3279 = vmatprep.subr.bf16.mxu0 %v2814
    %3280 = vmatpush1.bf16.msra.mxu0 %v2813
    %3281 = vmatprep.subr.bf16.mxu0 %v2822
    %3282 = vmatpush1.bf16.msra.mxu0 %v2821
    %3283 = vmatprep.subr.bf16.mxu0 %v2830
    %3284 = vmatpush1.bf16.msra.mxu0 %v2829
    %3285 = vmatprep.subr.bf16.mxu0 %v2838
    %3286 = vmatpush1.bf16.msra.mxu0 %v2837
    %3287 = vmatprep.subr.bf16.mxu0 %v2846
    %3288 = vmatpush1.bf16.msra.mxu0 %v2845
    %3289 = vmatprep.subr.bf16.mxu0 %v2854
    %3290 = vmatpush1.bf16.msra.mxu0 %v2853
    %3291 = vmatprep.subr.bf16.mxu0 %v2862
    %3292 = vmatpush1.bf16.msra.mxu0 %v2861
    %3293 = vmatprep.mubr.bf16.mxu0 %v3254
    %3294 = vmatmul.mubr.bf16.gmra.mrb[0].mxu0 %v3253
    %v3295 = vpop.f32.mrb[0].mxu0
    %v3296 = vadd.f32 0.0, %v3295
    %v3297 = vpop.f32.mrb[0].mxu0
    %v3298 = vadd.f32 0.0, %v3297
    %v3299 = vpop.f32.mrb[0].mxu0
    %v3300 = vpop.f32.mrb[0].mxu0
    %3301 = vdwg.mxu0
    %3302 = vmatprep.subr.bf16.mxu0 %v2870
    %3303 = vmatpush1.bf16.msra.mxu0 %v2869
    %3304 = vmatprep.subr.bf16.mxu0 %v2878
    %3305 = vmatpush1.bf16.msra.mxu0 %v2877
    %3306 = vmatprep.subr.bf16.mxu0 %v2886
    %3307 = vmatpush1.bf16.msra.mxu0 %v2885
    %3308 = vmatprep.subr.bf16.mxu0 %v2894
    %3309 = vmatpush1.bf16.msra.mxu0 %v2893
    %3310 = vmatprep.subr.bf16.mxu0 %v2902
    %3311 = vmatpush1.bf16.msra.mxu0 %v2901
    %3312 = vmatprep.subr.bf16.mxu0 %v2910
    %3313 = vmatpush1.bf16.msra.mxu0 %v2909
    %3314 = vmatprep.subr.bf16.mxu0 %v2918
    %3315 = vmatpush1.bf16.msra.mxu0 %v2917
    %3316 = vmatprep.subr.bf16.mxu0 %v2926
    %3317 = vmatpush1.bf16.msra.mxu0 %v2925
    %3318 = vmatprep.subr.bf16.mxu0 %v2934
    %3319 = vmatpush1.bf16.msra.mxu0 %v2933
    %3320 = vmatprep.subr.bf16.mxu0 %v2942
    %3321 = vmatpush1.bf16.msra.mxu0 %v2941
    %3322 = vmatprep.subr.bf16.mxu0 %v2950
    %3323 = vmatpush1.bf16.msra.mxu0 %v2949
    %3324 = vmatprep.subr.bf16.mxu0 %v2958
    %3325 = vmatpush1.bf16.msra.mxu0 %v2957
    %3326 = vmatprep.subr.bf16.mxu0 %v2966
    %3327 = vmatpush1.bf16.msra.mxu0 %v2965
    %3328 = vmatprep.subr.bf16.mxu0 %v2974
    %3329 = vmatpush1.bf16.msra.mxu0 %v2973
    %3330 = vmatprep.subr.bf16.mxu0 %v2982
    %3331 = vmatpush1.bf16.msra.mxu0 %v2981
    %3332 = vmatprep.subr.bf16.mxu0 %v2990
    %3333 = vmatpush1.bf16.msra.mxu0 %v2989
    %3334 = vmatprep.mubr.bf16.mxu0 %v3256
    %3335 = vmatmul.mubr.bf16.gmra.mrb[0].mxu0 %v3255
    %v3336 = vpop.f32.mrb[0].mxu0
    %v3337 = vadd.f32 %v3296, %v3336
    %v3338 = vpop.f32.mrb[0].mxu0
    %v3339 = vadd.f32 %v3298, %v3338
    %v3340 = vpop.f32.mrb[0].mxu0
    %v3341 = vpop.f32.mrb[0].mxu0
    %3342 = vdwg.mxu0
    %3343 = vmatprep.subr.bf16.mxu0 %v2998
    %3344 = vmatpush1.bf16.msra.mxu0 %v2997
    %3345 = vmatprep.subr.bf16.mxu0 %v3006
    %3346 = vmatpush1.bf16.msra.mxu0 %v3005
    %3347 = vmatprep.subr.bf16.mxu0 %v3014
    %3348 = vmatpush1.bf16.msra.mxu0 %v3013
    %3349 = vmatprep.subr.bf16.mxu0 %v3022
    %3350 = vmatpush1.bf16.msra.mxu0 %v3021
    %3351 = vmatprep.subr.bf16.mxu0 %v3030
    %3352 = vmatpush1.bf16.msra.mxu0 %v3029
    %3353 = vmatprep.subr.bf16.mxu0 %v3038
    %3354 = vmatpush1.bf16.msra.mxu0 %v3037
    %3355 = vmatprep.subr.bf16.mxu0 %v3046
    %3356 = vmatpush1.bf16.msra.mxu0 %v3045
    %3357 = vmatprep.subr.bf16.mxu0 %v3054
    %3358 = vmatpush1.bf16.msra.mxu0 %v3053
    %3359 = vmatprep.subr.bf16.mxu0 %v3062
    %3360 = vmatpush1.bf16.msra.mxu0 %v3061
    %3361 = vmatprep.subr.bf16.mxu0 %v3070
    %3362 = vmatpush1.bf16.msra.mxu0 %v3069
    %3363 = vmatprep.subr.bf16.mxu0 %v3078
    %3364 = vmatpush1.bf16.msra.mxu0 %v3077
    %3365 = vmatprep.subr.bf16.mxu0 %v3086
    %3366 = vmatpush1.bf16.msra.mxu0 %v3085
    %3367 = vmatprep.subr.bf16.mxu0 %v3094
    %3368 = vmatpush1.bf16.msra.mxu0 %v3093
    %3369 = vmatprep.subr.bf16.mxu0 %v3102
    %3370 = vmatpush1.bf16.msra.mxu0 %v3101
    %3371 = vmatprep.subr.bf16.mxu0 %v3110
    %3372 = vmatpush1.bf16.msra.mxu0 %v3109
    %3373 = vmatprep.subr.bf16.mxu0 %v3118
    %3374 = vmatpush1.bf16.msra.mxu0 %v3117
    %3375 = vmatprep.mubr.bf16.mxu0 %v3258
    %3376 = vmatmul.mubr.bf16.gmra.mrb[0].mxu0 %v3257
    %v3377 = vpop.f32.mrb[0].mxu0
    %v3378 = vadd.f32 %v3337, %v3377
    %v3379 = vpop.f32.mrb[0].mxu0
    %v3380 = vadd.f32 %v3339, %v3379
    %v3381 = vpop.f32.mrb[0].mxu0
    %v3382 = vpop.f32.mrb[0].mxu0
    %3383 = vdwg.mxu0
    %3384 = vmatprep.subr.bf16.mxu0 %v3126
    %3385 = vmatpush1.bf16.msra.mxu0 %v3125
    %3386 = vmatprep.subr.bf16.mxu0 %v3134
    %3387 = vmatpush1.bf16.msra.mxu0 %v3133
    %3388 = vmatprep.subr.bf16.mxu0 %v3142
    %3389 = vmatpush1.bf16.msra.mxu0 %v3141
    %3390 = vmatprep.subr.bf16.mxu0 %v3150
    %3391 = vmatpush1.bf16.msra.mxu0 %v3149
    %3392 = vmatprep.subr.bf16.mxu0 %v3158
    %3393 = vmatpush1.bf16.msra.mxu0 %v3157
    %3394 = vmatprep.subr.bf16.mxu0 %v3166
    %3395 = vmatpush1.bf16.msra.mxu0 %v3165
    %3396 = vmatprep.subr.bf16.mxu0 %v3174
    %3397 = vmatpush1.bf16.msra.mxu0 %v3173
    %3398 = vmatprep.subr.bf16.mxu0 %v3182
    %3399 = vmatpush1.bf16.msra.mxu0 %v3181
    %3400 = vmatprep.subr.bf16.mxu0 %v3190
    %3401 = vmatpush1.bf16.msra.mxu0 %v3189
    %3402 = vmatprep.subr.bf16.mxu0 %v3198
    %3403 = vmatpush1.bf16.msra.mxu0 %v3197
    %3404 = vmatprep.subr.bf16.mxu0 %v3206
    %3405 = vmatpush1.bf16.msra.mxu0 %v3205
    %3406 = vmatprep.subr.bf16.mxu0 %v3214
    %3407 = vmatpush1.bf16.msra.mxu0 %v3213
    %3408 = vmatprep.subr.bf16.mxu0 %v3222
    %3409 = vmatpush1.bf16.msra.mxu0 %v3221
    %3410 = vmatprep.subr.bf16.mxu0 %v3230
    %3411 = vmatpush1.bf16.msra.mxu0 %v3229
    %3412 = vmatprep.subr.bf16.mxu0 %v3238
    %3413 = vmatpush1.bf16.msra.mxu0 %v3237
    %3414 = vmatprep.subr.bf16.mxu0 %v3246
    %3415 = vmatpush1.bf16.msra.mxu0 %v3245
    %3416 = vmatprep.mubr.bf16.mxu0 %v3260
    %3417 = vmatmul.mubr.bf16.gmra.mrb[0].mxu0 %v3259
    %v3418 = vpop.f32.mrb[0].mxu0
    %v3419 = vadd.f32 %v3378, %v3418
    %v3420 = vpop.f32.mrb[0].mxu0
    %v3421 = vadd.f32 %v3380, %v3420
    %v3422 = vpop.f32.mrb[0].mxu0
    %v3423 = vpop.f32.mrb[0].mxu0
    %3424 = vdwg.mxu0
    %3425 = vmatprep.subr.bf16.mxu0 %v2744
    %3426 = vmatpush1.bf16.msra.mxu0 %v2743
    %3427 = vmatprep.subr.bf16.mxu0 %v2752
    %3428 = vmatpush1.bf16.msra.mxu0 %v2751
    %3429 = vmatprep.subr.bf16.mxu0 %v2760
    %3430 = vmatpush1.bf16.msra.mxu0 %v2759
    %3431 = vmatprep.subr.bf16.mxu0 %v2768
    %3432 = vmatpush1.bf16.msra.mxu0 %v2767
    %3433 = vmatprep.subr.bf16.mxu0 %v2776
    %3434 = vmatpush1.bf16.msra.mxu0 %v2775
    %3435 = vmatprep.subr.bf16.mxu0 %v2784
    %3436 = vmatpush1.bf16.msra.mxu0 %v2783
    %3437 = vmatprep.subr.bf16.mxu0 %v2792
    %3438 = vmatpush1.bf16.msra.mxu0 %v2791
    %3439 = vmatprep.subr.bf16.mxu0 %v2800
    %3440 = vmatpush1.bf16.msra.mxu0 %v2799
    %3441 = vmatprep.subr.bf16.mxu0 %v2808
    %3442 = vmatpush1.bf16.msra.mxu0 %v2807
    %3443 = vmatprep.subr.bf16.mxu0 %v2816
    %3444 = vmatpush1.bf16.msra.mxu0 %v2815
    %3445 = vmatprep.subr.bf16.mxu0 %v2824
    %3446 = vmatpush1.bf16.msra.mxu0 %v2823
    %3447 = vmatprep.subr.bf16.mxu0 %v2832
    %3448 = vmatpush1.bf16.msra.mxu0 %v2831
    %3449 = vmatprep.subr.bf16.mxu0 %v2840
    %3450 = vmatpush1.bf16.msra.mxu0 %v2839
    %3451 = vmatprep.subr.bf16.mxu0 %v2848
    %3452 = vmatpush1.bf16.msra.mxu0 %v2847
    %3453 = vmatprep.subr.bf16.mxu0 %v2856
    %3454 = vmatpush1.bf16.msra.mxu0 %v2855
    %3455 = vmatprep.subr.bf16.mxu0 %v2864
    %3456 = vmatpush1.bf16.msra.mxu0 %v2863
    %3457 = vmatprep.mubr.bf16.mxu0 %v3254
    %3458 = vmatmul.mubr.bf16.gmra.mrb[0].mxu0 %v3253
    %v3459 = vpop.f32.mrb[0].mxu0
    %v3460 = vadd.f32 0.0, %v3459
    %v3461 = vpop.f32.mrb[0].mxu0
    %v3462 = vadd.f32 0.0, %v3461
    %v3463 = vpop.f32.mrb[0].mxu0
    %v3464 = vpop.f32.mrb[0].mxu0
    %3465 = vdwg.mxu0
    %3466 = vmatprep.subr.bf16.mxu0 %v2872
    %3467 = vmatpush1.bf16.msra.mxu0 %v2871
    %3468 = vmatprep.subr.bf16.mxu0 %v2880
    %3469 = vmatpush1.bf16.msra.mxu0 %v2879
    %3470 = vmatprep.subr.bf16.mxu0 %v2888
    %3471 = vmatpush1.bf16.msra.mxu0 %v2887
    %3472 = vmatprep.subr.bf16.mxu0 %v2896
    %3473 = vmatpush1.bf16.msra.mxu0 %v2895
    %3474 = vmatprep.subr.bf16.mxu0 %v2904
    %3475 = vmatpush1.bf16.msra.mxu0 %v2903
    %3476 = vmatprep.subr.bf16.mxu0 %v2912
    %3477 = vmatpush1.bf16.msra.mxu0 %v2911
    %3478 = vmatprep.subr.bf16.mxu0 %v2920
    %3479 = vmatpush1.bf16.msra.mxu0 %v2919
    %3480 = vmatprep.subr.bf16.mxu0 %v2928
    %3481 = vmatpush1.bf16.msra.mxu0 %v2927
    %3482 = vmatprep.subr.bf16.mxu0 %v2936
    %3483 = vmatpush1.bf16.msra.mxu0 %v2935
    %3484 = vmatprep.subr.bf16.mxu0 %v2944
    %3485 = vmatpush1.bf16.msra.mxu0 %v2943
    %3486 = vmatprep.subr.bf16.mxu0 %v2952
    %3487 = vmatpush1.bf16.msra.mxu0 %v2951
    %3488 = vmatprep.subr.bf16.mxu0 %v2960
    %3489 = vmatpush1.bf16.msra.mxu0 %v2959
    %3490 = vmatprep.subr.bf16.mxu0 %v2968
    %3491 = vmatpush1.bf16.msra.mxu0 %v2967
    %3492 = vmatprep.subr.bf16.mxu0 %v2976
    %3493 = vmatpush1.bf16.msra.mxu0 %v2975
    %3494 = vmatprep.subr.bf16.mxu0 %v2984
    %3495 = vmatpush1.bf16.msra.mxu0 %v2983
    %3496 = vmatprep.subr.bf16.mxu0 %v2992
    %3497 = vmatpush1.bf16.msra.mxu0 %v2991
    %3498 = vmatprep.mubr.bf16.mxu0 %v3256
    %3499 = vmatmul.mubr.bf16.gmra.mrb[0].mxu0 %v3255
    %v3500 = vpop.f32.mrb[0].mxu0
    %v3501 = vadd.f32 %v3460, %v3500
    %v3502 = vpop.f32.mrb[0].mxu0
    %v3503 = vadd.f32 %v3462, %v3502
    %v3504 = vpop.f32.mrb[0].mxu0
    %v3505 = vpop.f32.mrb[0].mxu0
    %3506 = vdwg.mxu0
    %3507 = vmatprep.subr.bf16.mxu0 %v3000
    %3508 = vmatpush1.bf16.msra.mxu0 %v2999
    %3509 = vmatprep.subr.bf16.mxu0 %v3008
    %3510 = vmatpush1.bf16.msra.mxu0 %v3007
    %3511 = vmatprep.subr.bf16.mxu0 %v3016
    %3512 = vmatpush1.bf16.msra.mxu0 %v3015
    %3513 = vmatprep.subr.bf16.mxu0 %v3024
    %3514 = vmatpush1.bf16.msra.mxu0 %v3023
    %3515 = vmatprep.subr.bf16.mxu0 %v3032
    %3516 = vmatpush1.bf16.msra.mxu0 %v3031
    %3517 = vmatprep.subr.bf16.mxu0 %v3040
    %3518 = vmatpush1.bf16.msra.mxu0 %v3039
    %3519 = vmatprep.subr.bf16.mxu0 %v3048
    %3520 = vmatpush1.bf16.msra.mxu0 %v3047
    %3521 = vmatprep.subr.bf16.mxu0 %v3056
    %3522 = vmatpush1.bf16.msra.mxu0 %v3055
    %3523 = vmatprep.subr.bf16.mxu0 %v3064
    %3524 = vmatpush1.bf16.msra.mxu0 %v3063
    %3525 = vmatprep.subr.bf16.mxu0 %v3072
    %3526 = vmatpush1.bf16.msra.mxu0 %v3071
    %3527 = vmatprep.subr.bf16.mxu0 %v3080
    %3528 = vmatpush1.bf16.msra.mxu0 %v3079
    %3529 = vmatprep.subr.bf16.mxu0 %v3088
    %3530 = vmatpush1.bf16.msra.mxu0 %v3087
    %3531 = vmatprep.subr.bf16.mxu0 %v3096
    %3532 = vmatpush1.bf16.msra.mxu0 %v3095
    %3533 = vmatprep.subr.bf16.mxu0 %v3104
    %3534 = vmatpush1.bf16.msra.mxu0 %v3103
    %3535 = vmatprep.subr.bf16.mxu0 %v3112
    %3536 = vmatpush1.bf16.msra.mxu0 %v3111
    %3537 = vmatprep.subr.bf16.mxu0 %v3120
    %3538 = vmatpush1.bf16.msra.mxu0 %v3119
    %3539 = vmatprep.mubr.bf16.mxu0 %v3258
    %3540 = vmatmul.mubr.bf16.gmra.mrb[0].mxu0 %v3257
    %v3541 = vpop.f32.mrb[0].mxu0
    %v3542 = vadd.f32 %v3501, %v3541
    %v3543 = vpop.f32.mrb[0].mxu0
    %v3544 = vadd.f32 %v3503, %v3543
    %v3545 = vpop.f32.mrb[0].mxu0
    %v3546 = vpop.f32.mrb[0].mxu0
    %3547 = vdwg.mxu0
    %3548 = vmatprep.subr.bf16.mxu0 %v3128
    %3549 = vmatpush1.bf16.msra.mxu0 %v3127
    %3550 = vmatprep.subr.bf16.mxu0 %v3136
    %3551 = vmatpush1.bf16.msra.mxu0 %v3135
    %3552 = vmatprep.subr.bf16.mxu0 %v3144
    %3553 = vmatpush1.bf16.msra.mxu0 %v3143
    %3554 = vmatprep.subr.bf16.mxu0 %v3152
    %3555 = vmatpush1.bf16.msra.mxu0 %v3151
    %3556 = vmatprep.subr.bf16.mxu0 %v3160
    %3557 = vmatpush1.bf16.msra.mxu0 %v3159
    %3558 = vmatprep.subr.bf16.mxu0 %v3168
    %3559 = vmatpush1.bf16.msra.mxu0 %v3167
    %3560 = vmatprep.subr.bf16.mxu0 %v3176
    %3561 = vmatpush1.bf16.msra.mxu0 %v3175
    %3562 = vmatprep.subr.bf16.mxu0 %v3184
    %3563 = vmatpush1.bf16.msra.mxu0 %v3183
    %3564 = vmatprep.subr.bf16.mxu0 %v3192
    %3565 = vmatpush1.bf16.msra.mxu0 %v3191
    %3566 = vmatprep.subr.bf16.mxu0 %v3200
    %3567 = vmatpush1.bf16.msra.mxu0 %v3199
    %3568 = vmatprep.subr.bf16.mxu0 %v3208
    %3569 = vmatpush1.bf16.msra.mxu0 %v3207
    %3570 = vmatprep.subr.bf16.mxu0 %v3216
    %3571 = vmatpush1.bf16.msra.mxu0 %v3215
    %3572 = vmatprep.subr.bf16.mxu0 %v3224
    %3573 = vmatpush1.bf16.msra.mxu0 %v3223
    %3574 = vmatprep.subr.bf16.mxu0 %v3232
    %3575 = vmatpush1.bf16.msra.mxu0 %v3231
    %3576 = vmatprep.subr.bf16.mxu0 %v3240
    %3577 = vmatpush1.bf16.msra.mxu0 %v3239
    %3578 = vmatprep.subr.bf16.mxu0 %v3248
    %3579 = vmatpush1.bf16.msra.mxu0 %v3247
    %3580 = vmatprep.mubr.bf16.mxu0 %v3260
    %3581 = vmatmul.mubr.bf16.gmra.mrb[0].mxu0 %v3259
    %v3582 = vpop.f32.mrb[0].mxu0
    %v3583 = vadd.f32 %v3542, %v3582
    %v3584 = vpop.f32.mrb[0].mxu0
    %v3585 = vadd.f32 %v3544, %v3584
    %v3586 = vpop.f32.mrb[0].mxu0
    %v3587 = vpop.f32.mrb[0].mxu0
    %3588 = vdwg.mxu0
    %3589 = vmatprep.subr.bf16.mxu0 %v2746
    %3590 = vmatpush1.bf16.msra.mxu0 %v2745
    %3591 = vmatprep.subr.bf16.mxu0 %v2754
    %3592 = vmatpush1.bf16.msra.mxu0 %v2753
    %3593 = vmatprep.subr.bf16.mxu0 %v2762
    %3594 = vmatpush1.bf16.msra.mxu0 %v2761
    %3595 = vmatprep.subr.bf16.mxu0 %v2770
    %3596 = vmatpush1.bf16.msra.mxu0 %v2769
    %3597 = vmatprep.subr.bf16.mxu0 %v2778
    %3598 = vmatpush1.bf16.msra.mxu0 %v2777
    %3599 = vmatprep.subr.bf16.mxu0 %v2786
    %3600 = vmatpush1.bf16.msra.mxu0 %v2785
    %3601 = vmatprep.subr.bf16.mxu0 %v2794
    %3602 = vmatpush1.bf16.msra.mxu0 %v2793
    %3603 = vmatprep.subr.bf16.mxu0 %v2802
    %3604 = vmatpush1.bf16.msra.mxu0 %v2801
    %3605 = vmatprep.subr.bf16.mxu0 %v2810
    %3606 = vmatpush1.bf16.msra.mxu0 %v2809
    %3607 = vmatprep.subr.bf16.mxu0 %v2818
    %3608 = vmatpush1.bf16.msra.mxu0 %v2817
    %3609 = vmatprep.subr.bf16.mxu0 %v2826
    %3610 = vmatpush1.bf16.msra.mxu0 %v2825
    %3611 = vmatprep.subr.bf16.mxu0 %v2834
    %3612 = vmatpush1.bf16.msra.mxu0 %v2833
    %3613 = vmatprep.subr.bf16.mxu0 %v2842
    %3614 = vmatpush1.bf16.msra.mxu0 %v2841
    %3615 = vmatprep.subr.bf16.mxu0 %v2850
    %3616 = vmatpush1.bf16.msra.mxu0 %v2849
    %3617 = vmatprep.subr.bf16.mxu0 %v2858
    %3618 = vmatpush1.bf16.msra.mxu0 %v2857
    %3619 = vmatprep.subr.bf16.mxu0 %v2866
    %3620 = vmatpush1.bf16.msra.mxu0 %v2865
    %3621 = vmatprep.mubr.bf16.mxu0 %v3254
    %3622 = vmatmul.mubr.bf16.gmra.mrb[0].mxu0 %v3253
    %v3623 = vpop.f32.mrb[0].mxu0
    %v3624 = vadd.f32 0.0, %v3623
    %v3625 = vpop.f32.mrb[0].mxu0
    %v3626 = vadd.f32 0.0, %v3625
    %v3627 = vpop.f32.mrb[0].mxu0
    %v3628 = vpop.f32.mrb[0].mxu0
    %3629 = vdwg.mxu0
    %3630 = vmatprep.subr.bf16.mxu0 %v2874
    %3631 = vmatpush1.bf16.msra.mxu0 %v2873
    %3632 = vmatprep.subr.bf16.mxu0 %v2882
    %3633 = vmatpush1.bf16.msra.mxu0 %v2881
    %3634 = vmatprep.subr.bf16.mxu0 %v2890
    %3635 = vmatpush1.bf16.msra.mxu0 %v2889
    %3636 = vmatprep.subr.bf16.mxu0 %v2898
    %3637 = vmatpush1.bf16.msra.mxu0 %v2897
    %3638 = vmatprep.subr.bf16.mxu0 %v2906
    %3639 = vmatpush1.bf16.msra.mxu0 %v2905
    %3640 = vmatprep.subr.bf16.mxu0 %v2914
    %3641 = vmatpush1.bf16.msra.mxu0 %v2913
    %3642 = vmatprep.subr.bf16.mxu0 %v2922
    %3643 = vmatpush1.bf16.msra.mxu0 %v2921
    %3644 = vmatprep.subr.bf16.mxu0 %v2930
    %3645 = vmatpush1.bf16.msra.mxu0 %v2929
    %3646 = vmatprep.subr.bf16.mxu0 %v2938
    %3647 = vmatpush1.bf16.msra.mxu0 %v2937
    %3648 = vmatprep.subr.bf16.mxu0 %v2946
    %3649 = vmatpush1.bf16.msra.mxu0 %v2945
    %3650 = vmatprep.subr.bf16.mxu0 %v2954
    %3651 = vmatpush1.bf16.msra.mxu0 %v2953
    %3652 = vmatprep.subr.bf16.mxu0 %v2962
    %3653 = vmatpush1.bf16.msra.mxu0 %v2961
    %3654 = vmatprep.subr.bf16.mxu0 %v2970
    %3655 = vmatpush1.bf16.msra.mxu0 %v2969
    %3656 = vmatprep.subr.bf16.mxu0 %v2978
    %3657 = vmatpush1.bf16.msra.mxu0 %v2977
    %3658 = vmatprep.subr.bf16.mxu0 %v2986
    %3659 = vmatpush1.bf16.msra.mxu0 %v2985
    %3660 = vmatprep.subr.bf16.mxu0 %v2994
    %3661 = vmatpush1.bf16.msra.mxu0 %v2993
    %3662 = vmatprep.mubr.bf16.mxu0 %v3256
    %3663 = vmatmul.mubr.bf16.gmra.mrb[0].mxu0 %v3255
    %v3664 = vpop.f32.mrb[0].mxu0
    %v3665 = vadd.f32 %v3624, %v3664
    %v3666 = vpop.f32.mrb[0].mxu0
    %v3667 = vadd.f32 %v3626, %v3666
    %v3668 = vpop.f32.mrb[0].mxu0
    %v3669 = vpop.f32.mrb[0].mxu0
    %3670 = vdwg.mxu0
    %3671 = vmatprep.subr.bf16.mxu0 %v3002
    %3672 = vmatpush1.bf16.msra.mxu0 %v3001
    %3673 = vmatprep.subr.bf16.mxu0 %v3010
    %3674 = vmatpush1.bf16.msra.mxu0 %v3009
    %3675 = vmatprep.subr.bf16.mxu0 %v3018
    %3676 = vmatpush1.bf16.msra.mxu0 %v3017
    %3677 = vmatprep.subr.bf16.mxu0 %v3026
    %3678 = vmatpush1.bf16.msra.mxu0 %v3025
    %3679 = vmatprep.subr.bf16.mxu0 %v3034
    %3680 = vmatpush1.bf16.msra.mxu0 %v3033
    %3681 = vmatprep.subr.bf16.mxu0 %v3042
    %3682 = vmatpush1.bf16.msra.mxu0 %v3041
    %3683 = vmatprep.subr.bf16.mxu0 %v3050
    %3684 = vmatpush1.bf16.msra.mxu0 %v3049
    %3685 = vmatprep.subr.bf16.mxu0 %v3058
    %3686 = vmatpush1.bf16.msra.mxu0 %v3057
    %3687 = vmatprep.subr.bf16.mxu0 %v3066
    %3688 = vmatpush1.bf16.msra.mxu0 %v3065
    %3689 = vmatprep.subr.bf16.mxu0 %v3074
    %3690 = vmatpush1.bf16.msra.mxu0 %v3073
    %3691 = vmatprep.subr.bf16.mxu0 %v3082
    %3692 = vmatpush1.bf16.msra.mxu0 %v3081
    %3693 = vmatprep.subr.bf16.mxu0 %v3090
    %3694 = vmatpush1.bf16.msra.mxu0 %v3089
    %3695 = vmatprep.subr.bf16.mxu0 %v3098
    %3696 = vmatpush1.bf16.msra.mxu0 %v3097
    %3697 = vmatprep.subr.bf16.mxu0 %v3106
    %3698 = vmatpush1.bf16.msra.mxu0 %v3105
    %3699 = vmatprep.subr.bf16.mxu0 %v3114
    %3700 = vmatpush1.bf16.msra.mxu0 %v3113
    %3701 = vmatprep.subr.bf16.mxu0 %v3122
    %3702 = vmatpush1.bf16.msra.mxu0 %v3121
    %3703 = vmatprep.mubr.bf16.mxu0 %v3258
    %3704 = vmatmul.mubr.bf16.gmra.mrb[0].mxu0 %v3257
    %v3705 = vpop.f32.mrb[0].mxu0
    %v3706 = vadd.f32 %v3665, %v3705
    %v3707 = vpop.f32.mrb[0].mxu0
    %v3708 = vadd.f32 %v3667, %v3707
    %v3709 = vpop.f32.mrb[0].mxu0
    %v3710 = vpop.f32.mrb[0].mxu0
    %3711 = vdwg.mxu0
    %3712 = vmatprep.subr.bf16.mxu0 %v3130
    %3713 = vmatpush1.bf16.msra.mxu0 %v3129
    %3714 = vmatprep.subr.bf16.mxu0 %v3138
    %3715 = vmatpush1.bf16.msra.mxu0 %v3137
    %3716 = vmatprep.subr.bf16.mxu0 %v3146
    %3717 = vmatpush1.bf16.msra.mxu0 %v3145
    %3718 = vmatprep.subr.bf16.mxu0 %v3154
    %3719 = vmatpush1.bf16.msra.mxu0 %v3153
    %3720 = vmatprep.subr.bf16.mxu0 %v3162
    %3721 = vmatpush1.bf16.msra.mxu0 %v3161
    %3722 = vmatprep.subr.bf16.mxu0 %v3170
    %3723 = vmatpush1.bf16.msra.mxu0 %v3169
    %3724 = vmatprep.subr.bf16.mxu0 %v3178
    %3725 = vmatpush1.bf16.msra.mxu0 %v3177
    %3726 = vmatprep.subr.bf16.mxu0 %v3186
    %3727 = vmatpush1.bf16.msra.mxu0 %v3185
    %3728 = vmatprep.subr.bf16.mxu0 %v3194
    %3729 = vmatpush1.bf16.msra.mxu0 %v3193
    %3730 = vmatprep.subr.bf16.mxu0 %v3202
    %3731 = vmatpush1.bf16.msra.mxu0 %v3201
    %3732 = vmatprep.subr.bf16.mxu0 %v3210
    %3733 = vmatpush1.bf16.msra.mxu0 %v3209
    %3734 = vmatprep.subr.bf16.mxu0 %v3218
    %3735 = vmatpush1.bf16.msra.mxu0 %v3217
    %3736 = vmatprep.subr.bf16.mxu0 %v3226
    %3737 = vmatpush1.bf16.msra.mxu0 %v3225
    %3738 = vmatprep.subr.bf16.mxu0 %v3234
    %3739 = vmatpush1.bf16.msra.mxu0 %v3233
    %3740 = vmatprep.subr.bf16.mxu0 %v3242
    %3741 = vmatpush1.bf16.msra.mxu0 %v3241
    %3742 = vmatprep.subr.bf16.mxu0 %v3250
    %3743 = vmatpush1.bf16.msra.mxu0 %v3249
    %3744 = vmatprep.mubr.bf16.mxu0 %v3260
    %3745 = vmatmul.mubr.bf16.gmra.mrb[0].mxu0 %v3259
    %v3746 = vpop.f32.mrb[0].mxu0
    %v3747 = vadd.f32 %v3706, %v3746
    %v3748 = vpop.f32.mrb[0].mxu0
    %v3749 = vadd.f32 %v3708, %v3748
    %v3750 = vpop.f32.mrb[0].mxu0
    %v3751 = vpop.f32.mrb[0].mxu0
    %3752 = vdwg.mxu0
    %3753 = vmatprep.subr.bf16.mxu0 %v2748
    %3754 = vmatpush1.bf16.msra.mxu0 %v2747
    %3755 = vmatprep.subr.bf16.mxu0 %v2756
    %3756 = vmatpush1.bf16.msra.mxu0 %v2755
    %3757 = vmatprep.subr.bf16.mxu0 %v2764
    %3758 = vmatpush1.bf16.msra.mxu0 %v2763
    %3759 = vmatprep.subr.bf16.mxu0 %v2772
    %3760 = vmatpush1.bf16.msra.mxu0 %v2771
    %3761 = vmatprep.subr.bf16.mxu0 %v2780
    %3762 = vmatpush1.bf16.msra.mxu0 %v2779
    %3763 = vmatprep.subr.bf16.mxu0 %v2788
    %3764 = vmatpush1.bf16.msra.mxu0 %v2787
    %3765 = vmatprep.subr.bf16.mxu0 %v2796
    %3766 = vmatpush1.bf16.msra.mxu0 %v2795
    %3767 = vmatprep.subr.bf16.mxu0 %v2804
    %3768 = vmatpush1.bf16.msra.mxu0 %v2803
    %3769 = vmatprep.subr.bf16.mxu0 %v2812
    %3770 = vmatpush1.bf16.msra.mxu0 %v2811
    %3771 = vmatprep.subr.bf16.mxu0 %v2820
    %3772 = vmatpush1.bf16.msra.mxu0 %v2819
    %3773 = vmatprep.subr.bf16.mxu0 %v2828
    %3774 = vmatpush1.bf16.msra.mxu0 %v2827
    %3775 = vmatprep.subr.bf16.mxu0 %v2836
    %3776 = vmatpush1.bf16.msra.mxu0 %v2835
    %3777 = vmatprep.subr.bf16.mxu0 %v2844
    %3778 = vmatpush1.bf16.msra.mxu0 %v2843
    %3779 = vmatprep.subr.bf16.mxu0 %v2852
    %3780 = vmatpush1.bf16.msra.mxu0 %v2851
    %3781 = vmatprep.subr.bf16.mxu0 %v2860
    %3782 = vmatpush1.bf16.msra.mxu0 %v2859
    %3783 = vmatprep.subr.bf16.mxu0 %v2868
    %3784 = vmatpush1.bf16.msra.mxu0 %v2867
    %3785 = vmatprep.mubr.bf16.mxu0 %v3254
    %3786 = vmatmul.mubr.bf16.gmra.mrb[0].mxu0 %v3253
    %v3787 = vpop.f32.mrb[0].mxu0
    %v3788 = vadd.f32 0.0, %v3787
    %v3789 = vpop.f32.mrb[0].mxu0
    %v3790 = vadd.f32 0.0, %v3789
    %v3791 = vpop.f32.mrb[0].mxu0
    %v3792 = vpop.f32.mrb[0].mxu0
    %3793 = vdwg.mxu0
    %3794 = vmatprep.subr.bf16.mxu0 %v2876
    %3795 = vmatpush1.bf16.msra.mxu0 %v2875
    %3796 = vmatprep.subr.bf16.mxu0 %v2884
    %3797 = vmatpush1.bf16.msra.mxu0 %v2883
    %3798 = vmatprep.subr.bf16.mxu0 %v2892
    %3799 = vmatpush1.bf16.msra.mxu0 %v2891
    %3800 = vmatprep.subr.bf16.mxu0 %v2900
    %3801 = vmatpush1.bf16.msra.mxu0 %v2899
    %3802 = vmatprep.subr.bf16.mxu0 %v2908
    %3803 = vmatpush1.bf16.msra.mxu0 %v2907
    %3804 = vmatprep.subr.bf16.mxu0 %v2916
    %3805 = vmatpush1.bf16.msra.mxu0 %v2915
    %3806 = vmatprep.subr.bf16.mxu0 %v2924
    %3807 = vmatpush1.bf16.msra.mxu0 %v2923
    %3808 = vmatprep.subr.bf16.mxu0 %v2932
    %3809 = vmatpush1.bf16.msra.mxu0 %v2931
    %3810 = vmatprep.subr.bf16.mxu0 %v2940
    %3811 = vmatpush1.bf16.msra.mxu0 %v2939
    %3812 = vmatprep.subr.bf16.mxu0 %v2948
    %3813 = vmatpush1.bf16.msra.mxu0 %v2947
    %3814 = vmatprep.subr.bf16.mxu0 %v2956
    %3815 = vmatpush1.bf16.msra.mxu0 %v2955
    %3816 = vmatprep.subr.bf16.mxu0 %v2964
    %3817 = vmatpush1.bf16.msra.mxu0 %v2963
    %3818 = vmatprep.subr.bf16.mxu0 %v2972
    %3819 = vmatpush1.bf16.msra.mxu0 %v2971
    %3820 = vmatprep.subr.bf16.mxu0 %v2980
    %3821 = vmatpush1.bf16.msra.mxu0 %v2979
    %3822 = vmatprep.subr.bf16.mxu0 %v2988
    %3823 = vmatpush1.bf16.msra.mxu0 %v2987
    %3824 = vmatprep.subr.bf16.mxu0 %v2996
    %3825 = vmatpush1.bf16.msra.mxu0 %v2995
    %3826 = vmatprep.mubr.bf16.mxu0 %v3256
    %3827 = vmatmul.mubr.bf16.gmra.mrb[0].mxu0 %v3255
    %v3828 = vpop.f32.mrb[0].mxu0
    %v3829 = vadd.f32 %v3788, %v3828
    %v3830 = vpop.f32.mrb[0].mxu0
    %v3831 = vadd.f32 %v3790, %v3830
    %v3832 = vpop.f32.mrb[0].mxu0
    %v3833 = vpop.f32.mrb[0].mxu0
    %3834 = vdwg.mxu0
    %3835 = vmatprep.subr.bf16.mxu0 %v3004
    %3836 = vmatpush1.bf16.msra.mxu0 %v3003
    %3837 = vmatprep.subr.bf16.mxu0 %v3012
    %3838 = vmatpush1.bf16.msra.mxu0 %v3011
    %3839 = vmatprep.subr.bf16.mxu0 %v3020
    %3840 = vmatpush1.bf16.msra.mxu0 %v3019
    %3841 = vmatprep.subr.bf16.mxu0 %v3028
    %3842 = vmatpush1.bf16.msra.mxu0 %v3027
    %3843 = vmatprep.subr.bf16.mxu0 %v3036
    %3844 = vmatpush1.bf16.msra.mxu0 %v3035
    %3845 = vmatprep.subr.bf16.mxu0 %v3044
    %3846 = vmatpush1.bf16.msra.mxu0 %v3043
    %3847 = vmatprep.subr.bf16.mxu0 %v3052
    %3848 = vmatpush1.bf16.msra.mxu0 %v3051
    %3849 = vmatprep.subr.bf16.mxu0 %v3060
    %3850 = vmatpush1.bf16.msra.mxu0 %v3059
    %3851 = vmatprep.subr.bf16.mxu0 %v3068
    %3852 = vmatpush1.bf16.msra.mxu0 %v3067
    %3853 = vmatprep.subr.bf16.mxu0 %v3076
    %3854 = vmatpush1.bf16.msra.mxu0 %v3075
    %3855 = vmatprep.subr.bf16.mxu0 %v3084
    %3856 = vmatpush1.bf16.msra.mxu0 %v3083
    %3857 = vmatprep.subr.bf16.mxu0 %v3092
    %3858 = vmatpush1.bf16.msra.mxu0 %v3091
    %3859 = vmatprep.subr.bf16.mxu0 %v3100
    %3860 = vmatpush1.bf16.msra.mxu0 %v3099
    %3861 = vmatprep.subr.bf16.mxu0 %v3108
    %3862 = vmatpush1.bf16.msra.mxu0 %v3107
    %3863 = vmatprep.subr.bf16.mxu0 %v3116
    %3864 = vmatpush1.bf16.msra.mxu0 %v3115
    %3865 = vmatprep.subr.bf16.mxu0 %v3124
    %3866 = vmatpush1.bf16.msra.mxu0 %v3123
    %3867 = vmatprep.mubr.bf16.mxu0 %v3258
    %3868 = vmatmul.mubr.bf16.gmra.mrb[0].mxu0 %v3257
    %v3869 = vpop.f32.mrb[0].mxu0
    %v3870 = vadd.f32 %v3829, %v3869
    %v3871 = vpop.f32.mrb[0].mxu0
    %v3872 = vadd.f32 %v3831, %v3871
    %v3873 = vpop.f32.mrb[0].mxu0
    %v3874 = vpop.f32.mrb[0].mxu0
    %3875 = vdwg.mxu0
    %3876 = vmatprep.subr.bf16.mxu0 %v3132
    %3877 = vmatpush1.bf16.msra.mxu0 %v3131
    %3878 = vmatprep.subr.bf16.mxu0 %v3140
    %3879 = vmatpush1.bf16.msra.mxu0 %v3139
    %3880 = vmatprep.subr.bf16.mxu0 %v3148
    %3881 = vmatpush1.bf16.msra.mxu0 %v3147
    %3882 = vmatprep.subr.bf16.mxu0 %v3156
    %3883 = vmatpush1.bf16.msra.mxu0 %v3155
    %3884 = vmatprep.subr.bf16.mxu0 %v3164
    %3885 = vmatpush1.bf16.msra.mxu0 %v3163
    %3886 = vmatprep.subr.bf16.mxu0 %v3172
    %3887 = vmatpush1.bf16.msra.mxu0 %v3171
    %3888 = vmatprep.subr.bf16.mxu0 %v3180
    %3889 = vmatpush1.bf16.msra.mxu0 %v3179
    %3890 = vmatprep.subr.bf16.mxu0 %v3188
    %3891 = vmatpush1.bf16.msra.mxu0 %v3187
    %3892 = vmatprep.subr.bf16.mxu0 %v3196
    %3893 = vmatpush1.bf16.msra.mxu0 %v3195
    %3894 = vmatprep.subr.bf16.mxu0 %v3204
    %3895 = vmatpush1.bf16.msra.mxu0 %v3203
    %3896 = vmatprep.subr.bf16.mxu0 %v3212
    %3897 = vmatpush1.bf16.msra.mxu0 %v3211
    %3898 = vmatprep.subr.bf16.mxu0 %v3220
    %3899 = vmatpush1.bf16.msra.mxu0 %v3219
    %3900 = vmatprep.subr.bf16.mxu0 %v3228
    %3901 = vmatpush1.bf16.msra.mxu0 %v3227
    %3902 = vmatprep.subr.bf16.mxu0 %v3236
    %3903 = vmatpush1.bf16.msra.mxu0 %v3235
    %3904 = vmatprep.subr.bf16.mxu0 %v3244
    %3905 = vmatpush1.bf16.msra.mxu0 %v3243
    %3906 = vmatprep.subr.bf16.mxu0 %v3252
    %3907 = vmatpush1.bf16.msra.mxu0 %v3251
    %3908 = vmatprep.mubr.bf16.mxu0 %v3260
    %3909 = vmatmul.mubr.bf16.gmra.mrb[0].mxu0 %v3259
    %v3910 = vpop.f32.mrb[0].mxu0
    %v3911 = vadd.f32 %v3870, %v3910
    %v3912 = vpop.f32.mrb[0].mxu0
    %v3913 = vadd.f32 %v3872, %v3912
    %v3914 = vpop.f32.mrb[0].mxu0
    %v3915 = vpop.f32.mrb[0].mxu0
    %3916 = vdwg.mxu0
    %v3917 = vld [vmem:[#allocation13] sm:$0xff]
    %v3919 = vlaneseq
    %v3920 = vshrl.u32 %v3919, 7
    %v3921 = vsub.s32 0, %v3920
    %v3922 = vrot.slane %v3917, %v3921
    %v3923 = vlaneseq
    %v3924 = vshrl.u32 %v3923, 7
    %v3925 = vsub.s32 1, %v3924
    %v3926 = vrot.slane %v3917, %v3925
    %v3927 = vlaneseq
    %v3928 = vshrl.u32 %v3927, 7
    %v3929 = vsub.s32 2, %v3928
    %v3930 = vrot.slane %v3917, %v3929
    %v3931 = vlaneseq
    %v3932 = vshrl.u32 %v3931, 7
    %v3933 = vsub.s32 3, %v3932
    %v3934 = vrot.slane %v3917, %v3933
    %v3935 = vlaneseq
    %v3936 = vshrl.u32 %v3935, 7
    %v3937 = vsub.s32 4, %v3936
    %v3938 = vrot.slane %v3917, %v3937
    %v3939 = vlaneseq
    %v3940 = vshrl.u32 %v3939, 7
    %v3941 = vsub.s32 5, %v3940
    %v3942 = vrot.slane %v3917, %v3941
    %v3943 = vlaneseq
    %v3944 = vshrl.u32 %v3943, 7
    %v3945 = vsub.s32 6, %v3944
    %v3946 = vrot.slane %v3917, %v3945
    %v3947 = vlaneseq
    %v3948 = vshrl.u32 %v3947, 7
    %v3949 = vsub.s32 7, %v3948
    %v3950 = vrot.slane %v3917, %v3949
    %v3959 = vmul.f32 %v3419, %v3922
    %v3960 = vmul.f32 %v3421, %v3926
    %v3961 = vmul.f32 %v3583, %v3930
    %v3962 = vmul.f32 %v3585, %v3934
    %v3963 = vmul.f32 %v3747, %v3938
    %v3964 = vmul.f32 %v3749, %v3942
    %v3965 = vmul.f32 %v3911, %v3946
    %v3966 = vmul.f32 %v3913, %v3950
    %v3967 = vld [vmem:[#allocation14] sm:$0xff]
    %v3969 = vlaneseq
    %v3970 = vshrl.u32 %v3969, 7
    %v3971 = vsub.s32 0, %v3970
    %v3972 = vrot.slane %v3967, %v3971
    %v3973 = vlaneseq
    %v3974 = vshrl.u32 %v3973, 7
    %v3975 = vsub.s32 1, %v3974
    %v3976 = vrot.slane %v3967, %v3975
    %v3977 = vlaneseq
    %v3978 = vshrl.u32 %v3977, 7
    %v3979 = vsub.s32 2, %v3978
    %v3980 = vrot.slane %v3967, %v3979
    %v3981 = vlaneseq
    %v3982 = vshrl.u32 %v3981, 7
    %v3983 = vsub.s32 3, %v3982
    %v3984 = vrot.slane %v3967, %v3983
    %v3985 = vlaneseq
    %v3986 = vshrl.u32 %v3985, 7
    %v3987 = vsub.s32 4, %v3986
    %v3988 = vrot.slane %v3967, %v3987
    %v3989 = vlaneseq
    %v3990 = vshrl.u32 %v3989, 7
    %v3991 = vsub.s32 5, %v3990
    %v3992 = vrot.slane %v3967, %v3991
    %v3993 = vlaneseq
    %v3994 = vshrl.u32 %v3993, 7
    %v3995 = vsub.s32 6, %v3994
    %v3996 = vrot.slane %v3967, %v3995
    %v3997 = vlaneseq
    %v3998 = vshrl.u32 %v3997, 7
    %v3999 = vsub.s32 7, %v3998
    %v4000 = vrot.slane %v3967, %v3999
    %v4009 = vadd.f32 %v3959, %v3972
    %v4010 = vadd.f32 %v3960, %v3976
    %v4011 = vadd.f32 %v3961, %v3980
    %v4012 = vadd.f32 %v3962, %v3984
    %v4013 = vadd.f32 %v3963, %v3988
    %v4014 = vadd.f32 %v3964, %v3992
    %v4015 = vadd.f32 %v3965, %v3996
    %v4016 = vadd.f32 %v3966, %v4000
    %v4017 = vmax.f32 %v4009, 0.0
    %v4018 = vmax.f32 %v4010, 0.0
    %v4019 = vmax.f32 %v4011, 0.0
    %v4020 = vmax.f32 %v4012, 0.0
    %v4021 = vmax.f32 %v4013, 0.0
    %v4022 = vmax.f32 %v4014, 0.0
    %v4023 = vmax.f32 %v4015, 0.0
    %v4024 = vmax.f32 %v4016, 0.0
    %v4025 = vmin.f32 %v4017, 6.0
    %v4026 = vmin.f32 %v4018, 6.0
    %v4027 = vmin.f32 %v4019, 6.0
    %v4028 = vmin.f32 %v4020, 6.0
    %v4029 = vmin.f32 %v4021, 6.0
    %v4030 = vmin.f32 %v4022, 6.0
    %v4031 = vmin.f32 %v4023, 6.0
    %v4032 = vmin.f32 %v4024, 6.0
    %v4033 = vld [vmem:[#allocation16] sm:$0xff]
    %v4034 = vld [vmem:[#allocation16 + $0x8] sm:$0xff]
    %v4035 = vld [vmem:[#allocation16 + $0x10] sm:$0xff]
    %v4036 = vld [vmem:[#allocation16 + $0x18] sm:$0xff]
    %v4037 = vld [vmem:[#allocation16 + $0x20] sm:$0xff]
    %v4038 = vld [vmem:[#allocation16 + $0x28] sm:$0xff]
    %v4039 = vld [vmem:[#allocation16 + $0x30] sm:$0xff]
    %v4040 = vld [vmem:[#allocation16 + $0x38] sm:$0xff]
    %v4041 = vld [vmem:[#allocation16 + $0x40] sm:$0xff]
    %v4042 = vld [vmem:[#allocation16 + $0x48] sm:$0xff]
    %v4043 = vld [vmem:[#allocation16 + $0x50] sm:$0xff]
    %v4044 = vld [vmem:[#allocation16 + $0x58] sm:$0xff]
    %v4045 = vld [vmem:[#allocation16 + $0x60] sm:$0xff]
    %v4046 = vld [vmem:[#allocation16 + $0x68] sm:$0xff]
    %v4047 = vld [vmem:[#allocation16 + $0x70] sm:$0xff]
    %v4048 = vld [vmem:[#allocation16 + $0x78] sm:$0xff]
    %v4049 = vld [vmem:[#allocation16 + $0x80] sm:$0xff]
    %v4050 = vld [vmem:[#allocation16 + $0x88] sm:$0xff]
    %v4051 = vld [vmem:[#allocation16 + $0x90] sm:$0xff]
    %v4052 = vld [vmem:[#allocation16 + $0x98] sm:$0xff]
    %v4053 = vld [vmem:[#allocation16 + $0xa0] sm:$0xff]
    %v4054 = vld [vmem:[#allocation16 + $0xa8] sm:$0xff]
    %v4055 = vld [vmem:[#allocation16 + $0xb0] sm:$0xff]
    %v4056 = vld [vmem:[#allocation16 + $0xb8] sm:$0xff]
    %v4057 = vld [vmem:[#allocation16 + $0xc0] sm:$0xff]
    %v4058 = vld [vmem:[#allocation16 + $0xc8] sm:$0xff]
    %v4059 = vld [vmem:[#allocation16 + $0xd0] sm:$0xff]
    %v4060 = vld [vmem:[#allocation16 + $0xd8] sm:$0xff]
    %v4061 = vld [vmem:[#allocation16 + $0xe0] sm:$0xff]
    %v4062 = vld [vmem:[#allocation16 + $0xe8] sm:$0xff]
    %v4063 = vld [vmem:[#allocation16 + $0xf0] sm:$0xff]
    %v4064 = vld [vmem:[#allocation16 + $0xf8] sm:$0xff]
    %v4065 = vld [vmem:[#allocation16 + $0x100] sm:$0xff]
    %v4066 = vld [vmem:[#allocation16 + $0x108] sm:$0xff]
    %v4067 = vld [vmem:[#allocation16 + $0x110] sm:$0xff]
    %v4068 = vld [vmem:[#allocation16 + $0x118] sm:$0xff]
    %v4069 = vld [vmem:[#allocation16 + $0x120] sm:$0xff]
    %v4070 = vld [vmem:[#allocation16 + $0x128] sm:$0xff]
    %v4071 = vld [vmem:[#allocation16 + $0x130] sm:$0xff]
    %v4072 = vld [vmem:[#allocation16 + $0x138] sm:$0xff]
    %v4073 = vld [vmem:[#allocation16 + $0x140] sm:$0xff]
    %v4074 = vld [vmem:[#allocation16 + $0x148] sm:$0xff]
    %v4075 = vld [vmem:[#allocation16 + $0x150] sm:$0xff]
    %v4076 = vld [vmem:[#allocation16 + $0x158] sm:$0xff]
    %v4077 = vld [vmem:[#allocation16 + $0x160] sm:$0xff]
    %v4078 = vld [vmem:[#allocation16 + $0x168] sm:$0xff]
    %v4079 = vld [vmem:[#allocation16 + $0x170] sm:$0xff]
    %v4080 = vld [vmem:[#allocation16 + $0x178] sm:$0xff]
    %v4081 = vld [vmem:[#allocation16 + $0x180] sm:$0xff]
    %v4082 = vld [vmem:[#allocation16 + $0x188] sm:$0xff]
    %v4083 = vld [vmem:[#allocation16 + $0x190] sm:$0xff]
    %v4084 = vld [vmem:[#allocation16 + $0x198] sm:$0xff]
    %v4085 = vld [vmem:[#allocation16 + $0x1a0] sm:$0xff]
    %v4086 = vld [vmem:[#allocation16 + $0x1a8] sm:$0xff]
    %v4087 = vld [vmem:[#allocation16 + $0x1b0] sm:$0xff]
    %v4088 = vld [vmem:[#allocation16 + $0x1b8] sm:$0xff]
    %v4089 = vld [vmem:[#allocation16 + $0x1c0] sm:$0xff]
    %v4090 = vld [vmem:[#allocation16 + $0x1c8] sm:$0xff]
    %v4091 = vld [vmem:[#allocation16 + $0x1d0] sm:$0xff]
    %v4092 = vld [vmem:[#allocation16 + $0x1d8] sm:$0xff]
    %v4093 = vld [vmem:[#allocation16 + $0x1e0] sm:$0xff]
    %v4094 = vld [vmem:[#allocation16 + $0x1e8] sm:$0xff]
    %v4095 = vld [vmem:[#allocation16 + $0x1f0] sm:$0xff]
    %v4096 = vld [vmem:[#allocation16 + $0x1f8] sm:$0xff]
    %v4097 = vld [vmem:[#allocation16 + $0x200] sm:$0xff]
    %v4098 = vld [vmem:[#allocation16 + $0x208] sm:$0xff]
    %v4099 = vld [vmem:[#allocation16 + $0x210] sm:$0xff]
    %v4100 = vld [vmem:[#allocation16 + $0x218] sm:$0xff]
    %v4101 = vld [vmem:[#allocation16 + $0x220] sm:$0xff]
    %v4102 = vld [vmem:[#allocation16 + $0x228] sm:$0xff]
    %v4103 = vld [vmem:[#allocation16 + $0x230] sm:$0xff]
    %v4104 = vld [vmem:[#allocation16 + $0x238] sm:$0xff]
    %v4105 = vld [vmem:[#allocation16 + $0x240] sm:$0xff]
    %v4106 = vld [vmem:[#allocation16 + $0x248] sm:$0xff]
    %v4107 = vld [vmem:[#allocation16 + $0x250] sm:$0xff]
    %v4108 = vld [vmem:[#allocation16 + $0x258] sm:$0xff]
    %v4109 = vld [vmem:[#allocation16 + $0x260] sm:$0xff]
    %v4110 = vld [vmem:[#allocation16 + $0x268] sm:$0xff]
    %v4111 = vld [vmem:[#allocation16 + $0x270] sm:$0xff]
    %v4112 = vld [vmem:[#allocation16 + $0x278] sm:$0xff]
    %v4113 = vld [vmem:[#allocation16 + $0x280] sm:$0xff]
    %v4114 = vld [vmem:[#allocation16 + $0x288] sm:$0xff]
    %v4115 = vld [vmem:[#allocation16 + $0x290] sm:$0xff]
    %v4116 = vld [vmem:[#allocation16 + $0x298] sm:$0xff]
    %v4117 = vld [vmem:[#allocation16 + $0x2a0] sm:$0xff]
    %v4118 = vld [vmem:[#allocation16 + $0x2a8] sm:$0xff]
    %v4119 = vld [vmem:[#allocation16 + $0x2b0] sm:$0xff]
    %v4120 = vld [vmem:[#allocation16 + $0x2b8] sm:$0xff]
    %v4121 = vld [vmem:[#allocation16 + $0x2c0] sm:$0xff]
    %v4122 = vld [vmem:[#allocation16 + $0x2c8] sm:$0xff]
    %v4123 = vld [vmem:[#allocation16 + $0x2d0] sm:$0xff]
    %v4124 = vld [vmem:[#allocation16 + $0x2d8] sm:$0xff]
    %v4125 = vld [vmem:[#allocation16 + $0x2e0] sm:$0xff]
    %v4126 = vld [vmem:[#allocation16 + $0x2e8] sm:$0xff]
    %v4127 = vld [vmem:[#allocation16 + $0x2f0] sm:$0xff]
    %v4128 = vld [vmem:[#allocation16 + $0x2f8] sm:$0xff]
    %v4129 = vld [vmem:[#allocation16 + $0x300] sm:$0xff]
    %v4130 = vld [vmem:[#allocation16 + $0x308] sm:$0xff]
    %v4131 = vld [vmem:[#allocation16 + $0x310] sm:$0xff]
    %v4132 = vld [vmem:[#allocation16 + $0x318] sm:$0xff]
    %v4133 = vld [vmem:[#allocation16 + $0x320] sm:$0xff]
    %v4134 = vld [vmem:[#allocation16 + $0x328] sm:$0xff]
    %v4135 = vld [vmem:[#allocation16 + $0x330] sm:$0xff]
    %v4136 = vld [vmem:[#allocation16 + $0x338] sm:$0xff]
    %v4137 = vld [vmem:[#allocation16 + $0x340] sm:$0xff]
    %v4138 = vld [vmem:[#allocation16 + $0x348] sm:$0xff]
    %v4139 = vld [vmem:[#allocation16 + $0x350] sm:$0xff]
    %v4140 = vld [vmem:[#allocation16 + $0x358] sm:$0xff]
    %v4141 = vld [vmem:[#allocation16 + $0x360] sm:$0xff]
    %v4142 = vld [vmem:[#allocation16 + $0x368] sm:$0xff]
    %v4143 = vld [vmem:[#allocation16 + $0x370] sm:$0xff]
    %v4144 = vld [vmem:[#allocation16 + $0x378] sm:$0xff]
    %v4145 = vld [vmem:[#allocation16 + $0x380] sm:$0xff]
    %v4146 = vld [vmem:[#allocation16 + $0x388] sm:$0xff]
    %v4147 = vld [vmem:[#allocation16 + $0x390] sm:$0xff]
    %v4148 = vld [vmem:[#allocation16 + $0x398] sm:$0xff]
    %v4149 = vld [vmem:[#allocation16 + $0x3a0] sm:$0xff]
    %v4150 = vld [vmem:[#allocation16 + $0x3a8] sm:$0xff]
    %v4151 = vld [vmem:[#allocation16 + $0x3b0] sm:$0xff]
    %v4152 = vld [vmem:[#allocation16 + $0x3b8] sm:$0xff]
    %v4153 = vld [vmem:[#allocation16 + $0x3c0] sm:$0xff]
    %v4154 = vld [vmem:[#allocation16 + $0x3c8] sm:$0xff]
    %v4155 = vld [vmem:[#allocation16 + $0x3d0] sm:$0xff]
    %v4156 = vld [vmem:[#allocation16 + $0x3d8] sm:$0xff]
    %v4157 = vld [vmem:[#allocation16 + $0x3e0] sm:$0xff]
    %v4158 = vld [vmem:[#allocation16 + $0x3e8] sm:$0xff]
    %v4159 = vld [vmem:[#allocation16 + $0x3f0] sm:$0xff]
    %v4160 = vld [vmem:[#allocation16 + $0x3f8] sm:$0xff]
    %v4161 = vld [vmem:[#allocation16 + $0x400] sm:$0xff]
    %v4162 = vld [vmem:[#allocation16 + $0x408] sm:$0xff]
    %v4163 = vld [vmem:[#allocation16 + $0x410] sm:$0xff]
    %v4164 = vld [vmem:[#allocation16 + $0x418] sm:$0xff]
    %v4165 = vld [vmem:[#allocation16 + $0x420] sm:$0xff]
    %v4166 = vld [vmem:[#allocation16 + $0x428] sm:$0xff]
    %v4167 = vld [vmem:[#allocation16 + $0x430] sm:$0xff]
    %v4168 = vld [vmem:[#allocation16 + $0x438] sm:$0xff]
    %v4169 = vld [vmem:[#allocation16 + $0x440] sm:$0xff]
    %v4170 = vld [vmem:[#allocation16 + $0x448] sm:$0xff]
    %v4171 = vld [vmem:[#allocation16 + $0x450] sm:$0xff]
    %v4172 = vld [vmem:[#allocation16 + $0x458] sm:$0xff]
    %v4173 = vld [vmem:[#allocation16 + $0x460] sm:$0xff]
    %v4174 = vld [vmem:[#allocation16 + $0x468] sm:$0xff]
    %v4175 = vld [vmem:[#allocation16 + $0x470] sm:$0xff]
    %v4176 = vld [vmem:[#allocation16 + $0x478] sm:$0xff]
    %v4177 = vld [vmem:[#allocation16 + $0x480] sm:$0xff]
    %v4178 = vld [vmem:[#allocation16 + $0x488] sm:$0xff]
    %v4179 = vld [vmem:[#allocation16 + $0x490] sm:$0xff]
    %v4180 = vld [vmem:[#allocation16 + $0x498] sm:$0xff]
    %v4181 = vld [vmem:[#allocation16 + $0x4a0] sm:$0xff]
    %v4182 = vld [vmem:[#allocation16 + $0x4a8] sm:$0xff]
    %v4183 = vld [vmem:[#allocation16 + $0x4b0] sm:$0xff]
    %v4184 = vld [vmem:[#allocation16 + $0x4b8] sm:$0xff]
    %v4185 = vld [vmem:[#allocation16 + $0x4c0] sm:$0xff]
    %v4186 = vld [vmem:[#allocation16 + $0x4c8] sm:$0xff]
    %v4187 = vld [vmem:[#allocation16 + $0x4d0] sm:$0xff]
    %v4188 = vld [vmem:[#allocation16 + $0x4d8] sm:$0xff]
    %v4189 = vld [vmem:[#allocation16 + $0x4e0] sm:$0xff]
    %v4190 = vld [vmem:[#allocation16 + $0x4e8] sm:$0xff]
    %v4191 = vld [vmem:[#allocation16 + $0x4f0] sm:$0xff]
    %v4192 = vld [vmem:[#allocation16 + $0x4f8] sm:$0xff]
    %v4193 = vld [vmem:[#allocation16 + $0x500] sm:$0xff]
    %v4194 = vld [vmem:[#allocation16 + $0x508] sm:$0xff]
    %v4195 = vld [vmem:[#allocation16 + $0x510] sm:$0xff]
    %v4196 = vld [vmem:[#allocation16 + $0x518] sm:$0xff]
    %v4197 = vld [vmem:[#allocation16 + $0x520] sm:$0xff]
    %v4198 = vld [vmem:[#allocation16 + $0x528] sm:$0xff]
    %v4199 = vld [vmem:[#allocation16 + $0x530] sm:$0xff]
    %v4200 = vld [vmem:[#allocation16 + $0x538] sm:$0xff]
    %v4201 = vld [vmem:[#allocation16 + $0x540] sm:$0xff]
    %v4202 = vld [vmem:[#allocation16 + $0x548] sm:$0xff]
    %v4203 = vld [vmem:[#allocation16 + $0x550] sm:$0xff]
    %v4204 = vld [vmem:[#allocation16 + $0x558] sm:$0xff]
    %v4205 = vld [vmem:[#allocation16 + $0x560] sm:$0xff]
    %v4206 = vld [vmem:[#allocation16 + $0x568] sm:$0xff]
    %v4207 = vld [vmem:[#allocation16 + $0x570] sm:$0xff]
    %v4208 = vld [vmem:[#allocation16 + $0x578] sm:$0xff]
    %v4209 = vld [vmem:[#allocation16 + $0x580] sm:$0xff]
    %v4210 = vld [vmem:[#allocation16 + $0x588] sm:$0xff]
    %v4211 = vld [vmem:[#allocation16 + $0x590] sm:$0xff]
    %v4212 = vld [vmem:[#allocation16 + $0x598] sm:$0xff]
    %v4213 = vld [vmem:[#allocation16 + $0x5a0] sm:$0xff]
    %v4214 = vld [vmem:[#allocation16 + $0x5a8] sm:$0xff]
    %v4215 = vld [vmem:[#allocation16 + $0x5b0] sm:$0xff]
    %v4216 = vld [vmem:[#allocation16 + $0x5b8] sm:$0xff]
    %v4217 = vld [vmem:[#allocation16 + $0x5c0] sm:$0xff]
    %v4218 = vld [vmem:[#allocation16 + $0x5c8] sm:$0xff]
    %v4219 = vld [vmem:[#allocation16 + $0x5d0] sm:$0xff]
    %v4220 = vld [vmem:[#allocation16 + $0x5d8] sm:$0xff]
    %v4221 = vld [vmem:[#allocation16 + $0x5e0] sm:$0xff]
    %v4222 = vld [vmem:[#allocation16 + $0x5e8] sm:$0xff]
    %v4223 = vld [vmem:[#allocation16 + $0x5f0] sm:$0xff]
    %v4224 = vld [vmem:[#allocation16 + $0x5f8] sm:$0xff]
    %v4225 = vld [vmem:[#allocation16 + $0x600] sm:$0xff]
    %v4226 = vld [vmem:[#allocation16 + $0x608] sm:$0xff]
    %v4227 = vld [vmem:[#allocation16 + $0x610] sm:$0xff]
    %v4228 = vld [vmem:[#allocation16 + $0x618] sm:$0xff]
    %v4229 = vld [vmem:[#allocation16 + $0x620] sm:$0xff]
    %v4230 = vld [vmem:[#allocation16 + $0x628] sm:$0xff]
    %v4231 = vld [vmem:[#allocation16 + $0x630] sm:$0xff]
    %v4232 = vld [vmem:[#allocation16 + $0x638] sm:$0xff]
    %v4233 = vld [vmem:[#allocation16 + $0x640] sm:$0xff]
    %v4234 = vld [vmem:[#allocation16 + $0x648] sm:$0xff]
    %v4235 = vld [vmem:[#allocation16 + $0x650] sm:$0xff]
    %v4236 = vld [vmem:[#allocation16 + $0x658] sm:$0xff]
    %v4237 = vld [vmem:[#allocation16 + $0x660] sm:$0xff]
    %v4238 = vld [vmem:[#allocation16 + $0x668] sm:$0xff]
    %v4239 = vld [vmem:[#allocation16 + $0x670] sm:$0xff]
    %v4240 = vld [vmem:[#allocation16 + $0x678] sm:$0xff]
    %v4241 = vld [vmem:[#allocation16 + $0x680] sm:$0xff]
    %v4242 = vld [vmem:[#allocation16 + $0x688] sm:$0xff]
    %v4243 = vld [vmem:[#allocation16 + $0x690] sm:$0xff]
    %v4244 = vld [vmem:[#allocation16 + $0x698] sm:$0xff]
    %v4245 = vld [vmem:[#allocation16 + $0x6a0] sm:$0xff]
    %v4246 = vld [vmem:[#allocation16 + $0x6a8] sm:$0xff]
    %v4247 = vld [vmem:[#allocation16 + $0x6b0] sm:$0xff]
    %v4248 = vld [vmem:[#allocation16 + $0x6b8] sm:$0xff]
    %v4249 = vld [vmem:[#allocation16 + $0x6c0] sm:$0xff]
    %v4250 = vld [vmem:[#allocation16 + $0x6c8] sm:$0xff]
    %v4251 = vld [vmem:[#allocation16 + $0x6d0] sm:$0xff]
    %v4252 = vld [vmem:[#allocation16 + $0x6d8] sm:$0xff]
    %v4253 = vld [vmem:[#allocation16 + $0x6e0] sm:$0xff]
    %v4254 = vld [vmem:[#allocation16 + $0x6e8] sm:$0xff]
    %v4255 = vld [vmem:[#allocation16 + $0x6f0] sm:$0xff]
    %v4256 = vld [vmem:[#allocation16 + $0x6f8] sm:$0xff]
    %v4257 = vld [vmem:[#allocation16 + $0x700] sm:$0xff]
    %v4258 = vld [vmem:[#allocation16 + $0x708] sm:$0xff]
    %v4259 = vld [vmem:[#allocation16 + $0x710] sm:$0xff]
    %v4260 = vld [vmem:[#allocation16 + $0x718] sm:$0xff]
    %v4261 = vld [vmem:[#allocation16 + $0x720] sm:$0xff]
    %v4262 = vld [vmem:[#allocation16 + $0x728] sm:$0xff]
    %v4263 = vld [vmem:[#allocation16 + $0x730] sm:$0xff]
    %v4264 = vld [vmem:[#allocation16 + $0x738] sm:$0xff]
    %v4265 = vld [vmem:[#allocation16 + $0x740] sm:$0xff]
    %v4266 = vld [vmem:[#allocation16 + $0x748] sm:$0xff]
    %v4267 = vld [vmem:[#allocation16 + $0x750] sm:$0xff]
    %v4268 = vld [vmem:[#allocation16 + $0x758] sm:$0xff]
    %v4269 = vld [vmem:[#allocation16 + $0x760] sm:$0xff]
    %v4270 = vld [vmem:[#allocation16 + $0x768] sm:$0xff]
    %v4271 = vld [vmem:[#allocation16 + $0x770] sm:$0xff]
    %v4272 = vld [vmem:[#allocation16 + $0x778] sm:$0xff]
    %v4273 = vld [vmem:[#allocation16 + $0x780] sm:$0xff]
    %v4274 = vld [vmem:[#allocation16 + $0x788] sm:$0xff]
    %v4275 = vld [vmem:[#allocation16 + $0x790] sm:$0xff]
    %v4276 = vld [vmem:[#allocation16 + $0x798] sm:$0xff]
    %v4277 = vld [vmem:[#allocation16 + $0x7a0] sm:$0xff]
    %v4278 = vld [vmem:[#allocation16 + $0x7a8] sm:$0xff]
    %v4279 = vld [vmem:[#allocation16 + $0x7b0] sm:$0xff]
    %v4280 = vld [vmem:[#allocation16 + $0x7b8] sm:$0xff]
    %v4281 = vld [vmem:[#allocation16 + $0x7c0] sm:$0xff]
    %v4282 = vld [vmem:[#allocation16 + $0x7c8] sm:$0xff]
    %v4283 = vld [vmem:[#allocation16 + $0x7d0] sm:$0xff]
    %v4284 = vld [vmem:[#allocation16 + $0x7d8] sm:$0xff]
    %v4285 = vld [vmem:[#allocation16 + $0x7e0] sm:$0xff]
    %v4286 = vld [vmem:[#allocation16 + $0x7e8] sm:$0xff]
    %v4287 = vld [vmem:[#allocation16 + $0x7f0] sm:$0xff]
    %v4288 = vld [vmem:[#allocation16 + $0x7f8] sm:$0xff]
    %v4289 = vunpack.c.l.s8.bf16 %v4033
    %v4290 = vunpack.c.l.s8.bf16 %v4034
    %v4291 = vunpack.c.l.s8.bf16 %v4035
    %v4292 = vunpack.c.l.s8.bf16 %v4036
    %v4293 = vunpack.c.l.s8.bf16 %v4037
    %v4294 = vunpack.c.l.s8.bf16 %v4038
    %v4295 = vunpack.c.l.s8.bf16 %v4039
    %v4296 = vunpack.c.l.s8.bf16 %v4040
    %v4297 = vunpack.c.h.s8.bf16 %v4033
    %v4298 = vunpack.c.h.s8.bf16 %v4034
    %v4299 = vunpack.c.h.s8.bf16 %v4035
    %v4300 = vunpack.c.h.s8.bf16 %v4036
    %v4301 = vunpack.c.h.s8.bf16 %v4037
    %v4302 = vunpack.c.h.s8.bf16 %v4038
    %v4303 = vunpack.c.h.s8.bf16 %v4039
    %v4304 = vunpack.c.h.s8.bf16 %v4040
    %v4305 = vunpack.c.l.s8.bf16 %v4041
    %v4306 = vunpack.c.l.s8.bf16 %v4042
    %v4307 = vunpack.c.l.s8.bf16 %v4043
    %v4308 = vunpack.c.l.s8.bf16 %v4044
    %v4309 = vunpack.c.l.s8.bf16 %v4045
    %v4310 = vunpack.c.l.s8.bf16 %v4046
    %v4311 = vunpack.c.l.s8.bf16 %v4047
    %v4312 = vunpack.c.l.s8.bf16 %v4048
    %v4313 = vunpack.c.h.s8.bf16 %v4041
    %v4314 = vunpack.c.h.s8.bf16 %v4042
    %v4315 = vunpack.c.h.s8.bf16 %v4043
    %v4316 = vunpack.c.h.s8.bf16 %v4044
    %v4317 = vunpack.c.h.s8.bf16 %v4045
    %v4318 = vunpack.c.h.s8.bf16 %v4046
    %v4319 = vunpack.c.h.s8.bf16 %v4047
    %v4320 = vunpack.c.h.s8.bf16 %v4048
    %v4321 = vunpack.c.l.s8.bf16 %v4049
    %v4322 = vunpack.c.l.s8.bf16 %v4050
    %v4323 = vunpack.c.l.s8.bf16 %v4051
    %v4324 = vunpack.c.l.s8.bf16 %v4052
    %v4325 = vunpack.c.l.s8.bf16 %v4053
    %v4326 = vunpack.c.l.s8.bf16 %v4054
    %v4327 = vunpack.c.l.s8.bf16 %v4055
    %v4328 = vunpack.c.l.s8.bf16 %v4056
    %v4329 = vunpack.c.h.s8.bf16 %v4049
    %v4330 = vunpack.c.h.s8.bf16 %v4050
    %v4331 = vunpack.c.h.s8.bf16 %v4051
    %v4332 = vunpack.c.h.s8.bf16 %v4052
    %v4333 = vunpack.c.h.s8.bf16 %v4053
    %v4334 = vunpack.c.h.s8.bf16 %v4054
    %v4335 = vunpack.c.h.s8.bf16 %v4055
    %v4336 = vunpack.c.h.s8.bf16 %v4056
    %v4337 = vunpack.c.l.s8.bf16 %v4057
    %v4338 = vunpack.c.l.s8.bf16 %v4058
    %v4339 = vunpack.c.l.s8.bf16 %v4059
    %v4340 = vunpack.c.l.s8.bf16 %v4060
    %v4341 = vunpack.c.l.s8.bf16 %v4061
    %v4342 = vunpack.c.l.s8.bf16 %v4062
    %v4343 = vunpack.c.l.s8.bf16 %v4063
    %v4344 = vunpack.c.l.s8.bf16 %v4064
    %v4345 = vunpack.c.h.s8.bf16 %v4057
    %v4346 = vunpack.c.h.s8.bf16 %v4058
    %v4347 = vunpack.c.h.s8.bf16 %v4059
    %v4348 = vunpack.c.h.s8.bf16 %v4060
    %v4349 = vunpack.c.h.s8.bf16 %v4061
    %v4350 = vunpack.c.h.s8.bf16 %v4062
    %v4351 = vunpack.c.h.s8.bf16 %v4063
    %v4352 = vunpack.c.h.s8.bf16 %v4064
    %v4353 = vunpack.c.l.s8.bf16 %v4065
    %v4354 = vunpack.c.l.s8.bf16 %v4066
    %v4355 = vunpack.c.l.s8.bf16 %v4067
    %v4356 = vunpack.c.l.s8.bf16 %v4068
    %v4357 = vunpack.c.l.s8.bf16 %v4069
    %v4358 = vunpack.c.l.s8.bf16 %v4070
    %v4359 = vunpack.c.l.s8.bf16 %v4071
    %v4360 = vunpack.c.l.s8.bf16 %v4072
    %v4361 = vunpack.c.h.s8.bf16 %v4065
    %v4362 = vunpack.c.h.s8.bf16 %v4066
    %v4363 = vunpack.c.h.s8.bf16 %v4067
    %v4364 = vunpack.c.h.s8.bf16 %v4068
    %v4365 = vunpack.c.h.s8.bf16 %v4069
    %v4366 = vunpack.c.h.s8.bf16 %v4070
    %v4367 = vunpack.c.h.s8.bf16 %v4071
    %v4368 = vunpack.c.h.s8.bf16 %v4072
    %v4369 = vunpack.c.l.s8.bf16 %v4073
    %v4370 = vunpack.c.l.s8.bf16 %v4074
    %v4371 = vunpack.c.l.s8.bf16 %v4075
    %v4372 = vunpack.c.l.s8.bf16 %v4076
    %v4373 = vunpack.c.l.s8.bf16 %v4077
    %v4374 = vunpack.c.l.s8.bf16 %v4078
    %v4375 = vunpack.c.l.s8.bf16 %v4079
    %v4376 = vunpack.c.l.s8.bf16 %v4080
    %v4377 = vunpack.c.h.s8.bf16 %v4073
    %v4378 = vunpack.c.h.s8.bf16 %v4074
    %v4379 = vunpack.c.h.s8.bf16 %v4075
    %v4380 = vunpack.c.h.s8.bf16 %v4076
    %v4381 = vunpack.c.h.s8.bf16 %v4077
    %v4382 = vunpack.c.h.s8.bf16 %v4078
    %v4383 = vunpack.c.h.s8.bf16 %v4079
    %v4384 = vunpack.c.h.s8.bf16 %v4080
    %v4385 = vunpack.c.l.s8.bf16 %v4081
    %v4386 = vunpack.c.l.s8.bf16 %v4082
    %v4387 = vunpack.c.l.s8.bf16 %v4083
    %v4388 = vunpack.c.l.s8.bf16 %v4084
    %v4389 = vunpack.c.l.s8.bf16 %v4085
    %v4390 = vunpack.c.l.s8.bf16 %v4086
    %v4391 = vunpack.c.l.s8.bf16 %v4087
    %v4392 = vunpack.c.l.s8.bf16 %v4088
    %v4393 = vunpack.c.h.s8.bf16 %v4081
    %v4394 = vunpack.c.h.s8.bf16 %v4082
    %v4395 = vunpack.c.h.s8.bf16 %v4083
    %v4396 = vunpack.c.h.s8.bf16 %v4084
    %v4397 = vunpack.c.h.s8.bf16 %v4085
    %v4398 = vunpack.c.h.s8.bf16 %v4086
    %v4399 = vunpack.c.h.s8.bf16 %v4087
    %v4400 = vunpack.c.h.s8.bf16 %v4088
    %v4401 = vunpack.c.l.s8.bf16 %v4089
    %v4402 = vunpack.c.l.s8.bf16 %v4090
    %v4403 = vunpack.c.l.s8.bf16 %v4091
    %v4404 = vunpack.c.l.s8.bf16 %v4092
    %v4405 = vunpack.c.l.s8.bf16 %v4093
    %v4406 = vunpack.c.l.s8.bf16 %v4094
    %v4407 = vunpack.c.l.s8.bf16 %v4095
    %v4408 = vunpack.c.l.s8.bf16 %v4096
    %v4409 = vunpack.c.h.s8.bf16 %v4089
    %v4410 = vunpack.c.h.s8.bf16 %v4090
    %v4411 = vunpack.c.h.s8.bf16 %v4091
    %v4412 = vunpack.c.h.s8.bf16 %v4092
    %v4413 = vunpack.c.h.s8.bf16 %v4093
    %v4414 = vunpack.c.h.s8.bf16 %v4094
    %v4415 = vunpack.c.h.s8.bf16 %v4095
    %v4416 = vunpack.c.h.s8.bf16 %v4096
    %v4417 = vunpack.c.l.s8.bf16 %v4097
    %v4418 = vunpack.c.l.s8.bf16 %v4098
    %v4419 = vunpack.c.l.s8.bf16 %v4099
    %v4420 = vunpack.c.l.s8.bf16 %v4100
    %v4421 = vunpack.c.l.s8.bf16 %v4101
    %v4422 = vunpack.c.l.s8.bf16 %v4102
    %v4423 = vunpack.c.l.s8.bf16 %v4103
    %v4424 = vunpack.c.l.s8.bf16 %v4104
    %v4425 = vunpack.c.h.s8.bf16 %v4097
    %v4426 = vunpack.c.h.s8.bf16 %v4098
    %v4427 = vunpack.c.h.s8.bf16 %v4099
    %v4428 = vunpack.c.h.s8.bf16 %v4100
    %v4429 = vunpack.c.h.s8.bf16 %v4101
    %v4430 = vunpack.c.h.s8.bf16 %v4102
    %v4431 = vunpack.c.h.s8.bf16 %v4103
    %v4432 = vunpack.c.h.s8.bf16 %v4104
    %v4433 = vunpack.c.l.s8.bf16 %v4105
    %v4434 = vunpack.c.l.s8.bf16 %v4106
    %v4435 = vunpack.c.l.s8.bf16 %v4107
    %v4436 = vunpack.c.l.s8.bf16 %v4108
    %v4437 = vunpack.c.l.s8.bf16 %v4109
    %v4438 = vunpack.c.l.s8.bf16 %v4110
    %v4439 = vunpack.c.l.s8.bf16 %v4111
    %v4440 = vunpack.c.l.s8.bf16 %v4112
    %v4441 = vunpack.c.h.s8.bf16 %v4105
    %v4442 = vunpack.c.h.s8.bf16 %v4106
    %v4443 = vunpack.c.h.s8.bf16 %v4107
    %v4444 = vunpack.c.h.s8.bf16 %v4108
    %v4445 = vunpack.c.h.s8.bf16 %v4109
    %v4446 = vunpack.c.h.s8.bf16 %v4110
    %v4447 = vunpack.c.h.s8.bf16 %v4111
    %v4448 = vunpack.c.h.s8.bf16 %v4112
    %v4449 = vunpack.c.l.s8.bf16 %v4113
    %v4450 = vunpack.c.l.s8.bf16 %v4114
    %v4451 = vunpack.c.l.s8.bf16 %v4115
    %v4452 = vunpack.c.l.s8.bf16 %v4116
    %v4453 = vunpack.c.l.s8.bf16 %v4117
    %v4454 = vunpack.c.l.s8.bf16 %v4118
    %v4455 = vunpack.c.l.s8.bf16 %v4119
    %v4456 = vunpack.c.l.s8.bf16 %v4120
    %v4457 = vunpack.c.h.s8.bf16 %v4113
    %v4458 = vunpack.c.h.s8.bf16 %v4114
    %v4459 = vunpack.c.h.s8.bf16 %v4115
    %v4460 = vunpack.c.h.s8.bf16 %v4116
    %v4461 = vunpack.c.h.s8.bf16 %v4117
    %v4462 = vunpack.c.h.s8.bf16 %v4118
    %v4463 = vunpack.c.h.s8.bf16 %v4119
    %v4464 = vunpack.c.h.s8.bf16 %v4120
    %v4465 = vunpack.c.l.s8.bf16 %v4121
    %v4466 = vunpack.c.l.s8.bf16 %v4122
    %v4467 = vunpack.c.l.s8.bf16 %v4123
    %v4468 = vunpack.c.l.s8.bf16 %v4124
    %v4469 = vunpack.c.l.s8.bf16 %v4125
    %v4470 = vunpack.c.l.s8.bf16 %v4126
    %v4471 = vunpack.c.l.s8.bf16 %v4127
    %v4472 = vunpack.c.l.s8.bf16 %v4128
    %v4473 = vunpack.c.h.s8.bf16 %v4121
    %v4474 = vunpack.c.h.s8.bf16 %v4122
    %v4475 = vunpack.c.h.s8.bf16 %v4123
    %v4476 = vunpack.c.h.s8.bf16 %v4124
    %v4477 = vunpack.c.h.s8.bf16 %v4125
    %v4478 = vunpack.c.h.s8.bf16 %v4126
    %v4479 = vunpack.c.h.s8.bf16 %v4127
    %v4480 = vunpack.c.h.s8.bf16 %v4128
    %v4481 = vunpack.c.l.s8.bf16 %v4129
    %v4482 = vunpack.c.l.s8.bf16 %v4130
    %v4483 = vunpack.c.l.s8.bf16 %v4131
    %v4484 = vunpack.c.l.s8.bf16 %v4132
    %v4485 = vunpack.c.l.s8.bf16 %v4133
    %v4486 = vunpack.c.l.s8.bf16 %v4134
    %v4487 = vunpack.c.l.s8.bf16 %v4135
    %v4488 = vunpack.c.l.s8.bf16 %v4136
    %v4489 = vunpack.c.h.s8.bf16 %v4129
    %v4490 = vunpack.c.h.s8.bf16 %v4130
    %v4491 = vunpack.c.h.s8.bf16 %v4131
    %v4492 = vunpack.c.h.s8.bf16 %v4132
    %v4493 = vunpack.c.h.s8.bf16 %v4133
    %v4494 = vunpack.c.h.s8.bf16 %v4134
    %v4495 = vunpack.c.h.s8.bf16 %v4135
    %v4496 = vunpack.c.h.s8.bf16 %v4136
    %v4497 = vunpack.c.l.s8.bf16 %v4137
    %v4498 = vunpack.c.l.s8.bf16 %v4138
    %v4499 = vunpack.c.l.s8.bf16 %v4139
    %v4500 = vunpack.c.l.s8.bf16 %v4140
    %v4501 = vunpack.c.l.s8.bf16 %v4141
    %v4502 = vunpack.c.l.s8.bf16 %v4142
    %v4503 = vunpack.c.l.s8.bf16 %v4143
    %v4504 = vunpack.c.l.s8.bf16 %v4144
    %v4505 = vunpack.c.h.s8.bf16 %v4137
    %v4506 = vunpack.c.h.s8.bf16 %v4138
    %v4507 = vunpack.c.h.s8.bf16 %v4139
    %v4508 = vunpack.c.h.s8.bf16 %v4140
    %v4509 = vunpack.c.h.s8.bf16 %v4141
    %v4510 = vunpack.c.h.s8.bf16 %v4142
    %v4511 = vunpack.c.h.s8.bf16 %v4143
    %v4512 = vunpack.c.h.s8.bf16 %v4144
    %v4513 = vunpack.c.l.s8.bf16 %v4145
    %v4514 = vunpack.c.l.s8.bf16 %v4146
    %v4515 = vunpack.c.l.s8.bf16 %v4147
    %v4516 = vunpack.c.l.s8.bf16 %v4148
    %v4517 = vunpack.c.l.s8.bf16 %v4149
    %v4518 = vunpack.c.l.s8.bf16 %v4150
    %v4519 = vunpack.c.l.s8.bf16 %v4151
    %v4520 = vunpack.c.l.s8.bf16 %v4152
    %v4521 = vunpack.c.h.s8.bf16 %v4145
    %v4522 = vunpack.c.h.s8.bf16 %v4146
    %v4523 = vunpack.c.h.s8.bf16 %v4147
    %v4524 = vunpack.c.h.s8.bf16 %v4148
    %v4525 = vunpack.c.h.s8.bf16 %v4149
    %v4526 = vunpack.c.h.s8.bf16 %v4150
    %v4527 = vunpack.c.h.s8.bf16 %v4151
    %v4528 = vunpack.c.h.s8.bf16 %v4152
    %v4529 = vunpack.c.l.s8.bf16 %v4153
    %v4530 = vunpack.c.l.s8.bf16 %v4154
    %v4531 = vunpack.c.l.s8.bf16 %v4155
    %v4532 = vunpack.c.l.s8.bf16 %v4156
    %v4533 = vunpack.c.l.s8.bf16 %v4157
    %v4534 = vunpack.c.l.s8.bf16 %v4158
    %v4535 = vunpack.c.l.s8.bf16 %v4159
    %v4536 = vunpack.c.l.s8.bf16 %v4160
    %v4537 = vunpack.c.h.s8.bf16 %v4153
    %v4538 = vunpack.c.h.s8.bf16 %v4154
    %v4539 = vunpack.c.h.s8.bf16 %v4155
    %v4540 = vunpack.c.h.s8.bf16 %v4156
    %v4541 = vunpack.c.h.s8.bf16 %v4157
    %v4542 = vunpack.c.h.s8.bf16 %v4158
    %v4543 = vunpack.c.h.s8.bf16 %v4159
    %v4544 = vunpack.c.h.s8.bf16 %v4160
    %v4545 = vunpack.c.l.s8.bf16 %v4161
    %v4546 = vunpack.c.l.s8.bf16 %v4162
    %v4547 = vunpack.c.l.s8.bf16 %v4163
    %v4548 = vunpack.c.l.s8.bf16 %v4164
    %v4549 = vunpack.c.l.s8.bf16 %v4165
    %v4550 = vunpack.c.l.s8.bf16 %v4166
    %v4551 = vunpack.c.l.s8.bf16 %v4167
    %v4552 = vunpack.c.l.s8.bf16 %v4168
    %v4553 = vunpack.c.h.s8.bf16 %v4161
    %v4554 = vunpack.c.h.s8.bf16 %v4162
    %v4555 = vunpack.c.h.s8.bf16 %v4163
    %v4556 = vunpack.c.h.s8.bf16 %v4164
    %v4557 = vunpack.c.h.s8.bf16 %v4165
    %v4558 = vunpack.c.h.s8.bf16 %v4166
    %v4559 = vunpack.c.h.s8.bf16 %v4167
    %v4560 = vunpack.c.h.s8.bf16 %v4168
    %v4561 = vunpack.c.l.s8.bf16 %v4169
    %v4562 = vunpack.c.l.s8.bf16 %v4170
    %v4563 = vunpack.c.l.s8.bf16 %v4171
    %v4564 = vunpack.c.l.s8.bf16 %v4172
    %v4565 = vunpack.c.l.s8.bf16 %v4173
    %v4566 = vunpack.c.l.s8.bf16 %v4174
    %v4567 = vunpack.c.l.s8.bf16 %v4175
    %v4568 = vunpack.c.l.s8.bf16 %v4176
    %v4569 = vunpack.c.h.s8.bf16 %v4169
    %v4570 = vunpack.c.h.s8.bf16 %v4170
    %v4571 = vunpack.c.h.s8.bf16 %v4171
    %v4572 = vunpack.c.h.s8.bf16 %v4172
    %v4573 = vunpack.c.h.s8.bf16 %v4173
    %v4574 = vunpack.c.h.s8.bf16 %v4174
    %v4575 = vunpack.c.h.s8.bf16 %v4175
    %v4576 = vunpack.c.h.s8.bf16 %v4176
    %v4577 = vunpack.c.l.s8.bf16 %v4177
    %v4578 = vunpack.c.l.s8.bf16 %v4178
    %v4579 = vunpack.c.l.s8.bf16 %v4179
    %v4580 = vunpack.c.l.s8.bf16 %v4180
    %v4581 = vunpack.c.l.s8.bf16 %v4181
    %v4582 = vunpack.c.l.s8.bf16 %v4182
    %v4583 = vunpack.c.l.s8.bf16 %v4183
    %v4584 = vunpack.c.l.s8.bf16 %v4184
    %v4585 = vunpack.c.h.s8.bf16 %v4177
    %v4586 = vunpack.c.h.s8.bf16 %v4178
    %v4587 = vunpack.c.h.s8.bf16 %v4179
    %v4588 = vunpack.c.h.s8.bf16 %v4180
    %v4589 = vunpack.c.h.s8.bf16 %v4181
    %v4590 = vunpack.c.h.s8.bf16 %v4182
    %v4591 = vunpack.c.h.s8.bf16 %v4183
    %v4592 = vunpack.c.h.s8.bf16 %v4184
    %v4593 = vunpack.c.l.s8.bf16 %v4185
    %v4594 = vunpack.c.l.s8.bf16 %v4186
    %v4595 = vunpack.c.l.s8.bf16 %v4187
    %v4596 = vunpack.c.l.s8.bf16 %v4188
    %v4597 = vunpack.c.l.s8.bf16 %v4189
    %v4598 = vunpack.c.l.s8.bf16 %v4190
    %v4599 = vunpack.c.l.s8.bf16 %v4191
    %v4600 = vunpack.c.l.s8.bf16 %v4192
    %v4601 = vunpack.c.h.s8.bf16 %v4185
    %v4602 = vunpack.c.h.s8.bf16 %v4186
    %v4603 = vunpack.c.h.s8.bf16 %v4187
    %v4604 = vunpack.c.h.s8.bf16 %v4188
    %v4605 = vunpack.c.h.s8.bf16 %v4189
    %v4606 = vunpack.c.h.s8.bf16 %v4190
    %v4607 = vunpack.c.h.s8.bf16 %v4191
    %v4608 = vunpack.c.h.s8.bf16 %v4192
    %v4609 = vunpack.c.l.s8.bf16 %v4193
    %v4610 = vunpack.c.l.s8.bf16 %v4194
    %v4611 = vunpack.c.l.s8.bf16 %v4195
    %v4612 = vunpack.c.l.s8.bf16 %v4196
    %v4613 = vunpack.c.l.s8.bf16 %v4197
    %v4614 = vunpack.c.l.s8.bf16 %v4198
    %v4615 = vunpack.c.l.s8.bf16 %v4199
    %v4616 = vunpack.c.l.s8.bf16 %v4200
    %v4617 = vunpack.c.h.s8.bf16 %v4193
    %v4618 = vunpack.c.h.s8.bf16 %v4194
    %v4619 = vunpack.c.h.s8.bf16 %v4195
    %v4620 = vunpack.c.h.s8.bf16 %v4196
    %v4621 = vunpack.c.h.s8.bf16 %v4197
    %v4622 = vunpack.c.h.s8.bf16 %v4198
    %v4623 = vunpack.c.h.s8.bf16 %v4199
    %v4624 = vunpack.c.h.s8.bf16 %v4200
    %v4625 = vunpack.c.l.s8.bf16 %v4201
    %v4626 = vunpack.c.l.s8.bf16 %v4202
    %v4627 = vunpack.c.l.s8.bf16 %v4203
    %v4628 = vunpack.c.l.s8.bf16 %v4204
    %v4629 = vunpack.c.l.s8.bf16 %v4205
    %v4630 = vunpack.c.l.s8.bf16 %v4206
    %v4631 = vunpack.c.l.s8.bf16 %v4207
    %v4632 = vunpack.c.l.s8.bf16 %v4208
    %v4633 = vunpack.c.h.s8.bf16 %v4201
    %v4634 = vunpack.c.h.s8.bf16 %v4202
    %v4635 = vunpack.c.h.s8.bf16 %v4203
    %v4636 = vunpack.c.h.s8.bf16 %v4204
    %v4637 = vunpack.c.h.s8.bf16 %v4205
    %v4638 = vunpack.c.h.s8.bf16 %v4206
    %v4639 = vunpack.c.h.s8.bf16 %v4207
    %v4640 = vunpack.c.h.s8.bf16 %v4208
    %v4641 = vunpack.c.l.s8.bf16 %v4209
    %v4642 = vunpack.c.l.s8.bf16 %v4210
    %v4643 = vunpack.c.l.s8.bf16 %v4211
    %v4644 = vunpack.c.l.s8.bf16 %v4212
    %v4645 = vunpack.c.l.s8.bf16 %v4213
    %v4646 = vunpack.c.l.s8.bf16 %v4214
    %v4647 = vunpack.c.l.s8.bf16 %v4215
    %v4648 = vunpack.c.l.s8.bf16 %v4216
    %v4649 = vunpack.c.h.s8.bf16 %v4209
    %v4650 = vunpack.c.h.s8.bf16 %v4210
    %v4651 = vunpack.c.h.s8.bf16 %v4211
    %v4652 = vunpack.c.h.s8.bf16 %v4212
    %v4653 = vunpack.c.h.s8.bf16 %v4213
    %v4654 = vunpack.c.h.s8.bf16 %v4214
    %v4655 = vunpack.c.h.s8.bf16 %v4215
    %v4656 = vunpack.c.h.s8.bf16 %v4216
    %v4657 = vunpack.c.l.s8.bf16 %v4217
    %v4658 = vunpack.c.l.s8.bf16 %v4218
    %v4659 = vunpack.c.l.s8.bf16 %v4219
    %v4660 = vunpack.c.l.s8.bf16 %v4220
    %v4661 = vunpack.c.l.s8.bf16 %v4221
    %v4662 = vunpack.c.l.s8.bf16 %v4222
    %v4663 = vunpack.c.l.s8.bf16 %v4223
    %v4664 = vunpack.c.l.s8.bf16 %v4224
    %v4665 = vunpack.c.h.s8.bf16 %v4217
    %v4666 = vunpack.c.h.s8.bf16 %v4218
    %v4667 = vunpack.c.h.s8.bf16 %v4219
    %v4668 = vunpack.c.h.s8.bf16 %v4220
    %v4669 = vunpack.c.h.s8.bf16 %v4221
    %v4670 = vunpack.c.h.s8.bf16 %v4222
    %v4671 = vunpack.c.h.s8.bf16 %v4223
    %v4672 = vunpack.c.h.s8.bf16 %v4224
    %v4673 = vunpack.c.l.s8.bf16 %v4225
    %v4674 = vunpack.c.l.s8.bf16 %v4226
    %v4675 = vunpack.c.l.s8.bf16 %v4227
    %v4676 = vunpack.c.l.s8.bf16 %v4228
    %v4677 = vunpack.c.l.s8.bf16 %v4229
    %v4678 = vunpack.c.l.s8.bf16 %v4230
    %v4679 = vunpack.c.l.s8.bf16 %v4231
    %v4680 = vunpack.c.l.s8.bf16 %v4232
    %v4681 = vunpack.c.h.s8.bf16 %v4225
    %v4682 = vunpack.c.h.s8.bf16 %v4226
    %v4683 = vunpack.c.h.s8.bf16 %v4227
    %v4684 = vunpack.c.h.s8.bf16 %v4228
    %v4685 = vunpack.c.h.s8.bf16 %v4229
    %v4686 = vunpack.c.h.s8.bf16 %v4230
    %v4687 = vunpack.c.h.s8.bf16 %v4231
    %v4688 = vunpack.c.h.s8.bf16 %v4232
    %v4689 = vunpack.c.l.s8.bf16 %v4233
    %v4690 = vunpack.c.l.s8.bf16 %v4234
    %v4691 = vunpack.c.l.s8.bf16 %v4235
    %v4692 = vunpack.c.l.s8.bf16 %v4236
    %v4693 = vunpack.c.l.s8.bf16 %v4237
    %v4694 = vunpack.c.l.s8.bf16 %v4238
    %v4695 = vunpack.c.l.s8.bf16 %v4239
    %v4696 = vunpack.c.l.s8.bf16 %v4240
    %v4697 = vunpack.c.h.s8.bf16 %v4233
    %v4698 = vunpack.c.h.s8.bf16 %v4234
    %v4699 = vunpack.c.h.s8.bf16 %v4235
    %v4700 = vunpack.c.h.s8.bf16 %v4236
    %v4701 = vunpack.c.h.s8.bf16 %v4237
    %v4702 = vunpack.c.h.s8.bf16 %v4238
    %v4703 = vunpack.c.h.s8.bf16 %v4239
    %v4704 = vunpack.c.h.s8.bf16 %v4240
    %v4705 = vunpack.c.l.s8.bf16 %v4241
    %v4706 = vunpack.c.l.s8.bf16 %v4242
    %v4707 = vunpack.c.l.s8.bf16 %v4243
    %v4708 = vunpack.c.l.s8.bf16 %v4244
    %v4709 = vunpack.c.l.s8.bf16 %v4245
    %v4710 = vunpack.c.l.s8.bf16 %v4246
    %v4711 = vunpack.c.l.s8.bf16 %v4247
    %v4712 = vunpack.c.l.s8.bf16 %v4248
    %v4713 = vunpack.c.h.s8.bf16 %v4241
    %v4714 = vunpack.c.h.s8.bf16 %v4242
    %v4715 = vunpack.c.h.s8.bf16 %v4243
    %v4716 = vunpack.c.h.s8.bf16 %v4244
    %v4717 = vunpack.c.h.s8.bf16 %v4245
    %v4718 = vunpack.c.h.s8.bf16 %v4246
    %v4719 = vunpack.c.h.s8.bf16 %v4247
    %v4720 = vunpack.c.h.s8.bf16 %v4248
    %v4721 = vunpack.c.l.s8.bf16 %v4249
    %v4722 = vunpack.c.l.s8.bf16 %v4250
    %v4723 = vunpack.c.l.s8.bf16 %v4251
    %v4724 = vunpack.c.l.s8.bf16 %v4252
    %v4725 = vunpack.c.l.s8.bf16 %v4253
    %v4726 = vunpack.c.l.s8.bf16 %v4254
    %v4727 = vunpack.c.l.s8.bf16 %v4255
    %v4728 = vunpack.c.l.s8.bf16 %v4256
    %v4729 = vunpack.c.h.s8.bf16 %v4249
    %v4730 = vunpack.c.h.s8.bf16 %v4250
    %v4731 = vunpack.c.h.s8.bf16 %v4251
    %v4732 = vunpack.c.h.s8.bf16 %v4252
    %v4733 = vunpack.c.h.s8.bf16 %v4253
    %v4734 = vunpack.c.h.s8.bf16 %v4254
    %v4735 = vunpack.c.h.s8.bf16 %v4255
    %v4736 = vunpack.c.h.s8.bf16 %v4256
    %v4737 = vunpack.c.l.s8.bf16 %v4257
    %v4738 = vunpack.c.l.s8.bf16 %v4258
    %v4739 = vunpack.c.l.s8.bf16 %v4259
    %v4740 = vunpack.c.l.s8.bf16 %v4260
    %v4741 = vunpack.c.l.s8.bf16 %v4261
    %v4742 = vunpack.c.l.s8.bf16 %v4262
    %v4743 = vunpack.c.l.s8.bf16 %v4263
    %v4744 = vunpack.c.l.s8.bf16 %v4264
    %v4745 = vunpack.c.h.s8.bf16 %v4257
    %v4746 = vunpack.c.h.s8.bf16 %v4258
    %v4747 = vunpack.c.h.s8.bf16 %v4259
    %v4748 = vunpack.c.h.s8.bf16 %v4260
    %v4749 = vunpack.c.h.s8.bf16 %v4261
    %v4750 = vunpack.c.h.s8.bf16 %v4262
    %v4751 = vunpack.c.h.s8.bf16 %v4263
    %v4752 = vunpack.c.h.s8.bf16 %v4264
    %v4753 = vunpack.c.l.s8.bf16 %v4265
    %v4754 = vunpack.c.l.s8.bf16 %v4266
    %v4755 = vunpack.c.l.s8.bf16 %v4267
    %v4756 = vunpack.c.l.s8.bf16 %v4268
    %v4757 = vunpack.c.l.s8.bf16 %v4269
    %v4758 = vunpack.c.l.s8.bf16 %v4270
    %v4759 = vunpack.c.l.s8.bf16 %v4271
    %v4760 = vunpack.c.l.s8.bf16 %v4272
    %v4761 = vunpack.c.h.s8.bf16 %v4265
    %v4762 = vunpack.c.h.s8.bf16 %v4266
    %v4763 = vunpack.c.h.s8.bf16 %v4267
    %v4764 = vunpack.c.h.s8.bf16 %v4268
    %v4765 = vunpack.c.h.s8.bf16 %v4269
    %v4766 = vunpack.c.h.s8.bf16 %v4270
    %v4767 = vunpack.c.h.s8.bf16 %v4271
    %v4768 = vunpack.c.h.s8.bf16 %v4272
    %v4769 = vunpack.c.l.s8.bf16 %v4273
    %v4770 = vunpack.c.l.s8.bf16 %v4274
    %v4771 = vunpack.c.l.s8.bf16 %v4275
    %v4772 = vunpack.c.l.s8.bf16 %v4276
    %v4773 = vunpack.c.l.s8.bf16 %v4277
    %v4774 = vunpack.c.l.s8.bf16 %v4278
    %v4775 = vunpack.c.l.s8.bf16 %v4279
    %v4776 = vunpack.c.l.s8.bf16 %v4280
    %v4777 = vunpack.c.h.s8.bf16 %v4273
    %v4778 = vunpack.c.h.s8.bf16 %v4274
    %v4779 = vunpack.c.h.s8.bf16 %v4275
    %v4780 = vunpack.c.h.s8.bf16 %v4276
    %v4781 = vunpack.c.h.s8.bf16 %v4277
    %v4782 = vunpack.c.h.s8.bf16 %v4278
    %v4783 = vunpack.c.h.s8.bf16 %v4279
    %v4784 = vunpack.c.h.s8.bf16 %v4280
    %v4785 = vunpack.c.l.s8.bf16 %v4281
    %v4786 = vunpack.c.l.s8.bf16 %v4282
    %v4787 = vunpack.c.l.s8.bf16 %v4283
    %v4788 = vunpack.c.l.s8.bf16 %v4284
    %v4789 = vunpack.c.l.s8.bf16 %v4285
    %v4790 = vunpack.c.l.s8.bf16 %v4286
    %v4791 = vunpack.c.l.s8.bf16 %v4287
    %v4792 = vunpack.c.l.s8.bf16 %v4288
    %v4793 = vunpack.c.h.s8.bf16 %v4281
    %v4794 = vunpack.c.h.s8.bf16 %v4282
    %v4795 = vunpack.c.h.s8.bf16 %v4283
    %v4796 = vunpack.c.h.s8.bf16 %v4284
    %v4797 = vunpack.c.h.s8.bf16 %v4285
    %v4798 = vunpack.c.h.s8.bf16 %v4286
    %v4799 = vunpack.c.h.s8.bf16 %v4287
    %v4800 = vunpack.c.h.s8.bf16 %v4288
    %v4801 = vpack.c.bf16 %v4025, %v4025
    %v4802 = vpack.c.bf16 %v4026, %v4026
    %v4803 = vpack.c.bf16 %v4027, %v4027
    %v4804 = vpack.c.bf16 %v4028, %v4028
    %v4805 = vpack.c.bf16 %v4029, %v4029
    %v4806 = vpack.c.bf16 %v4030, %v4030
    %v4807 = vpack.c.bf16 %v4031, %v4031
    %v4808 = vpack.c.bf16 %v4032, %v4032
    %4809 = vmatprep.subr.bf16.mxu0 %v4290
    %4810 = vmatpush1.bf16.msra.mxu0 %v4289
    %4811 = vmatprep.subr.bf16.mxu0 %v4298
    %4812 = vmatpush1.bf16.msra.mxu0 %v4297
    %4813 = vmatprep.subr.bf16.mxu0 %v4306
    %4814 = vmatpush1.bf16.msra.mxu0 %v4305
    %4815 = vmatprep.subr.bf16.mxu0 %v4314
    %4816 = vmatpush1.bf16.msra.mxu0 %v4313
    %4817 = vmatprep.subr.bf16.mxu0 %v4322
    %4818 = vmatpush1.bf16.msra.mxu0 %v4321
    %4819 = vmatprep.subr.bf16.mxu0 %v4330
    %4820 = vmatpush1.bf16.msra.mxu0 %v4329
    %4821 = vmatprep.subr.bf16.mxu0 %v4338
    %4822 = vmatpush1.bf16.msra.mxu0 %v4337
    %4823 = vmatprep.subr.bf16.mxu0 %v4346
    %4824 = vmatpush1.bf16.msra.mxu0 %v4345
    %4825 = vmatprep.subr.bf16.mxu0 %v4354
    %4826 = vmatpush1.bf16.msra.mxu0 %v4353
    %4827 = vmatprep.subr.bf16.mxu0 %v4362
    %4828 = vmatpush1.bf16.msra.mxu0 %v4361
    %4829 = vmatprep.subr.bf16.mxu0 %v4370
    %4830 = vmatpush1.bf16.msra.mxu0 %v4369
    %4831 = vmatprep.subr.bf16.mxu0 %v4378
    %4832 = vmatpush1.bf16.msra.mxu0 %v4377
    %4833 = vmatprep.subr.bf16.mxu0 %v4386
    %4834 = vmatpush1.bf16.msra.mxu0 %v4385
    %4835 = vmatprep.subr.bf16.mxu0 %v4394
    %4836 = vmatpush1.bf16.msra.mxu0 %v4393
    %4837 = vmatprep.subr.bf16.mxu0 %v4402
    %4838 = vmatpush1.bf16.msra.mxu0 %v4401
    %4839 = vmatprep.subr.bf16.mxu0 %v4410
    %4840 = vmatpush1.bf16.msra.mxu0 %v4409
    %4841 = vmatprep.mubr.bf16.mxu0 %v4802
    %4842 = vmatmul.mubr.bf16.gmra.mrb[0].mxu0 %v4801
    %v4843 = vpop.f32.mrb[0].mxu0
    %v4844 = vadd.f32 0.0, %v4843
    %v4845 = vpop.f32.mrb[0].mxu0
    %v4846 = vadd.f32 0.0, %v4845
    %v4847 = vpop.f32.mrb[0].mxu0
    %v4848 = vpop.f32.mrb[0].mxu0
    %4849 = vdwg.mxu0
    %4850 = vmatprep.subr.bf16.mxu0 %v4418
    %4851 = vmatpush1.bf16.msra.mxu0 %v4417
    %4852 = vmatprep.subr.bf16.mxu0 %v4426
    %4853 = vmatpush1.bf16.msra.mxu0 %v4425
    %4854 = vmatprep.subr.bf16.mxu0 %v4434
    %4855 = vmatpush1.bf16.msra.mxu0 %v4433
    %4856 = vmatprep.subr.bf16.mxu0 %v4442
    %4857 = vmatpush1.bf16.msra.mxu0 %v4441
    %4858 = vmatprep.subr.bf16.mxu0 %v4450
    %4859 = vmatpush1.bf16.msra.mxu0 %v4449
    %4860 = vmatprep.subr.bf16.mxu0 %v4458
    %4861 = vmatpush1.bf16.msra.mxu0 %v4457
    %4862 = vmatprep.subr.bf16.mxu0 %v4466
    %4863 = vmatpush1.bf16.msra.mxu0 %v4465
    %4864 = vmatprep.subr.bf16.mxu0 %v4474
    %4865 = vmatpush1.bf16.msra.mxu0 %v4473
    %4866 = vmatprep.subr.bf16.mxu0 %v4482
    %4867 = vmatpush1.bf16.msra.mxu0 %v4481
    %4868 = vmatprep.subr.bf16.mxu0 %v4490
    %4869 = vmatpush1.bf16.msra.mxu0 %v4489
    %4870 = vmatprep.subr.bf16.mxu0 %v4498
    %4871 = vmatpush1.bf16.msra.mxu0 %v4497
    %4872 = vmatprep.subr.bf16.mxu0 %v4506
    %4873 = vmatpush1.bf16.msra.mxu0 %v4505
    %4874 = vmatprep.subr.bf16.mxu0 %v4514
    %4875 = vmatpush1.bf16.msra.mxu0 %v4513
    %4876 = vmatprep.subr.bf16.mxu0 %v4522
    %4877 = vmatpush1.bf16.msra.mxu0 %v4521
    %4878 = vmatprep.subr.bf16.mxu0 %v4530
    %4879 = vmatpush1.bf16.msra.mxu0 %v4529
    %4880 = vmatprep.subr.bf16.mxu0 %v4538
    %4881 = vmatpush1.bf16.msra.mxu0 %v4537
    %4882 = vmatprep.mubr.bf16.mxu0 %v4804
    %4883 = vmatmul.mubr.bf16.gmra.mrb[0].mxu0 %v4803
    %v4884 = vpop.f32.mrb[0].mxu0
    %v4885 = vadd.f32 %v4844, %v4884
    %v4886 = vpop.f32.mrb[0].mxu0
    %v4887 = vadd.f32 %v4846, %v4886
    %v4888 = vpop.f32.mrb[0].mxu0
    %v4889 = vpop.f32.mrb[0].mxu0
    %4890 = vdwg.mxu0
    %4891 = vmatprep.subr.bf16.mxu0 %v4546
    %4892 = vmatpush1.bf16.msra.mxu0 %v4545
    %4893 = vmatprep.subr.bf16.mxu0 %v4554
    %4894 = vmatpush1.bf16.msra.mxu0 %v4553
    %4895 = vmatprep.subr.bf16.mxu0 %v4562
    %4896 = vmatpush1.bf16.msra.mxu0 %v4561
    %4897 = vmatprep.subr.bf16.mxu0 %v4570
    %4898 = vmatpush1.bf16.msra.mxu0 %v4569
    %4899 = vmatprep.subr.bf16.mxu0 %v4578
    %4900 = vmatpush1.bf16.msra.mxu0 %v4577
    %4901 = vmatprep.subr.bf16.mxu0 %v4586
    %4902 = vmatpush1.bf16.msra.mxu0 %v4585
    %4903 = vmatprep.subr.bf16.mxu0 %v4594
    %4904 = vmatpush1.bf16.msra.mxu0 %v4593
    %4905 = vmatprep.subr.bf16.mxu0 %v4602
    %4906 = vmatpush1.bf16.msra.mxu0 %v4601
    %4907 = vmatprep.subr.bf16.mxu0 %v4610
    %4908 = vmatpush1.bf16.msra.mxu0 %v4609
    %4909 = vmatprep.subr.bf16.mxu0 %v4618
    %4910 = vmatpush1.bf16.msra.mxu0 %v4617
    %4911 = vmatprep.subr.bf16.mxu0 %v4626
    %4912 = vmatpush1.bf16.msra.mxu0 %v4625
    %4913 = vmatprep.subr.bf16.mxu0 %v4634
    %4914 = vmatpush1.bf16.msra.mxu0 %v4633
    %4915 = vmatprep.subr.bf16.mxu0 %v4642
    %4916 = vmatpush1.bf16.msra.mxu0 %v4641
    %4917 = vmatprep.subr.bf16.mxu0 %v4650
    %4918 = vmatpush1.bf16.msra.mxu0 %v4649
    %4919 = vmatprep.subr.bf16.mxu0 %v4658
    %4920 = vmatpush1.bf16.msra.mxu0 %v4657
    %4921 = vmatprep.subr.bf16.mxu0 %v4666
    %4922 = vmatpush1.bf16.msra.mxu0 %v4665
    %4923 = vmatprep.mubr.bf16.mxu0 %v4806
    %4924 = vmatmul.mubr.bf16.gmra.mrb[0].mxu0 %v4805
    %v4925 = vpop.f32.mrb[0].mxu0
    %v4926 = vadd.f32 %v4885, %v4925
    %v4927 = vpop.f32.mrb[0].mxu0
    %v4928 = vadd.f32 %v4887, %v4927
    %v4929 = vpop.f32.mrb[0].mxu0
    %v4930 = vpop.f32.mrb[0].mxu0
    %4931 = vdwg.mxu0
    %4932 = vmatprep.subr.bf16.mxu0 %v4674
    %4933 = vmatpush1.bf16.msra.mxu0 %v4673
    %4934 = vmatprep.subr.bf16.mxu0 %v4682
    %4935 = vmatpush1.bf16.msra.mxu0 %v4681
    %4936 = vmatprep.subr.bf16.mxu0 %v4690
    %4937 = vmatpush1.bf16.msra.mxu0 %v4689
    %4938 = vmatprep.subr.bf16.mxu0 %v4698
    %4939 = vmatpush1.bf16.msra.mxu0 %v4697
    %4940 = vmatprep.subr.bf16.mxu0 %v4706
    %4941 = vmatpush1.bf16.msra.mxu0 %v4705
    %4942 = vmatprep.subr.bf16.mxu0 %v4714
    %4943 = vmatpush1.bf16.msra.mxu0 %v4713
    %4944 = vmatprep.subr.bf16.mxu0 %v4722
    %4945 = vmatpush1.bf16.msra.mxu0 %v4721
    %4946 = vmatprep.subr.bf16.mxu0 %v4730
    %4947 = vmatpush1.bf16.msra.mxu0 %v4729
    %4948 = vmatprep.subr.bf16.mxu0 %v4738
    %4949 = vmatpush1.bf16.msra.mxu0 %v4737
    %4950 = vmatprep.subr.bf16.mxu0 %v4746
    %4951 = vmatpush1.bf16.msra.mxu0 %v4745
    %4952 = vmatprep.subr.bf16.mxu0 %v4754
    %4953 = vmatpush1.bf16.msra.mxu0 %v4753
    %4954 = vmatprep.subr.bf16.mxu0 %v4762
    %4955 = vmatpush1.bf16.msra.mxu0 %v4761
    %4956 = vmatprep.subr.bf16.mxu0 %v4770
    %4957 = vmatpush1.bf16.msra.mxu0 %v4769
    %4958 = vmatprep.subr.bf16.mxu0 %v4778
    %4959 = vmatpush1.bf16.msra.mxu0 %v4777
    %4960 = vmatprep.subr.bf16.mxu0 %v4786
    %4961 = vmatpush1.bf16.msra.mxu0 %v4785
    %4962 = vmatprep.subr.bf16.mxu0 %v4794
    %4963 = vmatpush1.bf16.msra.mxu0 %v4793
    %4964 = vmatprep.mubr.bf16.mxu0 %v4808
    %4965 = vmatmul.mubr.bf16.gmra.mrb[0].mxu0 %v4807
    %v4966 = vpop.f32.mrb[0].mxu0
    %v4967 = vadd.f32 %v4926, %v4966
    %v4968 = vpop.f32.mrb[0].mxu0
    %v4969 = vadd.f32 %v4928, %v4968
    %v4970 = vpop.f32.mrb[0].mxu0
    %v4971 = vpop.f32.mrb[0].mxu0
    %4972 = vdwg.mxu0
    %4973 = vmatprep.subr.bf16.mxu0 %v4292
    %4974 = vmatpush1.bf16.msra.mxu0 %v4291
    %4975 = vmatprep.subr.bf16.mxu0 %v4300
    %4976 = vmatpush1.bf16.msra.mxu0 %v4299
    %4977 = vmatprep.subr.bf16.mxu0 %v4308
    %4978 = vmatpush1.bf16.msra.mxu0 %v4307
    %4979 = vmatprep.subr.bf16.mxu0 %v4316
    %4980 = vmatpush1.bf16.msra.mxu0 %v4315
    %4981 = vmatprep.subr.bf16.mxu0 %v4324
    %4982 = vmatpush1.bf16.msra.mxu0 %v4323
    %4983 = vmatprep.subr.bf16.mxu0 %v4332
    %4984 = vmatpush1.bf16.msra.mxu0 %v4331
    %4985 = vmatprep.subr.bf16.mxu0 %v4340
    %4986 = vmatpush1.bf16.msra.mxu0 %v4339
    %4987 = vmatprep.subr.bf16.mxu0 %v4348
    %4988 = vmatpush1.bf16.msra.mxu0 %v4347
    %4989 = vmatprep.subr.bf16.mxu0 %v4356
    %4990 = vmatpush1.bf16.msra.mxu0 %v4355
    %4991 = vmatprep.subr.bf16.mxu0 %v4364
    %4992 = vmatpush1.bf16.msra.mxu0 %v4363
    %4993 = vmatprep.subr.bf16.mxu0 %v4372
    %4994 = vmatpush1.bf16.msra.mxu0 %v4371
    %4995 = vmatprep.subr.bf16.mxu0 %v4380
    %4996 = vmatpush1.bf16.msra.mxu0 %v4379
    %4997 = vmatprep.subr.bf16.mxu0 %v4388
    %4998 = vmatpush1.bf16.msra.mxu0 %v4387
    %4999 = vmatprep.subr.bf16.mxu0 %v4396
    %5000 = vmatpush1.bf16.msra.mxu0 %v4395
    %5001 = vmatprep.subr.bf16.mxu0 %v4404
    %5002 = vmatpush1.bf16.msra.mxu0 %v4403
    %5003 = vmatprep.subr.bf16.mxu0 %v4412
    %5004 = vmatpush1.bf16.msra.mxu0 %v4411
    %5005 = vmatprep.mubr.bf16.mxu0 %v4802
    %5006 = vmatmul.mubr.bf16.gmra.mrb[0].mxu0 %v4801
    %v5007 = vpop.f32.mrb[0].mxu0
    %v5008 = vadd.f32 0.0, %v5007
    %v5009 = vpop.f32.mrb[0].mxu0
    %v5010 = vadd.f32 0.0, %v5009
    %v5011 = vpop.f32.mrb[0].mxu0
    %v5012 = vpop.f32.mrb[0].mxu0
    %5013 = vdwg.mxu0
    %5014 = vmatprep.subr.bf16.mxu0 %v4420
    %5015 = vmatpush1.bf16.msra.mxu0 %v4419
    %5016 = vmatprep.subr.bf16.mxu0 %v4428
    %5017 = vmatpush1.bf16.msra.mxu0 %v4427
    %5018 = vmatprep.subr.bf16.mxu0 %v4436
    %5019 = vmatpush1.bf16.msra.mxu0 %v4435
    %5020 = vmatprep.subr.bf16.mxu0 %v4444
    %5021 = vmatpush1.bf16.msra.mxu0 %v4443
    %5022 = vmatprep.subr.bf16.mxu0 %v4452
    %5023 = vmatpush1.bf16.msra.mxu0 %v4451
    %5024 = vmatprep.subr.bf16.mxu0 %v4460
    %5025 = vmatpush1.bf16.msra.mxu0 %v4459
    %5026 = vmatprep.subr.bf16.mxu0 %v4468
    %5027 = vmatpush1.bf16.msra.mxu0 %v4467
    %5028 = vmatprep.subr.bf16.mxu0 %v4476
    %5029 = vmatpush1.bf16.msra.mxu0 %v4475
    %5030 = vmatprep.subr.bf16.mxu0 %v4484
    %5031 = vmatpush1.bf16.msra.mxu0 %v4483
    %5032 = vmatprep.subr.bf16.mxu0 %v4492
    %5033 = vmatpush1.bf16.msra.mxu0 %v4491
    %5034 = vmatprep.subr.bf16.mxu0 %v4500
    %5035 = vmatpush1.bf16.msra.mxu0 %v4499
    %5036 = vmatprep.subr.bf16.mxu0 %v4508
    %5037 = vmatpush1.bf16.msra.mxu0 %v4507
    %5038 = vmatprep.subr.bf16.mxu0 %v4516
    %5039 = vmatpush1.bf16.msra.mxu0 %v4515
    %5040 = vmatprep.subr.bf16.mxu0 %v4524
    %5041 = vmatpush1.bf16.msra.mxu0 %v4523
    %5042 = vmatprep.subr.bf16.mxu0 %v4532
    %5043 = vmatpush1.bf16.msra.mxu0 %v4531
    %5044 = vmatprep.subr.bf16.mxu0 %v4540
    %5045 = vmatpush1.bf16.msra.mxu0 %v4539
    %5046 = vmatprep.mubr.bf16.mxu0 %v4804
    %5047 = vmatmul.mubr.bf16.gmra.mrb[0].mxu0 %v4803
    %v5048 = vpop.f32.mrb[0].mxu0
    %v5049 = vadd.f32 %v5008, %v5048
    %v5050 = vpop.f32.mrb[0].mxu0
    %v5051 = vadd.f32 %v5010, %v5050
    %v5052 = vpop.f32.mrb[0].mxu0
    %v5053 = vpop.f32.mrb[0].mxu0
    %5054 = vdwg.mxu0
    %5055 = vmatprep.subr.bf16.mxu0 %v4548
    %5056 = vmatpush1.bf16.msra.mxu0 %v4547
    %5057 = vmatprep.subr.bf16.mxu0 %v4556
    %5058 = vmatpush1.bf16.msra.mxu0 %v4555
    %5059 = vmatprep.subr.bf16.mxu0 %v4564
    %5060 = vmatpush1.bf16.msra.mxu0 %v4563
    %5061 = vmatprep.subr.bf16.mxu0 %v4572
    %5062 = vmatpush1.bf16.msra.mxu0 %v4571
    %5063 = vmatprep.subr.bf16.mxu0 %v4580
    %5064 = vmatpush1.bf16.msra.mxu0 %v4579
    %5065 = vmatprep.subr.bf16.mxu0 %v4588
    %5066 = vmatpush1.bf16.msra.mxu0 %v4587
    %5067 = vmatprep.subr.bf16.mxu0 %v4596
    %5068 = vmatpush1.bf16.msra.mxu0 %v4595
    %5069 = vmatprep.subr.bf16.mxu0 %v4604
    %5070 = vmatpush1.bf16.msra.mxu0 %v4603
    %5071 = vmatprep.subr.bf16.mxu0 %v4612
    %5072 = vmatpush1.bf16.msra.mxu0 %v4611
    %5073 = vmatprep.subr.bf16.mxu0 %v4620
    %5074 = vmatpush1.bf16.msra.mxu0 %v4619
    %5075 = vmatprep.subr.bf16.mxu0 %v4628
    %5076 = vmatpush1.bf16.msra.mxu0 %v4627
    %5077 = vmatprep.subr.bf16.mxu0 %v4636
    %5078 = vmatpush1.bf16.msra.mxu0 %v4635
    %5079 = vmatprep.subr.bf16.mxu0 %v4644
    %5080 = vmatpush1.bf16.msra.mxu0 %v4643
    %5081 = vmatprep.subr.bf16.mxu0 %v4652
    %5082 = vmatpush1.bf16.msra.mxu0 %v4651
    %5083 = vmatprep.subr.bf16.mxu0 %v4660
    %5084 = vmatpush1.bf16.msra.mxu0 %v4659
    %5085 = vmatprep.subr.bf16.mxu0 %v4668
    %5086 = vmatpush1.bf16.msra.mxu0 %v4667
    %5087 = vmatprep.mubr.bf16.mxu0 %v4806
    %5088 = vmatmul.mubr.bf16.gmra.mrb[0].mxu0 %v4805
    %v5089 = vpop.f32.mrb[0].mxu0
    %v5090 = vadd.f32 %v5049, %v5089
    %v5091 = vpop.f32.mrb[0].mxu0
    %v5092 = vadd.f32 %v5051, %v5091
    %v5093 = vpop.f32.mrb[0].mxu0
    %v5094 = vpop.f32.mrb[0].mxu0
    %5095 = vdwg.mxu0
    %5096 = vmatprep.subr.bf16.mxu0 %v4676
    %5097 = vmatpush1.bf16.msra.mxu0 %v4675
    %5098 = vmatprep.subr.bf16.mxu0 %v4684
    %5099 = vmatpush1.bf16.msra.mxu0 %v4683
    %5100 = vmatprep.subr.bf16.mxu0 %v4692
    %5101 = vmatpush1.bf16.msra.mxu0 %v4691
    %5102 = vmatprep.subr.bf16.mxu0 %v4700
    %5103 = vmatpush1.bf16.msra.mxu0 %v4699
    %5104 = vmatprep.subr.bf16.mxu0 %v4708
    %5105 = vmatpush1.bf16.msra.mxu0 %v4707
    %5106 = vmatprep.subr.bf16.mxu0 %v4716
    %5107 = vmatpush1.bf16.msra.mxu0 %v4715
    %5108 = vmatprep.subr.bf16.mxu0 %v4724
    %5109 = vmatpush1.bf16.msra.mxu0 %v4723
    %5110 = vmatprep.subr.bf16.mxu0 %v4732
    %5111 = vmatpush1.bf16.msra.mxu0 %v4731
    %5112 = vmatprep.subr.bf16.mxu0 %v4740
    %5113 = vmatpush1.bf16.msra.mxu0 %v4739
    %5114 = vmatprep.subr.bf16.mxu0 %v4748
    %5115 = vmatpush1.bf16.msra.mxu0 %v4747
    %5116 = vmatprep.subr.bf16.mxu0 %v4756
    %5117 = vmatpush1.bf16.msra.mxu0 %v4755
    %5118 = vmatprep.subr.bf16.mxu0 %v4764
    %5119 = vmatpush1.bf16.msra.mxu0 %v4763
    %5120 = vmatprep.subr.bf16.mxu0 %v4772
    %5121 = vmatpush1.bf16.msra.mxu0 %v4771
    %5122 = vmatprep.subr.bf16.mxu0 %v4780
    %5123 = vmatpush1.bf16.msra.mxu0 %v4779
    %5124 = vmatprep.subr.bf16.mxu0 %v4788
    %5125 = vmatpush1.bf16.msra.mxu0 %v4787
    %5126 = vmatprep.subr.bf16.mxu0 %v4796
    %5127 = vmatpush1.bf16.msra.mxu0 %v4795
    %5128 = vmatprep.mubr.bf16.mxu0 %v4808
    %5129 = vmatmul.mubr.bf16.gmra.mrb[0].mxu0 %v4807
    %v5130 = vpop.f32.mrb[0].mxu0
    %v5131 = vadd.f32 %v5090, %v5130
    %v5132 = vpop.f32.mrb[0].mxu0
    %v5133 = vadd.f32 %v5092, %v5132
    %v5134 = vpop.f32.mrb[0].mxu0
    %v5135 = vpop.f32.mrb[0].mxu0
    %5136 = vdwg.mxu0
    %5137 = vmatprep.subr.bf16.mxu0 %v4294
    %5138 = vmatpush1.bf16.msra.mxu0 %v4293
    %5139 = vmatprep.subr.bf16.mxu0 %v4302
    %5140 = vmatpush1.bf16.msra.mxu0 %v4301
    %5141 = vmatprep.subr.bf16.mxu0 %v4310
    %5142 = vmatpush1.bf16.msra.mxu0 %v4309
    %5143 = vmatprep.subr.bf16.mxu0 %v4318
    %5144 = vmatpush1.bf16.msra.mxu0 %v4317
    %5145 = vmatprep.subr.bf16.mxu0 %v4326
    %5146 = vmatpush1.bf16.msra.mxu0 %v4325
    %5147 = vmatprep.subr.bf16.mxu0 %v4334
    %5148 = vmatpush1.bf16.msra.mxu0 %v4333
    %5149 = vmatprep.subr.bf16.mxu0 %v4342
    %5150 = vmatpush1.bf16.msra.mxu0 %v4341
    %5151 = vmatprep.subr.bf16.mxu0 %v4350
    %5152 = vmatpush1.bf16.msra.mxu0 %v4349
    %5153 = vmatprep.subr.bf16.mxu0 %v4358
    %5154 = vmatpush1.bf16.msra.mxu0 %v4357
    %5155 = vmatprep.subr.bf16.mxu0 %v4366
    %5156 = vmatpush1.bf16.msra.mxu0 %v4365
    %5157 = vmatprep.subr.bf16.mxu0 %v4374
    %5158 = vmatpush1.bf16.msra.mxu0 %v4373
    %5159 = vmatprep.subr.bf16.mxu0 %v4382
    %5160 = vmatpush1.bf16.msra.mxu0 %v4381
    %5161 = vmatprep.subr.bf16.mxu0 %v4390
    %5162 = vmatpush1.bf16.msra.mxu0 %v4389
    %5163 = vmatprep.subr.bf16.mxu0 %v4398
    %5164 = vmatpush1.bf16.msra.mxu0 %v4397
    %5165 = vmatprep.subr.bf16.mxu0 %v4406
    %5166 = vmatpush1.bf16.msra.mxu0 %v4405
    %5167 = vmatprep.subr.bf16.mxu0 %v4414
    %5168 = vmatpush1.bf16.msra.mxu0 %v4413
    %5169 = vmatprep.mubr.bf16.mxu0 %v4802
    %5170 = vmatmul.mubr.bf16.gmra.mrb[0].mxu0 %v4801
    %v5171 = vpop.f32.mrb[0].mxu0
    %v5172 = vadd.f32 0.0, %v5171
    %v5173 = vpop.f32.mrb[0].mxu0
    %v5174 = vadd.f32 0.0, %v5173
    %v5175 = vpop.f32.mrb[0].mxu0
    %v5176 = vpop.f32.mrb[0].mxu0
    %5177 = vdwg.mxu0
    %5178 = vmatprep.subr.bf16.mxu0 %v4422
    %5179 = vmatpush1.bf16.msra.mxu0 %v4421
    %5180 = vmatprep.subr.bf16.mxu0 %v4430
    %5181 = vmatpush1.bf16.msra.mxu0 %v4429
    %5182 = vmatprep.subr.bf16.mxu0 %v4438
    %5183 = vmatpush1.bf16.msra.mxu0 %v4437
    %5184 = vmatprep.subr.bf16.mxu0 %v4446
    %5185 = vmatpush1.bf16.msra.mxu0 %v4445
    %5186 = vmatprep.subr.bf16.mxu0 %v4454
    %5187 = vmatpush1.bf16.msra.mxu0 %v4453
    %5188 = vmatprep.subr.bf16.mxu0 %v4462
    %5189 = vmatpush1.bf16.msra.mxu0 %v4461
    %5190 = vmatprep.subr.bf16.mxu0 %v4470
    %5191 = vmatpush1.bf16.msra.mxu0 %v4469
    %5192 = vmatprep.subr.bf16.mxu0 %v4478
    %5193 = vmatpush1.bf16.msra.mxu0 %v4477
    %5194 = vmatprep.subr.bf16.mxu0 %v4486
    %5195 = vmatpush1.bf16.msra.mxu0 %v4485
    %5196 = vmatprep.subr.bf16.mxu0 %v4494
    %5197 = vmatpush1.bf16.msra.mxu0 %v4493
    %5198 = vmatprep.subr.bf16.mxu0 %v4502
    %5199 = vmatpush1.bf16.msra.mxu0 %v4501
    %5200 = vmatprep.subr.bf16.mxu0 %v4510
    %5201 = vmatpush1.bf16.msra.mxu0 %v4509
    %5202 = vmatprep.subr.bf16.mxu0 %v4518
    %5203 = vmatpush1.bf16.msra.mxu0 %v4517
    %5204 = vmatprep.subr.bf16.mxu0 %v4526
    %5205 = vmatpush1.bf16.msra.mxu0 %v4525
    %5206 = vmatprep.subr.bf16.mxu0 %v4534
    %5207 = vmatpush1.bf16.msra.mxu0 %v4533
    %5208 = vmatprep.subr.bf16.mxu0 %v4542
    %5209 = vmatpush1.bf16.msra.mxu0 %v4541
    %5210 = vmatprep.mubr.bf16.mxu0 %v4804
    %5211 = vmatmul.mubr.bf16.gmra.mrb[0].mxu0 %v4803
    %v5212 = vpop.f32.mrb[0].mxu0
    %v5213 = vadd.f32 %v5172, %v5212
    %v5214 = vpop.f32.mrb[0].mxu0
    %v5215 = vadd.f32 %v5174, %v5214
    %v5216 = vpop.f32.mrb[0].mxu0
    %v5217 = vpop.f32.mrb[0].mxu0
    %5218 = vdwg.mxu0
    %5219 = vmatprep.subr.bf16.mxu0 %v4550
    %5220 = vmatpush1.bf16.msra.mxu0 %v4549
    %5221 = vmatprep.subr.bf16.mxu0 %v4558
    %5222 = vmatpush1.bf16.msra.mxu0 %v4557
    %5223 = vmatprep.subr.bf16.mxu0 %v4566
    %5224 = vmatpush1.bf16.msra.mxu0 %v4565
    %5225 = vmatprep.subr.bf16.mxu0 %v4574
    %5226 = vmatpush1.bf16.msra.mxu0 %v4573
    %5227 = vmatprep.subr.bf16.mxu0 %v4582
    %5228 = vmatpush1.bf16.msra.mxu0 %v4581
    %5229 = vmatprep.subr.bf16.mxu0 %v4590
    %5230 = vmatpush1.bf16.msra.mxu0 %v4589
    %5231 = vmatprep.subr.bf16.mxu0 %v4598
    %5232 = vmatpush1.bf16.msra.mxu0 %v4597
    %5233 = vmatprep.subr.bf16.mxu0 %v4606
    %5234 = vmatpush1.bf16.msra.mxu0 %v4605
    %5235 = vmatprep.subr.bf16.mxu0 %v4614
    %5236 = vmatpush1.bf16.msra.mxu0 %v4613
    %5237 = vmatprep.subr.bf16.mxu0 %v4622
    %5238 = vmatpush1.bf16.msra.mxu0 %v4621
    %5239 = vmatprep.subr.bf16.mxu0 %v4630
    %5240 = vmatpush1.bf16.msra.mxu0 %v4629
    %5241 = vmatprep.subr.bf16.mxu0 %v4638
    %5242 = vmatpush1.bf16.msra.mxu0 %v4637
    %5243 = vmatprep.subr.bf16.mxu0 %v4646
    %5244 = vmatpush1.bf16.msra.mxu0 %v4645
    %5245 = vmatprep.subr.bf16.mxu0 %v4654
    %5246 = vmatpush1.bf16.msra.mxu0 %v4653
    %5247 = vmatprep.subr.bf16.mxu0 %v4662
    %5248 = vmatpush1.bf16.msra.mxu0 %v4661
    %5249 = vmatprep.subr.bf16.mxu0 %v4670
    %5250 = vmatpush1.bf16.msra.mxu0 %v4669
    %5251 = vmatprep.mubr.bf16.mxu0 %v4806
    %5252 = vmatmul.mubr.bf16.gmra.mrb[0].mxu0 %v4805
    %v5253 = vpop.f32.mrb[0].mxu0
    %v5254 = vadd.f32 %v5213, %v5253
    %v5255 = vpop.f32.mrb[0].mxu0
    %v5256 = vadd.f32 %v5215, %v5255
    %v5257 = vpop.f32.mrb[0].mxu0
    %v5258 = vpop.f32.mrb[0].mxu0
    %5259 = vdwg.mxu0
    %5260 = vmatprep.subr.bf16.mxu0 %v4678
    %5261 = vmatpush1.bf16.msra.mxu0 %v4677
    %5262 = vmatprep.subr.bf16.mxu0 %v4686
    %5263 = vmatpush1.bf16.msra.mxu0 %v4685
    %5264 = vmatprep.subr.bf16.mxu0 %v4694
    %5265 = vmatpush1.bf16.msra.mxu0 %v4693
    %5266 = vmatprep.subr.bf16.mxu0 %v4702
    %5267 = vmatpush1.bf16.msra.mxu0 %v4701
    %5268 = vmatprep.subr.bf16.mxu0 %v4710
    %5269 = vmatpush1.bf16.msra.mxu0 %v4709
    %5270 = vmatprep.subr.bf16.mxu0 %v4718
    %5271 = vmatpush1.bf16.msra.mxu0 %v4717
    %5272 = vmatprep.subr.bf16.mxu0 %v4726
    %5273 = vmatpush1.bf16.msra.mxu0 %v4725
    %5274 = vmatprep.subr.bf16.mxu0 %v4734
    %5275 = vmatpush1.bf16.msra.mxu0 %v4733
    %5276 = vmatprep.subr.bf16.mxu0 %v4742
    %5277 = vmatpush1.bf16.msra.mxu0 %v4741
    %5278 = vmatprep.subr.bf16.mxu0 %v4750
    %5279 = vmatpush1.bf16.msra.mxu0 %v4749
    %5280 = vmatprep.subr.bf16.mxu0 %v4758
    %5281 = vmatpush1.bf16.msra.mxu0 %v4757
    %5282 = vmatprep.subr.bf16.mxu0 %v4766
    %5283 = vmatpush1.bf16.msra.mxu0 %v4765
    %5284 = vmatprep.subr.bf16.mxu0 %v4774
    %5285 = vmatpush1.bf16.msra.mxu0 %v4773
    %5286 = vmatprep.subr.bf16.mxu0 %v4782
    %5287 = vmatpush1.bf16.msra.mxu0 %v4781
    %5288 = vmatprep.subr.bf16.mxu0 %v4790
    %5289 = vmatpush1.bf16.msra.mxu0 %v4789
    %5290 = vmatprep.subr.bf16.mxu0 %v4798
    %5291 = vmatpush1.bf16.msra.mxu0 %v4797
    %5292 = vmatprep.mubr.bf16.mxu0 %v4808
    %5293 = vmatmul.mubr.bf16.gmra.mrb[0].mxu0 %v4807
    %v5294 = vpop.f32.mrb[0].mxu0
    %v5295 = vadd.f32 %v5254, %v5294
    %v5296 = vpop.f32.mrb[0].mxu0
    %v5297 = vadd.f32 %v5256, %v5296
    %v5298 = vpop.f32.mrb[0].mxu0
    %v5299 = vpop.f32.mrb[0].mxu0
    %5300 = vdwg.mxu0
    %5301 = vmatprep.subr.bf16.mxu0 %v4296
    %5302 = vmatpush1.bf16.msra.mxu0 %v4295
    %5303 = vmatprep.subr.bf16.mxu0 %v4304
    %5304 = vmatpush1.bf16.msra.mxu0 %v4303
    %5305 = vmatprep.subr.bf16.mxu0 %v4312
    %5306 = vmatpush1.bf16.msra.mxu0 %v4311
    %5307 = vmatprep.subr.bf16.mxu0 %v4320
    %5308 = vmatpush1.bf16.msra.mxu0 %v4319
    %5309 = vmatprep.subr.bf16.mxu0 %v4328
    %5310 = vmatpush1.bf16.msra.mxu0 %v4327
    %5311 = vmatprep.subr.bf16.mxu0 %v4336
    %5312 = vmatpush1.bf16.msra.mxu0 %v4335
    %5313 = vmatprep.subr.bf16.mxu0 %v4344
    %5314 = vmatpush1.bf16.msra.mxu0 %v4343
    %5315 = vmatprep.subr.bf16.mxu0 %v4352
    %5316 = vmatpush1.bf16.msra.mxu0 %v4351
    %5317 = vmatprep.subr.bf16.mxu0 %v4360
    %5318 = vmatpush1.bf16.msra.mxu0 %v4359
    %5319 = vmatprep.subr.bf16.mxu0 %v4368
    %5320 = vmatpush1.bf16.msra.mxu0 %v4367
    %5321 = vmatprep.subr.bf16.mxu0 %v4376
    %5322 = vmatpush1.bf16.msra.mxu0 %v4375
    %5323 = vmatprep.subr.bf16.mxu0 %v4384
    %5324 = vmatpush1.bf16.msra.mxu0 %v4383
    %5325 = vmatprep.subr.bf16.mxu0 %v4392
    %5326 = vmatpush1.bf16.msra.mxu0 %v4391
    %5327 = vmatprep.subr.bf16.mxu0 %v4400
    %5328 = vmatpush1.bf16.msra.mxu0 %v4399
    %5329 = vmatprep.subr.bf16.mxu0 %v4408
    %5330 = vmatpush1.bf16.msra.mxu0 %v4407
    %5331 = vmatprep.subr.bf16.mxu0 %v4416
    %5332 = vmatpush1.bf16.msra.mxu0 %v4415
    %5333 = vmatprep.mubr.bf16.mxu0 %v4802
    %5334 = vmatmul.mubr.bf16.gmra.mrb[0].mxu0 %v4801
    %v5335 = vpop.f32.mrb[0].mxu0
    %v5336 = vadd.f32 0.0, %v5335
    %v5337 = vpop.f32.mrb[0].mxu0
    %v5338 = vadd.f32 0.0, %v5337
    %v5339 = vpop.f32.mrb[0].mxu0
    %v5340 = vpop.f32.mrb[0].mxu0
    %5341 = vdwg.mxu0
    %5342 = vmatprep.subr.bf16.mxu0 %v4424
    %5343 = vmatpush1.bf16.msra.mxu0 %v4423
    %5344 = vmatprep.subr.bf16.mxu0 %v4432
    %5345 = vmatpush1.bf16.msra.mxu0 %v4431
    %5346 = vmatprep.subr.bf16.mxu0 %v4440
    %5347 = vmatpush1.bf16.msra.mxu0 %v4439
    %5348 = vmatprep.subr.bf16.mxu0 %v4448
    %5349 = vmatpush1.bf16.msra.mxu0 %v4447
    %5350 = vmatprep.subr.bf16.mxu0 %v4456
    %5351 = vmatpush1.bf16.msra.mxu0 %v4455
    %5352 = vmatprep.subr.bf16.mxu0 %v4464
    %5353 = vmatpush1.bf16.msra.mxu0 %v4463
    %5354 = vmatprep.subr.bf16.mxu0 %v4472
    %5355 = vmatpush1.bf16.msra.mxu0 %v4471
    %5356 = vmatprep.subr.bf16.mxu0 %v4480
    %5357 = vmatpush1.bf16.msra.mxu0 %v4479
    %5358 = vmatprep.subr.bf16.mxu0 %v4488
    %5359 = vmatpush1.bf16.msra.mxu0 %v4487
    %5360 = vmatprep.subr.bf16.mxu0 %v4496
    %5361 = vmatpush1.bf16.msra.mxu0 %v4495
    %5362 = vmatprep.subr.bf16.mxu0 %v4504
    %5363 = vmatpush1.bf16.msra.mxu0 %v4503
    %5364 = vmatprep.subr.bf16.mxu0 %v4512
    %5365 = vmatpush1.bf16.msra.mxu0 %v4511
    %5366 = vmatprep.subr.bf16.mxu0 %v4520
    %5367 = vmatpush1.bf16.msra.mxu0 %v4519
    %5368 = vmatprep.subr.bf16.mxu0 %v4528
    %5369 = vmatpush1.bf16.msra.mxu0 %v4527
    %5370 = vmatprep.subr.bf16.mxu0 %v4536
    %5371 = vmatpush1.bf16.msra.mxu0 %v4535
    %5372 = vmatprep.subr.bf16.mxu0 %v4544
    %5373 = vmatpush1.bf16.msra.mxu0 %v4543
    %5374 = vmatprep.mubr.bf16.mxu0 %v4804
    %5375 = vmatmul.mubr.bf16.gmra.mrb[0].mxu0 %v4803
    %v5376 = vpop.f32.mrb[0].mxu0
    %v5377 = vadd.f32 %v5336, %v5376
    %v5378 = vpop.f32.mrb[0].mxu0
    %v5379 = vadd.f32 %v5338, %v5378
    %v5380 = vpop.f32.mrb[0].mxu0
    %v5381 = vpop.f32.mrb[0].mxu0
    %5382 = vdwg.mxu0
    %5383 = vmatprep.subr.bf16.mxu0 %v4552
    %5384 = vmatpush1.bf16.msra.mxu0 %v4551
    %5385 = vmatprep.subr.bf16.mxu0 %v4560
    %5386 = vmatpush1.bf16.msra.mxu0 %v4559
    %5387 = vmatprep.subr.bf16.mxu0 %v4568
    %5388 = vmatpush1.bf16.msra.mxu0 %v4567
    %5389 = vmatprep.subr.bf16.mxu0 %v4576
    %5390 = vmatpush1.bf16.msra.mxu0 %v4575
    %5391 = vmatprep.subr.bf16.mxu0 %v4584
    %5392 = vmatpush1.bf16.msra.mxu0 %v4583
    %5393 = vmatprep.subr.bf16.mxu0 %v4592
    %5394 = vmatpush1.bf16.msra.mxu0 %v4591
    %5395 = vmatprep.subr.bf16.mxu0 %v4600
    %5396 = vmatpush1.bf16.msra.mxu0 %v4599
    %5397 = vmatprep.subr.bf16.mxu0 %v4608
    %5398 = vmatpush1.bf16.msra.mxu0 %v4607
    %5399 = vmatprep.subr.bf16.mxu0 %v4616
    %5400 = vmatpush1.bf16.msra.mxu0 %v4615
    %5401 = vmatprep.subr.bf16.mxu0 %v4624
    %5402 = vmatpush1.bf16.msra.mxu0 %v4623
    %5403 = vmatprep.subr.bf16.mxu0 %v4632
    %5404 = vmatpush1.bf16.msra.mxu0 %v4631
    %5405 = vmatprep.subr.bf16.mxu0 %v4640
    %5406 = vmatpush1.bf16.msra.mxu0 %v4639
    %5407 = vmatprep.subr.bf16.mxu0 %v4648
    %5408 = vmatpush1.bf16.msra.mxu0 %v4647
    %5409 = vmatprep.subr.bf16.mxu0 %v4656
    %5410 = vmatpush1.bf16.msra.mxu0 %v4655
    %5411 = vmatprep.subr.bf16.mxu0 %v4664
    %5412 = vmatpush1.bf16.msra.mxu0 %v4663
    %5413 = vmatprep.subr.bf16.mxu0 %v4672
    %5414 = vmatpush1.bf16.msra.mxu0 %v4671
    %5415 = vmatprep.mubr.bf16.mxu0 %v4806
    %5416 = vmatmul.mubr.bf16.gmra.mrb[0].mxu0 %v4805
    %v5417 = vpop.f32.mrb[0].mxu0
    %v5418 = vadd.f32 %v5377, %v5417
    %v5419 = vpop.f32.mrb[0].mxu0
    %v5420 = vadd.f32 %v5379, %v5419
    %v5421 = vpop.f32.mrb[0].mxu0
    %v5422 = vpop.f32.mrb[0].mxu0
    %5423 = vdwg.mxu0
    %5424 = vmatprep.subr.bf16.mxu0 %v4680
    %5425 = vmatpush1.bf16.msra.mxu0 %v4679
    %5426 = vmatprep.subr.bf16.mxu0 %v4688
    %5427 = vmatpush1.bf16.msra.mxu0 %v4687
    %5428 = vmatprep.subr.bf16.mxu0 %v4696
    %5429 = vmatpush1.bf16.msra.mxu0 %v4695
    %5430 = vmatprep.subr.bf16.mxu0 %v4704
    %5431 = vmatpush1.bf16.msra.mxu0 %v4703
    %5432 = vmatprep.subr.bf16.mxu0 %v4712
    %5433 = vmatpush1.bf16.msra.mxu0 %v4711
    %5434 = vmatprep.subr.bf16.mxu0 %v4720
    %5435 = vmatpush1.bf16.msra.mxu0 %v4719
    %5436 = vmatprep.subr.bf16.mxu0 %v4728
    %5437 = vmatpush1.bf16.msra.mxu0 %v4727
    %5438 = vmatprep.subr.bf16.mxu0 %v4736
    %5439 = vmatpush1.bf16.msra.mxu0 %v4735
    %5440 = vmatprep.subr.bf16.mxu0 %v4744
    %5441 = vmatpush1.bf16.msra.mxu0 %v4743
    %5442 = vmatprep.subr.bf16.mxu0 %v4752
    %5443 = vmatpush1.bf16.msra.mxu0 %v4751
    %5444 = vmatprep.subr.bf16.mxu0 %v4760
    %5445 = vmatpush1.bf16.msra.mxu0 %v4759
    %5446 = vmatprep.subr.bf16.mxu0 %v4768
    %5447 = vmatpush1.bf16.msra.mxu0 %v4767
    %5448 = vmatprep.subr.bf16.mxu0 %v4776
    %5449 = vmatpush1.bf16.msra.mxu0 %v4775
    %5450 = vmatprep.subr.bf16.mxu0 %v4784
    %5451 = vmatpush1.bf16.msra.mxu0 %v4783
    %5452 = vmatprep.subr.bf16.mxu0 %v4792
    %5453 = vmatpush1.bf16.msra.mxu0 %v4791
    %5454 = vmatprep.subr.bf16.mxu0 %v4800
    %5455 = vmatpush1.bf16.msra.mxu0 %v4799
    %5456 = vmatprep.mubr.bf16.mxu0 %v4808
    %5457 = vmatmul.mubr.bf16.gmra.mrb[0].mxu0 %v4807
    %v5458 = vpop.f32.mrb[0].mxu0
    %v5459 = vadd.f32 %v5418, %v5458
    %v5460 = vpop.f32.mrb[0].mxu0
    %v5461 = vadd.f32 %v5420, %v5460
    %v5462 = vpop.f32.mrb[0].mxu0
    %v5463 = vpop.f32.mrb[0].mxu0
    %5464 = vdwg.mxu0
    %v5465 = vld [vmem:[#allocation17] sm:$0xff]
    %v5467 = vlaneseq
    %v5468 = vshrl.u32 %v5467, 7
    %v5469 = vsub.s32 0, %v5468
    %v5470 = vrot.slane %v5465, %v5469
    %v5471 = vlaneseq
    %v5472 = vshrl.u32 %v5471, 7
    %v5473 = vsub.s32 1, %v5472
    %v5474 = vrot.slane %v5465, %v5473
    %v5475 = vlaneseq
    %v5476 = vshrl.u32 %v5475, 7
    %v5477 = vsub.s32 2, %v5476
    %v5478 = vrot.slane %v5465, %v5477
    %v5479 = vlaneseq
    %v5480 = vshrl.u32 %v5479, 7
    %v5481 = vsub.s32 3, %v5480
    %v5482 = vrot.slane %v5465, %v5481
    %v5483 = vlaneseq
    %v5484 = vshrl.u32 %v5483, 7
    %v5485 = vsub.s32 4, %v5484
    %v5486 = vrot.slane %v5465, %v5485
    %v5487 = vlaneseq
    %v5488 = vshrl.u32 %v5487, 7
    %v5489 = vsub.s32 5, %v5488
    %v5490 = vrot.slane %v5465, %v5489
    %v5491 = vlaneseq
    %v5492 = vshrl.u32 %v5491, 7
    %v5493 = vsub.s32 6, %v5492
    %v5494 = vrot.slane %v5465, %v5493
    %v5495 = vlaneseq
    %v5496 = vshrl.u32 %v5495, 7
    %v5497 = vsub.s32 7, %v5496
    %v5498 = vrot.slane %v5465, %v5497
    %v5507 = vmul.f32 %v4967, %v5470
    %v5508 = vmul.f32 %v4969, %v5474
    %v5509 = vmul.f32 %v5131, %v5478
    %v5510 = vmul.f32 %v5133, %v5482
    %v5511 = vmul.f32 %v5295, %v5486
    %v5512 = vmul.f32 %v5297, %v5490
    %v5513 = vmul.f32 %v5459, %v5494
    %v5514 = vmul.f32 %v5461, %v5498
    %v5515 = vld [vmem:[#allocation19] sm:$0xff]
    %v5517 = vlaneseq
    %v5518 = vshrl.u32 %v5517, 7
    %v5519 = vsub.s32 0, %v5518
    %v5520 = vrot.slane %v5515, %v5519
    %v5521 = vlaneseq
    %v5522 = vshrl.u32 %v5521, 7
    %v5523 = vsub.s32 1, %v5522
    %v5524 = vrot.slane %v5515, %v5523
    %v5525 = vlaneseq
    %v5526 = vshrl.u32 %v5525, 7
    %v5527 = vsub.s32 2, %v5526
    %v5528 = vrot.slane %v5515, %v5527
    %v5529 = vlaneseq
    %v5530 = vshrl.u32 %v5529, 7
    %v5531 = vsub.s32 3, %v5530
    %v5532 = vrot.slane %v5515, %v5531
    %v5533 = vlaneseq
    %v5534 = vshrl.u32 %v5533, 7
    %v5535 = vsub.s32 4, %v5534
    %v5536 = vrot.slane %v5515, %v5535
    %v5537 = vlaneseq
    %v5538 = vshrl.u32 %v5537, 7
    %v5539 = vsub.s32 5, %v5538
    %v5540 = vrot.slane %v5515, %v5539
    %v5541 = vlaneseq
    %v5542 = vshrl.u32 %v5541, 7
    %v5543 = vsub.s32 6, %v5542
    %v5544 = vrot.slane %v5515, %v5543
    %v5545 = vlaneseq
    %v5546 = vshrl.u32 %v5545, 7
    %v5547 = vsub.s32 7, %v5546
    %v5548 = vrot.slane %v5515, %v5547
    %v5557 = vadd.f32 %v5507, %v5520
    %v5558 = vadd.f32 %v5508, %v5524
    %v5559 = vadd.f32 %v5509, %v5528
    %v5560 = vadd.f32 %v5510, %v5532
    %v5561 = vadd.f32 %v5511, %v5536
    %v5562 = vadd.f32 %v5512, %v5540
    %v5563 = vadd.f32 %v5513, %v5544
    %v5564 = vadd.f32 %v5514, %v5548
    %v5573 = vcombine.low %v5557, %v5558
    %v5574 = vcombine.low %v5559, %v5560
    %v5576 = vunpack.c.l.s4 1983009808
    %v5577 = vunpack.c.0.s8 %v5576
    %v5578 = vlaneseq
    %v5579 = vshrl.u32 %v5578, 7
    %v5580 = vsub.s32 %v5577, %v5579
    %v5581 = vrot.slane %v5573, %v5580
    %v5583 = vunpack.c.l.s4 1983009808
    %v5584 = vunpack.c.0.s8 %v5583
    %v5585 = vlaneseq
    %v5586 = vshrl.u32 %v5585, 7
    %v5587 = vsub.s32 %v5584, %v5586
    %v5588 = vrot.slane %v5574, %v5587
    %v5589 = vcombine.low %v5581, %v5588
    %v5590 = vcombine.low %v5561, %v5562
    %v5591 = vcombine.low %v5563, %v5564
    %v5593 = vunpack.c.l.s4 1983009808
    %v5594 = vunpack.c.0.s8 %v5593
    %v5595 = vlaneseq
    %v5596 = vshrl.u32 %v5595, 7
    %v5597 = vsub.s32 %v5594, %v5596
    %v5598 = vrot.slane %v5590, %v5597
    %v5600 = vunpack.c.l.s4 1983009808
    %v5601 = vunpack.c.0.s8 %v5600
    %v5602 = vlaneseq
    %v5603 = vshrl.u32 %v5602, 7
    %v5604 = vsub.s32 %v5601, %v5603
    %v5605 = vrot.slane %v5591, %v5604
    %v5606 = vcombine.low %v5598, %v5605
    %5609 = vst [vmem:[#allocation20] sm:$0xff] %v5589
    %5610 = vst [vmem:[#allocation20 + $0x8] sm:$0xff] %v5606
    // Predicated region
    $region94: #{tmodel_forward.1} parent=1 // pred_check
      _
    $region95: #{tmodel_forward.1} parent=1 // pred_check_branch
      %5612 = sbr.rel (0) target = $region97
    $region96: #{tmodel_forward.1} parent=1 // pred_region
      %s5614 = ssub.s32 256, 256
      %5615 = vsyncadd [#allocation4], %s5614
      %s5617 = sshll.u32 [#allocation20], 4
      %s5618 = int_to_ptr.vmem [resolvable:$true] %s5617
      %5620 = dma.vmem_to_hbm [thread:$0]  %s5618, 256, %s12, [#allocation4]
    $region97: #{tmodel_forward.1} parent=1 // pred_fallthru
      _
    // Predicated region
    $region98: #{tmodel_forward.1} parent=1 // pred_check
      _
    $region99: #{tmodel_forward.1} parent=1 // pred_check_branch
      %5622 = sbr.rel (0) target = $region101
    $region100: #{tmodel_forward.1} parent=1 // pred_region
      %5623 = dma.done [#allocation4], 256
    $region101: #{tmodel_forward.1} parent=1 // pred_fallthru
      _
    %5624 = vsyncpa [#allocation3], 1
    %5625 = vsyncpa [#allocation6], 1
    %5626 = vsyncpa [#allocation9], 1
    %5627 = vsyncpa [#allocation12], 1
    %5628 = vsyncpa [#allocation15], 1
    %5629 = vsyncpa [#allocation18], 1
    %5630 = vsyncpa [#allocation4], 1

</llo_original>
